<compile_context>
chip_gen: v6e
topology: v6e:2x2x1
jax: 0.10.0
libtpu: 0.0.40
codegen_flags: <defaults>
</compile_context>

<pallas_src>
import math

import jax
import jax.numpy as jnp
from jax.experimental import pallas as pl
from jax.experimental.pallas import tpu as pltpu

# ----------------------------- problem sizes ---------------------------------
BATCH = 2
Z_DIM = 32
SEQ_LEN = 16          # GRU hidden size H (and GRU input size)
SEQ_WIDTH = 8         # number of GRU time steps T (batch_first sequence length)
NUM_LAYERS = 4
OUT_DIM = SEQ_LEN * SEQ_WIDTH  # Linear output dim (scale == 1 in both branches)


# ------------------------------- kernel ---------------------------------------
def decoder_kernel(z_ref, wl_ref, bl_ref, wih_ref, whh_ref, bih_ref, bhh_ref,
                   out_ref, seq_ref):
    """Whole decoder forward in one VMEM-resident kernel invocation.

    Shapes:
      z_ref   : (B, Z_DIM)
      wl_ref  : (Z_DIM, OUT_DIM)      Linear weight, pre-transposed
      bl_ref  : (1, OUT_DIM)
      wih_ref : (L, 3, H, H)          per-gate W_ih^T, gate order [r, z, n]
      whh_ref : (L, 3, H, H)          per-gate W_hh^T
      bih_ref : (L, 3, 1, H)
      bhh_ref : (L, 3, 1, H)
      out_ref : (B, T*H)              tanh(GRU output), row-major (b, t, h)
      seq_ref : (T*B, H) VMEM scratch, time-major rows (row = t*B + b)
    """
    B = z_ref.shape[0]
    H = SEQ_LEN
    T = SEQ_WIDTH
    L = NUM_LAYERS

    # Linear(z_dim -> seq_len*seq_width)  (MXU matmul, f32 accumulate).
    # Dropout(0.2): identity in eval mode.
    x = jnp.dot(z_ref[...], wl_ref[...],
                preferred_element_type=jnp.float32) + bl_ref[...]   # (B, T*H)

    # Reshape1DTo2D((seq_width, seq_len)) is a row-major view: time step t of
    # the layer-0 input is the flat lane slice [t*H : (t+1)*H].  Scatter it
    # into a time-major (T*B, H) slab once (off the recurrence).
    for t in range(T):
        seq_ref[t * B:(t + 1) * B, :] = x[:, t * H:(t + 1) * H]

    # 4-layer GRU, PyTorch gate order [r, z, n], h0 = 0.
    for l in range(L):
        # Per-gate weights (H, H) and biases (1, H), loaded once per layer.
        wih_r = wih_ref[l, 0, :, :]
        wih_z = wih_ref[l, 1, :, :]
        wih_n = wih_ref[l, 2, :, :]
        whh_r = whh_ref[l, 0, :, :]
        whh_z = whh_ref[l, 1, :, :]
        whh_n = whh_ref[l, 2, :, :]
        # r/z gate biases fold into the hoisted gx term; b_hn must stay inside
        # the r * (...) term (PyTorch GRU definition).
        b_r = bih_ref[l, 0, :, :] + bhh_ref[l, 0, :, :]
        b_z = bih_ref[l, 1, :, :] + bhh_ref[l, 1, :, :]
        b_in = bih_ref[l, 2, :, :]
        b_hn = bhh_ref[l, 2, :, :]

        # Hoisted input-to-hidden matmuls for all T steps at once:
        # (T*B, H) @ (H, H) per gate — off the serial h chain.
        seq_mat = seq_ref[...]
        gx_r = jnp.dot(seq_mat, wih_r, preferred_element_type=jnp.float32) + b_r
        gx_z = jnp.dot(seq_mat, wih_z, preferred_element_type=jnp.float32) + b_z
        gx_n = jnp.dot(seq_mat, wih_n, preferred_element_type=jnp.float32) + b_in

        h = jnp.zeros((B, H), dtype=jnp.float32)
        for t in range(T):
            r0 = t * B
            # Only the hidden-to-hidden matmuls remain in the recurrence; the
            # three per-gate dots are independent and pipeline in the MXU.
            gh_r = jnp.dot(h, whh_r, preferred_element_type=jnp.float32)
            gh_z = jnp.dot(h, whh_z, preferred_element_type=jnp.float32)
            gh_n = jnp.dot(h, whh_n, preferred_element_type=jnp.float32) + b_hn
            r = jax.nn.sigmoid(gx_r[r0:r0 + B, :] + gh_r)
            zg = jax.nn.sigmoid(gx_z[r0:r0 + B, :] + gh_z)
            n = jnp.tanh(gx_n[r0:r0 + B, :] + r * gh_n)
            h = n + zg * (h - n)          # == (1 - z) * n + z * h
            if l == L - 1:
                # ExtractLSTMOutput + Tanh fused into the last layer's step;
                # write straight into the lane-dense (B, T*H) output buffer.
                out_ref[:, t * H:(t + 1) * H] = jnp.tanh(h)
            else:
                seq_ref[r0:r0 + B, :] = h


# ------------------------------- wrapper --------------------------------------
def decoder_forward(z, params):
    w_lin_t, b_lin, wih_g, whh_g, bih_g, bhh_g = params
    B = z.shape[0]

    vmem = pl.BlockSpec(memory_space=pltpu.MemorySpace.VMEM)
    out = pl.pallas_call(
        decoder_kernel,
        out_shape=jax.ShapeDtypeStruct((B, OUT_DIM), jnp.float32),
        in_specs=[vmem] * 7,
        out_specs=vmem,
        scratch_shapes=[pltpu.VMEM((SEQ_WIDTH * B, SEQ_LEN), jnp.float32)],
    )(z, w_lin_t, b_lin, wih_g, whh_g, bih_g, bhh_g)

    # (B, T*H) row-major == (B, T, H) row-major.
    # torch: output.reshape((-1, seq_len, seq_width)) — pure row-major reshape.
    return out.reshape(B, SEQ_LEN, SEQ_WIDTH)


# ---------------------------- pure-JAX reference -------------------------------
def decoder_reference(z, params):
    w_lin_t, b_lin, wih_g, whh_g, bih_g, bhh_g = params
    B = z.shape[0]
    H, T, L = SEQ_LEN, SEQ_WIDTH, NUM_LAYERS

    x = z @ w_lin_t + b_lin[0]
    seq = x.reshape(B, T, H)
    for l in range(L):
        h = jnp.zeros((B, H), dtype=jnp.float32)
        outs = []
        for t in range(T):
            xt = seq[:, t, :]
            r = jax.nn.sigmoid(xt @ wih_g[l, 0] + bih_g[l, 0]
                               + h @ whh_g[l, 0] + bhh_g[l, 0])
            zg = jax.nn.sigmoid(xt @ wih_g[l, 1] + bih_g[l, 1]
                                + h @ whh_g[l, 1] + bhh_g[l, 1])
            n = jnp.tanh(xt @ wih_g[l, 2] + bih_g[l, 2]
                         + r * (h @ whh_g[l, 2] + bhh_g[l, 2]))
            h = (1.0 - zg) * n + zg * h
            outs.append(h)
        seq = jnp.stack(outs, axis=1)
    out = jnp.tanh(seq)
    return out.reshape(B, SEQ_LEN, SEQ_WIDTH)


# ------------------------------ param init ------------------------------------
def init_params(key):
    kl_w, kl_b, *kg = jax.random.split(key, 2 + 4 * NUM_LAYERS)
    H = SEQ_LEN

    # nn.Linear init: U(-1/sqrt(in), 1/sqrt(in))
    bound_l = 1.0 / math.sqrt(Z_DIM)
    w_lin = jax.random.uniform(kl_w, (OUT_DIM, Z_DIM), jnp.float32,
                               -bound_l, bound_l)
    b_lin = jax.random.uniform(kl_b, (1, OUT_DIM), jnp.float32,
                               -bound_l, bound_l)
    w_lin_t = w_lin.T  # (Z_DIM, OUT_DIM)

    # nn.GRU init: U(-1/sqrt(H), 1/sqrt(H)); input size == hidden == SEQ_LEN.
    # Re-pack per gate: gate g (PyTorch order [r, z, n]) -> W[g*H:(g+1)*H].T
    bound_g = 1.0 / math.sqrt(H)
    wih, whh, bih, bhh = [], [], [], []
    for l in range(NUM_LAYERS):
        k0, k1, k2, k3 = kg[4 * l:4 * l + 4]
        w_ih = jax.random.uniform(k0, (3 * H, H), jnp.float32, -bound_g, bound_g)
        w_hh = jax.random.uniform(k1, (3 * H, H), jnp.float32, -bound_g, bound_g)
        b_ih = jax.random.uniform(k2, (3 * H,), jnp.float32, -bound_g, bound_g)
        b_hh = jax.random.uniform(k3, (3 * H,), jnp.float32, -bound_g, bound_g)
        wih.append(jnp.stack([w_ih[g * H:(g + 1) * H, :].T for g in range(3)]))
        whh.append(jnp.stack([w_hh[g * H:(g + 1) * H, :].T for g in range(3)]))
        bih.append(jnp.stack([b_ih[g * H:(g + 1) * H][None, :] for g in range(3)]))
        bhh.append(jnp.stack([b_hh[g * H:(g + 1) * H][None, :] for g in range(3)]))

    return (w_lin_t, b_lin,
            jnp.stack(wih),   # (L, 3, H, H)
            jnp.stack(whh),   # (L, 3, H, H)
            jnp.stack(bih),   # (L, 3, 1, H)
            jnp.stack(bhh))   # (L, 3, 1, H)


# --------------------------------- main ----------------------------------------
if __name__ == "__main__":
    key = jax.random.PRNGKey(0)
    k_z, k_p = jax.random.split(key)
    z = jax.random.normal(k_z, (BATCH, Z_DIM), dtype=jnp.float32)
    params = init_params(k_p)

    out = decoder_forward(z, params)
    out = jax.block_until_ready(out)

    ref = decoder_reference(z, params)
    assert out.shape == (BATCH, SEQ_LEN, SEQ_WIDTH), out.shape
    assert jnp.allclose(out, ref, atol=1e-5, rtol=1e-5), \
        float(jnp.max(jnp.abs(out - ref)))

    print("KERNEL_OK")
</pallas_src>

<mosaic_0001>
module attributes {stable_mosaic.version = 11 : i64} {
  func.func @decoder_kernel(%arg0: memref<2x32xf32, #tpu.memory_space<vmem>>, %arg1: memref<32x128xf32, #tpu.memory_space<vmem>>, %arg2: memref<1x128xf32, #tpu.memory_space<vmem>>, %arg3: memref<4x3x16x16xf32, #tpu.memory_space<vmem>>, %arg4: memref<4x3x16x16xf32, #tpu.memory_space<vmem>>, %arg5: memref<4x3x1x16xf32, #tpu.memory_space<vmem>>, %arg6: memref<4x3x1x16xf32, #tpu.memory_space<vmem>>, %arg7: memref<2x128xf32, #tpu.memory_space<vmem>>, %arg8: memref<16x16xf32, #tpu.memory_space<vmem>>) attributes {dimension_semantics = [], scalar_prefetch = 0 : i64, scratch_operands = 1 : i64, tpu.core_type = #tpu.core_type<tc>} {
    %c0 = arith.constant 0 : index
    %c0_0 = arith.constant 0 : index
    %0 = vector.load %arg0[%c0, %c0_0] : memref<2x32xf32, #tpu.memory_space<vmem>>, vector<2x32xf32>
    %c0_1 = arith.constant 0 : index
    %c0_2 = arith.constant 0 : index
    %1 = vector.load %arg1[%c0_1, %c0_2] : memref<32x128xf32, #tpu.memory_space<vmem>>, vector<32x128xf32>
    %cst = arith.constant dense<0.000000e+00> : vector<2x128xf32>
    %2 = tpu.matmul %0, %1, %cst {dimension_numbers = #tpu.dot_dimension_numbers<[1], [0], [0], [1], [0, 0, 1, 1], [], []>} : vector<2x32xf32>, vector<32x128xf32>, vector<2x128xf32> -> vector<2x128xf32>
    %c0_3 = arith.constant 0 : index
    %c0_4 = arith.constant 0 : index
    %3 = vector.load %arg2[%c0_3, %c0_4] : memref<1x128xf32, #tpu.memory_space<vmem>>, vector<1x128xf32>
    %4 = vector.broadcast %3 : vector<1x128xf32> to vector<2x128xf32>
    %5 = arith.addf %2, %4 : vector<2x128xf32>
    %6 = vector.extract_strided_slice %5 {offsets = [0, 0], sizes = [2, 16], strides = [1, 1]} : vector<2x128xf32> to vector<2x16xf32>
    %c0_5 = arith.constant 0 : index
    %c0_6 = arith.constant 0 : index
    %7 = vector.load %arg8[%c0_5, %c0_6] : memref<16x16xf32, #tpu.memory_space<vmem>>, vector<2x16xf32>
    tpu.vector_store %arg8[%c0_5, %c0_6], %6 {strides = array<i32>} : memref<16x16xf32, #tpu.memory_space<vmem>>, vector<2x16xf32>,
    %8 = vector.extract_strided_slice %5 {offsets = [0, 16], sizes = [2, 16], strides = [1, 1]} : vector<2x128xf32> to vector<2x16xf32>
    %c2 = arith.constant 2 : index
    %c0_7 = arith.constant 0 : index
    %9 = vector.load %arg8[%c2, %c0_7] : memref<16x16xf32, #tpu.memory_space<vmem>>, vector<2x16xf32>
    tpu.vector_store %arg8[%c2, %c0_7], %8 {strides = array<i32>} : memref<16x16xf32, #tpu.memory_space<vmem>>, vector<2x16xf32>,
    %10 = vector.extract_strided_slice %5 {offsets = [0, 32], sizes = [2, 16], strides = [1, 1]} : vector<2x128xf32> to vector<2x16xf32>
    %c4 = arith.constant 4 : index
    %c0_8 = arith.constant 0 : index
    %11 = vector.load %arg8[%c4, %c0_8] : memref<16x16xf32, #tpu.memory_space<vmem>>, vector<2x16xf32>
    tpu.vector_store %arg8[%c4, %c0_8], %10 {strides = array<i32>} : memref<16x16xf32, #tpu.memory_space<vmem>>, vector<2x16xf32>,
    %12 = vector.extract_strided_slice %5 {offsets = [0, 48], sizes = [2, 16], strides = [1, 1]} : vector<2x128xf32> to vector<2x16xf32>
    %c6 = arith.constant 6 : index
    %c0_9 = arith.constant 0 : index
    %13 = vector.load %arg8[%c6, %c0_9] : memref<16x16xf32, #tpu.memory_space<vmem>>, vector<2x16xf32>
    tpu.vector_store %arg8[%c6, %c0_9], %12 {strides = array<i32>} : memref<16x16xf32, #tpu.memory_space<vmem>>, vector<2x16xf32>,
    %14 = vector.extract_strided_slice %5 {offsets = [0, 64], sizes = [2, 16], strides = [1, 1]} : vector<2x128xf32> to vector<2x16xf32>
    %c8 = arith.constant 8 : index
    %c0_10 = arith.constant 0 : index
    %15 = vector.load %arg8[%c8, %c0_10] : memref<16x16xf32, #tpu.memory_space<vmem>>, vector<2x16xf32>
    tpu.vector_store %arg8[%c8, %c0_10], %14 {strides = array<i32>} : memref<16x16xf32, #tpu.memory_space<vmem>>, vector<2x16xf32>,
    %16 = vector.extract_strided_slice %5 {offsets = [0, 80], sizes = [2, 16], strides = [1, 1]} : vector<2x128xf32> to vector<2x16xf32>
    %c10 = arith.constant 10 : index
    %c0_11 = arith.constant 0 : index
    %17 = vector.load %arg8[%c10, %c0_11] : memref<16x16xf32, #tpu.memory_space<vmem>>, vector<2x16xf32>
    tpu.vector_store %arg8[%c10, %c0_11], %16 {strides = array<i32>} : memref<16x16xf32, #tpu.memory_space<vmem>>, vector<2x16xf32>,
    %18 = vector.extract_strided_slice %5 {offsets = [0, 96], sizes = [2, 16], strides = [1, 1]} : vector<2x128xf32> to vector<2x16xf32>
    %c12 = arith.constant 12 : index
    %c0_12 = arith.constant 0 : index
    %19 = vector.load %arg8[%c12, %c0_12] : memref<16x16xf32, #tpu.memory_space<vmem>>, vector<2x16xf32>
    tpu.vector_store %arg8[%c12, %c0_12], %18 {strides = array<i32>} : memref<16x16xf32, #tpu.memory_space<vmem>>, vector<2x16xf32>,
    %20 = vector.extract_strided_slice %5 {offsets = [0, 112], sizes = [2, 16], strides = [1, 1]} : vector<2x128xf32> to vector<2x16xf32>
    %c14 = arith.constant 14 : index
    %c0_13 = arith.constant 0 : index
    %21 = vector.load %arg8[%c14, %c0_13] : memref<16x16xf32, #tpu.memory_space<vmem>>, vector<2x16xf32>
    tpu.vector_store %arg8[%c14, %c0_13], %20 {strides = array<i32>} : memref<16x16xf32, #tpu.memory_space<vmem>>, vector<2x16xf32>,
    %c0_14 = arith.constant 0 : index
    %c0_15 = arith.constant 0 : index
    %c0_16 = arith.constant 0 : index
    %c0_17 = arith.constant 0 : index
    %22 = vector.load %arg3[%c0_14, %c0_15, %c0_16, %c0_17] : memref<4x3x16x16xf32, #tpu.memory_space<vmem>>, vector<1x1x16x16xf32>
    %23 = vector.shape_cast %22 : vector<1x1x16x16xf32> to vector<16x16xf32>
    %c0_18 = arith.constant 0 : index
    %c1 = arith.constant 1 : index
    %c0_19 = arith.constant 0 : index
    %c0_20 = arith.constant 0 : index
    %24 = vector.load %arg3[%c0_18, %c1, %c0_19, %c0_20] : memref<4x3x16x16xf32, #tpu.memory_space<vmem>>, vector<1x1x16x16xf32>
    %25 = vector.shape_cast %24 : vector<1x1x16x16xf32> to vector<16x16xf32>
    %c0_21 = arith.constant 0 : index
    %c2_22 = arith.constant 2 : index
    %c0_23 = arith.constant 0 : index
    %c0_24 = arith.constant 0 : index
    %26 = vector.load %arg3[%c0_21, %c2_22, %c0_23, %c0_24] : memref<4x3x16x16xf32, #tpu.memory_space<vmem>>, vector<1x1x16x16xf32>
    %27 = vector.shape_cast %26 : vector<1x1x16x16xf32> to vector<16x16xf32>
    %c0_25 = arith.constant 0 : index
    %c0_26 = arith.constant 0 : index
    %c0_27 = arith.constant 0 : index
    %c0_28 = arith.constant 0 : index
    %28 = vector.load %arg4[%c0_25, %c0_26, %c0_27, %c0_28] : memref<4x3x16x16xf32, #tpu.memory_space<vmem>>, vector<1x1x16x16xf32>
    %29 = vector.shape_cast %28 : vector<1x1x16x16xf32> to vector<16x16xf32>
    %c0_29 = arith.constant 0 : index
    %c1_30 = arith.constant 1 : index
    %c0_31 = arith.constant 0 : index
    %c0_32 = arith.constant 0 : index
    %30 = vector.load %arg4[%c0_29, %c1_30, %c0_31, %c0_32] : memref<4x3x16x16xf32, #tpu.memory_space<vmem>>, vector<1x1x16x16xf32>
    %31 = vector.shape_cast %30 : vector<1x1x16x16xf32> to vector<16x16xf32>
    %c0_33 = arith.constant 0 : index
    %c2_34 = arith.constant 2 : index
    %c0_35 = arith.constant 0 : index
    %c0_36 = arith.constant 0 : index
    %32 = vector.load %arg4[%c0_33, %c2_34, %c0_35, %c0_36] : memref<4x3x16x16xf32, #tpu.memory_space<vmem>>, vector<1x1x16x16xf32>
    %33 = vector.shape_cast %32 : vector<1x1x16x16xf32> to vector<16x16xf32>
    %c0_37 = arith.constant 0 : index
    %c0_38 = arith.constant 0 : index
    %c0_39 = arith.constant 0 : index
    %c0_40 = arith.constant 0 : index
    %34 = vector.load %arg5[%c0_37, %c0_38, %c0_39, %c0_40] : memref<4x3x1x16xf32, #tpu.memory_space<vmem>>, vector<1x1x1x16xf32>
    %35 = vector.shape_cast %34 : vector<1x1x1x16xf32> to vector<1x16xf32>
    %c0_41 = arith.constant 0 : index
    %c0_42 = arith.constant 0 : index
    %c0_43 = arith.constant 0 : index
    %c0_44 = arith.constant 0 : index
    %36 = vector.load %arg6[%c0_41, %c0_42, %c0_43, %c0_44] : memref<4x3x1x16xf32, #tpu.memory_space<vmem>>, vector<1x1x1x16xf32>
    %37 = vector.shape_cast %36 : vector<1x1x1x16xf32> to vector<1x16xf32>
    %38 = arith.addf %35, %37 : vector<1x16xf32>
    %c0_45 = arith.constant 0 : index
    %c1_46 = arith.constant 1 : index
    %c0_47 = arith.constant 0 : index
    %c0_48 = arith.constant 0 : index
    %39 = vector.load %arg5[%c0_45, %c1_46, %c0_47, %c0_48] : memref<4x3x1x16xf32, #tpu.memory_space<vmem>>, vector<1x1x1x16xf32>
    %40 = vector.shape_cast %39 : vector<1x1x1x16xf32> to vector<1x16xf32>
    %c0_49 = arith.constant 0 : index
    %c1_50 = arith.constant 1 : index
    %c0_51 = arith.constant 0 : index
    %c0_52 = arith.constant 0 : index
    %41 = vector.load %arg6[%c0_49, %c1_50, %c0_51, %c0_52] : memref<4x3x1x16xf32, #tpu.memory_space<vmem>>, vector<1x1x1x16xf32>
    %42 = vector.shape_cast %41 : vector<1x1x1x16xf32> to vector<1x16xf32>
    %43 = arith.addf %40, %42 : vector<1x16xf32>
    %c0_53 = arith.constant 0 : index
    %c2_54 = arith.constant 2 : index
    %c0_55 = arith.constant 0 : index
    %c0_56 = arith.constant 0 : index
    %44 = vector.load %arg5[%c0_53, %c2_54, %c0_55, %c0_56] : memref<4x3x1x16xf32, #tpu.memory_space<vmem>>, vector<1x1x1x16xf32>
    %45 = vector.shape_cast %44 : vector<1x1x1x16xf32> to vector<1x16xf32>
    %c0_57 = arith.constant 0 : index
    %c2_58 = arith.constant 2 : index
    %c0_59 = arith.constant 0 : index
    %c0_60 = arith.constant 0 : index
    %46 = vector.load %arg6[%c0_57, %c2_58, %c0_59, %c0_60] : memref<4x3x1x16xf32, #tpu.memory_space<vmem>>, vector<1x1x1x16xf32>
    %47 = vector.shape_cast %46 : vector<1x1x1x16xf32> to vector<1x16xf32>
    %c0_61 = arith.constant 0 : index
    %c0_62 = arith.constant 0 : index
    %48 = vector.load %arg8[%c0_61, %c0_62] : memref<16x16xf32, #tpu.memory_space<vmem>>, vector<16x16xf32>
    %cst_63 = arith.constant dense<0.000000e+00> : vector<16x16xf32>
    %49 = tpu.matmul %48, %23, %cst_63 {dimension_numbers = #tpu.dot_dimension_numbers<[1], [0], [0], [1], [0, 0, 1, 1], [], []>} : vector<16x16xf32>, vector<16x16xf32>, vector<16x16xf32> -> vector<16x16xf32>
    %50 = vector.broadcast %38 : vector<1x16xf32> to vector<16x16xf32>
    %51 = arith.addf %49, %50 : vector<16x16xf32>
    %cst_64 = arith.constant dense<0.000000e+00> : vector<16x16xf32>
    %52 = tpu.matmul %48, %25, %cst_64 {dimension_numbers = #tpu.dot_dimension_numbers<[1], [0], [0], [1], [0, 0, 1, 1], [], []>} : vector<16x16xf32>, vector<16x16xf32>, vector<16x16xf32> -> vector<16x16xf32>
    %53 = vector.broadcast %43 : vector<1x16xf32> to vector<16x16xf32>
    %54 = arith.addf %52, %53 : vector<16x16xf32>
    %cst_65 = arith.constant dense<0.000000e+00> : vector<16x16xf32>
    %55 = tpu.matmul %48, %27, %cst_65 {dimension_numbers = #tpu.dot_dimension_numbers<[1], [0], [0], [1], [0, 0, 1, 1], [], []>} : vector<16x16xf32>, vector<16x16xf32>, vector<16x16xf32> -> vector<16x16xf32>
    %56 = vector.broadcast %45 : vector<1x16xf32> to vector<16x16xf32>
    %57 = arith.addf %55, %56 : vector<16x16xf32>
    %cst_66 = arith.constant 0.000000e+00 : f32
    %58 = vector.broadcast %cst_66 : f32 to vector<2x16xf32>
    %cst_67 = arith.constant dense<0.000000e+00> : vector<2x16xf32>
    %59 = tpu.matmul %58, %29, %cst_67 {dimension_numbers = #tpu.dot_dimension_numbers<[1], [0], [0], [1], [0, 0, 1, 1], [], []>} : vector<2x16xf32>, vector<16x16xf32>, vector<2x16xf32> -> vector<2x16xf32>
    %cst_68 = arith.constant dense<0.000000e+00> : vector<2x16xf32>
    %60 = tpu.matmul %58, %31, %cst_68 {dimension_numbers = #tpu.dot_dimension_numbers<[1], [0], [0], [1], [0, 0, 1, 1], [], []>} : vector<2x16xf32>, vector<16x16xf32>, vector<2x16xf32> -> vector<2x16xf32>
    %cst_69 = arith.constant dense<0.000000e+00> : vector<2x16xf32>
    %61 = tpu.matmul %58, %33, %cst_69 {dimension_numbers = #tpu.dot_dimension_numbers<[1], [0], [0], [1], [0, 0, 1, 1], [], []>} : vector<2x16xf32>, vector<16x16xf32>, vector<2x16xf32> -> vector<2x16xf32>
    %62 = vector.broadcast %47 : vector<1x16xf32> to vector<2x16xf32>
    %63 = arith.addf %61, %62 : vector<2x16xf32>
    %64 = vector.extract_strided_slice %51 {offsets = [0, 0], sizes = [2, 16], strides = [1, 1]} : vector<16x16xf32> to vector<2x16xf32>
    %65 = arith.addf %64, %59 : vector<2x16xf32>
    %66 = arith.negf %65 : vector<2x16xf32>
    %67 = math.exp %66 : vector<2x16xf32>
    %cst_70 = arith.constant 1.000000e+00 : f32
    %68 = vector.broadcast %cst_70 : f32 to vector<2x16xf32>
    %69 = arith.addf %68, %67 : vector<2x16xf32>
    %70 = arith.divf %68, %69 : vector<2x16xf32>
    %71 = vector.extract_strided_slice %54 {offsets = [0, 0], sizes = [2, 16], strides = [1, 1]} : vector<16x16xf32> to vector<2x16xf32>
    %72 = arith.addf %71, %60 : vector<2x16xf32>
    %73 = arith.negf %72 : vector<2x16xf32>
    %74 = math.exp %73 : vector<2x16xf32>
    %cst_71 = arith.constant 1.000000e+00 : f32
    %75 = vector.broadcast %cst_71 : f32 to vector<2x16xf32>
    %76 = arith.addf %75, %74 : vector<2x16xf32>
    %77 = arith.divf %75, %76 : vector<2x16xf32>
    %78 = vector.extract_strided_slice %57 {offsets = [0, 0], sizes = [2, 16], strides = [1, 1]} : vector<16x16xf32> to vector<2x16xf32>
    %79 = arith.mulf %70, %63 : vector<2x16xf32>
    %80 = arith.addf %78, %79 : vector<2x16xf32>
    %81 = math.tanh %80 : vector<2x16xf32>
    %82 = arith.subf %58, %81 : vector<2x16xf32>
    %83 = arith.mulf %77, %82 : vector<2x16xf32>
    %84 = arith.addf %81, %83 : vector<2x16xf32>
    %c0_72 = arith.constant 0 : index
    %c0_73 = arith.constant 0 : index
    %85 = vector.load %arg8[%c0_72, %c0_73] : memref<16x16xf32, #tpu.memory_space<vmem>>, vector<2x16xf32>
    tpu.vector_store %arg8[%c0_72, %c0_73], %84 {strides = array<i32>} : memref<16x16xf32, #tpu.memory_space<vmem>>, vector<2x16xf32>,
    %cst_74 = arith.constant dense<0.000000e+00> : vector<2x16xf32>
    %86 = tpu.matmul %84, %29, %cst_74 {dimension_numbers = #tpu.dot_dimension_numbers<[1], [0], [0], [1], [0, 0, 1, 1], [], []>} : vector<2x16xf32>, vector<16x16xf32>, vector<2x16xf32> -> vector<2x16xf32>
    %cst_75 = arith.constant dense<0.000000e+00> : vector<2x16xf32>
    %87 = tpu.matmul %84, %31, %cst_75 {dimension_numbers = #tpu.dot_dimension_numbers<[1], [0], [0], [1], [0, 0, 1, 1], [], []>} : vector<2x16xf32>, vector<16x16xf32>, vector<2x16xf32> -> vector<2x16xf32>
    %cst_76 = arith.constant dense<0.000000e+00> : vector<2x16xf32>
    %88 = tpu.matmul %84, %33, %cst_76 {dimension_numbers = #tpu.dot_dimension_numbers<[1], [0], [0], [1], [0, 0, 1, 1], [], []>} : vector<2x16xf32>, vector<16x16xf32>, vector<2x16xf32> -> vector<2x16xf32>
    %89 = vector.broadcast %47 : vector<1x16xf32> to vector<2x16xf32>
    %90 = arith.addf %88, %89 : vector<2x16xf32>
    %91 = vector.extract_strided_slice %51 {offsets = [2, 0], sizes = [2, 16], strides = [1, 1]} : vector<16x16xf32> to vector<2x16xf32>
    %92 = arith.addf %91, %86 : vector<2x16xf32>
    %93 = arith.negf %92 : vector<2x16xf32>
    %94 = math.exp %93 : vector<2x16xf32>
    %cst_77 = arith.constant 1.000000e+00 : f32
    %95 = vector.broadcast %cst_77 : f32 to vector<2x16xf32>
    %96 = arith.addf %95, %94 : vector<2x16xf32>
    %97 = arith.divf %95, %96 : vector<2x16xf32>
    %98 = vector.extract_strided_slice %54 {offsets = [2, 0], sizes = [2, 16], strides = [1, 1]} : vector<16x16xf32> to vector<2x16xf32>
    %99 = arith.addf %98, %87 : vector<2x16xf32>
    %100 = arith.negf %99 : vector<2x16xf32>
    %101 = math.exp %100 : vector<2x16xf32>
    %cst_78 = arith.constant 1.000000e+00 : f32
    %102 = vector.broadcast %cst_78 : f32 to vector<2x16xf32>
    %103 = arith.addf %102, %101 : vector<2x16xf32>
    %104 = arith.divf %102, %103 : vector<2x16xf32>
    %105 = vector.extract_strided_slice %57 {offsets = [2, 0], sizes = [2, 16], strides = [1, 1]} : vector<16x16xf32> to vector<2x16xf32>
    %106 = arith.mulf %97, %90 : vector<2x16xf32>
    %107 = arith.addf %105, %106 : vector<2x16xf32>
    %108 = math.tanh %107 : vector<2x16xf32>
    %109 = arith.subf %84, %108 : vector<2x16xf32>
    %110 = arith.mulf %104, %109 : vector<2x16xf32>
    %111 = arith.addf %108, %110 : vector<2x16xf32>
    %c2_79 = arith.constant 2 : index
    %c0_80 = arith.constant 0 : index
    %112 = vector.load %arg8[%c2_79, %c0_80] : memref<16x16xf32, #tpu.memory_space<vmem>>, vector<2x16xf32>
    tpu.vector_store %arg8[%c2_79, %c0_80], %111 {strides = array<i32>} : memref<16x16xf32, #tpu.memory_space<vmem>>, vector<2x16xf32>,
    %cst_81 = arith.constant dense<0.000000e+00> : vector<2x16xf32>
    %113 = tpu.matmul %111, %29, %cst_81 {dimension_numbers = #tpu.dot_dimension_numbers<[1], [0], [0], [1], [0, 0, 1, 1], [], []>} : vector<2x16xf32>, vector<16x16xf32>, vector<2x16xf32> -> vector<2x16xf32>
    %cst_82 = arith.constant dense<0.000000e+00> : vector<2x16xf32>
    %114 = tpu.matmul %111, %31, %cst_82 {dimension_numbers = #tpu.dot_dimension_numbers<[1], [0], [0], [1], [0, 0, 1, 1], [], []>} : vector<2x16xf32>, vector<16x16xf32>, vector<2x16xf32> -> vector<2x16xf32>
    %cst_83 = arith.constant dense<0.000000e+00> : vector<2x16xf32>
    %115 = tpu.matmul %111, %33, %cst_83 {dimension_numbers = #tpu.dot_dimension_numbers<[1], [0], [0], [1], [0, 0, 1, 1], [], []>} : vector<2x16xf32>, vector<16x16xf32>, vector<2x16xf32> -> vector<2x16xf32>
    %116 = vector.broadcast %47 : vector<1x16xf32> to vector<2x16xf32>
    %117 = arith.addf %115, %116 : vector<2x16xf32>
    %118 = vector.extract_strided_slice %51 {offsets = [4, 0], sizes = [2, 16], strides = [1, 1]} : vector<16x16xf32> to vector<2x16xf32>
    %119 = arith.addf %118, %113 : vector<2x16xf32>
    %120 = arith.negf %119 : vector<2x16xf32>
    %121 = math.exp %120 : vector<2x16xf32>
    %cst_84 = arith.constant 1.000000e+00 : f32
    %122 = vector.broadcast %cst_84 : f32 to vector<2x16xf32>
    %123 = arith.addf %122, %121 : vector<2x16xf32>
    %124 = arith.divf %122, %123 : vector<2x16xf32>
    %125 = vector.extract_strided_slice %54 {offsets = [4, 0], sizes = [2, 16], strides = [1, 1]} : vector<16x16xf32> to vector<2x16xf32>
    %126 = arith.addf %125, %114 : vector<2x16xf32>
    %127 = arith.negf %126 : vector<2x16xf32>
    %128 = math.exp %127 : vector<2x16xf32>
    %cst_85 = arith.constant 1.000000e+00 : f32
    %129 = vector.broadcast %cst_85 : f32 to vector<2x16xf32>
    %130 = arith.addf %129, %128 : vector<2x16xf32>
    %131 = arith.divf %129, %130 : vector<2x16xf32>
    %132 = vector.extract_strided_slice %57 {offsets = [4, 0], sizes = [2, 16], strides = [1, 1]} : vector<16x16xf32> to vector<2x16xf32>
    %133 = arith.mulf %124, %117 : vector<2x16xf32>
    %134 = arith.addf %132, %133 : vector<2x16xf32>
    %135 = math.tanh %134 : vector<2x16xf32>
    %136 = arith.subf %111, %135 : vector<2x16xf32>
    %137 = arith.mulf %131, %136 : vector<2x16xf32>
    %138 = arith.addf %135, %137 : vector<2x16xf32>
    %c4_86 = arith.constant 4 : index
    %c0_87 = arith.constant 0 : index
    %139 = vector.load %arg8[%c4_86, %c0_87] : memref<16x16xf32, #tpu.memory_space<vmem>>, vector<2x16xf32>
    tpu.vector_store %arg8[%c4_86, %c0_87], %138 {strides = array<i32>} : memref<16x16xf32, #tpu.memory_space<vmem>>, vector<2x16xf32>,
    %cst_88 = arith.constant dense<0.000000e+00> : vector<2x16xf32>
    %140 = tpu.matmul %138, %29, %cst_88 {dimension_numbers = #tpu.dot_dimension_numbers<[1], [0], [0], [1], [0, 0, 1, 1], [], []>} : vector<2x16xf32>, vector<16x16xf32>, vector<2x16xf32> -> vector<2x16xf32>
    %cst_89 = arith.constant dense<0.000000e+00> : vector<2x16xf32>
    %141 = tpu.matmul %138, %31, %cst_89 {dimension_numbers = #tpu.dot_dimension_numbers<[1], [0], [0], [1], [0, 0, 1, 1], [], []>} : vector<2x16xf32>, vector<16x16xf32>, vector<2x16xf32> -> vector<2x16xf32>
    %cst_90 = arith.constant dense<0.000000e+00> : vector<2x16xf32>
    %142 = tpu.matmul %138, %33, %cst_90 {dimension_numbers = #tpu.dot_dimension_numbers<[1], [0], [0], [1], [0, 0, 1, 1], [], []>} : vector<2x16xf32>, vector<16x16xf32>, vector<2x16xf32> -> vector<2x16xf32>
    %143 = vector.broadcast %47 : vector<1x16xf32> to vector<2x16xf32>
    %144 = arith.addf %142, %143 : vector<2x16xf32>
    %145 = vector.extract_strided_slice %51 {offsets = [6, 0], sizes = [2, 16], strides = [1, 1]} : vector<16x16xf32> to vector<2x16xf32>
    %146 = arith.addf %145, %140 : vector<2x16xf32>
    %147 = arith.negf %146 : vector<2x16xf32>
    %148 = math.exp %147 : vector<2x16xf32>
    %cst_91 = arith.constant 1.000000e+00 : f32
    %149 = vector.broadcast %cst_91 : f32 to vector<2x16xf32>
    %150 = arith.addf %149, %148 : vector<2x16xf32>
    %151 = arith.divf %149, %150 : vector<2x16xf32>
    %152 = vector.extract_strided_slice %54 {offsets = [6, 0], sizes = [2, 16], strides = [1, 1]} : vector<16x16xf32> to vector<2x16xf32>
    %153 = arith.addf %152, %141 : vector<2x16xf32>
    %154 = arith.negf %153 : vector<2x16xf32>
    %155 = math.exp %154 : vector<2x16xf32>
    %cst_92 = arith.constant 1.000000e+00 : f32
    %156 = vector.broadcast %cst_92 : f32 to vector<2x16xf32>
    %157 = arith.addf %156, %155 : vector<2x16xf32>
    %158 = arith.divf %156, %157 : vector<2x16xf32>
    %159 = vector.extract_strided_slice %57 {offsets = [6, 0], sizes = [2, 16], strides = [1, 1]} : vector<16x16xf32> to vector<2x16xf32>
    %160 = arith.mulf %151, %144 : vector<2x16xf32>
    %161 = arith.addf %159, %160 : vector<2x16xf32>
    %162 = math.tanh %161 : vector<2x16xf32>
    %163 = arith.subf %138, %162 : vector<2x16xf32>
    %164 = arith.mulf %158, %163 : vector<2x16xf32>
    %165 = arith.addf %162, %164 : vector<2x16xf32>
    %c6_93 = arith.constant 6 : index
    %c0_94 = arith.constant 0 : index
    %166 = vector.load %arg8[%c6_93, %c0_94] : memref<16x16xf32, #tpu.memory_space<vmem>>, vector<2x16xf32>
    tpu.vector_store %arg8[%c6_93, %c0_94], %165 {strides = array<i32>} : memref<16x16xf32, #tpu.memory_space<vmem>>, vector<2x16xf32>,
    %cst_95 = arith.constant dense<0.000000e+00> : vector<2x16xf32>
    %167 = tpu.matmul %165, %29, %cst_95 {dimension_numbers = #tpu.dot_dimension_numbers<[1], [0], [0], [1], [0, 0, 1, 1], [], []>} : vector<2x16xf32>, vector<16x16xf32>, vector<2x16xf32> -> vector<2x16xf32>
    %cst_96 = arith.constant dense<0.000000e+00> : vector<2x16xf32>
    %168 = tpu.matmul %165, %31, %cst_96 {dimension_numbers = #tpu.dot_dimension_numbers<[1], [0], [0], [1], [0, 0, 1, 1], [], []>} : vector<2x16xf32>, vector<16x16xf32>, vector<2x16xf32> -> vector<2x16xf32>
    %cst_97 = arith.constant dense<0.000000e+00> : vector<2x16xf32>
    %169 = tpu.matmul %165, %33, %cst_97 {dimension_numbers = #tpu.dot_dimension_numbers<[1], [0], [0], [1], [0, 0, 1, 1], [], []>} : vector<2x16xf32>, vector<16x16xf32>, vector<2x16xf32> -> vector<2x16xf32>
    %170 = vector.broadcast %47 : vector<1x16xf32> to vector<2x16xf32>
    %171 = arith.addf %169, %170 : vector<2x16xf32>
    %172 = vector.extract_strided_slice %51 {offsets = [8, 0], sizes = [2, 16], strides = [1, 1]} : vector<16x16xf32> to vector<2x16xf32>
    %173 = arith.addf %172, %167 : vector<2x16xf32>
    %174 = arith.negf %173 : vector<2x16xf32>
    %175 = math.exp %174 : vector<2x16xf32>
    %cst_98 = arith.constant 1.000000e+00 : f32
    %176 = vector.broadcast %cst_98 : f32 to vector<2x16xf32>
    %177 = arith.addf %176, %175 : vector<2x16xf32>
    %178 = arith.divf %176, %177 : vector<2x16xf32>
    %179 = vector.extract_strided_slice %54 {offsets = [8, 0], sizes = [2, 16], strides = [1, 1]} : vector<16x16xf32> to vector<2x16xf32>
    %180 = arith.addf %179, %168 : vector<2x16xf32>
    %181 = arith.negf %180 : vector<2x16xf32>
    %182 = math.exp %181 : vector<2x16xf32>
    %cst_99 = arith.constant 1.000000e+00 : f32
    %183 = vector.broadcast %cst_99 : f32 to vector<2x16xf32>
    %184 = arith.addf %183, %182 : vector<2x16xf32>
    %185 = arith.divf %183, %184 : vector<2x16xf32>
    %186 = vector.extract_strided_slice %57 {offsets = [8, 0], sizes = [2, 16], strides = [1, 1]} : vector<16x16xf32> to vector<2x16xf32>
    %187 = arith.mulf %178, %171 : vector<2x16xf32>
    %188 = arith.addf %186, %187 : vector<2x16xf32>
    %189 = math.tanh %188 : vector<2x16xf32>
    %190 = arith.subf %165, %189 : vector<2x16xf32>
    %191 = arith.mulf %185, %190 : vector<2x16xf32>
    %192 = arith.addf %189, %191 : vector<2x16xf32>
    %c8_100 = arith.constant 8 : index
    %c0_101 = arith.constant 0 : index
    %193 = vector.load %arg8[%c8_100, %c0_101] : memref<16x16xf32, #tpu.memory_space<vmem>>, vector<2x16xf32>
    tpu.vector_store %arg8[%c8_100, %c0_101], %192 {strides = array<i32>} : memref<16x16xf32, #tpu.memory_space<vmem>>, vector<2x16xf32>,
    %cst_102 = arith.constant dense<0.000000e+00> : vector<2x16xf32>
    %194 = tpu.matmul %192, %29, %cst_102 {dimension_numbers = #tpu.dot_dimension_numbers<[1], [0], [0], [1], [0, 0, 1, 1], [], []>} : vector<2x16xf32>, vector<16x16xf32>, vector<2x16xf32> -> vector<2x16xf32>
    %cst_103 = arith.constant dense<0.000000e+00> : vector<2x16xf32>
    %195 = tpu.matmul %192, %31, %cst_103 {dimension_numbers = #tpu.dot_dimension_numbers<[1], [0], [0], [1], [0, 0, 1, 1], [], []>} : vector<2x16xf32>, vector<16x16xf32>, vector<2x16xf32> -> vector<2x16xf32>
    %cst_104 = arith.constant dense<0.000000e+00> : vector<2x16xf32>
    %196 = tpu.matmul %192, %33, %cst_104 {dimension_numbers = #tpu.dot_dimension_numbers<[1], [0], [0], [1], [0, 0, 1, 1], [], []>} : vector<2x16xf32>, vector<16x16xf32>, vector<2x16xf32> -> vector<2x16xf32>
    %197 = vector.broadcast %47 : vector<1x16xf32> to vector<2x16xf32>
    %198 = arith.addf %196, %197 : vector<2x16xf32>
    %199 = vector.extract_strided_slice %51 {offsets = [10, 0], sizes = [2, 16], strides = [1, 1]} : vector<16x16xf32> to vector<2x16xf32>
    %200 = arith.addf %199, %194 : vector<2x16xf32>
    %201 = arith.negf %200 : vector<2x16xf32>
    %202 = math.exp %201 : vector<2x16xf32>
    %cst_105 = arith.constant 1.000000e+00 : f32
    %203 = vector.broadcast %cst_105 : f32 to vector<2x16xf32>
    %204 = arith.addf %203, %202 : vector<2x16xf32>
    %205 = arith.divf %203, %204 : vector<2x16xf32>
    %206 = vector.extract_strided_slice %54 {offsets = [10, 0], sizes = [2, 16], strides = [1, 1]} : vector<16x16xf32> to vector<2x16xf32>
    %207 = arith.addf %206, %195 : vector<2x16xf32>
    %208 = arith.negf %207 : vector<2x16xf32>
    %209 = math.exp %208 : vector<2x16xf32>
    %cst_106 = arith.constant 1.000000e+00 : f32
    %210 = vector.broadcast %cst_106 : f32 to vector<2x16xf32>
    %211 = arith.addf %210, %209 : vector<2x16xf32>
    %212 = arith.divf %210, %211 : vector<2x16xf32>
    %213 = vector.extract_strided_slice %57 {offsets = [10, 0], sizes = [2, 16], strides = [1, 1]} : vector<16x16xf32> to vector<2x16xf32>
    %214 = arith.mulf %205, %198 : vector<2x16xf32>
    %215 = arith.addf %213, %214 : vector<2x16xf32>
    %216 = math.tanh %215 : vector<2x16xf32>
    %217 = arith.subf %192, %216 : vector<2x16xf32>
    %218 = arith.mulf %212, %217 : vector<2x16xf32>
    %219 = arith.addf %216, %218 : vector<2x16xf32>
    %c10_107 = arith.constant 10 : index
    %c0_108 = arith.constant 0 : index
    %220 = vector.load %arg8[%c10_107, %c0_108] : memref<16x16xf32, #tpu.memory_space<vmem>>, vector<2x16xf32>
    tpu.vector_store %arg8[%c10_107, %c0_108], %219 {strides = array<i32>} : memref<16x16xf32, #tpu.memory_space<vmem>>, vector<2x16xf32>,
    %cst_109 = arith.constant dense<0.000000e+00> : vector<2x16xf32>
    %221 = tpu.matmul %219, %29, %cst_109 {dimension_numbers = #tpu.dot_dimension_numbers<[1], [0], [0], [1], [0, 0, 1, 1], [], []>} : vector<2x16xf32>, vector<16x16xf32>, vector<2x16xf32> -> vector<2x16xf32>
    %cst_110 = arith.constant dense<0.000000e+00> : vector<2x16xf32>
    %222 = tpu.matmul %219, %31, %cst_110 {dimension_numbers = #tpu.dot_dimension_numbers<[1], [0], [0], [1], [0, 0, 1, 1], [], []>} : vector<2x16xf32>, vector<16x16xf32>, vector<2x16xf32> -> vector<2x16xf32>
    %cst_111 = arith.constant dense<0.000000e+00> : vector<2x16xf32>
    %223 = tpu.matmul %219, %33, %cst_111 {dimension_numbers = #tpu.dot_dimension_numbers<[1], [0], [0], [1], [0, 0, 1, 1], [], []>} : vector<2x16xf32>, vector<16x16xf32>, vector<2x16xf32> -> vector<2x16xf32>
    %224 = vector.broadcast %47 : vector<1x16xf32> to vector<2x16xf32>
    %225 = arith.addf %223, %224 : vector<2x16xf32>
    %226 = vector.extract_strided_slice %51 {offsets = [12, 0], sizes = [2, 16], strides = [1, 1]} : vector<16x16xf32> to vector<2x16xf32>
    %227 = arith.addf %226, %221 : vector<2x16xf32>
    %228 = arith.negf %227 : vector<2x16xf32>
    %229 = math.exp %228 : vector<2x16xf32>
    %cst_112 = arith.constant 1.000000e+00 : f32
    %230 = vector.broadcast %cst_112 : f32 to vector<2x16xf32>
    %231 = arith.addf %230, %229 : vector<2x16xf32>
    %232 = arith.divf %230, %231 : vector<2x16xf32>
    %233 = vector.extract_strided_slice %54 {offsets = [12, 0], sizes = [2, 16], strides = [1, 1]} : vector<16x16xf32> to vector<2x16xf32>
    %234 = arith.addf %233, %222 : vector<2x16xf32>
    %235 = arith.negf %234 : vector<2x16xf32>
    %236 = math.exp %235 : vector<2x16xf32>
    %cst_113 = arith.constant 1.000000e+00 : f32
    %237 = vector.broadcast %cst_113 : f32 to vector<2x16xf32>
    %238 = arith.addf %237, %236 : vector<2x16xf32>
    %239 = arith.divf %237, %238 : vector<2x16xf32>
    %240 = vector.extract_strided_slice %57 {offsets = [12, 0], sizes = [2, 16], strides = [1, 1]} : vector<16x16xf32> to vector<2x16xf32>
    %241 = arith.mulf %232, %225 : vector<2x16xf32>
    %242 = arith.addf %240, %241 : vector<2x16xf32>
    %243 = math.tanh %242 : vector<2x16xf32>
    %244 = arith.subf %219, %243 : vector<2x16xf32>
    %245 = arith.mulf %239, %244 : vector<2x16xf32>
    %246 = arith.addf %243, %245 : vector<2x16xf32>
    %c12_114 = arith.constant 12 : index
    %c0_115 = arith.constant 0 : index
    %247 = vector.load %arg8[%c12_114, %c0_115] : memref<16x16xf32, #tpu.memory_space<vmem>>, vector<2x16xf32>
    tpu.vector_store %arg8[%c12_114, %c0_115], %246 {strides = array<i32>} : memref<16x16xf32, #tpu.memory_space<vmem>>, vector<2x16xf32>,
    %cst_116 = arith.constant dense<0.000000e+00> : vector<2x16xf32>
    %248 = tpu.matmul %246, %29, %cst_116 {dimension_numbers = #tpu.dot_dimension_numbers<[1], [0], [0], [1], [0, 0, 1, 1], [], []>} : vector<2x16xf32>, vector<16x16xf32>, vector<2x16xf32> -> vector<2x16xf32>
    %cst_117 = arith.constant dense<0.000000e+00> : vector<2x16xf32>
    %249 = tpu.matmul %246, %31, %cst_117 {dimension_numbers = #tpu.dot_dimension_numbers<[1], [0], [0], [1], [0, 0, 1, 1], [], []>} : vector<2x16xf32>, vector<16x16xf32>, vector<2x16xf32> -> vector<2x16xf32>
    %cst_118 = arith.constant dense<0.000000e+00> : vector<2x16xf32>
    %250 = tpu.matmul %246, %33, %cst_118 {dimension_numbers = #tpu.dot_dimension_numbers<[1], [0], [0], [1], [0, 0, 1, 1], [], []>} : vector<2x16xf32>, vector<16x16xf32>, vector<2x16xf32> -> vector<2x16xf32>
    %251 = vector.broadcast %47 : vector<1x16xf32> to vector<2x16xf32>
    %252 = arith.addf %250, %251 : vector<2x16xf32>
    %253 = vector.extract_strided_slice %51 {offsets = [14, 0], sizes = [2, 16], strides = [1, 1]} : vector<16x16xf32> to vector<2x16xf32>
    %254 = arith.addf %253, %248 : vector<2x16xf32>
    %255 = arith.negf %254 : vector<2x16xf32>
    %256 = math.exp %255 : vector<2x16xf32>
    %cst_119 = arith.constant 1.000000e+00 : f32
    %257 = vector.broadcast %cst_119 : f32 to vector<2x16xf32>
    %258 = arith.addf %257, %256 : vector<2x16xf32>
    %259 = arith.divf %257, %258 : vector<2x16xf32>
    %260 = vector.extract_strided_slice %54 {offsets = [14, 0], sizes = [2, 16], strides = [1, 1]} : vector<16x16xf32> to vector<2x16xf32>
    %261 = arith.addf %260, %249 : vector<2x16xf32>
    %262 = arith.negf %261 : vector<2x16xf32>
    %263 = math.exp %262 : vector<2x16xf32>
    %cst_120 = arith.constant 1.000000e+00 : f32
    %264 = vector.broadcast %cst_120 : f32 to vector<2x16xf32>
    %265 = arith.addf %264, %263 : vector<2x16xf32>
    %266 = arith.divf %264, %265 : vector<2x16xf32>
    %267 = vector.extract_strided_slice %57 {offsets = [14, 0], sizes = [2, 16], strides = [1, 1]} : vector<16x16xf32> to vector<2x16xf32>
    %268 = arith.mulf %259, %252 : vector<2x16xf32>
    %269 = arith.addf %267, %268 : vector<2x16xf32>
    %270 = math.tanh %269 : vector<2x16xf32>
    %271 = arith.subf %246, %270 : vector<2x16xf32>
    %272 = arith.mulf %266, %271 : vector<2x16xf32>
    %273 = arith.addf %270, %272 : vector<2x16xf32>
    %c14_121 = arith.constant 14 : index
    %c0_122 = arith.constant 0 : index
    %274 = vector.load %arg8[%c14_121, %c0_122] : memref<16x16xf32, #tpu.memory_space<vmem>>, vector<2x16xf32>
    tpu.vector_store %arg8[%c14_121, %c0_122], %273 {strides = array<i32>} : memref<16x16xf32, #tpu.memory_space<vmem>>, vector<2x16xf32>,
    %c1_123 = arith.constant 1 : index
    %c0_124 = arith.constant 0 : index
    %c0_125 = arith.constant 0 : index
    %c0_126 = arith.constant 0 : index
    %275 = vector.load %arg3[%c1_123, %c0_124, %c0_125, %c0_126] : memref<4x3x16x16xf32, #tpu.memory_space<vmem>>, vector<1x1x16x16xf32>
    %276 = vector.shape_cast %275 : vector<1x1x16x16xf32> to vector<16x16xf32>
    %c1_127 = arith.constant 1 : index
    %c1_128 = arith.constant 1 : index
    %c0_129 = arith.constant 0 : index
    %c0_130 = arith.constant 0 : index
    %277 = vector.load %arg3[%c1_127, %c1_128, %c0_129, %c0_130] : memref<4x3x16x16xf32, #tpu.memory_space<vmem>>, vector<1x1x16x16xf32>
    %278 = vector.shape_cast %277 : vector<1x1x16x16xf32> to vector<16x16xf32>
    %c1_131 = arith.constant 1 : index
    %c2_132 = arith.constant 2 : index
    %c0_133 = arith.constant 0 : index
    %c0_134 = arith.constant 0 : index
    %279 = vector.load %arg3[%c1_131, %c2_132, %c0_133, %c0_134] : memref<4x3x16x16xf32, #tpu.memory_space<vmem>>, vector<1x1x16x16xf32>
    %280 = vector.shape_cast %279 : vector<1x1x16x16xf32> to vector<16x16xf32>
    %c1_135 = arith.constant 1 : index
    %c0_136 = arith.constant 0 : index
    %c0_137 = arith.constant 0 : index
    %c0_138 = arith.constant 0 : index
    %281 = vector.load %arg4[%c1_135, %c0_136, %c0_137, %c0_138] : memref<4x3x16x16xf32, #tpu.memory_space<vmem>>, vector<1x1x16x16xf32>
    %282 = vector.shape_cast %281 : vector<1x1x16x16xf32> to vector<16x16xf32>
    %c1_139 = arith.constant 1 : index
    %c1_140 = arith.constant 1 : index
    %c0_141 = arith.constant 0 : index
    %c0_142 = arith.constant 0 : index
    %283 = vector.load %arg4[%c1_139, %c1_140, %c0_141, %c0_142] : memref<4x3x16x16xf32, #tpu.memory_space<vmem>>, vector<1x1x16x16xf32>
    %284 = vector.shape_cast %283 : vector<1x1x16x16xf32> to vector<16x16xf32>
    %c1_143 = arith.constant 1 : index
    %c2_144 = arith.constant 2 : index
    %c0_145 = arith.constant 0 : index
    %c0_146 = arith.constant 0 : index
    %285 = vector.load %arg4[%c1_143, %c2_144, %c0_145, %c0_146] : memref<4x3x16x16xf32, #tpu.memory_space<vmem>>, vector<1x1x16x16xf32>
    %286 = vector.shape_cast %285 : vector<1x1x16x16xf32> to vector<16x16xf32>
    %c1_147 = arith.constant 1 : index
    %c0_148 = arith.constant 0 : index
    %c0_149 = arith.constant 0 : index
    %c0_150 = arith.constant 0 : index
    %287 = vector.load %arg5[%c1_147, %c0_148, %c0_149, %c0_150] : memref<4x3x1x16xf32, #tpu.memory_space<vmem>>, vector<1x1x1x16xf32>
    %288 = vector.shape_cast %287 : vector<1x1x1x16xf32> to vector<1x16xf32>
    %c1_151 = arith.constant 1 : index
    %c0_152 = arith.constant 0 : index
    %c0_153 = arith.constant 0 : index
    %c0_154 = arith.constant 0 : index
    %289 = vector.load %arg6[%c1_151, %c0_152, %c0_153, %c0_154] : memref<4x3x1x16xf32, #tpu.memory_space<vmem>>, vector<1x1x1x16xf32>
    %290 = vector.shape_cast %289 : vector<1x1x1x16xf32> to vector<1x16xf32>
    %291 = arith.addf %288, %290 : vector<1x16xf32>
    %c1_155 = arith.constant 1 : index
    %c1_156 = arith.constant 1 : index
    %c0_157 = arith.constant 0 : index
    %c0_158 = arith.constant 0 : index
    %292 = vector.load %arg5[%c1_155, %c1_156, %c0_157, %c0_158] : memref<4x3x1x16xf32, #tpu.memory_space<vmem>>, vector<1x1x1x16xf32>
    %293 = vector.shape_cast %292 : vector<1x1x1x16xf32> to vector<1x16xf32>
    %c1_159 = arith.constant 1 : index
    %c1_160 = arith.constant 1 : index
    %c0_161 = arith.constant 0 : index
    %c0_162 = arith.constant 0 : index
    %294 = vector.load %arg6[%c1_159, %c1_160, %c0_161, %c0_162] : memref<4x3x1x16xf32, #tpu.memory_space<vmem>>, vector<1x1x1x16xf32>
    %295 = vector.shape_cast %294 : vector<1x1x1x16xf32> to vector<1x16xf32>
    %296 = arith.addf %293, %295 : vector<1x16xf32>
    %c1_163 = arith.constant 1 : index
    %c2_164 = arith.constant 2 : index
    %c0_165 = arith.constant 0 : index
    %c0_166 = arith.constant 0 : index
    %297 = vector.load %arg5[%c1_163, %c2_164, %c0_165, %c0_166] : memref<4x3x1x16xf32, #tpu.memory_space<vmem>>, vector<1x1x1x16xf32>
    %298 = vector.shape_cast %297 : vector<1x1x1x16xf32> to vector<1x16xf32>
    %c1_167 = arith.constant 1 : index
    %c2_168 = arith.constant 2 : index
    %c0_169 = arith.constant 0 : index
    %c0_170 = arith.constant 0 : index
    %299 = vector.load %arg6[%c1_167, %c2_168, %c0_169, %c0_170] : memref<4x3x1x16xf32, #tpu.memory_space<vmem>>, vector<1x1x1x16xf32>
    %300 = vector.shape_cast %299 : vector<1x1x1x16xf32> to vector<1x16xf32>
    %c0_171 = arith.constant 0 : index
    %c0_172 = arith.constant 0 : index
    %301 = vector.load %arg8[%c0_171, %c0_172] : memref<16x16xf32, #tpu.memory_space<vmem>>, vector<16x16xf32>
    %cst_173 = arith.constant dense<0.000000e+00> : vector<16x16xf32>
    %302 = tpu.matmul %301, %276, %cst_173 {dimension_numbers = #tpu.dot_dimension_numbers<[1], [0], [0], [1], [0, 0, 1, 1], [], []>} : vector<16x16xf32>, vector<16x16xf32>, vector<16x16xf32> -> vector<16x16xf32>
    %303 = vector.broadcast %291 : vector<1x16xf32> to vector<16x16xf32>
    %304 = arith.addf %302, %303 : vector<16x16xf32>
    %cst_174 = arith.constant dense<0.000000e+00> : vector<16x16xf32>
    %305 = tpu.matmul %301, %278, %cst_174 {dimension_numbers = #tpu.dot_dimension_numbers<[1], [0], [0], [1], [0, 0, 1, 1], [], []>} : vector<16x16xf32>, vector<16x16xf32>, vector<16x16xf32> -> vector<16x16xf32>
    %306 = vector.broadcast %296 : vector<1x16xf32> to vector<16x16xf32>
    %307 = arith.addf %305, %306 : vector<16x16xf32>
    %cst_175 = arith.constant dense<0.000000e+00> : vector<16x16xf32>
    %308 = tpu.matmul %301, %280, %cst_175 {dimension_numbers = #tpu.dot_dimension_numbers<[1], [0], [0], [1], [0, 0, 1, 1], [], []>} : vector<16x16xf32>, vector<16x16xf32>, vector<16x16xf32> -> vector<16x16xf32>
    %309 = vector.broadcast %298 : vector<1x16xf32> to vector<16x16xf32>
    %310 = arith.addf %308, %309 : vector<16x16xf32>
    %cst_176 = arith.constant 0.000000e+00 : f32
    %311 = vector.broadcast %cst_176 : f32 to vector<2x16xf32>
    %cst_177 = arith.constant dense<0.000000e+00> : vector<2x16xf32>
    %312 = tpu.matmul %311, %282, %cst_177 {dimension_numbers = #tpu.dot_dimension_numbers<[1], [0], [0], [1], [0, 0, 1, 1], [], []>} : vector<2x16xf32>, vector<16x16xf32>, vector<2x16xf32> -> vector<2x16xf32>
    %cst_178 = arith.constant dense<0.000000e+00> : vector<2x16xf32>
    %313 = tpu.matmul %311, %284, %cst_178 {dimension_numbers = #tpu.dot_dimension_numbers<[1], [0], [0], [1], [0, 0, 1, 1], [], []>} : vector<2x16xf32>, vector<16x16xf32>, vector<2x16xf32> -> vector<2x16xf32>
    %cst_179 = arith.constant dense<0.000000e+00> : vector<2x16xf32>
    %314 = tpu.matmul %311, %286, %cst_179 {dimension_numbers = #tpu.dot_dimension_numbers<[1], [0], [0], [1], [0, 0, 1, 1], [], []>} : vector<2x16xf32>, vector<16x16xf32>, vector<2x16xf32> -> vector<2x16xf32>
    %315 = vector.broadcast %300 : vector<1x16xf32> to vector<2x16xf32>
    %316 = arith.addf %314, %315 : vector<2x16xf32>
    %317 = vector.extract_strided_slice %304 {offsets = [0, 0], sizes = [2, 16], strides = [1, 1]} : vector<16x16xf32> to vector<2x16xf32>
    %318 = arith.addf %317, %312 : vector<2x16xf32>
    %319 = arith.negf %318 : vector<2x16xf32>
    %320 = math.exp %319 : vector<2x16xf32>
    %cst_180 = arith.constant 1.000000e+00 : f32
    %321 = vector.broadcast %cst_180 : f32 to vector<2x16xf32>
    %322 = arith.addf %321, %320 : vector<2x16xf32>
    %323 = arith.divf %321, %322 : vector<2x16xf32>
    %324 = vector.extract_strided_slice %307 {offsets = [0, 0], sizes = [2, 16], strides = [1, 1]} : vector<16x16xf32> to vector<2x16xf32>
    %325 = arith.addf %324, %313 : vector<2x16xf32>
    %326 = arith.negf %325 : vector<2x16xf32>
    %327 = math.exp %326 : vector<2x16xf32>
    %cst_181 = arith.constant 1.000000e+00 : f32
    %328 = vector.broadcast %cst_181 : f32 to vector<2x16xf32>
    %329 = arith.addf %328, %327 : vector<2x16xf32>
    %330 = arith.divf %328, %329 : vector<2x16xf32>
    %331 = vector.extract_strided_slice %310 {offsets = [0, 0], sizes = [2, 16], strides = [1, 1]} : vector<16x16xf32> to vector<2x16xf32>
    %332 = arith.mulf %323, %316 : vector<2x16xf32>
    %333 = arith.addf %331, %332 : vector<2x16xf32>
    %334 = math.tanh %333 : vector<2x16xf32>
    %335 = arith.subf %311, %334 : vector<2x16xf32>
    %336 = arith.mulf %330, %335 : vector<2x16xf32>
    %337 = arith.addf %334, %336 : vector<2x16xf32>
    %c0_182 = arith.constant 0 : index
    %c0_183 = arith.constant 0 : index
    %338 = vector.load %arg8[%c0_182, %c0_183] : memref<16x16xf32, #tpu.memory_space<vmem>>, vector<2x16xf32>
    tpu.vector_store %arg8[%c0_182, %c0_183], %337 {strides = array<i32>} : memref<16x16xf32, #tpu.memory_space<vmem>>, vector<2x16xf32>,
    %cst_184 = arith.constant dense<0.000000e+00> : vector<2x16xf32>
    %339 = tpu.matmul %337, %282, %cst_184 {dimension_numbers = #tpu.dot_dimension_numbers<[1], [0], [0], [1], [0, 0, 1, 1], [], []>} : vector<2x16xf32>, vector<16x16xf32>, vector<2x16xf32> -> vector<2x16xf32>
    %cst_185 = arith.constant dense<0.000000e+00> : vector<2x16xf32>
    %340 = tpu.matmul %337, %284, %cst_185 {dimension_numbers = #tpu.dot_dimension_numbers<[1], [0], [0], [1], [0, 0, 1, 1], [], []>} : vector<2x16xf32>, vector<16x16xf32>, vector<2x16xf32> -> vector<2x16xf32>
    %cst_186 = arith.constant dense<0.000000e+00> : vector<2x16xf32>
    %341 = tpu.matmul %337, %286, %cst_186 {dimension_numbers = #tpu.dot_dimension_numbers<[1], [0], [0], [1], [0, 0, 1, 1], [], []>} : vector<2x16xf32>, vector<16x16xf32>, vector<2x16xf32> -> vector<2x16xf32>
    %342 = vector.broadcast %300 : vector<1x16xf32> to vector<2x16xf32>
    %343 = arith.addf %341, %342 : vector<2x16xf32>
    %344 = vector.extract_strided_slice %304 {offsets = [2, 0], sizes = [2, 16], strides = [1, 1]} : vector<16x16xf32> to vector<2x16xf32>
    %345 = arith.addf %344, %339 : vector<2x16xf32>
    %346 = arith.negf %345 : vector<2x16xf32>
    %347 = math.exp %346 : vector<2x16xf32>
    %cst_187 = arith.constant 1.000000e+00 : f32
    %348 = vector.broadcast %cst_187 : f32 to vector<2x16xf32>
    %349 = arith.addf %348, %347 : vector<2x16xf32>
    %350 = arith.divf %348, %349 : vector<2x16xf32>
    %351 = vector.extract_strided_slice %307 {offsets = [2, 0], sizes = [2, 16], strides = [1, 1]} : vector<16x16xf32> to vector<2x16xf32>
    %352 = arith.addf %351, %340 : vector<2x16xf32>
    %353 = arith.negf %352 : vector<2x16xf32>
    %354 = math.exp %353 : vector<2x16xf32>
    %cst_188 = arith.constant 1.000000e+00 : f32
    %355 = vector.broadcast %cst_188 : f32 to vector<2x16xf32>
    %356 = arith.addf %355, %354 : vector<2x16xf32>
    %357 = arith.divf %355, %356 : vector<2x16xf32>
    %358 = vector.extract_strided_slice %310 {offsets = [2, 0], sizes = [2, 16], strides = [1, 1]} : vector<16x16xf32> to vector<2x16xf32>
    %359 = arith.mulf %350, %343 : vector<2x16xf32>
    %360 = arith.addf %358, %359 : vector<2x16xf32>
    %361 = math.tanh %360 : vector<2x16xf32>
    %362 = arith.subf %337, %361 : vector<2x16xf32>
    %363 = arith.mulf %357, %362 : vector<2x16xf32>
    %364 = arith.addf %361, %363 : vector<2x16xf32>
    %c2_189 = arith.constant 2 : index
    %c0_190 = arith.constant 0 : index
    %365 = vector.load %arg8[%c2_189, %c0_190] : memref<16x16xf32, #tpu.memory_space<vmem>>, vector<2x16xf32>
    tpu.vector_store %arg8[%c2_189, %c0_190], %364 {strides = array<i32>} : memref<16x16xf32, #tpu.memory_space<vmem>>, vector<2x16xf32>,
    %cst_191 = arith.constant dense<0.000000e+00> : vector<2x16xf32>
    %366 = tpu.matmul %364, %282, %cst_191 {dimension_numbers = #tpu.dot_dimension_numbers<[1], [0], [0], [1], [0, 0, 1, 1], [], []>} : vector<2x16xf32>, vector<16x16xf32>, vector<2x16xf32> -> vector<2x16xf32>
    %cst_192 = arith.constant dense<0.000000e+00> : vector<2x16xf32>
    %367 = tpu.matmul %364, %284, %cst_192 {dimension_numbers = #tpu.dot_dimension_numbers<[1], [0], [0], [1], [0, 0, 1, 1], [], []>} : vector<2x16xf32>, vector<16x16xf32>, vector<2x16xf32> -> vector<2x16xf32>
    %cst_193 = arith.constant dense<0.000000e+00> : vector<2x16xf32>
    %368 = tpu.matmul %364, %286, %cst_193 {dimension_numbers = #tpu.dot_dimension_numbers<[1], [0], [0], [1], [0, 0, 1, 1], [], []>} : vector<2x16xf32>, vector<16x16xf32>, vector<2x16xf32> -> vector<2x16xf32>
    %369 = vector.broadcast %300 : vector<1x16xf32> to vector<2x16xf32>
    %370 = arith.addf %368, %369 : vector<2x16xf32>
    %371 = vector.extract_strided_slice %304 {offsets = [4, 0], sizes = [2, 16], strides = [1, 1]} : vector<16x16xf32> to vector<2x16xf32>
    %372 = arith.addf %371, %366 : vector<2x16xf32>
    %373 = arith.negf %372 : vector<2x16xf32>
    %374 = math.exp %373 : vector<2x16xf32>
    %cst_194 = arith.constant 1.000000e+00 : f32
    %375 = vector.broadcast %cst_194 : f32 to vector<2x16xf32>
    %376 = arith.addf %375, %374 : vector<2x16xf32>
    %377 = arith.divf %375, %376 : vector<2x16xf32>
    %378 = vector.extract_strided_slice %307 {offsets = [4, 0], sizes = [2, 16], strides = [1, 1]} : vector<16x16xf32> to vector<2x16xf32>
    %379 = arith.addf %378, %367 : vector<2x16xf32>
    %380 = arith.negf %379 : vector<2x16xf32>
    %381 = math.exp %380 : vector<2x16xf32>
    %cst_195 = arith.constant 1.000000e+00 : f32
    %382 = vector.broadcast %cst_195 : f32 to vector<2x16xf32>
    %383 = arith.addf %382, %381 : vector<2x16xf32>
    %384 = arith.divf %382, %383 : vector<2x16xf32>
    %385 = vector.extract_strided_slice %310 {offsets = [4, 0], sizes = [2, 16], strides = [1, 1]} : vector<16x16xf32> to vector<2x16xf32>
    %386 = arith.mulf %377, %370 : vector<2x16xf32>
    %387 = arith.addf %385, %386 : vector<2x16xf32>
    %388 = math.tanh %387 : vector<2x16xf32>
    %389 = arith.subf %364, %388 : vector<2x16xf32>
    %390 = arith.mulf %384, %389 : vector<2x16xf32>
    %391 = arith.addf %388, %390 : vector<2x16xf32>
    %c4_196 = arith.constant 4 : index
    %c0_197 = arith.constant 0 : index
    %392 = vector.load %arg8[%c4_196, %c0_197] : memref<16x16xf32, #tpu.memory_space<vmem>>, vector<2x16xf32>
    tpu.vector_store %arg8[%c4_196, %c0_197], %391 {strides = array<i32>} : memref<16x16xf32, #tpu.memory_space<vmem>>, vector<2x16xf32>,
    %cst_198 = arith.constant dense<0.000000e+00> : vector<2x16xf32>
    %393 = tpu.matmul %391, %282, %cst_198 {dimension_numbers = #tpu.dot_dimension_numbers<[1], [0], [0], [1], [0, 0, 1, 1], [], []>} : vector<2x16xf32>, vector<16x16xf32>, vector<2x16xf32> -> vector<2x16xf32>
    %cst_199 = arith.constant dense<0.000000e+00> : vector<2x16xf32>
    %394 = tpu.matmul %391, %284, %cst_199 {dimension_numbers = #tpu.dot_dimension_numbers<[1], [0], [0], [1], [0, 0, 1, 1], [], []>} : vector<2x16xf32>, vector<16x16xf32>, vector<2x16xf32> -> vector<2x16xf32>
    %cst_200 = arith.constant dense<0.000000e+00> : vector<2x16xf32>
    %395 = tpu.matmul %391, %286, %cst_200 {dimension_numbers = #tpu.dot_dimension_numbers<[1], [0], [0], [1], [0, 0, 1, 1], [], []>} : vector<2x16xf32>, vector<16x16xf32>, vector<2x16xf32> -> vector<2x16xf32>
    %396 = vector.broadcast %300 : vector<1x16xf32> to vector<2x16xf32>
    %397 = arith.addf %395, %396 : vector<2x16xf32>
    %398 = vector.extract_strided_slice %304 {offsets = [6, 0], sizes = [2, 16], strides = [1, 1]} : vector<16x16xf32> to vector<2x16xf32>
    %399 = arith.addf %398, %393 : vector<2x16xf32>
    %400 = arith.negf %399 : vector<2x16xf32>
    %401 = math.exp %400 : vector<2x16xf32>
    %cst_201 = arith.constant 1.000000e+00 : f32
    %402 = vector.broadcast %cst_201 : f32 to vector<2x16xf32>
    %403 = arith.addf %402, %401 : vector<2x16xf32>
    %404 = arith.divf %402, %403 : vector<2x16xf32>
    %405 = vector.extract_strided_slice %307 {offsets = [6, 0], sizes = [2, 16], strides = [1, 1]} : vector<16x16xf32> to vector<2x16xf32>
    %406 = arith.addf %405, %394 : vector<2x16xf32>
    %407 = arith.negf %406 : vector<2x16xf32>
    %408 = math.exp %407 : vector<2x16xf32>
    %cst_202 = arith.constant 1.000000e+00 : f32
    %409 = vector.broadcast %cst_202 : f32 to vector<2x16xf32>
    %410 = arith.addf %409, %408 : vector<2x16xf32>
    %411 = arith.divf %409, %410 : vector<2x16xf32>
    %412 = vector.extract_strided_slice %310 {offsets = [6, 0], sizes = [2, 16], strides = [1, 1]} : vector<16x16xf32> to vector<2x16xf32>
    %413 = arith.mulf %404, %397 : vector<2x16xf32>
    %414 = arith.addf %412, %413 : vector<2x16xf32>
    %415 = math.tanh %414 : vector<2x16xf32>
    %416 = arith.subf %391, %415 : vector<2x16xf32>
    %417 = arith.mulf %411, %416 : vector<2x16xf32>
    %418 = arith.addf %415, %417 : vector<2x16xf32>
    %c6_203 = arith.constant 6 : index
    %c0_204 = arith.constant 0 : index
    %419 = vector.load %arg8[%c6_203, %c0_204] : memref<16x16xf32, #tpu.memory_space<vmem>>, vector<2x16xf32>
    tpu.vector_store %arg8[%c6_203, %c0_204], %418 {strides = array<i32>} : memref<16x16xf32, #tpu.memory_space<vmem>>, vector<2x16xf32>,
    %cst_205 = arith.constant dense<0.000000e+00> : vector<2x16xf32>
    %420 = tpu.matmul %418, %282, %cst_205 {dimension_numbers = #tpu.dot_dimension_numbers<[1], [0], [0], [1], [0, 0, 1, 1], [], []>} : vector<2x16xf32>, vector<16x16xf32>, vector<2x16xf32> -> vector<2x16xf32>
    %cst_206 = arith.constant dense<0.000000e+00> : vector<2x16xf32>
    %421 = tpu.matmul %418, %284, %cst_206 {dimension_numbers = #tpu.dot_dimension_numbers<[1], [0], [0], [1], [0, 0, 1, 1], [], []>} : vector<2x16xf32>, vector<16x16xf32>, vector<2x16xf32> -> vector<2x16xf32>
    %cst_207 = arith.constant dense<0.000000e+00> : vector<2x16xf32>
    %422 = tpu.matmul %418, %286, %cst_207 {dimension_numbers = #tpu.dot_dimension_numbers<[1], [0], [0], [1], [0, 0, 1, 1], [], []>} : vector<2x16xf32>, vector<16x16xf32>, vector<2x16xf32> -> vector<2x16xf32>
    %423 = vector.broadcast %300 : vector<1x16xf32> to vector<2x16xf32>
    %424 = arith.addf %422, %423 : vector<2x16xf32>
    %425 = vector.extract_strided_slice %304 {offsets = [8, 0], sizes = [2, 16], strides = [1, 1]} : vector<16x16xf32> to vector<2x16xf32>
    %426 = arith.addf %425, %420 : vector<2x16xf32>
    %427 = arith.negf %426 : vector<2x16xf32>
    %428 = math.exp %427 : vector<2x16xf32>
    %cst_208 = arith.constant 1.000000e+00 : f32
    %429 = vector.broadcast %cst_208 : f32 to vector<2x16xf32>
    %430 = arith.addf %429, %428 : vector<2x16xf32>
    %431 = arith.divf %429, %430 : vector<2x16xf32>
    %432 = vector.extract_strided_slice %307 {offsets = [8, 0], sizes = [2, 16], strides = [1, 1]} : vector<16x16xf32> to vector<2x16xf32>
    %433 = arith.addf %432, %421 : vector<2x16xf32>
    %434 = arith.negf %433 : vector<2x16xf32>
    %435 = math.exp %434 : vector<2x16xf32>
    %cst_209 = arith.constant 1.000000e+00 : f32
    %436 = vector.broadcast %cst_209 : f32 to vector<2x16xf32>
    %437 = arith.addf %436, %435 : vector<2x16xf32>
    %438 = arith.divf %436, %437 : vector<2x16xf32>
    %439 = vector.extract_strided_slice %310 {offsets = [8, 0], sizes = [2, 16], strides = [1, 1]} : vector<16x16xf32> to vector<2x16xf32>
    %440 = arith.mulf %431, %424 : vector<2x16xf32>
    %441 = arith.addf %439, %440 : vector<2x16xf32>
    %442 = math.tanh %441 : vector<2x16xf32>
    %443 = arith.subf %418, %442 : vector<2x16xf32>
    %444 = arith.mulf %438, %443 : vector<2x16xf32>
    %445 = arith.addf %442, %444 : vector<2x16xf32>
    %c8_210 = arith.constant 8 : index
    %c0_211 = arith.constant 0 : index
    %446 = vector.load %arg8[%c8_210, %c0_211] : memref<16x16xf32, #tpu.memory_space<vmem>>, vector<2x16xf32>
    tpu.vector_store %arg8[%c8_210, %c0_211], %445 {strides = array<i32>} : memref<16x16xf32, #tpu.memory_space<vmem>>, vector<2x16xf32>,
    %cst_212 = arith.constant dense<0.000000e+00> : vector<2x16xf32>
    %447 = tpu.matmul %445, %282, %cst_212 {dimension_numbers = #tpu.dot_dimension_numbers<[1], [0], [0], [1], [0, 0, 1, 1], [], []>} : vector<2x16xf32>, vector<16x16xf32>, vector<2x16xf32> -> vector<2x16xf32>
    %cst_213 = arith.constant dense<0.000000e+00> : vector<2x16xf32>
    %448 = tpu.matmul %445, %284, %cst_213 {dimension_numbers = #tpu.dot_dimension_numbers<[1], [0], [0], [1], [0, 0, 1, 1], [], []>} : vector<2x16xf32>, vector<16x16xf32>, vector<2x16xf32> -> vector<2x16xf32>
    %cst_214 = arith.constant dense<0.000000e+00> : vector<2x16xf32>
    %449 = tpu.matmul %445, %286, %cst_214 {dimension_numbers = #tpu.dot_dimension_numbers<[1], [0], [0], [1], [0, 0, 1, 1], [], []>} : vector<2x16xf32>, vector<16x16xf32>, vector<2x16xf32> -> vector<2x16xf32>
    %450 = vector.broadcast %300 : vector<1x16xf32> to vector<2x16xf32>
    %451 = arith.addf %449, %450 : vector<2x16xf32>
    %452 = vector.extract_strided_slice %304 {offsets = [10, 0], sizes = [2, 16], strides = [1, 1]} : vector<16x16xf32> to vector<2x16xf32>
    %453 = arith.addf %452, %447 : vector<2x16xf32>
    %454 = arith.negf %453 : vector<2x16xf32>
    %455 = math.exp %454 : vector<2x16xf32>
    %cst_215 = arith.constant 1.000000e+00 : f32
    %456 = vector.broadcast %cst_215 : f32 to vector<2x16xf32>
    %457 = arith.addf %456, %455 : vector<2x16xf32>
    %458 = arith.divf %456, %457 : vector<2x16xf32>
    %459 = vector.extract_strided_slice %307 {offsets = [10, 0], sizes = [2, 16], strides = [1, 1]} : vector<16x16xf32> to vector<2x16xf32>
    %460 = arith.addf %459, %448 : vector<2x16xf32>
    %461 = arith.negf %460 : vector<2x16xf32>
    %462 = math.exp %461 : vector<2x16xf32>
    %cst_216 = arith.constant 1.000000e+00 : f32
    %463 = vector.broadcast %cst_216 : f32 to vector<2x16xf32>
    %464 = arith.addf %463, %462 : vector<2x16xf32>
    %465 = arith.divf %463, %464 : vector<2x16xf32>
    %466 = vector.extract_strided_slice %310 {offsets = [10, 0], sizes = [2, 16], strides = [1, 1]} : vector<16x16xf32> to vector<2x16xf32>
    %467 = arith.mulf %458, %451 : vector<2x16xf32>
    %468 = arith.addf %466, %467 : vector<2x16xf32>
    %469 = math.tanh %468 : vector<2x16xf32>
    %470 = arith.subf %445, %469 : vector<2x16xf32>
    %471 = arith.mulf %465, %470 : vector<2x16xf32>
    %472 = arith.addf %469, %471 : vector<2x16xf32>
    %c10_217 = arith.constant 10 : index
    %c0_218 = arith.constant 0 : index
    %473 = vector.load %arg8[%c10_217, %c0_218] : memref<16x16xf32, #tpu.memory_space<vmem>>, vector<2x16xf32>
    tpu.vector_store %arg8[%c10_217, %c0_218], %472 {strides = array<i32>} : memref<16x16xf32, #tpu.memory_space<vmem>>, vector<2x16xf32>,
    %cst_219 = arith.constant dense<0.000000e+00> : vector<2x16xf32>
    %474 = tpu.matmul %472, %282, %cst_219 {dimension_numbers = #tpu.dot_dimension_numbers<[1], [0], [0], [1], [0, 0, 1, 1], [], []>} : vector<2x16xf32>, vector<16x16xf32>, vector<2x16xf32> -> vector<2x16xf32>
    %cst_220 = arith.constant dense<0.000000e+00> : vector<2x16xf32>
    %475 = tpu.matmul %472, %284, %cst_220 {dimension_numbers = #tpu.dot_dimension_numbers<[1], [0], [0], [1], [0, 0, 1, 1], [], []>} : vector<2x16xf32>, vector<16x16xf32>, vector<2x16xf32> -> vector<2x16xf32>
    %cst_221 = arith.constant dense<0.000000e+00> : vector<2x16xf32>
    %476 = tpu.matmul %472, %286, %cst_221 {dimension_numbers = #tpu.dot_dimension_numbers<[1], [0], [0], [1], [0, 0, 1, 1], [], []>} : vector<2x16xf32>, vector<16x16xf32>, vector<2x16xf32> -> vector<2x16xf32>
    %477 = vector.broadcast %300 : vector<1x16xf32> to vector<2x16xf32>
    %478 = arith.addf %476, %477 : vector<2x16xf32>
    %479 = vector.extract_strided_slice %304 {offsets = [12, 0], sizes = [2, 16], strides = [1, 1]} : vector<16x16xf32> to vector<2x16xf32>
    %480 = arith.addf %479, %474 : vector<2x16xf32>
    %481 = arith.negf %480 : vector<2x16xf32>
    %482 = math.exp %481 : vector<2x16xf32>
    %cst_222 = arith.constant 1.000000e+00 : f32
    %483 = vector.broadcast %cst_222 : f32 to vector<2x16xf32>
    %484 = arith.addf %483, %482 : vector<2x16xf32>
    %485 = arith.divf %483, %484 : vector<2x16xf32>
    %486 = vector.extract_strided_slice %307 {offsets = [12, 0], sizes = [2, 16], strides = [1, 1]} : vector<16x16xf32> to vector<2x16xf32>
    %487 = arith.addf %486, %475 : vector<2x16xf32>
    %488 = arith.negf %487 : vector<2x16xf32>
    %489 = math.exp %488 : vector<2x16xf32>
    %cst_223 = arith.constant 1.000000e+00 : f32
    %490 = vector.broadcast %cst_223 : f32 to vector<2x16xf32>
    %491 = arith.addf %490, %489 : vector<2x16xf32>
    %492 = arith.divf %490, %491 : vector<2x16xf32>
    %493 = vector.extract_strided_slice %310 {offsets = [12, 0], sizes = [2, 16], strides = [1, 1]} : vector<16x16xf32> to vector<2x16xf32>
    %494 = arith.mulf %485, %478 : vector<2x16xf32>
    %495 = arith.addf %493, %494 : vector<2x16xf32>
    %496 = math.tanh %495 : vector<2x16xf32>
    %497 = arith.subf %472, %496 : vector<2x16xf32>
    %498 = arith.mulf %492, %497 : vector<2x16xf32>
    %499 = arith.addf %496, %498 : vector<2x16xf32>
    %c12_224 = arith.constant 12 : index
    %c0_225 = arith.constant 0 : index
    %500 = vector.load %arg8[%c12_224, %c0_225] : memref<16x16xf32, #tpu.memory_space<vmem>>, vector<2x16xf32>
    tpu.vector_store %arg8[%c12_224, %c0_225], %499 {strides = array<i32>} : memref<16x16xf32, #tpu.memory_space<vmem>>, vector<2x16xf32>,
    %cst_226 = arith.constant dense<0.000000e+00> : vector<2x16xf32>
    %501 = tpu.matmul %499, %282, %cst_226 {dimension_numbers = #tpu.dot_dimension_numbers<[1], [0], [0], [1], [0, 0, 1, 1], [], []>} : vector<2x16xf32>, vector<16x16xf32>, vector<2x16xf32> -> vector<2x16xf32>
    %cst_227 = arith.constant dense<0.000000e+00> : vector<2x16xf32>
    %502 = tpu.matmul %499, %284, %cst_227 {dimension_numbers = #tpu.dot_dimension_numbers<[1], [0], [0], [1], [0, 0, 1, 1], [], []>} : vector<2x16xf32>, vector<16x16xf32>, vector<2x16xf32> -> vector<2x16xf32>
    %cst_228 = arith.constant dense<0.000000e+00> : vector<2x16xf32>
    %503 = tpu.matmul %499, %286, %cst_228 {dimension_numbers = #tpu.dot_dimension_numbers<[1], [0], [0], [1], [0, 0, 1, 1], [], []>} : vector<2x16xf32>, vector<16x16xf32>, vector<2x16xf32> -> vector<2x16xf32>
    %504 = vector.broadcast %300 : vector<1x16xf32> to vector<2x16xf32>
    %505 = arith.addf %503, %504 : vector<2x16xf32>
    %506 = vector.extract_strided_slice %304 {offsets = [14, 0], sizes = [2, 16], strides = [1, 1]} : vector<16x16xf32> to vector<2x16xf32>
    %507 = arith.addf %506, %501 : vector<2x16xf32>
    %508 = arith.negf %507 : vector<2x16xf32>
    %509 = math.exp %508 : vector<2x16xf32>
    %cst_229 = arith.constant 1.000000e+00 : f32
    %510 = vector.broadcast %cst_229 : f32 to vector<2x16xf32>
    %511 = arith.addf %510, %509 : vector<2x16xf32>
    %512 = arith.divf %510, %511 : vector<2x16xf32>
    %513 = vector.extract_strided_slice %307 {offsets = [14, 0], sizes = [2, 16], strides = [1, 1]} : vector<16x16xf32> to vector<2x16xf32>
    %514 = arith.addf %513, %502 : vector<2x16xf32>
    %515 = arith.negf %514 : vector<2x16xf32>
    %516 = math.exp %515 : vector<2x16xf32>
    %cst_230 = arith.constant 1.000000e+00 : f32
    %517 = vector.broadcast %cst_230 : f32 to vector<2x16xf32>
    %518 = arith.addf %517, %516 : vector<2x16xf32>
    %519 = arith.divf %517, %518 : vector<2x16xf32>
    %520 = vector.extract_strided_slice %310 {offsets = [14, 0], sizes = [2, 16], strides = [1, 1]} : vector<16x16xf32> to vector<2x16xf32>
    %521 = arith.mulf %512, %505 : vector<2x16xf32>
    %522 = arith.addf %520, %521 : vector<2x16xf32>
    %523 = math.tanh %522 : vector<2x16xf32>
    %524 = arith.subf %499, %523 : vector<2x16xf32>
    %525 = arith.mulf %519, %524 : vector<2x16xf32>
    %526 = arith.addf %523, %525 : vector<2x16xf32>
    %c14_231 = arith.constant 14 : index
    %c0_232 = arith.constant 0 : index
    %527 = vector.load %arg8[%c14_231, %c0_232] : memref<16x16xf32, #tpu.memory_space<vmem>>, vector<2x16xf32>
    tpu.vector_store %arg8[%c14_231, %c0_232], %526 {strides = array<i32>} : memref<16x16xf32, #tpu.memory_space<vmem>>, vector<2x16xf32>,
    %c2_233 = arith.constant 2 : index
    %c0_234 = arith.constant 0 : index
    %c0_235 = arith.constant 0 : index
    %c0_236 = arith.constant 0 : index
    %528 = vector.load %arg3[%c2_233, %c0_234, %c0_235, %c0_236] : memref<4x3x16x16xf32, #tpu.memory_space<vmem>>, vector<1x1x16x16xf32>
    %529 = vector.shape_cast %528 : vector<1x1x16x16xf32> to vector<16x16xf32>
    %c2_237 = arith.constant 2 : index
    %c1_238 = arith.constant 1 : index
    %c0_239 = arith.constant 0 : index
    %c0_240 = arith.constant 0 : index
    %530 = vector.load %arg3[%c2_237, %c1_238, %c0_239, %c0_240] : memref<4x3x16x16xf32, #tpu.memory_space<vmem>>, vector<1x1x16x16xf32>
    %531 = vector.shape_cast %530 : vector<1x1x16x16xf32> to vector<16x16xf32>
    %c2_241 = arith.constant 2 : index
    %c2_242 = arith.constant 2 : index
    %c0_243 = arith.constant 0 : index
    %c0_244 = arith.constant 0 : index
    %532 = vector.load %arg3[%c2_241, %c2_242, %c0_243, %c0_244] : memref<4x3x16x16xf32, #tpu.memory_space<vmem>>, vector<1x1x16x16xf32>
    %533 = vector.shape_cast %532 : vector<1x1x16x16xf32> to vector<16x16xf32>
    %c2_245 = arith.constant 2 : index
    %c0_246 = arith.constant 0 : index
    %c0_247 = arith.constant 0 : index
    %c0_248 = arith.constant 0 : index
    %534 = vector.load %arg4[%c2_245, %c0_246, %c0_247, %c0_248] : memref<4x3x16x16xf32, #tpu.memory_space<vmem>>, vector<1x1x16x16xf32>
    %535 = vector.shape_cast %534 : vector<1x1x16x16xf32> to vector<16x16xf32>
    %c2_249 = arith.constant 2 : index
    %c1_250 = arith.constant 1 : index
    %c0_251 = arith.constant 0 : index
    %c0_252 = arith.constant 0 : index
    %536 = vector.load %arg4[%c2_249, %c1_250, %c0_251, %c0_252] : memref<4x3x16x16xf32, #tpu.memory_space<vmem>>, vector<1x1x16x16xf32>
    %537 = vector.shape_cast %536 : vector<1x1x16x16xf32> to vector<16x16xf32>
    %c2_253 = arith.constant 2 : index
    %c2_254 = arith.constant 2 : index
    %c0_255 = arith.constant 0 : index
    %c0_256 = arith.constant 0 : index
    %538 = vector.load %arg4[%c2_253, %c2_254, %c0_255, %c0_256] : memref<4x3x16x16xf32, #tpu.memory_space<vmem>>, vector<1x1x16x16xf32>
    %539 = vector.shape_cast %538 : vector<1x1x16x16xf32> to vector<16x16xf32>
    %c2_257 = arith.constant 2 : index
    %c0_258 = arith.constant 0 : index
    %c0_259 = arith.constant 0 : index
    %c0_260 = arith.constant 0 : index
    %540 = vector.load %arg5[%c2_257, %c0_258, %c0_259, %c0_260] : memref<4x3x1x16xf32, #tpu.memory_space<vmem>>, vector<1x1x1x16xf32>
    %541 = vector.shape_cast %540 : vector<1x1x1x16xf32> to vector<1x16xf32>
    %c2_261 = arith.constant 2 : index
    %c0_262 = arith.constant 0 : index
    %c0_263 = arith.constant 0 : index
    %c0_264 = arith.constant 0 : index
    %542 = vector.load %arg6[%c2_261, %c0_262, %c0_263, %c0_264] : memref<4x3x1x16xf32, #tpu.memory_space<vmem>>, vector<1x1x1x16xf32>
    %543 = vector.shape_cast %542 : vector<1x1x1x16xf32> to vector<1x16xf32>
    %544 = arith.addf %541, %543 : vector<1x16xf32>
    %c2_265 = arith.constant 2 : index
    %c1_266 = arith.constant 1 : index
    %c0_267 = arith.constant 0 : index
    %c0_268 = arith.constant 0 : index
    %545 = vector.load %arg5[%c2_265, %c1_266, %c0_267, %c0_268] : memref<4x3x1x16xf32, #tpu.memory_space<vmem>>, vector<1x1x1x16xf32>
    %546 = vector.shape_cast %545 : vector<1x1x1x16xf32> to vector<1x16xf32>
    %c2_269 = arith.constant 2 : index
    %c1_270 = arith.constant 1 : index
    %c0_271 = arith.constant 0 : index
    %c0_272 = arith.constant 0 : index
    %547 = vector.load %arg6[%c2_269, %c1_270, %c0_271, %c0_272] : memref<4x3x1x16xf32, #tpu.memory_space<vmem>>, vector<1x1x1x16xf32>
    %548 = vector.shape_cast %547 : vector<1x1x1x16xf32> to vector<1x16xf32>
    %549 = arith.addf %546, %548 : vector<1x16xf32>
    %c2_273 = arith.constant 2 : index
    %c2_274 = arith.constant 2 : index
    %c0_275 = arith.constant 0 : index
    %c0_276 = arith.constant 0 : index
    %550 = vector.load %arg5[%c2_273, %c2_274, %c0_275, %c0_276] : memref<4x3x1x16xf32, #tpu.memory_space<vmem>>, vector<1x1x1x16xf32>
    %551 = vector.shape_cast %550 : vector<1x1x1x16xf32> to vector<1x16xf32>
    %c2_277 = arith.constant 2 : index
    %c2_278 = arith.constant 2 : index
    %c0_279 = arith.constant 0 : index
    %c0_280 = arith.constant 0 : index
    %552 = vector.load %arg6[%c2_277, %c2_278, %c0_279, %c0_280] : memref<4x3x1x16xf32, #tpu.memory_space<vmem>>, vector<1x1x1x16xf32>
    %553 = vector.shape_cast %552 : vector<1x1x1x16xf32> to vector<1x16xf32>
    %c0_281 = arith.constant 0 : index
    %c0_282 = arith.constant 0 : index
    %554 = vector.load %arg8[%c0_281, %c0_282] : memref<16x16xf32, #tpu.memory_space<vmem>>, vector<16x16xf32>
    %cst_283 = arith.constant dense<0.000000e+00> : vector<16x16xf32>
    %555 = tpu.matmul %554, %529, %cst_283 {dimension_numbers = #tpu.dot_dimension_numbers<[1], [0], [0], [1], [0, 0, 1, 1], [], []>} : vector<16x16xf32>, vector<16x16xf32>, vector<16x16xf32> -> vector<16x16xf32>
    %556 = vector.broadcast %544 : vector<1x16xf32> to vector<16x16xf32>
    %557 = arith.addf %555, %556 : vector<16x16xf32>
    %cst_284 = arith.constant dense<0.000000e+00> : vector<16x16xf32>
    %558 = tpu.matmul %554, %531, %cst_284 {dimension_numbers = #tpu.dot_dimension_numbers<[1], [0], [0], [1], [0, 0, 1, 1], [], []>} : vector<16x16xf32>, vector<16x16xf32>, vector<16x16xf32> -> vector<16x16xf32>
    %559 = vector.broadcast %549 : vector<1x16xf32> to vector<16x16xf32>
    %560 = arith.addf %558, %559 : vector<16x16xf32>
    %cst_285 = arith.constant dense<0.000000e+00> : vector<16x16xf32>
    %561 = tpu.matmul %554, %533, %cst_285 {dimension_numbers = #tpu.dot_dimension_numbers<[1], [0], [0], [1], [0, 0, 1, 1], [], []>} : vector<16x16xf32>, vector<16x16xf32>, vector<16x16xf32> -> vector<16x16xf32>
    %562 = vector.broadcast %551 : vector<1x16xf32> to vector<16x16xf32>
    %563 = arith.addf %561, %562 : vector<16x16xf32>
    %cst_286 = arith.constant 0.000000e+00 : f32
    %564 = vector.broadcast %cst_286 : f32 to vector<2x16xf32>
    %cst_287 = arith.constant dense<0.000000e+00> : vector<2x16xf32>
    %565 = tpu.matmul %564, %535, %cst_287 {dimension_numbers = #tpu.dot_dimension_numbers<[1], [0], [0], [1], [0, 0, 1, 1], [], []>} : vector<2x16xf32>, vector<16x16xf32>, vector<2x16xf32> -> vector<2x16xf32>
    %cst_288 = arith.constant dense<0.000000e+00> : vector<2x16xf32>
    %566 = tpu.matmul %564, %537, %cst_288 {dimension_numbers = #tpu.dot_dimension_numbers<[1], [0], [0], [1], [0, 0, 1, 1], [], []>} : vector<2x16xf32>, vector<16x16xf32>, vector<2x16xf32> -> vector<2x16xf32>
    %cst_289 = arith.constant dense<0.000000e+00> : vector<2x16xf32>
    %567 = tpu.matmul %564, %539, %cst_289 {dimension_numbers = #tpu.dot_dimension_numbers<[1], [0], [0], [1], [0, 0, 1, 1], [], []>} : vector<2x16xf32>, vector<16x16xf32>, vector<2x16xf32> -> vector<2x16xf32>
    %568 = vector.broadcast %553 : vector<1x16xf32> to vector<2x16xf32>
    %569 = arith.addf %567, %568 : vector<2x16xf32>
    %570 = vector.extract_strided_slice %557 {offsets = [0, 0], sizes = [2, 16], strides = [1, 1]} : vector<16x16xf32> to vector<2x16xf32>
    %571 = arith.addf %570, %565 : vector<2x16xf32>
    %572 = arith.negf %571 : vector<2x16xf32>
    %573 = math.exp %572 : vector<2x16xf32>
    %cst_290 = arith.constant 1.000000e+00 : f32
    %574 = vector.broadcast %cst_290 : f32 to vector<2x16xf32>
    %575 = arith.addf %574, %573 : vector<2x16xf32>
    %576 = arith.divf %574, %575 : vector<2x16xf32>
    %577 = vector.extract_strided_slice %560 {offsets = [0, 0], sizes = [2, 16], strides = [1, 1]} : vector<16x16xf32> to vector<2x16xf32>
    %578 = arith.addf %577, %566 : vector<2x16xf32>
    %579 = arith.negf %578 : vector<2x16xf32>
    %580 = math.exp %579 : vector<2x16xf32>
    %cst_291 = arith.constant 1.000000e+00 : f32
    %581 = vector.broadcast %cst_291 : f32 to vector<2x16xf32>
    %582 = arith.addf %581, %580 : vector<2x16xf32>
    %583 = arith.divf %581, %582 : vector<2x16xf32>
    %584 = vector.extract_strided_slice %563 {offsets = [0, 0], sizes = [2, 16], strides = [1, 1]} : vector<16x16xf32> to vector<2x16xf32>
    %585 = arith.mulf %576, %569 : vector<2x16xf32>
    %586 = arith.addf %584, %585 : vector<2x16xf32>
    %587 = math.tanh %586 : vector<2x16xf32>
    %588 = arith.subf %564, %587 : vector<2x16xf32>
    %589 = arith.mulf %583, %588 : vector<2x16xf32>
    %590 = arith.addf %587, %589 : vector<2x16xf32>
    %c0_292 = arith.constant 0 : index
    %c0_293 = arith.constant 0 : index
    %591 = vector.load %arg8[%c0_292, %c0_293] : memref<16x16xf32, #tpu.memory_space<vmem>>, vector<2x16xf32>
    tpu.vector_store %arg8[%c0_292, %c0_293], %590 {strides = array<i32>} : memref<16x16xf32, #tpu.memory_space<vmem>>, vector<2x16xf32>,
    %cst_294 = arith.constant dense<0.000000e+00> : vector<2x16xf32>
    %592 = tpu.matmul %590, %535, %cst_294 {dimension_numbers = #tpu.dot_dimension_numbers<[1], [0], [0], [1], [0, 0, 1, 1], [], []>} : vector<2x16xf32>, vector<16x16xf32>, vector<2x16xf32> -> vector<2x16xf32>
    %cst_295 = arith.constant dense<0.000000e+00> : vector<2x16xf32>
    %593 = tpu.matmul %590, %537, %cst_295 {dimension_numbers = #tpu.dot_dimension_numbers<[1], [0], [0], [1], [0, 0, 1, 1], [], []>} : vector<2x16xf32>, vector<16x16xf32>, vector<2x16xf32> -> vector<2x16xf32>
    %cst_296 = arith.constant dense<0.000000e+00> : vector<2x16xf32>
    %594 = tpu.matmul %590, %539, %cst_296 {dimension_numbers = #tpu.dot_dimension_numbers<[1], [0], [0], [1], [0, 0, 1, 1], [], []>} : vector<2x16xf32>, vector<16x16xf32>, vector<2x16xf32> -> vector<2x16xf32>
    %595 = vector.broadcast %553 : vector<1x16xf32> to vector<2x16xf32>
    %596 = arith.addf %594, %595 : vector<2x16xf32>
    %597 = vector.extract_strided_slice %557 {offsets = [2, 0], sizes = [2, 16], strides = [1, 1]} : vector<16x16xf32> to vector<2x16xf32>
    %598 = arith.addf %597, %592 : vector<2x16xf32>
    %599 = arith.negf %598 : vector<2x16xf32>
    %600 = math.exp %599 : vector<2x16xf32>
    %cst_297 = arith.constant 1.000000e+00 : f32
    %601 = vector.broadcast %cst_297 : f32 to vector<2x16xf32>
    %602 = arith.addf %601, %600 : vector<2x16xf32>
    %603 = arith.divf %601, %602 : vector<2x16xf32>
    %604 = vector.extract_strided_slice %560 {offsets = [2, 0], sizes = [2, 16], strides = [1, 1]} : vector<16x16xf32> to vector<2x16xf32>
    %605 = arith.addf %604, %593 : vector<2x16xf32>
    %606 = arith.negf %605 : vector<2x16xf32>
    %607 = math.exp %606 : vector<2x16xf32>
    %cst_298 = arith.constant 1.000000e+00 : f32
    %608 = vector.broadcast %cst_298 : f32 to vector<2x16xf32>
    %609 = arith.addf %608, %607 : vector<2x16xf32>
    %610 = arith.divf %608, %609 : vector<2x16xf32>
    %611 = vector.extract_strided_slice %563 {offsets = [2, 0], sizes = [2, 16], strides = [1, 1]} : vector<16x16xf32> to vector<2x16xf32>
    %612 = arith.mulf %603, %596 : vector<2x16xf32>
    %613 = arith.addf %611, %612 : vector<2x16xf32>
    %614 = math.tanh %613 : vector<2x16xf32>
    %615 = arith.subf %590, %614 : vector<2x16xf32>
    %616 = arith.mulf %610, %615 : vector<2x16xf32>
    %617 = arith.addf %614, %616 : vector<2x16xf32>
    %c2_299 = arith.constant 2 : index
    %c0_300 = arith.constant 0 : index
    %618 = vector.load %arg8[%c2_299, %c0_300] : memref<16x16xf32, #tpu.memory_space<vmem>>, vector<2x16xf32>
    tpu.vector_store %arg8[%c2_299, %c0_300], %617 {strides = array<i32>} : memref<16x16xf32, #tpu.memory_space<vmem>>, vector<2x16xf32>,
    %cst_301 = arith.constant dense<0.000000e+00> : vector<2x16xf32>
    %619 = tpu.matmul %617, %535, %cst_301 {dimension_numbers = #tpu.dot_dimension_numbers<[1], [0], [0], [1], [0, 0, 1, 1], [], []>} : vector<2x16xf32>, vector<16x16xf32>, vector<2x16xf32> -> vector<2x16xf32>
    %cst_302 = arith.constant dense<0.000000e+00> : vector<2x16xf32>
    %620 = tpu.matmul %617, %537, %cst_302 {dimension_numbers = #tpu.dot_dimension_numbers<[1], [0], [0], [1], [0, 0, 1, 1], [], []>} : vector<2x16xf32>, vector<16x16xf32>, vector<2x16xf32> -> vector<2x16xf32>
    %cst_303 = arith.constant dense<0.000000e+00> : vector<2x16xf32>
    %621 = tpu.matmul %617, %539, %cst_303 {dimension_numbers = #tpu.dot_dimension_numbers<[1], [0], [0], [1], [0, 0, 1, 1], [], []>} : vector<2x16xf32>, vector<16x16xf32>, vector<2x16xf32> -> vector<2x16xf32>
    %622 = vector.broadcast %553 : vector<1x16xf32> to vector<2x16xf32>
    %623 = arith.addf %621, %622 : vector<2x16xf32>
    %624 = vector.extract_strided_slice %557 {offsets = [4, 0], sizes = [2, 16], strides = [1, 1]} : vector<16x16xf32> to vector<2x16xf32>
    %625 = arith.addf %624, %619 : vector<2x16xf32>
    %626 = arith.negf %625 : vector<2x16xf32>
    %627 = math.exp %626 : vector<2x16xf32>
    %cst_304 = arith.constant 1.000000e+00 : f32
    %628 = vector.broadcast %cst_304 : f32 to vector<2x16xf32>
    %629 = arith.addf %628, %627 : vector<2x16xf32>
    %630 = arith.divf %628, %629 : vector<2x16xf32>
    %631 = vector.extract_strided_slice %560 {offsets = [4, 0], sizes = [2, 16], strides = [1, 1]} : vector<16x16xf32> to vector<2x16xf32>
    %632 = arith.addf %631, %620 : vector<2x16xf32>
    %633 = arith.negf %632 : vector<2x16xf32>
    %634 = math.exp %633 : vector<2x16xf32>
    %cst_305 = arith.constant 1.000000e+00 : f32
    %635 = vector.broadcast %cst_305 : f32 to vector<2x16xf32>
    %636 = arith.addf %635, %634 : vector<2x16xf32>
    %637 = arith.divf %635, %636 : vector<2x16xf32>
    %638 = vector.extract_strided_slice %563 {offsets = [4, 0], sizes = [2, 16], strides = [1, 1]} : vector<16x16xf32> to vector<2x16xf32>
    %639 = arith.mulf %630, %623 : vector<2x16xf32>
    %640 = arith.addf %638, %639 : vector<2x16xf32>
    %641 = math.tanh %640 : vector<2x16xf32>
    %642 = arith.subf %617, %641 : vector<2x16xf32>
    %643 = arith.mulf %637, %642 : vector<2x16xf32>
    %644 = arith.addf %641, %643 : vector<2x16xf32>
    %c4_306 = arith.constant 4 : index
    %c0_307 = arith.constant 0 : index
    %645 = vector.load %arg8[%c4_306, %c0_307] : memref<16x16xf32, #tpu.memory_space<vmem>>, vector<2x16xf32>
    tpu.vector_store %arg8[%c4_306, %c0_307], %644 {strides = array<i32>} : memref<16x16xf32, #tpu.memory_space<vmem>>, vector<2x16xf32>,
    %cst_308 = arith.constant dense<0.000000e+00> : vector<2x16xf32>
    %646 = tpu.matmul %644, %535, %cst_308 {dimension_numbers = #tpu.dot_dimension_numbers<[1], [0], [0], [1], [0, 0, 1, 1], [], []>} : vector<2x16xf32>, vector<16x16xf32>, vector<2x16xf32> -> vector<2x16xf32>
    %cst_309 = arith.constant dense<0.000000e+00> : vector<2x16xf32>
    %647 = tpu.matmul %644, %537, %cst_309 {dimension_numbers = #tpu.dot_dimension_numbers<[1], [0], [0], [1], [0, 0, 1, 1], [], []>} : vector<2x16xf32>, vector<16x16xf32>, vector<2x16xf32> -> vector<2x16xf32>
    %cst_310 = arith.constant dense<0.000000e+00> : vector<2x16xf32>
    %648 = tpu.matmul %644, %539, %cst_310 {dimension_numbers = #tpu.dot_dimension_numbers<[1], [0], [0], [1], [0, 0, 1, 1], [], []>} : vector<2x16xf32>, vector<16x16xf32>, vector<2x16xf32> -> vector<2x16xf32>
    %649 = vector.broadcast %553 : vector<1x16xf32> to vector<2x16xf32>
    %650 = arith.addf %648, %649 : vector<2x16xf32>
    %651 = vector.extract_strided_slice %557 {offsets = [6, 0], sizes = [2, 16], strides = [1, 1]} : vector<16x16xf32> to vector<2x16xf32>
    %652 = arith.addf %651, %646 : vector<2x16xf32>
    %653 = arith.negf %652 : vector<2x16xf32>
    %654 = math.exp %653 : vector<2x16xf32>
    %cst_311 = arith.constant 1.000000e+00 : f32
    %655 = vector.broadcast %cst_311 : f32 to vector<2x16xf32>
    %656 = arith.addf %655, %654 : vector<2x16xf32>
    %657 = arith.divf %655, %656 : vector<2x16xf32>
    %658 = vector.extract_strided_slice %560 {offsets = [6, 0], sizes = [2, 16], strides = [1, 1]} : vector<16x16xf32> to vector<2x16xf32>
    %659 = arith.addf %658, %647 : vector<2x16xf32>
    %660 = arith.negf %659 : vector<2x16xf32>
    %661 = math.exp %660 : vector<2x16xf32>
    %cst_312 = arith.constant 1.000000e+00 : f32
    %662 = vector.broadcast %cst_312 : f32 to vector<2x16xf32>
    %663 = arith.addf %662, %661 : vector<2x16xf32>
    %664 = arith.divf %662, %663 : vector<2x16xf32>
    %665 = vector.extract_strided_slice %563 {offsets = [6, 0], sizes = [2, 16], strides = [1, 1]} : vector<16x16xf32> to vector<2x16xf32>
    %666 = arith.mulf %657, %650 : vector<2x16xf32>
    %667 = arith.addf %665, %666 : vector<2x16xf32>
    %668 = math.tanh %667 : vector<2x16xf32>
    %669 = arith.subf %644, %668 : vector<2x16xf32>
    %670 = arith.mulf %664, %669 : vector<2x16xf32>
    %671 = arith.addf %668, %670 : vector<2x16xf32>
    %c6_313 = arith.constant 6 : index
    %c0_314 = arith.constant 0 : index
    %672 = vector.load %arg8[%c6_313, %c0_314] : memref<16x16xf32, #tpu.memory_space<vmem>>, vector<2x16xf32>
    tpu.vector_store %arg8[%c6_313, %c0_314], %671 {strides = array<i32>} : memref<16x16xf32, #tpu.memory_space<vmem>>, vector<2x16xf32>,
    %cst_315 = arith.constant dense<0.000000e+00> : vector<2x16xf32>
    %673 = tpu.matmul %671, %535, %cst_315 {dimension_numbers = #tpu.dot_dimension_numbers<[1], [0], [0], [1], [0, 0, 1, 1], [], []>} : vector<2x16xf32>, vector<16x16xf32>, vector<2x16xf32> -> vector<2x16xf32>
    %cst_316 = arith.constant dense<0.000000e+00> : vector<2x16xf32>
    %674 = tpu.matmul %671, %537, %cst_316 {dimension_numbers = #tpu.dot_dimension_numbers<[1], [0], [0], [1], [0, 0, 1, 1], [], []>} : vector<2x16xf32>, vector<16x16xf32>, vector<2x16xf32> -> vector<2x16xf32>
    %cst_317 = arith.constant dense<0.000000e+00> : vector<2x16xf32>
    %675 = tpu.matmul %671, %539, %cst_317 {dimension_numbers = #tpu.dot_dimension_numbers<[1], [0], [0], [1], [0, 0, 1, 1], [], []>} : vector<2x16xf32>, vector<16x16xf32>, vector<2x16xf32> -> vector<2x16xf32>
    %676 = vector.broadcast %553 : vector<1x16xf32> to vector<2x16xf32>
    %677 = arith.addf %675, %676 : vector<2x16xf32>
    %678 = vector.extract_strided_slice %557 {offsets = [8, 0], sizes = [2, 16], strides = [1, 1]} : vector<16x16xf32> to vector<2x16xf32>
    %679 = arith.addf %678, %673 : vector<2x16xf32>
    %680 = arith.negf %679 : vector<2x16xf32>
    %681 = math.exp %680 : vector<2x16xf32>
    %cst_318 = arith.constant 1.000000e+00 : f32
    %682 = vector.broadcast %cst_318 : f32 to vector<2x16xf32>
    %683 = arith.addf %682, %681 : vector<2x16xf32>
    %684 = arith.divf %682, %683 : vector<2x16xf32>
    %685 = vector.extract_strided_slice %560 {offsets = [8, 0], sizes = [2, 16], strides = [1, 1]} : vector<16x16xf32> to vector<2x16xf32>
    %686 = arith.addf %685, %674 : vector<2x16xf32>
    %687 = arith.negf %686 : vector<2x16xf32>
    %688 = math.exp %687 : vector<2x16xf32>
    %cst_319 = arith.constant 1.000000e+00 : f32
    %689 = vector.broadcast %cst_319 : f32 to vector<2x16xf32>
    %690 = arith.addf %689, %688 : vector<2x16xf32>
    %691 = arith.divf %689, %690 : vector<2x16xf32>
    %692 = vector.extract_strided_slice %563 {offsets = [8, 0], sizes = [2, 16], strides = [1, 1]} : vector<16x16xf32> to vector<2x16xf32>
    %693 = arith.mulf %684, %677 : vector<2x16xf32>
    %694 = arith.addf %692, %693 : vector<2x16xf32>
    %695 = math.tanh %694 : vector<2x16xf32>
    %696 = arith.subf %671, %695 : vector<2x16xf32>
    %697 = arith.mulf %691, %696 : vector<2x16xf32>
    %698 = arith.addf %695, %697 : vector<2x16xf32>
    %c8_320 = arith.constant 8 : index
    %c0_321 = arith.constant 0 : index
    %699 = vector.load %arg8[%c8_320, %c0_321] : memref<16x16xf32, #tpu.memory_space<vmem>>, vector<2x16xf32>
    tpu.vector_store %arg8[%c8_320, %c0_321], %698 {strides = array<i32>} : memref<16x16xf32, #tpu.memory_space<vmem>>, vector<2x16xf32>,
    %cst_322 = arith.constant dense<0.000000e+00> : vector<2x16xf32>
    %700 = tpu.matmul %698, %535, %cst_322 {dimension_numbers = #tpu.dot_dimension_numbers<[1], [0], [0], [1], [0, 0, 1, 1], [], []>} : vector<2x16xf32>, vector<16x16xf32>, vector<2x16xf32> -> vector<2x16xf32>
    %cst_323 = arith.constant dense<0.000000e+00> : vector<2x16xf32>
    %701 = tpu.matmul %698, %537, %cst_323 {dimension_numbers = #tpu.dot_dimension_numbers<[1], [0], [0], [1], [0, 0, 1, 1], [], []>} : vector<2x16xf32>, vector<16x16xf32>, vector<2x16xf32> -> vector<2x16xf32>
    %cst_324 = arith.constant dense<0.000000e+00> : vector<2x16xf32>
    %702 = tpu.matmul %698, %539, %cst_324 {dimension_numbers = #tpu.dot_dimension_numbers<[1], [0], [0], [1], [0, 0, 1, 1], [], []>} : vector<2x16xf32>, vector<16x16xf32>, vector<2x16xf32> -> vector<2x16xf32>
    %703 = vector.broadcast %553 : vector<1x16xf32> to vector<2x16xf32>
    %704 = arith.addf %702, %703 : vector<2x16xf32>
    %705 = vector.extract_strided_slice %557 {offsets = [10, 0], sizes = [2, 16], strides = [1, 1]} : vector<16x16xf32> to vector<2x16xf32>
    %706 = arith.addf %705, %700 : vector<2x16xf32>
    %707 = arith.negf %706 : vector<2x16xf32>
    %708 = math.exp %707 : vector<2x16xf32>
    %cst_325 = arith.constant 1.000000e+00 : f32
    %709 = vector.broadcast %cst_325 : f32 to vector<2x16xf32>
    %710 = arith.addf %709, %708 : vector<2x16xf32>
    %711 = arith.divf %709, %710 : vector<2x16xf32>
    %712 = vector.extract_strided_slice %560 {offsets = [10, 0], sizes = [2, 16], strides = [1, 1]} : vector<16x16xf32> to vector<2x16xf32>
    %713 = arith.addf %712, %701 : vector<2x16xf32>
    %714 = arith.negf %713 : vector<2x16xf32>
    %715 = math.exp %714 : vector<2x16xf32>
    %cst_326 = arith.constant 1.000000e+00 : f32
    %716 = vector.broadcast %cst_326 : f32 to vector<2x16xf32>
    %717 = arith.addf %716, %715 : vector<2x16xf32>
    %718 = arith.divf %716, %717 : vector<2x16xf32>
    %719 = vector.extract_strided_slice %563 {offsets = [10, 0], sizes = [2, 16], strides = [1, 1]} : vector<16x16xf32> to vector<2x16xf32>
    %720 = arith.mulf %711, %704 : vector<2x16xf32>
    %721 = arith.addf %719, %720 : vector<2x16xf32>
    %722 = math.tanh %721 : vector<2x16xf32>
    %723 = arith.subf %698, %722 : vector<2x16xf32>
    %724 = arith.mulf %718, %723 : vector<2x16xf32>
    %725 = arith.addf %722, %724 : vector<2x16xf32>
    %c10_327 = arith.constant 10 : index
    %c0_328 = arith.constant 0 : index
    %726 = vector.load %arg8[%c10_327, %c0_328] : memref<16x16xf32, #tpu.memory_space<vmem>>, vector<2x16xf32>
    tpu.vector_store %arg8[%c10_327, %c0_328], %725 {strides = array<i32>} : memref<16x16xf32, #tpu.memory_space<vmem>>, vector<2x16xf32>,
    %cst_329 = arith.constant dense<0.000000e+00> : vector<2x16xf32>
    %727 = tpu.matmul %725, %535, %cst_329 {dimension_numbers = #tpu.dot_dimension_numbers<[1], [0], [0], [1], [0, 0, 1, 1], [], []>} : vector<2x16xf32>, vector<16x16xf32>, vector<2x16xf32> -> vector<2x16xf32>
    %cst_330 = arith.constant dense<0.000000e+00> : vector<2x16xf32>
    %728 = tpu.matmul %725, %537, %cst_330 {dimension_numbers = #tpu.dot_dimension_numbers<[1], [0], [0], [1], [0, 0, 1, 1], [], []>} : vector<2x16xf32>, vector<16x16xf32>, vector<2x16xf32> -> vector<2x16xf32>
    %cst_331 = arith.constant dense<0.000000e+00> : vector<2x16xf32>
    %729 = tpu.matmul %725, %539, %cst_331 {dimension_numbers = #tpu.dot_dimension_numbers<[1], [0], [0], [1], [0, 0, 1, 1], [], []>} : vector<2x16xf32>, vector<16x16xf32>, vector<2x16xf32> -> vector<2x16xf32>
    %730 = vector.broadcast %553 : vector<1x16xf32> to vector<2x16xf32>
    %731 = arith.addf %729, %730 : vector<2x16xf32>
    %732 = vector.extract_strided_slice %557 {offsets = [12, 0], sizes = [2, 16], strides = [1, 1]} : vector<16x16xf32> to vector<2x16xf32>
    %733 = arith.addf %732, %727 : vector<2x16xf32>
    %734 = arith.negf %733 : vector<2x16xf32>
    %735 = math.exp %734 : vector<2x16xf32>
    %cst_332 = arith.constant 1.000000e+00 : f32
    %736 = vector.broadcast %cst_332 : f32 to vector<2x16xf32>
    %737 = arith.addf %736, %735 : vector<2x16xf32>
    %738 = arith.divf %736, %737 : vector<2x16xf32>
    %739 = vector.extract_strided_slice %560 {offsets = [12, 0], sizes = [2, 16], strides = [1, 1]} : vector<16x16xf32> to vector<2x16xf32>
    %740 = arith.addf %739, %728 : vector<2x16xf32>
    %741 = arith.negf %740 : vector<2x16xf32>
    %742 = math.exp %741 : vector<2x16xf32>
    %cst_333 = arith.constant 1.000000e+00 : f32
    %743 = vector.broadcast %cst_333 : f32 to vector<2x16xf32>
    %744 = arith.addf %743, %742 : vector<2x16xf32>
    %745 = arith.divf %743, %744 : vector<2x16xf32>
    %746 = vector.extract_strided_slice %563 {offsets = [12, 0], sizes = [2, 16], strides = [1, 1]} : vector<16x16xf32> to vector<2x16xf32>
    %747 = arith.mulf %738, %731 : vector<2x16xf32>
    %748 = arith.addf %746, %747 : vector<2x16xf32>
    %749 = math.tanh %748 : vector<2x16xf32>
    %750 = arith.subf %725, %749 : vector<2x16xf32>
    %751 = arith.mulf %745, %750 : vector<2x16xf32>
    %752 = arith.addf %749, %751 : vector<2x16xf32>
    %c12_334 = arith.constant 12 : index
    %c0_335 = arith.constant 0 : index
    %753 = vector.load %arg8[%c12_334, %c0_335] : memref<16x16xf32, #tpu.memory_space<vmem>>, vector<2x16xf32>
    tpu.vector_store %arg8[%c12_334, %c0_335], %752 {strides = array<i32>} : memref<16x16xf32, #tpu.memory_space<vmem>>, vector<2x16xf32>,
    %cst_336 = arith.constant dense<0.000000e+00> : vector<2x16xf32>
    %754 = tpu.matmul %752, %535, %cst_336 {dimension_numbers = #tpu.dot_dimension_numbers<[1], [0], [0], [1], [0, 0, 1, 1], [], []>} : vector<2x16xf32>, vector<16x16xf32>, vector<2x16xf32> -> vector<2x16xf32>
    %cst_337 = arith.constant dense<0.000000e+00> : vector<2x16xf32>
    %755 = tpu.matmul %752, %537, %cst_337 {dimension_numbers = #tpu.dot_dimension_numbers<[1], [0], [0], [1], [0, 0, 1, 1], [], []>} : vector<2x16xf32>, vector<16x16xf32>, vector<2x16xf32> -> vector<2x16xf32>
    %cst_338 = arith.constant dense<0.000000e+00> : vector<2x16xf32>
    %756 = tpu.matmul %752, %539, %cst_338 {dimension_numbers = #tpu.dot_dimension_numbers<[1], [0], [0], [1], [0, 0, 1, 1], [], []>} : vector<2x16xf32>, vector<16x16xf32>, vector<2x16xf32> -> vector<2x16xf32>
    %757 = vector.broadcast %553 : vector<1x16xf32> to vector<2x16xf32>
    %758 = arith.addf %756, %757 : vector<2x16xf32>
    %759 = vector.extract_strided_slice %557 {offsets = [14, 0], sizes = [2, 16], strides = [1, 1]} : vector<16x16xf32> to vector<2x16xf32>
    %760 = arith.addf %759, %754 : vector<2x16xf32>
    %761 = arith.negf %760 : vector<2x16xf32>
    %762 = math.exp %761 : vector<2x16xf32>
    %cst_339 = arith.constant 1.000000e+00 : f32
    %763 = vector.broadcast %cst_339 : f32 to vector<2x16xf32>
    %764 = arith.addf %763, %762 : vector<2x16xf32>
    %765 = arith.divf %763, %764 : vector<2x16xf32>
    %766 = vector.extract_strided_slice %560 {offsets = [14, 0], sizes = [2, 16], strides = [1, 1]} : vector<16x16xf32> to vector<2x16xf32>
    %767 = arith.addf %766, %755 : vector<2x16xf32>
    %768 = arith.negf %767 : vector<2x16xf32>
    %769 = math.exp %768 : vector<2x16xf32>
    %cst_340 = arith.constant 1.000000e+00 : f32
    %770 = vector.broadcast %cst_340 : f32 to vector<2x16xf32>
    %771 = arith.addf %770, %769 : vector<2x16xf32>
    %772 = arith.divf %770, %771 : vector<2x16xf32>
    %773 = vector.extract_strided_slice %563 {offsets = [14, 0], sizes = [2, 16], strides = [1, 1]} : vector<16x16xf32> to vector<2x16xf32>
    %774 = arith.mulf %765, %758 : vector<2x16xf32>
    %775 = arith.addf %773, %774 : vector<2x16xf32>
    %776 = math.tanh %775 : vector<2x16xf32>
    %777 = arith.subf %752, %776 : vector<2x16xf32>
    %778 = arith.mulf %772, %777 : vector<2x16xf32>
    %779 = arith.addf %776, %778 : vector<2x16xf32>
    %c14_341 = arith.constant 14 : index
    %c0_342 = arith.constant 0 : index
    %780 = vector.load %arg8[%c14_341, %c0_342] : memref<16x16xf32, #tpu.memory_space<vmem>>, vector<2x16xf32>
    tpu.vector_store %arg8[%c14_341, %c0_342], %779 {strides = array<i32>} : memref<16x16xf32, #tpu.memory_space<vmem>>, vector<2x16xf32>,
    %c3 = arith.constant 3 : index
    %c0_343 = arith.constant 0 : index
    %c0_344 = arith.constant 0 : index
    %c0_345 = arith.constant 0 : index
    %781 = vector.load %arg3[%c3, %c0_343, %c0_344, %c0_345] : memref<4x3x16x16xf32, #tpu.memory_space<vmem>>, vector<1x1x16x16xf32>
    %782 = vector.shape_cast %781 : vector<1x1x16x16xf32> to vector<16x16xf32>
    %c3_346 = arith.constant 3 : index
    %c1_347 = arith.constant 1 : index
    %c0_348 = arith.constant 0 : index
    %c0_349 = arith.constant 0 : index
    %783 = vector.load %arg3[%c3_346, %c1_347, %c0_348, %c0_349] : memref<4x3x16x16xf32, #tpu.memory_space<vmem>>, vector<1x1x16x16xf32>
    %784 = vector.shape_cast %783 : vector<1x1x16x16xf32> to vector<16x16xf32>
    %c3_350 = arith.constant 3 : index
    %c2_351 = arith.constant 2 : index
    %c0_352 = arith.constant 0 : index
    %c0_353 = arith.constant 0 : index
    %785 = vector.load %arg3[%c3_350, %c2_351, %c0_352, %c0_353] : memref<4x3x16x16xf32, #tpu.memory_space<vmem>>, vector<1x1x16x16xf32>
    %786 = vector.shape_cast %785 : vector<1x1x16x16xf32> to vector<16x16xf32>
    %c3_354 = arith.constant 3 : index
    %c0_355 = arith.constant 0 : index
    %c0_356 = arith.constant 0 : index
    %c0_357 = arith.constant 0 : index
    %787 = vector.load %arg4[%c3_354, %c0_355, %c0_356, %c0_357] : memref<4x3x16x16xf32, #tpu.memory_space<vmem>>, vector<1x1x16x16xf32>
    %788 = vector.shape_cast %787 : vector<1x1x16x16xf32> to vector<16x16xf32>
    %c3_358 = arith.constant 3 : index
    %c1_359 = arith.constant 1 : index
    %c0_360 = arith.constant 0 : index
    %c0_361 = arith.constant 0 : index
    %789 = vector.load %arg4[%c3_358, %c1_359, %c0_360, %c0_361] : memref<4x3x16x16xf32, #tpu.memory_space<vmem>>, vector<1x1x16x16xf32>
    %790 = vector.shape_cast %789 : vector<1x1x16x16xf32> to vector<16x16xf32>
    %c3_362 = arith.constant 3 : index
    %c2_363 = arith.constant 2 : index
    %c0_364 = arith.constant 0 : index
    %c0_365 = arith.constant 0 : index
    %791 = vector.load %arg4[%c3_362, %c2_363, %c0_364, %c0_365] : memref<4x3x16x16xf32, #tpu.memory_space<vmem>>, vector<1x1x16x16xf32>
    %792 = vector.shape_cast %791 : vector<1x1x16x16xf32> to vector<16x16xf32>
    %c3_366 = arith.constant 3 : index
    %c0_367 = arith.constant 0 : index
    %c0_368 = arith.constant 0 : index
    %c0_369 = arith.constant 0 : index
    %793 = vector.load %arg5[%c3_366, %c0_367, %c0_368, %c0_369] : memref<4x3x1x16xf32, #tpu.memory_space<vmem>>, vector<1x1x1x16xf32>
    %794 = vector.shape_cast %793 : vector<1x1x1x16xf32> to vector<1x16xf32>
    %c3_370 = arith.constant 3 : index
    %c0_371 = arith.constant 0 : index
    %c0_372 = arith.constant 0 : index
    %c0_373 = arith.constant 0 : index
    %795 = vector.load %arg6[%c3_370, %c0_371, %c0_372, %c0_373] : memref<4x3x1x16xf32, #tpu.memory_space<vmem>>, vector<1x1x1x16xf32>
    %796 = vector.shape_cast %795 : vector<1x1x1x16xf32> to vector<1x16xf32>
    %797 = arith.addf %794, %796 : vector<1x16xf32>
    %c3_374 = arith.constant 3 : index
    %c1_375 = arith.constant 1 : index
    %c0_376 = arith.constant 0 : index
    %c0_377 = arith.constant 0 : index
    %798 = vector.load %arg5[%c3_374, %c1_375, %c0_376, %c0_377] : memref<4x3x1x16xf32, #tpu.memory_space<vmem>>, vector<1x1x1x16xf32>
    %799 = vector.shape_cast %798 : vector<1x1x1x16xf32> to vector<1x16xf32>
    %c3_378 = arith.constant 3 : index
    %c1_379 = arith.constant 1 : index
    %c0_380 = arith.constant 0 : index
    %c0_381 = arith.constant 0 : index
    %800 = vector.load %arg6[%c3_378, %c1_379, %c0_380, %c0_381] : memref<4x3x1x16xf32, #tpu.memory_space<vmem>>, vector<1x1x1x16xf32>
    %801 = vector.shape_cast %800 : vector<1x1x1x16xf32> to vector<1x16xf32>
    %802 = arith.addf %799, %801 : vector<1x16xf32>
    %c3_382 = arith.constant 3 : index
    %c2_383 = arith.constant 2 : index
    %c0_384 = arith.constant 0 : index
    %c0_385 = arith.constant 0 : index
    %803 = vector.load %arg5[%c3_382, %c2_383, %c0_384, %c0_385] : memref<4x3x1x16xf32, #tpu.memory_space<vmem>>, vector<1x1x1x16xf32>
    %804 = vector.shape_cast %803 : vector<1x1x1x16xf32> to vector<1x16xf32>
    %c3_386 = arith.constant 3 : index
    %c2_387 = arith.constant 2 : index
    %c0_388 = arith.constant 0 : index
    %c0_389 = arith.constant 0 : index
    %805 = vector.load %arg6[%c3_386, %c2_387, %c0_388, %c0_389] : memref<4x3x1x16xf32, #tpu.memory_space<vmem>>, vector<1x1x1x16xf32>
    %806 = vector.shape_cast %805 : vector<1x1x1x16xf32> to vector<1x16xf32>
    %c0_390 = arith.constant 0 : index
    %c0_391 = arith.constant 0 : index
    %807 = vector.load %arg8[%c0_390, %c0_391] : memref<16x16xf32, #tpu.memory_space<vmem>>, vector<16x16xf32>
    %cst_392 = arith.constant dense<0.000000e+00> : vector<16x16xf32>
    %808 = tpu.matmul %807, %782, %cst_392 {dimension_numbers = #tpu.dot_dimension_numbers<[1], [0], [0], [1], [0, 0, 1, 1], [], []>} : vector<16x16xf32>, vector<16x16xf32>, vector<16x16xf32> -> vector<16x16xf32>
    %809 = vector.broadcast %797 : vector<1x16xf32> to vector<16x16xf32>
    %810 = arith.addf %808, %809 : vector<16x16xf32>
    %cst_393 = arith.constant dense<0.000000e+00> : vector<16x16xf32>
    %811 = tpu.matmul %807, %784, %cst_393 {dimension_numbers = #tpu.dot_dimension_numbers<[1], [0], [0], [1], [0, 0, 1, 1], [], []>} : vector<16x16xf32>, vector<16x16xf32>, vector<16x16xf32> -> vector<16x16xf32>
    %812 = vector.broadcast %802 : vector<1x16xf32> to vector<16x16xf32>
    %813 = arith.addf %811, %812 : vector<16x16xf32>
    %cst_394 = arith.constant dense<0.000000e+00> : vector<16x16xf32>
    %814 = tpu.matmul %807, %786, %cst_394 {dimension_numbers = #tpu.dot_dimension_numbers<[1], [0], [0], [1], [0, 0, 1, 1], [], []>} : vector<16x16xf32>, vector<16x16xf32>, vector<16x16xf32> -> vector<16x16xf32>
    %815 = vector.broadcast %804 : vector<1x16xf32> to vector<16x16xf32>
    %816 = arith.addf %814, %815 : vector<16x16xf32>
    %cst_395 = arith.constant 0.000000e+00 : f32
    %817 = vector.broadcast %cst_395 : f32 to vector<2x16xf32>
    %cst_396 = arith.constant dense<0.000000e+00> : vector<2x16xf32>
    %818 = tpu.matmul %817, %788, %cst_396 {dimension_numbers = #tpu.dot_dimension_numbers<[1], [0], [0], [1], [0, 0, 1, 1], [], []>} : vector<2x16xf32>, vector<16x16xf32>, vector<2x16xf32> -> vector<2x16xf32>
    %cst_397 = arith.constant dense<0.000000e+00> : vector<2x16xf32>
    %819 = tpu.matmul %817, %790, %cst_397 {dimension_numbers = #tpu.dot_dimension_numbers<[1], [0], [0], [1], [0, 0, 1, 1], [], []>} : vector<2x16xf32>, vector<16x16xf32>, vector<2x16xf32> -> vector<2x16xf32>
    %cst_398 = arith.constant dense<0.000000e+00> : vector<2x16xf32>
    %820 = tpu.matmul %817, %792, %cst_398 {dimension_numbers = #tpu.dot_dimension_numbers<[1], [0], [0], [1], [0, 0, 1, 1], [], []>} : vector<2x16xf32>, vector<16x16xf32>, vector<2x16xf32> -> vector<2x16xf32>
    %821 = vector.broadcast %806 : vector<1x16xf32> to vector<2x16xf32>
    %822 = arith.addf %820, %821 : vector<2x16xf32>
    %823 = vector.extract_strided_slice %810 {offsets = [0, 0], sizes = [2, 16], strides = [1, 1]} : vector<16x16xf32> to vector<2x16xf32>
    %824 = arith.addf %823, %818 : vector<2x16xf32>
    %825 = arith.negf %824 : vector<2x16xf32>
    %826 = math.exp %825 : vector<2x16xf32>
    %cst_399 = arith.constant 1.000000e+00 : f32
    %827 = vector.broadcast %cst_399 : f32 to vector<2x16xf32>
    %828 = arith.addf %827, %826 : vector<2x16xf32>
    %829 = arith.divf %827, %828 : vector<2x16xf32>
    %830 = vector.extract_strided_slice %813 {offsets = [0, 0], sizes = [2, 16], strides = [1, 1]} : vector<16x16xf32> to vector<2x16xf32>
    %831 = arith.addf %830, %819 : vector<2x16xf32>
    %832 = arith.negf %831 : vector<2x16xf32>
    %833 = math.exp %832 : vector<2x16xf32>
    %cst_400 = arith.constant 1.000000e+00 : f32
    %834 = vector.broadcast %cst_400 : f32 to vector<2x16xf32>
    %835 = arith.addf %834, %833 : vector<2x16xf32>
    %836 = arith.divf %834, %835 : vector<2x16xf32>
    %837 = vector.extract_strided_slice %816 {offsets = [0, 0], sizes = [2, 16], strides = [1, 1]} : vector<16x16xf32> to vector<2x16xf32>
    %838 = arith.mulf %829, %822 : vector<2x16xf32>
    %839 = arith.addf %837, %838 : vector<2x16xf32>
    %840 = math.tanh %839 : vector<2x16xf32>
    %841 = arith.subf %817, %840 : vector<2x16xf32>
    %842 = arith.mulf %836, %841 : vector<2x16xf32>
    %843 = arith.addf %840, %842 : vector<2x16xf32>
    %844 = math.tanh %843 : vector<2x16xf32>
    %c0_401 = arith.constant 0 : index
    %c0_402 = arith.constant 0 : index
    %845 = vector.load %arg7[%c0_401, %c0_402] : memref<2x128xf32, #tpu.memory_space<vmem>>, vector<2x16xf32>
    tpu.vector_store %arg7[%c0_401, %c0_402], %844 {strides = array<i32>} : memref<2x128xf32, #tpu.memory_space<vmem>>, vector<2x16xf32>,
    %cst_403 = arith.constant dense<0.000000e+00> : vector<2x16xf32>
    %846 = tpu.matmul %843, %788, %cst_403 {dimension_numbers = #tpu.dot_dimension_numbers<[1], [0], [0], [1], [0, 0, 1, 1], [], []>} : vector<2x16xf32>, vector<16x16xf32>, vector<2x16xf32> -> vector<2x16xf32>
    %cst_404 = arith.constant dense<0.000000e+00> : vector<2x16xf32>
    %847 = tpu.matmul %843, %790, %cst_404 {dimension_numbers = #tpu.dot_dimension_numbers<[1], [0], [0], [1], [0, 0, 1, 1], [], []>} : vector<2x16xf32>, vector<16x16xf32>, vector<2x16xf32> -> vector<2x16xf32>
    %cst_405 = arith.constant dense<0.000000e+00> : vector<2x16xf32>
    %848 = tpu.matmul %843, %792, %cst_405 {dimension_numbers = #tpu.dot_dimension_numbers<[1], [0], [0], [1], [0, 0, 1, 1], [], []>} : vector<2x16xf32>, vector<16x16xf32>, vector<2x16xf32> -> vector<2x16xf32>
    %849 = vector.broadcast %806 : vector<1x16xf32> to vector<2x16xf32>
    %850 = arith.addf %848, %849 : vector<2x16xf32>
    %851 = vector.extract_strided_slice %810 {offsets = [2, 0], sizes = [2, 16], strides = [1, 1]} : vector<16x16xf32> to vector<2x16xf32>
    %852 = arith.addf %851, %846 : vector<2x16xf32>
    %853 = arith.negf %852 : vector<2x16xf32>
    %854 = math.exp %853 : vector<2x16xf32>
    %cst_406 = arith.constant 1.000000e+00 : f32
    %855 = vector.broadcast %cst_406 : f32 to vector<2x16xf32>
    %856 = arith.addf %855, %854 : vector<2x16xf32>
    %857 = arith.divf %855, %856 : vector<2x16xf32>
    %858 = vector.extract_strided_slice %813 {offsets = [2, 0], sizes = [2, 16], strides = [1, 1]} : vector<16x16xf32> to vector<2x16xf32>
    %859 = arith.addf %858, %847 : vector<2x16xf32>
    %860 = arith.negf %859 : vector<2x16xf32>
    %861 = math.exp %860 : vector<2x16xf32>
    %cst_407 = arith.constant 1.000000e+00 : f32
    %862 = vector.broadcast %cst_407 : f32 to vector<2x16xf32>
    %863 = arith.addf %862, %861 : vector<2x16xf32>
    %864 = arith.divf %862, %863 : vector<2x16xf32>
    %865 = vector.extract_strided_slice %816 {offsets = [2, 0], sizes = [2, 16], strides = [1, 1]} : vector<16x16xf32> to vector<2x16xf32>
    %866 = arith.mulf %857, %850 : vector<2x16xf32>
    %867 = arith.addf %865, %866 : vector<2x16xf32>
    %868 = math.tanh %867 : vector<2x16xf32>
    %869 = arith.subf %843, %868 : vector<2x16xf32>
    %870 = arith.mulf %864, %869 : vector<2x16xf32>
    %871 = arith.addf %868, %870 : vector<2x16xf32>
    %872 = math.tanh %871 : vector<2x16xf32>
    %c0_408 = arith.constant 0 : index
    %c16 = arith.constant 16 : index
    %873 = vector.load %arg7[%c0_408, %c16] : memref<2x128xf32, #tpu.memory_space<vmem>>, vector<2x16xf32>
    tpu.vector_store %arg7[%c0_408, %c16], %872 {strides = array<i32>} : memref<2x128xf32, #tpu.memory_space<vmem>>, vector<2x16xf32>,
    %cst_409 = arith.constant dense<0.000000e+00> : vector<2x16xf32>
    %874 = tpu.matmul %871, %788, %cst_409 {dimension_numbers = #tpu.dot_dimension_numbers<[1], [0], [0], [1], [0, 0, 1, 1], [], []>} : vector<2x16xf32>, vector<16x16xf32>, vector<2x16xf32> -> vector<2x16xf32>
    %cst_410 = arith.constant dense<0.000000e+00> : vector<2x16xf32>
    %875 = tpu.matmul %871, %790, %cst_410 {dimension_numbers = #tpu.dot_dimension_numbers<[1], [0], [0], [1], [0, 0, 1, 1], [], []>} : vector<2x16xf32>, vector<16x16xf32>, vector<2x16xf32> -> vector<2x16xf32>
    %cst_411 = arith.constant dense<0.000000e+00> : vector<2x16xf32>
    %876 = tpu.matmul %871, %792, %cst_411 {dimension_numbers = #tpu.dot_dimension_numbers<[1], [0], [0], [1], [0, 0, 1, 1], [], []>} : vector<2x16xf32>, vector<16x16xf32>, vector<2x16xf32> -> vector<2x16xf32>
    %877 = vector.broadcast %806 : vector<1x16xf32> to vector<2x16xf32>
    %878 = arith.addf %876, %877 : vector<2x16xf32>
    %879 = vector.extract_strided_slice %810 {offsets = [4, 0], sizes = [2, 16], strides = [1, 1]} : vector<16x16xf32> to vector<2x16xf32>
    %880 = arith.addf %879, %874 : vector<2x16xf32>
    %881 = arith.negf %880 : vector<2x16xf32>
    %882 = math.exp %881 : vector<2x16xf32>
    %cst_412 = arith.constant 1.000000e+00 : f32
    %883 = vector.broadcast %cst_412 : f32 to vector<2x16xf32>
    %884 = arith.addf %883, %882 : vector<2x16xf32>
    %885 = arith.divf %883, %884 : vector<2x16xf32>
    %886 = vector.extract_strided_slice %813 {offsets = [4, 0], sizes = [2, 16], strides = [1, 1]} : vector<16x16xf32> to vector<2x16xf32>
    %887 = arith.addf %886, %875 : vector<2x16xf32>
    %888 = arith.negf %887 : vector<2x16xf32>
    %889 = math.exp %888 : vector<2x16xf32>
    %cst_413 = arith.constant 1.000000e+00 : f32
    %890 = vector.broadcast %cst_413 : f32 to vector<2x16xf32>
    %891 = arith.addf %890, %889 : vector<2x16xf32>
    %892 = arith.divf %890, %891 : vector<2x16xf32>
    %893 = vector.extract_strided_slice %816 {offsets = [4, 0], sizes = [2, 16], strides = [1, 1]} : vector<16x16xf32> to vector<2x16xf32>
    %894 = arith.mulf %885, %878 : vector<2x16xf32>
    %895 = arith.addf %893, %894 : vector<2x16xf32>
    %896 = math.tanh %895 : vector<2x16xf32>
    %897 = arith.subf %871, %896 : vector<2x16xf32>
    %898 = arith.mulf %892, %897 : vector<2x16xf32>
    %899 = arith.addf %896, %898 : vector<2x16xf32>
    %900 = math.tanh %899 : vector<2x16xf32>
    %c0_414 = arith.constant 0 : index
    %c32 = arith.constant 32 : index
    %901 = vector.load %arg7[%c0_414, %c32] : memref<2x128xf32, #tpu.memory_space<vmem>>, vector<2x16xf32>
    tpu.vector_store %arg7[%c0_414, %c32], %900 {strides = array<i32>} : memref<2x128xf32, #tpu.memory_space<vmem>>, vector<2x16xf32>,
    %cst_415 = arith.constant dense<0.000000e+00> : vector<2x16xf32>
    %902 = tpu.matmul %899, %788, %cst_415 {dimension_numbers = #tpu.dot_dimension_numbers<[1], [0], [0], [1], [0, 0, 1, 1], [], []>} : vector<2x16xf32>, vector<16x16xf32>, vector<2x16xf32> -> vector<2x16xf32>
    %cst_416 = arith.constant dense<0.000000e+00> : vector<2x16xf32>
    %903 = tpu.matmul %899, %790, %cst_416 {dimension_numbers = #tpu.dot_dimension_numbers<[1], [0], [0], [1], [0, 0, 1, 1], [], []>} : vector<2x16xf32>, vector<16x16xf32>, vector<2x16xf32> -> vector<2x16xf32>
    %cst_417 = arith.constant dense<0.000000e+00> : vector<2x16xf32>
    %904 = tpu.matmul %899, %792, %cst_417 {dimension_numbers = #tpu.dot_dimension_numbers<[1], [0], [0], [1], [0, 0, 1, 1], [], []>} : vector<2x16xf32>, vector<16x16xf32>, vector<2x16xf32> -> vector<2x16xf32>
    %905 = vector.broadcast %806 : vector<1x16xf32> to vector<2x16xf32>
    %906 = arith.addf %904, %905 : vector<2x16xf32>
    %907 = vector.extract_strided_slice %810 {offsets = [6, 0], sizes = [2, 16], strides = [1, 1]} : vector<16x16xf32> to vector<2x16xf32>
    %908 = arith.addf %907, %902 : vector<2x16xf32>
    %909 = arith.negf %908 : vector<2x16xf32>
    %910 = math.exp %909 : vector<2x16xf32>
    %cst_418 = arith.constant 1.000000e+00 : f32
    %911 = vector.broadcast %cst_418 : f32 to vector<2x16xf32>
    %912 = arith.addf %911, %910 : vector<2x16xf32>
    %913 = arith.divf %911, %912 : vector<2x16xf32>
    %914 = vector.extract_strided_slice %813 {offsets = [6, 0], sizes = [2, 16], strides = [1, 1]} : vector<16x16xf32> to vector<2x16xf32>
    %915 = arith.addf %914, %903 : vector<2x16xf32>
    %916 = arith.negf %915 : vector<2x16xf32>
    %917 = math.exp %916 : vector<2x16xf32>
    %cst_419 = arith.constant 1.000000e+00 : f32
    %918 = vector.broadcast %cst_419 : f32 to vector<2x16xf32>
    %919 = arith.addf %918, %917 : vector<2x16xf32>
    %920 = arith.divf %918, %919 : vector<2x16xf32>
    %921 = vector.extract_strided_slice %816 {offsets = [6, 0], sizes = [2, 16], strides = [1, 1]} : vector<16x16xf32> to vector<2x16xf32>
    %922 = arith.mulf %913, %906 : vector<2x16xf32>
    %923 = arith.addf %921, %922 : vector<2x16xf32>
    %924 = math.tanh %923 : vector<2x16xf32>
    %925 = arith.subf %899, %924 : vector<2x16xf32>
    %926 = arith.mulf %920, %925 : vector<2x16xf32>
    %927 = arith.addf %924, %926 : vector<2x16xf32>
    %928 = math.tanh %927 : vector<2x16xf32>
    %c0_420 = arith.constant 0 : index
    %c48 = arith.constant 48 : index
    %929 = vector.load %arg7[%c0_420, %c48] : memref<2x128xf32, #tpu.memory_space<vmem>>, vector<2x16xf32>
    tpu.vector_store %arg7[%c0_420, %c48], %928 {strides = array<i32>} : memref<2x128xf32, #tpu.memory_space<vmem>>, vector<2x16xf32>,
    %cst_421 = arith.constant dense<0.000000e+00> : vector<2x16xf32>
    %930 = tpu.matmul %927, %788, %cst_421 {dimension_numbers = #tpu.dot_dimension_numbers<[1], [0], [0], [1], [0, 0, 1, 1], [], []>} : vector<2x16xf32>, vector<16x16xf32>, vector<2x16xf32> -> vector<2x16xf32>
    %cst_422 = arith.constant dense<0.000000e+00> : vector<2x16xf32>
    %931 = tpu.matmul %927, %790, %cst_422 {dimension_numbers = #tpu.dot_dimension_numbers<[1], [0], [0], [1], [0, 0, 1, 1], [], []>} : vector<2x16xf32>, vector<16x16xf32>, vector<2x16xf32> -> vector<2x16xf32>
    %cst_423 = arith.constant dense<0.000000e+00> : vector<2x16xf32>
    %932 = tpu.matmul %927, %792, %cst_423 {dimension_numbers = #tpu.dot_dimension_numbers<[1], [0], [0], [1], [0, 0, 1, 1], [], []>} : vector<2x16xf32>, vector<16x16xf32>, vector<2x16xf32> -> vector<2x16xf32>
    %933 = vector.broadcast %806 : vector<1x16xf32> to vector<2x16xf32>
    %934 = arith.addf %932, %933 : vector<2x16xf32>
    %935 = vector.extract_strided_slice %810 {offsets = [8, 0], sizes = [2, 16], strides = [1, 1]} : vector<16x16xf32> to vector<2x16xf32>
    %936 = arith.addf %935, %930 : vector<2x16xf32>
    %937 = arith.negf %936 : vector<2x16xf32>
    %938 = math.exp %937 : vector<2x16xf32>
    %cst_424 = arith.constant 1.000000e+00 : f32
    %939 = vector.broadcast %cst_424 : f32 to vector<2x16xf32>
    %940 = arith.addf %939, %938 : vector<2x16xf32>
    %941 = arith.divf %939, %940 : vector<2x16xf32>
    %942 = vector.extract_strided_slice %813 {offsets = [8, 0], sizes = [2, 16], strides = [1, 1]} : vector<16x16xf32> to vector<2x16xf32>
    %943 = arith.addf %942, %931 : vector<2x16xf32>
    %944 = arith.negf %943 : vector<2x16xf32>
    %945 = math.exp %944 : vector<2x16xf32>
    %cst_425 = arith.constant 1.000000e+00 : f32
    %946 = vector.broadcast %cst_425 : f32 to vector<2x16xf32>
    %947 = arith.addf %946, %945 : vector<2x16xf32>
    %948 = arith.divf %946, %947 : vector<2x16xf32>
    %949 = vector.extract_strided_slice %816 {offsets = [8, 0], sizes = [2, 16], strides = [1, 1]} : vector<16x16xf32> to vector<2x16xf32>
    %950 = arith.mulf %941, %934 : vector<2x16xf32>
    %951 = arith.addf %949, %950 : vector<2x16xf32>
    %952 = math.tanh %951 : vector<2x16xf32>
    %953 = arith.subf %927, %952 : vector<2x16xf32>
    %954 = arith.mulf %948, %953 : vector<2x16xf32>
    %955 = arith.addf %952, %954 : vector<2x16xf32>
    %956 = math.tanh %955 : vector<2x16xf32>
    %c0_426 = arith.constant 0 : index
    %c64 = arith.constant 64 : index
    %957 = vector.load %arg7[%c0_426, %c64] : memref<2x128xf32, #tpu.memory_space<vmem>>, vector<2x16xf32>
    tpu.vector_store %arg7[%c0_426, %c64], %956 {strides = array<i32>} : memref<2x128xf32, #tpu.memory_space<vmem>>, vector<2x16xf32>,
    %cst_427 = arith.constant dense<0.000000e+00> : vector<2x16xf32>
    %958 = tpu.matmul %955, %788, %cst_427 {dimension_numbers = #tpu.dot_dimension_numbers<[1], [0], [0], [1], [0, 0, 1, 1], [], []>} : vector<2x16xf32>, vector<16x16xf32>, vector<2x16xf32> -> vector<2x16xf32>
    %cst_428 = arith.constant dense<0.000000e+00> : vector<2x16xf32>
    %959 = tpu.matmul %955, %790, %cst_428 {dimension_numbers = #tpu.dot_dimension_numbers<[1], [0], [0], [1], [0, 0, 1, 1], [], []>} : vector<2x16xf32>, vector<16x16xf32>, vector<2x16xf32> -> vector<2x16xf32>
    %cst_429 = arith.constant dense<0.000000e+00> : vector<2x16xf32>
    %960 = tpu.matmul %955, %792, %cst_429 {dimension_numbers = #tpu.dot_dimension_numbers<[1], [0], [0], [1], [0, 0, 1, 1], [], []>} : vector<2x16xf32>, vector<16x16xf32>, vector<2x16xf32> -> vector<2x16xf32>
    %961 = vector.broadcast %806 : vector<1x16xf32> to vector<2x16xf32>
    %962 = arith.addf %960, %961 : vector<2x16xf32>
    %963 = vector.extract_strided_slice %810 {offsets = [10, 0], sizes = [2, 16], strides = [1, 1]} : vector<16x16xf32> to vector<2x16xf32>
    %964 = arith.addf %963, %958 : vector<2x16xf32>
    %965 = arith.negf %964 : vector<2x16xf32>
    %966 = math.exp %965 : vector<2x16xf32>
    %cst_430 = arith.constant 1.000000e+00 : f32
    %967 = vector.broadcast %cst_430 : f32 to vector<2x16xf32>
    %968 = arith.addf %967, %966 : vector<2x16xf32>
    %969 = arith.divf %967, %968 : vector<2x16xf32>
    %970 = vector.extract_strided_slice %813 {offsets = [10, 0], sizes = [2, 16], strides = [1, 1]} : vector<16x16xf32> to vector<2x16xf32>
    %971 = arith.addf %970, %959 : vector<2x16xf32>
    %972 = arith.negf %971 : vector<2x16xf32>
    %973 = math.exp %972 : vector<2x16xf32>
    %cst_431 = arith.constant 1.000000e+00 : f32
    %974 = vector.broadcast %cst_431 : f32 to vector<2x16xf32>
    %975 = arith.addf %974, %973 : vector<2x16xf32>
    %976 = arith.divf %974, %975 : vector<2x16xf32>
    %977 = vector.extract_strided_slice %816 {offsets = [10, 0], sizes = [2, 16], strides = [1, 1]} : vector<16x16xf32> to vector<2x16xf32>
    %978 = arith.mulf %969, %962 : vector<2x16xf32>
    %979 = arith.addf %977, %978 : vector<2x16xf32>
    %980 = math.tanh %979 : vector<2x16xf32>
    %981 = arith.subf %955, %980 : vector<2x16xf32>
    %982 = arith.mulf %976, %981 : vector<2x16xf32>
    %983 = arith.addf %980, %982 : vector<2x16xf32>
    %984 = math.tanh %983 : vector<2x16xf32>
    %c0_432 = arith.constant 0 : index
    %c80 = arith.constant 80 : index
    %985 = vector.load %arg7[%c0_432, %c80] : memref<2x128xf32, #tpu.memory_space<vmem>>, vector<2x16xf32>
    tpu.vector_store %arg7[%c0_432, %c80], %984 {strides = array<i32>} : memref<2x128xf32, #tpu.memory_space<vmem>>, vector<2x16xf32>,
    %cst_433 = arith.constant dense<0.000000e+00> : vector<2x16xf32>
    %986 = tpu.matmul %983, %788, %cst_433 {dimension_numbers = #tpu.dot_dimension_numbers<[1], [0], [0], [1], [0, 0, 1, 1], [], []>} : vector<2x16xf32>, vector<16x16xf32>, vector<2x16xf32> -> vector<2x16xf32>
    %cst_434 = arith.constant dense<0.000000e+00> : vector<2x16xf32>
    %987 = tpu.matmul %983, %790, %cst_434 {dimension_numbers = #tpu.dot_dimension_numbers<[1], [0], [0], [1], [0, 0, 1, 1], [], []>} : vector<2x16xf32>, vector<16x16xf32>, vector<2x16xf32> -> vector<2x16xf32>
    %cst_435 = arith.constant dense<0.000000e+00> : vector<2x16xf32>
    %988 = tpu.matmul %983, %792, %cst_435 {dimension_numbers = #tpu.dot_dimension_numbers<[1], [0], [0], [1], [0, 0, 1, 1], [], []>} : vector<2x16xf32>, vector<16x16xf32>, vector<2x16xf32> -> vector<2x16xf32>
    %989 = vector.broadcast %806 : vector<1x16xf32> to vector<2x16xf32>
    %990 = arith.addf %988, %989 : vector<2x16xf32>
    %991 = vector.extract_strided_slice %810 {offsets = [12, 0], sizes = [2, 16], strides = [1, 1]} : vector<16x16xf32> to vector<2x16xf32>
    %992 = arith.addf %991, %986 : vector<2x16xf32>
    %993 = arith.negf %992 : vector<2x16xf32>
    %994 = math.exp %993 : vector<2x16xf32>
    %cst_436 = arith.constant 1.000000e+00 : f32
    %995 = vector.broadcast %cst_436 : f32 to vector<2x16xf32>
    %996 = arith.addf %995, %994 : vector<2x16xf32>
    %997 = arith.divf %995, %996 : vector<2x16xf32>
    %998 = vector.extract_strided_slice %813 {offsets = [12, 0], sizes = [2, 16], strides = [1, 1]} : vector<16x16xf32> to vector<2x16xf32>
    %999 = arith.addf %998, %987 : vector<2x16xf32>
    %1000 = arith.negf %999 : vector<2x16xf32>
    %1001 = math.exp %1000 : vector<2x16xf32>
    %cst_437 = arith.constant 1.000000e+00 : f32
    %1002 = vector.broadcast %cst_437 : f32 to vector<2x16xf32>
    %1003 = arith.addf %1002, %1001 : vector<2x16xf32>
    %1004 = arith.divf %1002, %1003 : vector<2x16xf32>
    %1005 = vector.extract_strided_slice %816 {offsets = [12, 0], sizes = [2, 16], strides = [1, 1]} : vector<16x16xf32> to vector<2x16xf32>
    %1006 = arith.mulf %997, %990 : vector<2x16xf32>
    %1007 = arith.addf %1005, %1006 : vector<2x16xf32>
    %1008 = math.tanh %1007 : vector<2x16xf32>
    %1009 = arith.subf %983, %1008 : vector<2x16xf32>
    %1010 = arith.mulf %1004, %1009 : vector<2x16xf32>
    %1011 = arith.addf %1008, %1010 : vector<2x16xf32>
    %1012 = math.tanh %1011 : vector<2x16xf32>
    %c0_438 = arith.constant 0 : index
    %c96 = arith.constant 96 : index
    %1013 = vector.load %arg7[%c0_438, %c96] : memref<2x128xf32, #tpu.memory_space<vmem>>, vector<2x16xf32>
    tpu.vector_store %arg7[%c0_438, %c96], %1012 {strides = array<i32>} : memref<2x128xf32, #tpu.memory_space<vmem>>, vector<2x16xf32>,
    %cst_439 = arith.constant dense<0.000000e+00> : vector<2x16xf32>
    %1014 = tpu.matmul %1011, %788, %cst_439 {dimension_numbers = #tpu.dot_dimension_numbers<[1], [0], [0], [1], [0, 0, 1, 1], [], []>} : vector<2x16xf32>, vector<16x16xf32>, vector<2x16xf32> -> vector<2x16xf32>
    %cst_440 = arith.constant dense<0.000000e+00> : vector<2x16xf32>
    %1015 = tpu.matmul %1011, %790, %cst_440 {dimension_numbers = #tpu.dot_dimension_numbers<[1], [0], [0], [1], [0, 0, 1, 1], [], []>} : vector<2x16xf32>, vector<16x16xf32>, vector<2x16xf32> -> vector<2x16xf32>
    %cst_441 = arith.constant dense<0.000000e+00> : vector<2x16xf32>
    %1016 = tpu.matmul %1011, %792, %cst_441 {dimension_numbers = #tpu.dot_dimension_numbers<[1], [0], [0], [1], [0, 0, 1, 1], [], []>} : vector<2x16xf32>, vector<16x16xf32>, vector<2x16xf32> -> vector<2x16xf32>
    %1017 = vector.broadcast %806 : vector<1x16xf32> to vector<2x16xf32>
    %1018 = arith.addf %1016, %1017 : vector<2x16xf32>
    %1019 = vector.extract_strided_slice %810 {offsets = [14, 0], sizes = [2, 16], strides = [1, 1]} : vector<16x16xf32> to vector<2x16xf32>
    %1020 = arith.addf %1019, %1014 : vector<2x16xf32>
    %1021 = arith.negf %1020 : vector<2x16xf32>
    %1022 = math.exp %1021 : vector<2x16xf32>
    %cst_442 = arith.constant 1.000000e+00 : f32
    %1023 = vector.broadcast %cst_442 : f32 to vector<2x16xf32>
    %1024 = arith.addf %1023, %1022 : vector<2x16xf32>
    %1025 = arith.divf %1023, %1024 : vector<2x16xf32>
    %1026 = vector.extract_strided_slice %813 {offsets = [14, 0], sizes = [2, 16], strides = [1, 1]} : vector<16x16xf32> to vector<2x16xf32>
    %1027 = arith.addf %1026, %1015 : vector<2x16xf32>
    %1028 = arith.negf %1027 : vector<2x16xf32>
    %1029 = math.exp %1028 : vector<2x16xf32>
    %cst_443 = arith.constant 1.000000e+00 : f32
    %1030 = vector.broadcast %cst_443 : f32 to vector<2x16xf32>
    %1031 = arith.addf %1030, %1029 : vector<2x16xf32>
    %1032 = arith.divf %1030, %1031 : vector<2x16xf32>
    %1033 = vector.extract_strided_slice %816 {offsets = [14, 0], sizes = [2, 16], strides = [1, 1]} : vector<16x16xf32> to vector<2x16xf32>
    %1034 = arith.mulf %1025, %1018 : vector<2x16xf32>
    %1035 = arith.addf %1033, %1034 : vector<2x16xf32>
    %1036 = math.tanh %1035 : vector<2x16xf32>
    %1037 = arith.subf %1011, %1036 : vector<2x16xf32>
    %1038 = arith.mulf %1032, %1037 : vector<2x16xf32>
    %1039 = arith.addf %1036, %1038 : vector<2x16xf32>
    %1040 = math.tanh %1039 : vector<2x16xf32>
    %c0_444 = arith.constant 0 : index
    %c112 = arith.constant 112 : index
    %1041 = vector.load %arg7[%c0_444, %c112] : memref<2x128xf32, #tpu.memory_space<vmem>>, vector<2x16xf32>
    tpu.vector_store %arg7[%c0_444, %c112], %1040 {strides = array<i32>} : memref<2x128xf32, #tpu.memory_space<vmem>>, vector<2x16xf32>,
    return
  }
}

</mosaic_0001>

<llo_original>
// kernel: tpu_custom_call.1
$region0: #{tpu_custom_call.1}
  #allocation0 [shape = 'u32[]', space=smem, size = 0x4, offset = 0x4, fixed_abs, tag = 'smem constant byte address 0x4 - core index']
  #allocation1 [shape = 'u32[144,128]{1,0:T(1,128)}', space=vmem, size = 0x12000, scoped, tag = 'internal scratch']
  #allocation2 [shape = 'f32[16,16]{1,0:T(8,128)}', space=vmem, size = 0x2000, scoped, tag = 'scratch operand']
  %s0 = inlined_call_operand.hbm [shape: f32[2,32], index: 0, kind: input, shape index: {}]
  %s1 = inlined_call_operand.hbm [shape: f32[32,128], index: 1, kind: input, shape index: {}]
  %s2 = inlined_call_operand.vmem [shape: f32[1,128], index: 2, kind: input, shape index: {}]
  %s3 = inlined_call_operand.hbm [shape: f32[4,3,16,16], index: 3, kind: input, shape index: {}]
  %s4 = inlined_call_operand.hbm [shape: f32[4,3,16,16], index: 4, kind: input, shape index: {}]
  %s5 = inlined_call_operand.hbm [shape: f32[4,3,1,16], index: 5, kind: input, shape index: {}]
  %s6 = inlined_call_operand.hbm [shape: f32[4,3,1,16], index: 6, kind: input, shape index: {}]
  %s7 = inlined_call_operand.hbm [shape: f32[2,128], index: 7, kind: output, shape index: {}]
  %s8 = sld [smem:[#allocation0]]
  $region62: #{tpu_custom_call.1} parent=0
    _
  %s10 = ssub.s32 1, %s8
  %s11 = scalar_select 0, %s10, %s8
  $region1: #{tpu_custom_call.1} parent=0
    #allocation3 [shape = 'u8[1024]{0}', space=vmem, size = 0x400, scoped, tag = 'input window, operand 0, single buffered']
    #allocation4 [shape = 's32[1]{0}', space=sflag, size = 0x4, scoped, tag = 'scoped memory for tpu_custom_call.1']
    #allocation5 [shape = 's32[1]{0}', space=sflag, size = 0x4, scoped, tag = 'scoped memory for tpu_custom_call.1']
    #allocation6 [shape = 'u8[16384]{0}', space=vmem, size = 0x4000, scoped, tag = 'input window, operand 1, single buffered']
    #allocation7 [shape = 's32[1]{0}', space=sflag, size = 0x4, scoped, tag = 'scoped memory for tpu_custom_call.1']
    #allocation8 [shape = 'u8[98304]{0}', space=vmem, size = 0x18000, scoped, tag = 'input window, operand 3, single buffered']
    #allocation9 [shape = 'u8[98304]{0}', space=vmem, size = 0x18000, scoped, tag = 'input window, operand 4, single buffered']
    #allocation10 [shape = 's32[1]{0}', space=sflag, size = 0x4, scoped, tag = 'scoped memory for tpu_custom_call.1']
    #allocation11 [shape = 'u8[6144]{0}', space=vmem, size = 0x1800, scoped, tag = 'input window, operand 5, single buffered']
    #allocation12 [shape = 'u8[6144]{0}', space=vmem, size = 0x1800, scoped, tag = 'input window, operand 6, single buffered']
    #allocation13 [shape = 's32[1]{0}', space=sflag, size = 0x4, scoped, tag = 'scoped memory for tpu_custom_call.1']
    #allocation14 [shape = 'u8[1024]{0}', space=vmem, size = 0x400, scoped, tag = 'output window, operand 0, single buffered']
    %12 = vsyncpa [#allocation4], 0
    %13 = vsyncpa [#allocation7], 0
    %14 = vsyncpa [#allocation10], 0
    %15 = vsyncpa [#allocation13], 0
    %16 = vsyncpa [#allocation5], 0
    // Predicated region
    $region2: #{tpu_custom_call.1} parent=1 // pred_check
      _
    $region3: #{tpu_custom_call.1} parent=1 // pred_check_branch
      %18 = sbr.rel (0) target = $region5
    $region4: #{tpu_custom_call.1} parent=1 // pred_region
      %s20 = ssub.s32 32, 32
      %21 = vsyncadd [#allocation4], %s20
      %s23 = sshll.u32 [#allocation3], 4
      %s24 = int_to_ptr.vmem [resolvable:$true] %s23
      %26 = dma.hbm_to_vmem [thread:$0]  %s0, 32, %s24, [#allocation4]
    $region5: #{tpu_custom_call.1} parent=1 // pred_fallthru
      _
    // Predicated region
    $region6: #{tpu_custom_call.1} parent=1 // pred_check
      _
    $region7: #{tpu_custom_call.1} parent=1 // pred_check_branch
      %28 = sbr.rel (0) target = $region9
    $region8: #{tpu_custom_call.1} parent=1 // pred_region
      %s30 = ssub.s32 512, 512
      %31 = vsyncadd [#allocation7], %s30
      %s32 = sshll.u32 [#allocation6], 4
      %s33 = int_to_ptr.vmem [resolvable:$true] %s32
      %38 = dma.hbm_to_vmem [thread:$0]  %s1, 512, %s33, [#allocation7], 128, 128, 8
    $region9: #{tpu_custom_call.1} parent=1 // pred_fallthru
      _
    // Predicated region
    $region10: #{tpu_custom_call.1} parent=1 // pred_check
      _
    $region11: #{tpu_custom_call.1} parent=1 // pred_check_branch
      %40 = sbr.rel (0) target = $region13
    $region12: #{tpu_custom_call.1} parent=1 // pred_region
      _
    $region13: #{tpu_custom_call.1} parent=1 // pred_fallthru
      _
    // Predicated region
    $region14: #{tpu_custom_call.1} parent=1 // pred_check
      _
    $region15: #{tpu_custom_call.1} parent=1 // pred_check_branch
      %42 = sbr.rel (0) target = $region17
    $region16: #{tpu_custom_call.1} parent=1 // pred_region
      %s44 = ssub.s32 3072, 3072
      %45 = vsyncadd [#allocation7], %s44
      %s46 = sshll.u32 [#allocation8], 4
      %s47 = int_to_ptr.vmem [resolvable:$true] %s46
      %52 = dma.hbm_to_vmem [thread:$0]  %s3, 3072, %s47, [#allocation7], 128, 128, 8
    $region17: #{tpu_custom_call.1} parent=1 // pred_fallthru
      _
    // Predicated region
    $region18: #{tpu_custom_call.1} parent=1 // pred_check
      _
    $region19: #{tpu_custom_call.1} parent=1 // pred_check_branch
      %54 = sbr.rel (0) target = $region21
    $region20: #{tpu_custom_call.1} parent=1 // pred_region
      %s56 = ssub.s32 3072, 3072
      %57 = vsyncadd [#allocation10], %s56
      %s58 = sshll.u32 [#allocation9], 4
      %s59 = int_to_ptr.vmem [resolvable:$true] %s58
      %64 = dma.hbm_to_vmem [thread:$0]  %s4, 3072, %s59, [#allocation10], 128, 128, 8
    $region21: #{tpu_custom_call.1} parent=1 // pred_fallthru
      _
    // Predicated region
    $region22: #{tpu_custom_call.1} parent=1 // pred_check
      _
    $region23: #{tpu_custom_call.1} parent=1 // pred_check_branch
      %66 = sbr.rel (0) target = $region25
    $region24: #{tpu_custom_call.1} parent=1 // pred_region
      %s68 = ssub.s32 192, 192
      %69 = vsyncadd [#allocation10], %s68
      %s70 = sshll.u32 [#allocation11], 4
      %s71 = int_to_ptr.vmem [resolvable:$true] %s70
      %76 = dma.hbm_to_vmem [thread:$0]  %s5, 192, %s71, [#allocation10], 16, 16, 1
    $region25: #{tpu_custom_call.1} parent=1 // pred_fallthru
      _
    // Predicated region
    $region26: #{tpu_custom_call.1} parent=1 // pred_check
      _
    $region27: #{tpu_custom_call.1} parent=1 // pred_check_branch
      %78 = sbr.rel (0) target = $region29
    $region28: #{tpu_custom_call.1} parent=1 // pred_region
      %s80 = ssub.s32 192, 192
      %81 = vsyncadd [#allocation13], %s80
      %s82 = sshll.u32 [#allocation12], 4
      %s83 = int_to_ptr.vmem [resolvable:$true] %s82
      %88 = dma.hbm_to_vmem [thread:$0]  %s6, 192, %s83, [#allocation13], 16, 16, 1
    $region29: #{tpu_custom_call.1} parent=1 // pred_fallthru
      _
    // Predicated region
    $region30: #{tpu_custom_call.1} parent=1 // pred_check
      _
    $region31: #{tpu_custom_call.1} parent=1 // pred_check_branch
      %90 = sbr.rel (0) target = $region33
    $region32: #{tpu_custom_call.1} parent=1 // pred_region
      %91 = dma.done [#allocation4], 32
    $region33: #{tpu_custom_call.1} parent=1 // pred_fallthru
      _
    // Predicated region
    $region34: #{tpu_custom_call.1} parent=1 // pred_check
      _
    $region35: #{tpu_custom_call.1} parent=1 // pred_check_branch
      %93 = sbr.rel (0) target = $region37
    $region36: #{tpu_custom_call.1} parent=1 // pred_region
      %94 = dma.done [#allocation7], 512
    $region37: #{tpu_custom_call.1} parent=1 // pred_fallthru
      _
    // Predicated region
    $region38: #{tpu_custom_call.1} parent=1 // pred_check
      _
    $region39: #{tpu_custom_call.1} parent=1 // pred_check_branch
      %96 = sbr.rel (0) target = $region41
    $region40: #{tpu_custom_call.1} parent=1 // pred_region
      %97 = dma.done [#allocation7], 3072
    $region41: #{tpu_custom_call.1} parent=1 // pred_fallthru
      _
    // Predicated region
    $region42: #{tpu_custom_call.1} parent=1 // pred_check
      _
    $region43: #{tpu_custom_call.1} parent=1 // pred_check_branch
      %99 = sbr.rel (0) target = $region45
    $region44: #{tpu_custom_call.1} parent=1 // pred_region
      %100 = dma.done [#allocation10], 3072
    $region45: #{tpu_custom_call.1} parent=1 // pred_fallthru
      _
    // Predicated region
    $region46: #{tpu_custom_call.1} parent=1 // pred_check
      _
    $region47: #{tpu_custom_call.1} parent=1 // pred_check_branch
      %102 = sbr.rel (0) target = $region49
    $region48: #{tpu_custom_call.1} parent=1 // pred_region
      %103 = dma.done [#allocation10], 192
    $region49: #{tpu_custom_call.1} parent=1 // pred_fallthru
      _
    // Predicated region
    $region50: #{tpu_custom_call.1} parent=1 // pred_check
      _
    $region51: #{tpu_custom_call.1} parent=1 // pred_check_branch
      %105 = sbr.rel (0) target = $region53
    $region52: #{tpu_custom_call.1} parent=1 // pred_region
      %106 = dma.done [#allocation13], 192
    $region53: #{tpu_custom_call.1} parent=1 // pred_fallthru
      _
    %v107 = vld [vmem:[#allocation3] sm:$0x3]
    %v108 = vld [vmem:[#allocation6] sm:$0xff]
    %v109 = vld [vmem:[#allocation6 + $0x8] sm:$0xff]
    %v110 = vld [vmem:[#allocation6 + $0x10] sm:$0xff]
    %v111 = vld [vmem:[#allocation6 + $0x18] sm:$0xff]
    %v112 = vld [vmem:[%s2] sm:$0x1]
    %v114 = vlaneseq
    %v115 = vshrl.u32 %v114, 7
    %v116 = vsub.s32 0, %v115
    %v117 = vrot.slane %v112, %v116
    %vm119 = vcmask 261120
    %v121 = vsel %vm119, %v107, 0
    %123 = vmatprep.subr.mxu0 0.0
    %124 = vmatpush1.msra.mxu0 0.0
    %125 = vmatprep.subr.mxu0 0.0
    %126 = vmatpush1.msra.mxu0 0.0
    %127 = vmatprep.subr.mxu0 0.0
    %128 = vmatpush1.msra.mxu0 0.0
    %129 = vmatprep.subr.mxu0 0.0
    %130 = vmatpush1.msra.mxu0 0.0
    %131 = vmatprep.subr.mxu0 0.0
    %132 = vmatpush1.msra.mxu0 0.0
    %133 = vmatprep.subr.mxu0 0.0
    %134 = vmatpush1.msra.mxu0 0.0
    %135 = vmatprep.subr.mxu0 0.0
    %136 = vmatpush1.msra.mxu0 0.0
    %137 = vmatprep.subr.mxu0 0.0
    %138 = vmatpush1.msra.mxu0 0.0
    %139 = vmatprep.subr.mxu0 0.0
    %140 = vmatpush1.msra.mxu0 0.0
    %141 = vmatprep.subr.mxu0 0.0
    %142 = vmatpush1.msra.mxu0 0.0
    %143 = vmatprep.subr.mxu0 0.0
    %144 = vmatpush1.msra.mxu0 0.0
    %145 = vmatprep.subr.mxu0 0.0
    %146 = vmatpush1.msra.mxu0 0.0
    %147 = vmatprep.subr.mxu0 0.0
    %148 = vmatpush1.msra.mxu0 %v111
    %149 = vmatprep.subr.mxu0 0.0
    %150 = vmatpush1.msra.mxu0 %v110
    %151 = vmatprep.subr.mxu0 0.0
    %152 = vmatpush1.msra.mxu0 %v109
    %153 = vmatprep.subr.mxu0 0.0
    %154 = vmatpush1.msra.mxu0 %v108
    %155 = vmatprep.subr.mxu0 0.0
    %156 = vmatpush2.msra.mxu0 0.0
    %157 = vmatprep.subr.mxu0 0.0
    %158 = vmatpush2.msra.mxu0 0.0
    %159 = vmatprep.subr.mxu0 0.0
    %160 = vmatpush2.msra.mxu0 0.0
    %161 = vmatprep.subr.mxu0 0.0
    %162 = vmatpush2.msra.mxu0 0.0
    %163 = vmatprep.subr.mxu0 0.0
    %164 = vmatpush2.msra.mxu0 0.0
    %165 = vmatprep.subr.mxu0 0.0
    %166 = vmatpush2.msra.mxu0 0.0
    %167 = vmatprep.subr.mxu0 0.0
    %168 = vmatpush2.msra.mxu0 0.0
    %169 = vmatprep.subr.mxu0 0.0
    %170 = vmatpush2.msra.mxu0 0.0
    %171 = vmatprep.subr.mxu0 0.0
    %172 = vmatpush2.msra.mxu0 0.0
    %173 = vmatprep.subr.mxu0 0.0
    %174 = vmatpush2.msra.mxu0 0.0
    %175 = vmatprep.subr.mxu0 0.0
    %176 = vmatpush2.msra.mxu0 0.0
    %177 = vmatprep.subr.mxu0 0.0
    %178 = vmatpush2.msra.mxu0 0.0
    %179 = vmatprep.subr.mxu0 0.0
    %180 = vmatpush2.msra.mxu0 0.0
    %181 = vmatprep.subr.mxu0 0.0
    %182 = vmatpush2.msra.mxu0 0.0
    %183 = vmatprep.subr.mxu0 0.0
    %184 = vmatpush2.msra.mxu0 0.0
    %185 = vmatprep.subr.mxu0 0.0
    %186 = vmatpush2.msra.mxu0 0.0
    %187 = vmatprep.mubr.f32.mxu0 0.0
    %188 = vmatmul.mubr.f32.gmra.mxu0 %v121
    %v189 = vpop.f32.mrf.mxu0
    %v190 = vadd.f32 %v117, %v189
    %v191 = vpop.f32.mrf.mxu0
    %192 = vdwg.mxu0
    %vm193 = vcmask 123904
    %194 = vst.msk [vmem:[#allocation2] sm:$0x3] %vm193, %v190
    %196 = vrot.lane.b32.xlu0 %v190, 112
    %v197 = vpop.permute.xlu0 %196
    %199 = vst.msk [vmem:[#allocation2 + $0x2] sm:$0x3] %vm193, %v197
    %200 = vrot.lane.b32.xlu0 %v190, 96
    %v201 = vpop.permute.xlu0 %200
    %203 = vst.msk [vmem:[#allocation2 + $0x4] sm:$0x3] %vm193, %v201
    %204 = vrot.lane.b32.xlu0 %v190, 80
    %v205 = vpop.permute.xlu0 %204
    %207 = vst.msk [vmem:[#allocation2 + $0x6] sm:$0x3] %vm193, %v205
    %208 = vrot.lane.b32.xlu0 %v190, 64
    %v209 = vpop.permute.xlu0 %208
    %211 = vst.msk [vmem:[#allocation2 + $0x8] sm:$0x3] %vm193, %v209
    %212 = vrot.lane.b32.xlu0 %v190, 48
    %v213 = vpop.permute.xlu0 %212
    %215 = vst.msk [vmem:[#allocation2 + $0xa] sm:$0x3] %vm193, %v213
    %216 = vrot.lane.b32.xlu0 %v190, 32
    %v217 = vpop.permute.xlu0 %216
    %219 = vst.msk [vmem:[#allocation2 + $0xc] sm:$0x3] %vm193, %v217
    %220 = vrot.lane.b32.xlu0 %v190, 16
    %v221 = vpop.permute.xlu0 %220
    %223 = vst.msk [vmem:[#allocation2 + $0xe] sm:$0x3] %vm193, %v221
    %v224 = vld [vmem:[#allocation8] sm:$0xff]
    %v225 = vld [vmem:[#allocation8 + $0x8] sm:$0xff]
    %s226 = scalar_lea.vmem [#allocation8], 16
    %v227 = vld [vmem:[%s226] sm:$0xff]
    %v228 = vld [vmem:[%s226 + $0x8] sm:$0xff]
    %s229 = scalar_lea.vmem [#allocation8], 32
    %v230 = vld [vmem:[%s229] sm:$0xff]
    %v231 = vld [vmem:[%s229 + $0x8] sm:$0xff]
    %v232 = vld [vmem:[#allocation9] sm:$0xff]
    %v233 = vld [vmem:[#allocation9 + $0x8] sm:$0xff]
    %s234 = scalar_lea.vmem [#allocation9], 16
    %v235 = vld [vmem:[%s234] sm:$0xff]
    %v236 = vld [vmem:[%s234 + $0x8] sm:$0xff]
    %s237 = scalar_lea.vmem [#allocation9], 32
    %v238 = vld [vmem:[%s237] sm:$0xff]
    %v239 = vld [vmem:[%s237 + $0x8] sm:$0xff]
    %v240 = vld [vmem:[#allocation11] sm:$0x1]
    %v241 = vld [vmem:[#allocation12] sm:$0x1]
    %v242 = vadd.f32 %v240, %v241
    %s243 = scalar_lea.vmem [#allocation11], 1
    %v244 = vld [vmem:[%s243] sm:$0x1]
    %s245 = scalar_lea.vmem [#allocation12], 1
    %v246 = vld [vmem:[%s245] sm:$0x1]
    %v247 = vadd.f32 %v244, %v246
    %s248 = scalar_lea.vmem [#allocation11], 2
    %v249 = vld [vmem:[%s248] sm:$0x1]
    %s250 = scalar_lea.vmem [#allocation12], 2
    %v251 = vld [vmem:[%s250] sm:$0x1]
    %v252 = vld [vmem:[#allocation2] sm:$0xff]
    %v253 = vld [vmem:[#allocation2 + $0x8] sm:$0xff]
    %v255 = vlaneseq
    %v256 = vshrl.u32 %v255, 7
    %v257 = vsub.s32 0, %v256
    %v258 = vrot.slane %v242, %v257
    %vm260 = vcmask 130048
    %v262 = vsel %vm260, %v252, 0
    %v265 = vsel %vm260, %v253, 0
    %267 = vmatprep.subr.mxu0 0.0
    %268 = vmatpush1.msra.mxu0 0.0
    %269 = vmatprep.subr.mxu0 0.0
    %270 = vmatpush1.msra.mxu0 0.0
    %271 = vmatprep.subr.mxu0 0.0
    %272 = vmatpush1.msra.mxu0 0.0
    %273 = vmatprep.subr.mxu0 0.0
    %274 = vmatpush1.msra.mxu0 0.0
    %275 = vmatprep.subr.mxu0 0.0
    %276 = vmatpush1.msra.mxu0 0.0
    %277 = vmatprep.subr.mxu0 0.0
    %278 = vmatpush1.msra.mxu0 0.0
    %279 = vmatprep.subr.mxu0 0.0
    %280 = vmatpush1.msra.mxu0 0.0
    %281 = vmatprep.subr.mxu0 0.0
    %282 = vmatpush1.msra.mxu0 0.0
    %283 = vmatprep.subr.mxu0 0.0
    %284 = vmatpush1.msra.mxu0 0.0
    %285 = vmatprep.subr.mxu0 0.0
    %286 = vmatpush1.msra.mxu0 0.0
    %287 = vmatprep.subr.mxu0 0.0
    %288 = vmatpush1.msra.mxu0 0.0
    %289 = vmatprep.subr.mxu0 0.0
    %290 = vmatpush1.msra.mxu0 0.0
    %291 = vmatprep.subr.mxu0 0.0
    %292 = vmatpush1.msra.mxu0 0.0
    %293 = vmatprep.subr.mxu0 0.0
    %294 = vmatpush1.msra.mxu0 0.0
    %295 = vmatprep.subr.mxu0 0.0
    %296 = vmatpush1.msra.mxu0 %v225
    %297 = vmatprep.subr.mxu0 0.0
    %298 = vmatpush1.msra.mxu0 %v224
    %299 = vmatprep.subr.mxu0 0.0
    %300 = vmatpush2.msra.mxu0 0.0
    %301 = vmatprep.subr.mxu0 0.0
    %302 = vmatpush2.msra.mxu0 0.0
    %303 = vmatprep.subr.mxu0 0.0
    %304 = vmatpush2.msra.mxu0 0.0
    %305 = vmatprep.subr.mxu0 0.0
    %306 = vmatpush2.msra.mxu0 0.0
    %307 = vmatprep.subr.mxu0 0.0
    %308 = vmatpush2.msra.mxu0 0.0
    %309 = vmatprep.subr.mxu0 0.0
    %310 = vmatpush2.msra.mxu0 0.0
    %311 = vmatprep.subr.mxu0 0.0
    %312 = vmatpush2.msra.mxu0 0.0
    %313 = vmatprep.subr.mxu0 0.0
    %314 = vmatpush2.msra.mxu0 0.0
    %315 = vmatprep.subr.mxu0 0.0
    %316 = vmatpush2.msra.mxu0 0.0
    %317 = vmatprep.subr.mxu0 0.0
    %318 = vmatpush2.msra.mxu0 0.0
    %319 = vmatprep.subr.mxu0 0.0
    %320 = vmatpush2.msra.mxu0 0.0
    %321 = vmatprep.subr.mxu0 0.0
    %322 = vmatpush2.msra.mxu0 0.0
    %323 = vmatprep.subr.mxu0 0.0
    %324 = vmatpush2.msra.mxu0 0.0
    %325 = vmatprep.subr.mxu0 0.0
    %326 = vmatpush2.msra.mxu0 0.0
    %327 = vmatprep.subr.mxu0 0.0
    %328 = vmatpush2.msra.mxu0 0.0
    %329 = vmatprep.subr.mxu0 0.0
    %330 = vmatpush2.msra.mxu0 0.0
    %331 = vmatprep.mubr.f32.mxu0 0.0
    %332 = vmatmul.mubr.f32.gmra.mxu0 %v262
    %v333 = vpop.f32.mrf.mxu0
    %v334 = vadd.f32 %v258, %v333
    %v335 = vpop.f32.mrf.mxu0
    %336 = vmatprep.mubr.f32.mxu0 0.0
    %337 = vmatmul.mubr.f32.gmra.mxu0 %v265
    %v338 = vpop.f32.mrf.mxu0
    %v339 = vadd.f32 %v258, %v338
    %v340 = vpop.f32.mrf.mxu0
    %341 = vdwg.mxu0
    %v343 = vlaneseq
    %v344 = vshrl.u32 %v343, 7
    %v345 = vsub.s32 0, %v344
    %v346 = vrot.slane %v247, %v345
    %348 = vmatprep.subr.mxu0 0.0
    %349 = vmatpush1.msra.mxu0 0.0
    %350 = vmatprep.subr.mxu0 0.0
    %351 = vmatpush1.msra.mxu0 0.0
    %352 = vmatprep.subr.mxu0 0.0
    %353 = vmatpush1.msra.mxu0 0.0
    %354 = vmatprep.subr.mxu0 0.0
    %355 = vmatpush1.msra.mxu0 0.0
    %356 = vmatprep.subr.mxu0 0.0
    %357 = vmatpush1.msra.mxu0 0.0
    %358 = vmatprep.subr.mxu0 0.0
    %359 = vmatpush1.msra.mxu0 0.0
    %360 = vmatprep.subr.mxu0 0.0
    %361 = vmatpush1.msra.mxu0 0.0
    %362 = vmatprep.subr.mxu0 0.0
    %363 = vmatpush1.msra.mxu0 0.0
    %364 = vmatprep.subr.mxu0 0.0
    %365 = vmatpush1.msra.mxu0 0.0
    %366 = vmatprep.subr.mxu0 0.0
    %367 = vmatpush1.msra.mxu0 0.0
    %368 = vmatprep.subr.mxu0 0.0
    %369 = vmatpush1.msra.mxu0 0.0
    %370 = vmatprep.subr.mxu0 0.0
    %371 = vmatpush1.msra.mxu0 0.0
    %372 = vmatprep.subr.mxu0 0.0
    %373 = vmatpush1.msra.mxu0 0.0
    %374 = vmatprep.subr.mxu0 0.0
    %375 = vmatpush1.msra.mxu0 0.0
    %376 = vmatprep.subr.mxu0 0.0
    %377 = vmatpush1.msra.mxu0 %v228
    %378 = vmatprep.subr.mxu0 0.0
    %379 = vmatpush1.msra.mxu0 %v227
    %380 = vmatprep.subr.mxu0 0.0
    %381 = vmatpush2.msra.mxu0 0.0
    %382 = vmatprep.subr.mxu0 0.0
    %383 = vmatpush2.msra.mxu0 0.0
    %384 = vmatprep.subr.mxu0 0.0
    %385 = vmatpush2.msra.mxu0 0.0
    %386 = vmatprep.subr.mxu0 0.0
    %387 = vmatpush2.msra.mxu0 0.0
    %388 = vmatprep.subr.mxu0 0.0
    %389 = vmatpush2.msra.mxu0 0.0
    %390 = vmatprep.subr.mxu0 0.0
    %391 = vmatpush2.msra.mxu0 0.0
    %392 = vmatprep.subr.mxu0 0.0
    %393 = vmatpush2.msra.mxu0 0.0
    %394 = vmatprep.subr.mxu0 0.0
    %395 = vmatpush2.msra.mxu0 0.0
    %396 = vmatprep.subr.mxu0 0.0
    %397 = vmatpush2.msra.mxu0 0.0
    %398 = vmatprep.subr.mxu0 0.0
    %399 = vmatpush2.msra.mxu0 0.0
    %400 = vmatprep.subr.mxu0 0.0
    %401 = vmatpush2.msra.mxu0 0.0
    %402 = vmatprep.subr.mxu0 0.0
    %403 = vmatpush2.msra.mxu0 0.0
    %404 = vmatprep.subr.mxu0 0.0
    %405 = vmatpush2.msra.mxu0 0.0
    %406 = vmatprep.subr.mxu0 0.0
    %407 = vmatpush2.msra.mxu0 0.0
    %408 = vmatprep.subr.mxu0 0.0
    %409 = vmatpush2.msra.mxu0 0.0
    %410 = vmatprep.subr.mxu0 0.0
    %411 = vmatpush2.msra.mxu0 0.0
    %412 = vmatprep.mubr.f32.mxu0 0.0
    %413 = vmatmul.mubr.f32.gmra.mxu0 %v262
    %v414 = vpop.f32.mrf.mxu0
    %v415 = vadd.f32 %v346, %v414
    %v416 = vpop.f32.mrf.mxu0
    %417 = vmatprep.mubr.f32.mxu0 0.0
    %418 = vmatmul.mubr.f32.gmra.mxu0 %v265
    %v419 = vpop.f32.mrf.mxu0
    %v420 = vadd.f32 %v346, %v419
    %v421 = vpop.f32.mrf.mxu0
    %422 = vdwg.mxu0
    %v424 = vlaneseq
    %v425 = vshrl.u32 %v424, 7
    %v426 = vsub.s32 0, %v425
    %v427 = vrot.slane %v249, %v426
    %429 = vmatprep.subr.mxu0 0.0
    %430 = vmatpush1.msra.mxu0 0.0
    %431 = vmatprep.subr.mxu0 0.0
    %432 = vmatpush1.msra.mxu0 0.0
    %433 = vmatprep.subr.mxu0 0.0
    %434 = vmatpush1.msra.mxu0 0.0
    %435 = vmatprep.subr.mxu0 0.0
    %436 = vmatpush1.msra.mxu0 0.0
    %437 = vmatprep.subr.mxu0 0.0
    %438 = vmatpush1.msra.mxu0 0.0
    %439 = vmatprep.subr.mxu0 0.0
    %440 = vmatpush1.msra.mxu0 0.0
    %441 = vmatprep.subr.mxu0 0.0
    %442 = vmatpush1.msra.mxu0 0.0
    %443 = vmatprep.subr.mxu0 0.0
    %444 = vmatpush1.msra.mxu0 0.0
    %445 = vmatprep.subr.mxu0 0.0
    %446 = vmatpush1.msra.mxu0 0.0
    %447 = vmatprep.subr.mxu0 0.0
    %448 = vmatpush1.msra.mxu0 0.0
    %449 = vmatprep.subr.mxu0 0.0
    %450 = vmatpush1.msra.mxu0 0.0
    %451 = vmatprep.subr.mxu0 0.0
    %452 = vmatpush1.msra.mxu0 0.0
    %453 = vmatprep.subr.mxu0 0.0
    %454 = vmatpush1.msra.mxu0 0.0
    %455 = vmatprep.subr.mxu0 0.0
    %456 = vmatpush1.msra.mxu0 0.0
    %457 = vmatprep.subr.mxu0 0.0
    %458 = vmatpush1.msra.mxu0 %v231
    %459 = vmatprep.subr.mxu0 0.0
    %460 = vmatpush1.msra.mxu0 %v230
    %461 = vmatprep.subr.mxu0 0.0
    %462 = vmatpush2.msra.mxu0 0.0
    %463 = vmatprep.subr.mxu0 0.0
    %464 = vmatpush2.msra.mxu0 0.0
    %465 = vmatprep.subr.mxu0 0.0
    %466 = vmatpush2.msra.mxu0 0.0
    %467 = vmatprep.subr.mxu0 0.0
    %468 = vmatpush2.msra.mxu0 0.0
    %469 = vmatprep.subr.mxu0 0.0
    %470 = vmatpush2.msra.mxu0 0.0
    %471 = vmatprep.subr.mxu0 0.0
    %472 = vmatpush2.msra.mxu0 0.0
    %473 = vmatprep.subr.mxu0 0.0
    %474 = vmatpush2.msra.mxu0 0.0
    %475 = vmatprep.subr.mxu0 0.0
    %476 = vmatpush2.msra.mxu0 0.0
    %477 = vmatprep.subr.mxu0 0.0
    %478 = vmatpush2.msra.mxu0 0.0
    %479 = vmatprep.subr.mxu0 0.0
    %480 = vmatpush2.msra.mxu0 0.0
    %481 = vmatprep.subr.mxu0 0.0
    %482 = vmatpush2.msra.mxu0 0.0
    %483 = vmatprep.subr.mxu0 0.0
    %484 = vmatpush2.msra.mxu0 0.0
    %485 = vmatprep.subr.mxu0 0.0
    %486 = vmatpush2.msra.mxu0 0.0
    %487 = vmatprep.subr.mxu0 0.0
    %488 = vmatpush2.msra.mxu0 0.0
    %489 = vmatprep.subr.mxu0 0.0
    %490 = vmatpush2.msra.mxu0 0.0
    %491 = vmatprep.subr.mxu0 0.0
    %492 = vmatpush2.msra.mxu0 0.0
    %493 = vmatprep.mubr.f32.mxu0 0.0
    %494 = vmatmul.mubr.f32.gmra.mxu0 %v262
    %v495 = vpop.f32.mrf.mxu0
    %v496 = vadd.f32 %v427, %v495
    %v497 = vpop.f32.mrf.mxu0
    %498 = vmatprep.mubr.f32.mxu0 0.0
    %499 = vmatmul.mubr.f32.gmra.mxu0 %v265
    %v500 = vpop.f32.mrf.mxu0
    %v501 = vadd.f32 %v427, %v500
    %v502 = vpop.f32.mrf.mxu0
    %503 = vdwg.mxu0
    %v505 = vsel %vm260, 0.0, 0
    %507 = vmatprep.subr.mxu0 0.0
    %508 = vmatpush1.msra.mxu0 0.0
    %509 = vmatprep.subr.mxu0 0.0
    %510 = vmatpush1.msra.mxu0 0.0
    %511 = vmatprep.subr.mxu0 0.0
    %512 = vmatpush1.msra.mxu0 0.0
    %513 = vmatprep.subr.mxu0 0.0
    %514 = vmatpush1.msra.mxu0 0.0
    %515 = vmatprep.subr.mxu0 0.0
    %516 = vmatpush1.msra.mxu0 0.0
    %517 = vmatprep.subr.mxu0 0.0
    %518 = vmatpush1.msra.mxu0 0.0
    %519 = vmatprep.subr.mxu0 0.0
    %520 = vmatpush1.msra.mxu0 0.0
    %521 = vmatprep.subr.mxu0 0.0
    %522 = vmatpush1.msra.mxu0 0.0
    %523 = vmatprep.subr.mxu0 0.0
    %524 = vmatpush1.msra.mxu0 0.0
    %525 = vmatprep.subr.mxu0 0.0
    %526 = vmatpush1.msra.mxu0 0.0
    %527 = vmatprep.subr.mxu0 0.0
    %528 = vmatpush1.msra.mxu0 0.0
    %529 = vmatprep.subr.mxu0 0.0
    %530 = vmatpush1.msra.mxu0 0.0
    %531 = vmatprep.subr.mxu0 0.0
    %532 = vmatpush1.msra.mxu0 0.0
    %533 = vmatprep.subr.mxu0 0.0
    %534 = vmatpush1.msra.mxu0 0.0
    %535 = vmatprep.subr.mxu0 0.0
    %536 = vmatpush1.msra.mxu0 %v233
    %537 = vmatprep.subr.mxu0 0.0
    %538 = vmatpush1.msra.mxu0 %v232
    %539 = vmatprep.subr.mxu0 0.0
    %540 = vmatpush2.msra.mxu0 0.0
    %541 = vmatprep.subr.mxu0 0.0
    %542 = vmatpush2.msra.mxu0 0.0
    %543 = vmatprep.subr.mxu0 0.0
    %544 = vmatpush2.msra.mxu0 0.0
    %545 = vmatprep.subr.mxu0 0.0
    %546 = vmatpush2.msra.mxu0 0.0
    %547 = vmatprep.subr.mxu0 0.0
    %548 = vmatpush2.msra.mxu0 0.0
    %549 = vmatprep.subr.mxu0 0.0
    %550 = vmatpush2.msra.mxu0 0.0
    %551 = vmatprep.subr.mxu0 0.0
    %552 = vmatpush2.msra.mxu0 0.0
    %553 = vmatprep.subr.mxu0 0.0
    %554 = vmatpush2.msra.mxu0 0.0
    %555 = vmatprep.subr.mxu0 0.0
    %556 = vmatpush2.msra.mxu0 0.0
    %557 = vmatprep.subr.mxu0 0.0
    %558 = vmatpush2.msra.mxu0 0.0
    %559 = vmatprep.subr.mxu0 0.0
    %560 = vmatpush2.msra.mxu0 0.0
    %561 = vmatprep.subr.mxu0 0.0
    %562 = vmatpush2.msra.mxu0 0.0
    %563 = vmatprep.subr.mxu0 0.0
    %564 = vmatpush2.msra.mxu0 0.0
    %565 = vmatprep.subr.mxu0 0.0
    %566 = vmatpush2.msra.mxu0 0.0
    %567 = vmatprep.subr.mxu0 0.0
    %568 = vmatpush2.msra.mxu0 0.0
    %569 = vmatprep.subr.mxu0 0.0
    %570 = vmatpush2.msra.mxu0 0.0
    %571 = vmatprep.mubr.f32.mxu0 0.0
    %572 = vmatmul.mubr.f32.gmra.mxu0 %v505
    %v573 = vpop.f32.mrf.mxu0
    %v574 = vadd.f32 0.0, %v573
    %v575 = vpop.f32.mrf.mxu0
    %576 = vdwg.mxu0
    %577 = vmatprep.subr.mxu0 0.0
    %578 = vmatpush1.msra.mxu0 0.0
    %579 = vmatprep.subr.mxu0 0.0
    %580 = vmatpush1.msra.mxu0 0.0
    %581 = vmatprep.subr.mxu0 0.0
    %582 = vmatpush1.msra.mxu0 0.0
    %583 = vmatprep.subr.mxu0 0.0
    %584 = vmatpush1.msra.mxu0 0.0
    %585 = vmatprep.subr.mxu0 0.0
    %586 = vmatpush1.msra.mxu0 0.0
    %587 = vmatprep.subr.mxu0 0.0
    %588 = vmatpush1.msra.mxu0 0.0
    %589 = vmatprep.subr.mxu0 0.0
    %590 = vmatpush1.msra.mxu0 0.0
    %591 = vmatprep.subr.mxu0 0.0
    %592 = vmatpush1.msra.mxu0 0.0
    %593 = vmatprep.subr.mxu0 0.0
    %594 = vmatpush1.msra.mxu0 0.0
    %595 = vmatprep.subr.mxu0 0.0
    %596 = vmatpush1.msra.mxu0 0.0
    %597 = vmatprep.subr.mxu0 0.0
    %598 = vmatpush1.msra.mxu0 0.0
    %599 = vmatprep.subr.mxu0 0.0
    %600 = vmatpush1.msra.mxu0 0.0
    %601 = vmatprep.subr.mxu0 0.0
    %602 = vmatpush1.msra.mxu0 0.0
    %603 = vmatprep.subr.mxu0 0.0
    %604 = vmatpush1.msra.mxu0 0.0
    %605 = vmatprep.subr.mxu0 0.0
    %606 = vmatpush1.msra.mxu0 %v236
    %607 = vmatprep.subr.mxu0 0.0
    %608 = vmatpush1.msra.mxu0 %v235
    %609 = vmatprep.subr.mxu0 0.0
    %610 = vmatpush2.msra.mxu0 0.0
    %611 = vmatprep.subr.mxu0 0.0
    %612 = vmatpush2.msra.mxu0 0.0
    %613 = vmatprep.subr.mxu0 0.0
    %614 = vmatpush2.msra.mxu0 0.0
    %615 = vmatprep.subr.mxu0 0.0
    %616 = vmatpush2.msra.mxu0 0.0
    %617 = vmatprep.subr.mxu0 0.0
    %618 = vmatpush2.msra.mxu0 0.0
    %619 = vmatprep.subr.mxu0 0.0
    %620 = vmatpush2.msra.mxu0 0.0
    %621 = vmatprep.subr.mxu0 0.0
    %622 = vmatpush2.msra.mxu0 0.0
    %623 = vmatprep.subr.mxu0 0.0
    %624 = vmatpush2.msra.mxu0 0.0
    %625 = vmatprep.subr.mxu0 0.0
    %626 = vmatpush2.msra.mxu0 0.0
    %627 = vmatprep.subr.mxu0 0.0
    %628 = vmatpush2.msra.mxu0 0.0
    %629 = vmatprep.subr.mxu0 0.0
    %630 = vmatpush2.msra.mxu0 0.0
    %631 = vmatprep.subr.mxu0 0.0
    %632 = vmatpush2.msra.mxu0 0.0
    %633 = vmatprep.subr.mxu0 0.0
    %634 = vmatpush2.msra.mxu0 0.0
    %635 = vmatprep.subr.mxu0 0.0
    %636 = vmatpush2.msra.mxu0 0.0
    %637 = vmatprep.subr.mxu0 0.0
    %638 = vmatpush2.msra.mxu0 0.0
    %639 = vmatprep.subr.mxu0 0.0
    %640 = vmatpush2.msra.mxu0 0.0
    %641 = vmatprep.mubr.f32.mxu0 0.0
    %642 = vmatmul.mubr.f32.gmra.mxu0 %v505
    %v643 = vpop.f32.mrf.mxu0
    %v644 = vadd.f32 0.0, %v643
    %v645 = vpop.f32.mrf.mxu0
    %646 = vdwg.mxu0
    %v648 = vlaneseq
    %v649 = vshrl.u32 %v648, 7
    %v650 = vsub.s32 0, %v649
    %v651 = vrot.slane %v251, %v650
    %653 = vmatprep.subr.mxu0 0.0
    %654 = vmatpush1.msra.mxu0 0.0
    %655 = vmatprep.subr.mxu0 0.0
    %656 = vmatpush1.msra.mxu0 0.0
    %657 = vmatprep.subr.mxu0 0.0
    %658 = vmatpush1.msra.mxu0 0.0
    %659 = vmatprep.subr.mxu0 0.0
    %660 = vmatpush1.msra.mxu0 0.0
    %661 = vmatprep.subr.mxu0 0.0
    %662 = vmatpush1.msra.mxu0 0.0
    %663 = vmatprep.subr.mxu0 0.0
    %664 = vmatpush1.msra.mxu0 0.0
    %665 = vmatprep.subr.mxu0 0.0
    %666 = vmatpush1.msra.mxu0 0.0
    %667 = vmatprep.subr.mxu0 0.0
    %668 = vmatpush1.msra.mxu0 0.0
    %669 = vmatprep.subr.mxu0 0.0
    %670 = vmatpush1.msra.mxu0 0.0
    %671 = vmatprep.subr.mxu0 0.0
    %672 = vmatpush1.msra.mxu0 0.0
    %673 = vmatprep.subr.mxu0 0.0
    %674 = vmatpush1.msra.mxu0 0.0
    %675 = vmatprep.subr.mxu0 0.0
    %676 = vmatpush1.msra.mxu0 0.0
    %677 = vmatprep.subr.mxu0 0.0
    %678 = vmatpush1.msra.mxu0 0.0
    %679 = vmatprep.subr.mxu0 0.0
    %680 = vmatpush1.msra.mxu0 0.0
    %681 = vmatprep.subr.mxu0 0.0
    %682 = vmatpush1.msra.mxu0 %v239
    %683 = vmatprep.subr.mxu0 0.0
    %684 = vmatpush1.msra.mxu0 %v238
    %685 = vmatprep.subr.mxu0 0.0
    %686 = vmatpush2.msra.mxu0 0.0
    %687 = vmatprep.subr.mxu0 0.0
    %688 = vmatpush2.msra.mxu0 0.0
    %689 = vmatprep.subr.mxu0 0.0
    %690 = vmatpush2.msra.mxu0 0.0
    %691 = vmatprep.subr.mxu0 0.0
    %692 = vmatpush2.msra.mxu0 0.0
    %693 = vmatprep.subr.mxu0 0.0
    %694 = vmatpush2.msra.mxu0 0.0
    %695 = vmatprep.subr.mxu0 0.0
    %696 = vmatpush2.msra.mxu0 0.0
    %697 = vmatprep.subr.mxu0 0.0
    %698 = vmatpush2.msra.mxu0 0.0
    %699 = vmatprep.subr.mxu0 0.0
    %700 = vmatpush2.msra.mxu0 0.0
    %701 = vmatprep.subr.mxu0 0.0
    %702 = vmatpush2.msra.mxu0 0.0
    %703 = vmatprep.subr.mxu0 0.0
    %704 = vmatpush2.msra.mxu0 0.0
    %705 = vmatprep.subr.mxu0 0.0
    %706 = vmatpush2.msra.mxu0 0.0
    %707 = vmatprep.subr.mxu0 0.0
    %708 = vmatpush2.msra.mxu0 0.0
    %709 = vmatprep.subr.mxu0 0.0
    %710 = vmatpush2.msra.mxu0 0.0
    %711 = vmatprep.subr.mxu0 0.0
    %712 = vmatpush2.msra.mxu0 0.0
    %713 = vmatprep.subr.mxu0 0.0
    %714 = vmatpush2.msra.mxu0 0.0
    %715 = vmatprep.subr.mxu0 0.0
    %716 = vmatpush2.msra.mxu0 0.0
    %717 = vmatprep.mubr.f32.mxu0 0.0
    %718 = vmatmul.mubr.f32.gmra.mxu0 %v505
    %v719 = vpop.f32.mrf.mxu0
    %v720 = vadd.f32 %v651, %v719
    %v721 = vpop.f32.mrf.mxu0
    %722 = vdwg.mxu0
    %v723 = vadd.f32 %v334, %v574
    %v724 = vxor.u32 %v723, 2147483648
    %v725 = vmul.f32 %v724, 1.442695
    %v726 = vpow.pop %v725
    %v727 = vadd.f32 %v726, 1.0
    %v728 = vrcp.pop %v727
    %v729 = vmul.f32 1.0, %v728
    %v730 = vadd.f32 %v415, %v644
    %v731 = vxor.u32 %v730, 2147483648
    %v732 = vmul.f32 %v731, 1.442695
    %v733 = vpow.pop %v732
    %v734 = vadd.f32 %v733, 1.0
    %v735 = vrcp.pop %v734
    %v736 = vmul.f32 1.0, %v735
    %v737 = vmul.f32 %v729, %v720
    %v738 = vadd.f32 %v496, %v737
    %v739 = vtanh.pop %v738
    %v740 = vsub.f32 0.0, %v739
    %v741 = vmul.f32 %v736, %v740
    %v742 = vadd.f32 %v739, %v741
    %743 = vst.msk [vmem:[#allocation2] sm:$0x3] %vm193, %v742
    %v745 = vsel %vm260, %v742, 0
    %747 = vmatprep.subr.mxu0 0.0
    %748 = vmatpush1.msra.mxu0 0.0
    %749 = vmatprep.subr.mxu0 0.0
    %750 = vmatpush1.msra.mxu0 0.0
    %751 = vmatprep.subr.mxu0 0.0
    %752 = vmatpush1.msra.mxu0 0.0
    %753 = vmatprep.subr.mxu0 0.0
    %754 = vmatpush1.msra.mxu0 0.0
    %755 = vmatprep.subr.mxu0 0.0
    %756 = vmatpush1.msra.mxu0 0.0
    %757 = vmatprep.subr.mxu0 0.0
    %758 = vmatpush1.msra.mxu0 0.0
    %759 = vmatprep.subr.mxu0 0.0
    %760 = vmatpush1.msra.mxu0 0.0
    %761 = vmatprep.subr.mxu0 0.0
    %762 = vmatpush1.msra.mxu0 0.0
    %763 = vmatprep.subr.mxu0 0.0
    %764 = vmatpush1.msra.mxu0 0.0
    %765 = vmatprep.subr.mxu0 0.0
    %766 = vmatpush1.msra.mxu0 0.0
    %767 = vmatprep.subr.mxu0 0.0
    %768 = vmatpush1.msra.mxu0 0.0
    %769 = vmatprep.subr.mxu0 0.0
    %770 = vmatpush1.msra.mxu0 0.0
    %771 = vmatprep.subr.mxu0 0.0
    %772 = vmatpush1.msra.mxu0 0.0
    %773 = vmatprep.subr.mxu0 0.0
    %774 = vmatpush1.msra.mxu0 0.0
    %775 = vmatprep.subr.mxu0 0.0
    %776 = vmatpush1.msra.mxu0 %v233
    %777 = vmatprep.subr.mxu0 0.0
    %778 = vmatpush1.msra.mxu0 %v232
    %779 = vmatprep.subr.mxu0 0.0
    %780 = vmatpush2.msra.mxu0 0.0
    %781 = vmatprep.subr.mxu0 0.0
    %782 = vmatpush2.msra.mxu0 0.0
    %783 = vmatprep.subr.mxu0 0.0
    %784 = vmatpush2.msra.mxu0 0.0
    %785 = vmatprep.subr.mxu0 0.0
    %786 = vmatpush2.msra.mxu0 0.0
    %787 = vmatprep.subr.mxu0 0.0
    %788 = vmatpush2.msra.mxu0 0.0
    %789 = vmatprep.subr.mxu0 0.0
    %790 = vmatpush2.msra.mxu0 0.0
    %791 = vmatprep.subr.mxu0 0.0
    %792 = vmatpush2.msra.mxu0 0.0
    %793 = vmatprep.subr.mxu0 0.0
    %794 = vmatpush2.msra.mxu0 0.0
    %795 = vmatprep.subr.mxu0 0.0
    %796 = vmatpush2.msra.mxu0 0.0
    %797 = vmatprep.subr.mxu0 0.0
    %798 = vmatpush2.msra.mxu0 0.0
    %799 = vmatprep.subr.mxu0 0.0
    %800 = vmatpush2.msra.mxu0 0.0
    %801 = vmatprep.subr.mxu0 0.0
    %802 = vmatpush2.msra.mxu0 0.0
    %803 = vmatprep.subr.mxu0 0.0
    %804 = vmatpush2.msra.mxu0 0.0
    %805 = vmatprep.subr.mxu0 0.0
    %806 = vmatpush2.msra.mxu0 0.0
    %807 = vmatprep.subr.mxu0 0.0
    %808 = vmatpush2.msra.mxu0 0.0
    %809 = vmatprep.subr.mxu0 0.0
    %810 = vmatpush2.msra.mxu0 0.0
    %811 = vmatprep.mubr.f32.mxu0 0.0
    %812 = vmatmul.mubr.f32.gmra.mxu0 %v745
    %v813 = vpop.f32.mrf.mxu0
    %v814 = vadd.f32 0.0, %v813
    %v815 = vpop.f32.mrf.mxu0
    %816 = vdwg.mxu0
    %817 = vmatprep.subr.mxu0 0.0
    %818 = vmatpush1.msra.mxu0 0.0
    %819 = vmatprep.subr.mxu0 0.0
    %820 = vmatpush1.msra.mxu0 0.0
    %821 = vmatprep.subr.mxu0 0.0
    %822 = vmatpush1.msra.mxu0 0.0
    %823 = vmatprep.subr.mxu0 0.0
    %824 = vmatpush1.msra.mxu0 0.0
    %825 = vmatprep.subr.mxu0 0.0
    %826 = vmatpush1.msra.mxu0 0.0
    %827 = vmatprep.subr.mxu0 0.0
    %828 = vmatpush1.msra.mxu0 0.0
    %829 = vmatprep.subr.mxu0 0.0
    %830 = vmatpush1.msra.mxu0 0.0
    %831 = vmatprep.subr.mxu0 0.0
    %832 = vmatpush1.msra.mxu0 0.0
    %833 = vmatprep.subr.mxu0 0.0
    %834 = vmatpush1.msra.mxu0 0.0
    %835 = vmatprep.subr.mxu0 0.0
    %836 = vmatpush1.msra.mxu0 0.0
    %837 = vmatprep.subr.mxu0 0.0
    %838 = vmatpush1.msra.mxu0 0.0
    %839 = vmatprep.subr.mxu0 0.0
    %840 = vmatpush1.msra.mxu0 0.0
    %841 = vmatprep.subr.mxu0 0.0
    %842 = vmatpush1.msra.mxu0 0.0
    %843 = vmatprep.subr.mxu0 0.0
    %844 = vmatpush1.msra.mxu0 0.0
    %845 = vmatprep.subr.mxu0 0.0
    %846 = vmatpush1.msra.mxu0 %v236
    %847 = vmatprep.subr.mxu0 0.0
    %848 = vmatpush1.msra.mxu0 %v235
    %849 = vmatprep.subr.mxu0 0.0
    %850 = vmatpush2.msra.mxu0 0.0
    %851 = vmatprep.subr.mxu0 0.0
    %852 = vmatpush2.msra.mxu0 0.0
    %853 = vmatprep.subr.mxu0 0.0
    %854 = vmatpush2.msra.mxu0 0.0
    %855 = vmatprep.subr.mxu0 0.0
    %856 = vmatpush2.msra.mxu0 0.0
    %857 = vmatprep.subr.mxu0 0.0
    %858 = vmatpush2.msra.mxu0 0.0
    %859 = vmatprep.subr.mxu0 0.0
    %860 = vmatpush2.msra.mxu0 0.0
    %861 = vmatprep.subr.mxu0 0.0
    %862 = vmatpush2.msra.mxu0 0.0
    %863 = vmatprep.subr.mxu0 0.0
    %864 = vmatpush2.msra.mxu0 0.0
    %865 = vmatprep.subr.mxu0 0.0
    %866 = vmatpush2.msra.mxu0 0.0
    %867 = vmatprep.subr.mxu0 0.0
    %868 = vmatpush2.msra.mxu0 0.0
    %869 = vmatprep.subr.mxu0 0.0
    %870 = vmatpush2.msra.mxu0 0.0
    %871 = vmatprep.subr.mxu0 0.0
    %872 = vmatpush2.msra.mxu0 0.0
    %873 = vmatprep.subr.mxu0 0.0
    %874 = vmatpush2.msra.mxu0 0.0
    %875 = vmatprep.subr.mxu0 0.0
    %876 = vmatpush2.msra.mxu0 0.0
    %877 = vmatprep.subr.mxu0 0.0
    %878 = vmatpush2.msra.mxu0 0.0
    %879 = vmatprep.subr.mxu0 0.0
    %880 = vmatpush2.msra.mxu0 0.0
    %881 = vmatprep.mubr.f32.mxu0 0.0
    %882 = vmatmul.mubr.f32.gmra.mxu0 %v745
    %v883 = vpop.f32.mrf.mxu0
    %v884 = vadd.f32 0.0, %v883
    %v885 = vpop.f32.mrf.mxu0
    %886 = vdwg.mxu0
    %887 = vmatprep.subr.mxu0 0.0
    %888 = vmatpush1.msra.mxu0 0.0
    %889 = vmatprep.subr.mxu0 0.0
    %890 = vmatpush1.msra.mxu0 0.0
    %891 = vmatprep.subr.mxu0 0.0
    %892 = vmatpush1.msra.mxu0 0.0
    %893 = vmatprep.subr.mxu0 0.0
    %894 = vmatpush1.msra.mxu0 0.0
    %895 = vmatprep.subr.mxu0 0.0
    %896 = vmatpush1.msra.mxu0 0.0
    %897 = vmatprep.subr.mxu0 0.0
    %898 = vmatpush1.msra.mxu0 0.0
    %899 = vmatprep.subr.mxu0 0.0
    %900 = vmatpush1.msra.mxu0 0.0
    %901 = vmatprep.subr.mxu0 0.0
    %902 = vmatpush1.msra.mxu0 0.0
    %903 = vmatprep.subr.mxu0 0.0
    %904 = vmatpush1.msra.mxu0 0.0
    %905 = vmatprep.subr.mxu0 0.0
    %906 = vmatpush1.msra.mxu0 0.0
    %907 = vmatprep.subr.mxu0 0.0
    %908 = vmatpush1.msra.mxu0 0.0
    %909 = vmatprep.subr.mxu0 0.0
    %910 = vmatpush1.msra.mxu0 0.0
    %911 = vmatprep.subr.mxu0 0.0
    %912 = vmatpush1.msra.mxu0 0.0
    %913 = vmatprep.subr.mxu0 0.0
    %914 = vmatpush1.msra.mxu0 0.0
    %915 = vmatprep.subr.mxu0 0.0
    %916 = vmatpush1.msra.mxu0 %v239
    %917 = vmatprep.subr.mxu0 0.0
    %918 = vmatpush1.msra.mxu0 %v238
    %919 = vmatprep.subr.mxu0 0.0
    %920 = vmatpush2.msra.mxu0 0.0
    %921 = vmatprep.subr.mxu0 0.0
    %922 = vmatpush2.msra.mxu0 0.0
    %923 = vmatprep.subr.mxu0 0.0
    %924 = vmatpush2.msra.mxu0 0.0
    %925 = vmatprep.subr.mxu0 0.0
    %926 = vmatpush2.msra.mxu0 0.0
    %927 = vmatprep.subr.mxu0 0.0
    %928 = vmatpush2.msra.mxu0 0.0
    %929 = vmatprep.subr.mxu0 0.0
    %930 = vmatpush2.msra.mxu0 0.0
    %931 = vmatprep.subr.mxu0 0.0
    %932 = vmatpush2.msra.mxu0 0.0
    %933 = vmatprep.subr.mxu0 0.0
    %934 = vmatpush2.msra.mxu0 0.0
    %935 = vmatprep.subr.mxu0 0.0
    %936 = vmatpush2.msra.mxu0 0.0
    %937 = vmatprep.subr.mxu0 0.0
    %938 = vmatpush2.msra.mxu0 0.0
    %939 = vmatprep.subr.mxu0 0.0
    %940 = vmatpush2.msra.mxu0 0.0
    %941 = vmatprep.subr.mxu0 0.0
    %942 = vmatpush2.msra.mxu0 0.0
    %943 = vmatprep.subr.mxu0 0.0
    %944 = vmatpush2.msra.mxu0 0.0
    %945 = vmatprep.subr.mxu0 0.0
    %946 = vmatpush2.msra.mxu0 0.0
    %947 = vmatprep.subr.mxu0 0.0
    %948 = vmatpush2.msra.mxu0 0.0
    %949 = vmatprep.subr.mxu0 0.0
    %950 = vmatpush2.msra.mxu0 0.0
    %951 = vmatprep.mubr.f32.mxu0 0.0
    %952 = vmatmul.mubr.f32.gmra.mxu0 %v745
    %v953 = vpop.f32.mrf.mxu0
    %v954 = vadd.f32 %v651, %v953
    %v955 = vpop.f32.mrf.mxu0
    %956 = vdwg.mxu0
    %v958 = vrot.slane %v814, 6
    %v960 = vadd.f32 %v334, %v958
    %v961 = vxor.u32 %v960, 2147483648
    %v962 = vmul.f32 %v961, 1.442695
    %v963 = vpow.pop %v962
    %v964 = vadd.f32 %v963, 1.0
    %v965 = vrcp.pop %v964
    %v966 = vmul.f32 1.0, %v965
    %v968 = vrot.slane %v884, 6
    %v970 = vadd.f32 %v415, %v968
    %v971 = vxor.u32 %v970, 2147483648
    %v972 = vmul.f32 %v971, 1.442695
    %v973 = vpow.pop %v972
    %v974 = vadd.f32 %v973, 1.0
    %v975 = vrcp.pop %v974
    %v976 = vmul.f32 1.0, %v975
    %v978 = vrot.slane %v954, 6
    %v980 = vmul.f32 %v966, %v978
    %v981 = vadd.f32 %v496, %v980
    %v982 = vtanh.pop %v981
    %v984 = vrot.slane %v982, 2
    %v986 = vsub.f32 %v742, %v984
    %v988 = vrot.slane %v986, 6
    %v990 = vmul.f32 %v976, %v988
    %v991 = vadd.f32 %v982, %v990
    %vm992 = vcmask 125954
    %993 = vst.msk [vmem:[#allocation2] sm:$0xc] %vm992, %v991
    %v995 = vrot.slane %v991, 2
    %v996 = vsel %vm260, %v995, 0
    %998 = vmatprep.subr.mxu0 0.0
    %999 = vmatpush1.msra.mxu0 0.0
    %1000 = vmatprep.subr.mxu0 0.0
    %1001 = vmatpush1.msra.mxu0 0.0
    %1002 = vmatprep.subr.mxu0 0.0
    %1003 = vmatpush1.msra.mxu0 0.0
    %1004 = vmatprep.subr.mxu0 0.0
    %1005 = vmatpush1.msra.mxu0 0.0
    %1006 = vmatprep.subr.mxu0 0.0
    %1007 = vmatpush1.msra.mxu0 0.0
    %1008 = vmatprep.subr.mxu0 0.0
    %1009 = vmatpush1.msra.mxu0 0.0
    %1010 = vmatprep.subr.mxu0 0.0
    %1011 = vmatpush1.msra.mxu0 0.0
    %1012 = vmatprep.subr.mxu0 0.0
    %1013 = vmatpush1.msra.mxu0 0.0
    %1014 = vmatprep.subr.mxu0 0.0
    %1015 = vmatpush1.msra.mxu0 0.0
    %1016 = vmatprep.subr.mxu0 0.0
    %1017 = vmatpush1.msra.mxu0 0.0
    %1018 = vmatprep.subr.mxu0 0.0
    %1019 = vmatpush1.msra.mxu0 0.0
    %1020 = vmatprep.subr.mxu0 0.0
    %1021 = vmatpush1.msra.mxu0 0.0
    %1022 = vmatprep.subr.mxu0 0.0
    %1023 = vmatpush1.msra.mxu0 0.0
    %1024 = vmatprep.subr.mxu0 0.0
    %1025 = vmatpush1.msra.mxu0 0.0
    %1026 = vmatprep.subr.mxu0 0.0
    %1027 = vmatpush1.msra.mxu0 %v233
    %1028 = vmatprep.subr.mxu0 0.0
    %1029 = vmatpush1.msra.mxu0 %v232
    %1030 = vmatprep.subr.mxu0 0.0
    %1031 = vmatpush2.msra.mxu0 0.0
    %1032 = vmatprep.subr.mxu0 0.0
    %1033 = vmatpush2.msra.mxu0 0.0
    %1034 = vmatprep.subr.mxu0 0.0
    %1035 = vmatpush2.msra.mxu0 0.0
    %1036 = vmatprep.subr.mxu0 0.0
    %1037 = vmatpush2.msra.mxu0 0.0
    %1038 = vmatprep.subr.mxu0 0.0
    %1039 = vmatpush2.msra.mxu0 0.0
    %1040 = vmatprep.subr.mxu0 0.0
    %1041 = vmatpush2.msra.mxu0 0.0
    %1042 = vmatprep.subr.mxu0 0.0
    %1043 = vmatpush2.msra.mxu0 0.0
    %1044 = vmatprep.subr.mxu0 0.0
    %1045 = vmatpush2.msra.mxu0 0.0
    %1046 = vmatprep.subr.mxu0 0.0
    %1047 = vmatpush2.msra.mxu0 0.0
    %1048 = vmatprep.subr.mxu0 0.0
    %1049 = vmatpush2.msra.mxu0 0.0
    %1050 = vmatprep.subr.mxu0 0.0
    %1051 = vmatpush2.msra.mxu0 0.0
    %1052 = vmatprep.subr.mxu0 0.0
    %1053 = vmatpush2.msra.mxu0 0.0
    %1054 = vmatprep.subr.mxu0 0.0
    %1055 = vmatpush2.msra.mxu0 0.0
    %1056 = vmatprep.subr.mxu0 0.0
    %1057 = vmatpush2.msra.mxu0 0.0
    %1058 = vmatprep.subr.mxu0 0.0
    %1059 = vmatpush2.msra.mxu0 0.0
    %1060 = vmatprep.subr.mxu0 0.0
    %1061 = vmatpush2.msra.mxu0 0.0
    %1062 = vmatprep.mubr.f32.mxu0 0.0
    %1063 = vmatmul.mubr.f32.gmra.mxu0 %v996
    %v1064 = vpop.f32.mrf.mxu0
    %v1065 = vadd.f32 0.0, %v1064
    %v1066 = vpop.f32.mrf.mxu0
    %1067 = vdwg.mxu0
    %1068 = vmatprep.subr.mxu0 0.0
    %1069 = vmatpush1.msra.mxu0 0.0
    %1070 = vmatprep.subr.mxu0 0.0
    %1071 = vmatpush1.msra.mxu0 0.0
    %1072 = vmatprep.subr.mxu0 0.0
    %1073 = vmatpush1.msra.mxu0 0.0
    %1074 = vmatprep.subr.mxu0 0.0
    %1075 = vmatpush1.msra.mxu0 0.0
    %1076 = vmatprep.subr.mxu0 0.0
    %1077 = vmatpush1.msra.mxu0 0.0
    %1078 = vmatprep.subr.mxu0 0.0
    %1079 = vmatpush1.msra.mxu0 0.0
    %1080 = vmatprep.subr.mxu0 0.0
    %1081 = vmatpush1.msra.mxu0 0.0
    %1082 = vmatprep.subr.mxu0 0.0
    %1083 = vmatpush1.msra.mxu0 0.0
    %1084 = vmatprep.subr.mxu0 0.0
    %1085 = vmatpush1.msra.mxu0 0.0
    %1086 = vmatprep.subr.mxu0 0.0
    %1087 = vmatpush1.msra.mxu0 0.0
    %1088 = vmatprep.subr.mxu0 0.0
    %1089 = vmatpush1.msra.mxu0 0.0
    %1090 = vmatprep.subr.mxu0 0.0
    %1091 = vmatpush1.msra.mxu0 0.0
    %1092 = vmatprep.subr.mxu0 0.0
    %1093 = vmatpush1.msra.mxu0 0.0
    %1094 = vmatprep.subr.mxu0 0.0
    %1095 = vmatpush1.msra.mxu0 0.0
    %1096 = vmatprep.subr.mxu0 0.0
    %1097 = vmatpush1.msra.mxu0 %v236
    %1098 = vmatprep.subr.mxu0 0.0
    %1099 = vmatpush1.msra.mxu0 %v235
    %1100 = vmatprep.subr.mxu0 0.0
    %1101 = vmatpush2.msra.mxu0 0.0
    %1102 = vmatprep.subr.mxu0 0.0
    %1103 = vmatpush2.msra.mxu0 0.0
    %1104 = vmatprep.subr.mxu0 0.0
    %1105 = vmatpush2.msra.mxu0 0.0
    %1106 = vmatprep.subr.mxu0 0.0
    %1107 = vmatpush2.msra.mxu0 0.0
    %1108 = vmatprep.subr.mxu0 0.0
    %1109 = vmatpush2.msra.mxu0 0.0
    %1110 = vmatprep.subr.mxu0 0.0
    %1111 = vmatpush2.msra.mxu0 0.0
    %1112 = vmatprep.subr.mxu0 0.0
    %1113 = vmatpush2.msra.mxu0 0.0
    %1114 = vmatprep.subr.mxu0 0.0
    %1115 = vmatpush2.msra.mxu0 0.0
    %1116 = vmatprep.subr.mxu0 0.0
    %1117 = vmatpush2.msra.mxu0 0.0
    %1118 = vmatprep.subr.mxu0 0.0
    %1119 = vmatpush2.msra.mxu0 0.0
    %1120 = vmatprep.subr.mxu0 0.0
    %1121 = vmatpush2.msra.mxu0 0.0
    %1122 = vmatprep.subr.mxu0 0.0
    %1123 = vmatpush2.msra.mxu0 0.0
    %1124 = vmatprep.subr.mxu0 0.0
    %1125 = vmatpush2.msra.mxu0 0.0
    %1126 = vmatprep.subr.mxu0 0.0
    %1127 = vmatpush2.msra.mxu0 0.0
    %1128 = vmatprep.subr.mxu0 0.0
    %1129 = vmatpush2.msra.mxu0 0.0
    %1130 = vmatprep.subr.mxu0 0.0
    %1131 = vmatpush2.msra.mxu0 0.0
    %1132 = vmatprep.mubr.f32.mxu0 0.0
    %1133 = vmatmul.mubr.f32.gmra.mxu0 %v996
    %v1134 = vpop.f32.mrf.mxu0
    %v1135 = vadd.f32 0.0, %v1134
    %v1136 = vpop.f32.mrf.mxu0
    %1137 = vdwg.mxu0
    %1138 = vmatprep.subr.mxu0 0.0
    %1139 = vmatpush1.msra.mxu0 0.0
    %1140 = vmatprep.subr.mxu0 0.0
    %1141 = vmatpush1.msra.mxu0 0.0
    %1142 = vmatprep.subr.mxu0 0.0
    %1143 = vmatpush1.msra.mxu0 0.0
    %1144 = vmatprep.subr.mxu0 0.0
    %1145 = vmatpush1.msra.mxu0 0.0
    %1146 = vmatprep.subr.mxu0 0.0
    %1147 = vmatpush1.msra.mxu0 0.0
    %1148 = vmatprep.subr.mxu0 0.0
    %1149 = vmatpush1.msra.mxu0 0.0
    %1150 = vmatprep.subr.mxu0 0.0
    %1151 = vmatpush1.msra.mxu0 0.0
    %1152 = vmatprep.subr.mxu0 0.0
    %1153 = vmatpush1.msra.mxu0 0.0
    %1154 = vmatprep.subr.mxu0 0.0
    %1155 = vmatpush1.msra.mxu0 0.0
    %1156 = vmatprep.subr.mxu0 0.0
    %1157 = vmatpush1.msra.mxu0 0.0
    %1158 = vmatprep.subr.mxu0 0.0
    %1159 = vmatpush1.msra.mxu0 0.0
    %1160 = vmatprep.subr.mxu0 0.0
    %1161 = vmatpush1.msra.mxu0 0.0
    %1162 = vmatprep.subr.mxu0 0.0
    %1163 = vmatpush1.msra.mxu0 0.0
    %1164 = vmatprep.subr.mxu0 0.0
    %1165 = vmatpush1.msra.mxu0 0.0
    %1166 = vmatprep.subr.mxu0 0.0
    %1167 = vmatpush1.msra.mxu0 %v239
    %1168 = vmatprep.subr.mxu0 0.0
    %1169 = vmatpush1.msra.mxu0 %v238
    %1170 = vmatprep.subr.mxu0 0.0
    %1171 = vmatpush2.msra.mxu0 0.0
    %1172 = vmatprep.subr.mxu0 0.0
    %1173 = vmatpush2.msra.mxu0 0.0
    %1174 = vmatprep.subr.mxu0 0.0
    %1175 = vmatpush2.msra.mxu0 0.0
    %1176 = vmatprep.subr.mxu0 0.0
    %1177 = vmatpush2.msra.mxu0 0.0
    %1178 = vmatprep.subr.mxu0 0.0
    %1179 = vmatpush2.msra.mxu0 0.0
    %1180 = vmatprep.subr.mxu0 0.0
    %1181 = vmatpush2.msra.mxu0 0.0
    %1182 = vmatprep.subr.mxu0 0.0
    %1183 = vmatpush2.msra.mxu0 0.0
    %1184 = vmatprep.subr.mxu0 0.0
    %1185 = vmatpush2.msra.mxu0 0.0
    %1186 = vmatprep.subr.mxu0 0.0
    %1187 = vmatpush2.msra.mxu0 0.0
    %1188 = vmatprep.subr.mxu0 0.0
    %1189 = vmatpush2.msra.mxu0 0.0
    %1190 = vmatprep.subr.mxu0 0.0
    %1191 = vmatpush2.msra.mxu0 0.0
    %1192 = vmatprep.subr.mxu0 0.0
    %1193 = vmatpush2.msra.mxu0 0.0
    %1194 = vmatprep.subr.mxu0 0.0
    %1195 = vmatpush2.msra.mxu0 0.0
    %1196 = vmatprep.subr.mxu0 0.0
    %1197 = vmatpush2.msra.mxu0 0.0
    %1198 = vmatprep.subr.mxu0 0.0
    %1199 = vmatpush2.msra.mxu0 0.0
    %1200 = vmatprep.subr.mxu0 0.0
    %1201 = vmatpush2.msra.mxu0 0.0
    %1202 = vmatprep.mubr.f32.mxu0 0.0
    %1203 = vmatmul.mubr.f32.gmra.mxu0 %v996
    %v1204 = vpop.f32.mrf.mxu0
    %v1205 = vadd.f32 %v651, %v1204
    %v1206 = vpop.f32.mrf.mxu0
    %1207 = vdwg.mxu0
    %v1209 = vrot.slane %v1065, 4
    %v1211 = vadd.f32 %v334, %v1209
    %v1212 = vxor.u32 %v1211, 2147483648
    %v1213 = vmul.f32 %v1212, 1.442695
    %v1214 = vpow.pop %v1213
    %v1215 = vadd.f32 %v1214, 1.0
    %v1216 = vrcp.pop %v1215
    %v1217 = vmul.f32 1.0, %v1216
    %v1219 = vrot.slane %v1135, 4
    %v1221 = vadd.f32 %v415, %v1219
    %v1222 = vxor.u32 %v1221, 2147483648
    %v1223 = vmul.f32 %v1222, 1.442695
    %v1224 = vpow.pop %v1223
    %v1225 = vadd.f32 %v1224, 1.0
    %v1226 = vrcp.pop %v1225
    %v1227 = vmul.f32 1.0, %v1226
    %v1229 = vrot.slane %v1205, 4
    %v1231 = vmul.f32 %v1217, %v1229
    %v1232 = vadd.f32 %v496, %v1231
    %v1233 = vtanh.pop %v1232
    %v1235 = vrot.slane %v1233, 2
    %v1237 = vsub.f32 %v991, %v1235
    %v1239 = vrot.slane %v1237, 6
    %v1241 = vmul.f32 %v1227, %v1239
    %v1242 = vadd.f32 %v1233, %v1241
    %vm1243 = vcmask 128004
    %1244 = vst.msk [vmem:[#allocation2] sm:$0x30] %vm1243, %v1242
    %v1246 = vrot.slane %v1242, 4
    %v1247 = vsel %vm260, %v1246, 0
    %1249 = vmatprep.subr.mxu0 0.0
    %1250 = vmatpush1.msra.mxu0 0.0
    %1251 = vmatprep.subr.mxu0 0.0
    %1252 = vmatpush1.msra.mxu0 0.0
    %1253 = vmatprep.subr.mxu0 0.0
    %1254 = vmatpush1.msra.mxu0 0.0
    %1255 = vmatprep.subr.mxu0 0.0
    %1256 = vmatpush1.msra.mxu0 0.0
    %1257 = vmatprep.subr.mxu0 0.0
    %1258 = vmatpush1.msra.mxu0 0.0
    %1259 = vmatprep.subr.mxu0 0.0
    %1260 = vmatpush1.msra.mxu0 0.0
    %1261 = vmatprep.subr.mxu0 0.0
    %1262 = vmatpush1.msra.mxu0 0.0
    %1263 = vmatprep.subr.mxu0 0.0
    %1264 = vmatpush1.msra.mxu0 0.0
    %1265 = vmatprep.subr.mxu0 0.0
    %1266 = vmatpush1.msra.mxu0 0.0
    %1267 = vmatprep.subr.mxu0 0.0
    %1268 = vmatpush1.msra.mxu0 0.0
    %1269 = vmatprep.subr.mxu0 0.0
    %1270 = vmatpush1.msra.mxu0 0.0
    %1271 = vmatprep.subr.mxu0 0.0
    %1272 = vmatpush1.msra.mxu0 0.0
    %1273 = vmatprep.subr.mxu0 0.0
    %1274 = vmatpush1.msra.mxu0 0.0
    %1275 = vmatprep.subr.mxu0 0.0
    %1276 = vmatpush1.msra.mxu0 0.0
    %1277 = vmatprep.subr.mxu0 0.0
    %1278 = vmatpush1.msra.mxu0 %v233
    %1279 = vmatprep.subr.mxu0 0.0
    %1280 = vmatpush1.msra.mxu0 %v232
    %1281 = vmatprep.subr.mxu0 0.0
    %1282 = vmatpush2.msra.mxu0 0.0
    %1283 = vmatprep.subr.mxu0 0.0
    %1284 = vmatpush2.msra.mxu0 0.0
    %1285 = vmatprep.subr.mxu0 0.0
    %1286 = vmatpush2.msra.mxu0 0.0
    %1287 = vmatprep.subr.mxu0 0.0
    %1288 = vmatpush2.msra.mxu0 0.0
    %1289 = vmatprep.subr.mxu0 0.0
    %1290 = vmatpush2.msra.mxu0 0.0
    %1291 = vmatprep.subr.mxu0 0.0
    %1292 = vmatpush2.msra.mxu0 0.0
    %1293 = vmatprep.subr.mxu0 0.0
    %1294 = vmatpush2.msra.mxu0 0.0
    %1295 = vmatprep.subr.mxu0 0.0
    %1296 = vmatpush2.msra.mxu0 0.0
    %1297 = vmatprep.subr.mxu0 0.0
    %1298 = vmatpush2.msra.mxu0 0.0
    %1299 = vmatprep.subr.mxu0 0.0
    %1300 = vmatpush2.msra.mxu0 0.0
    %1301 = vmatprep.subr.mxu0 0.0
    %1302 = vmatpush2.msra.mxu0 0.0
    %1303 = vmatprep.subr.mxu0 0.0
    %1304 = vmatpush2.msra.mxu0 0.0
    %1305 = vmatprep.subr.mxu0 0.0
    %1306 = vmatpush2.msra.mxu0 0.0
    %1307 = vmatprep.subr.mxu0 0.0
    %1308 = vmatpush2.msra.mxu0 0.0
    %1309 = vmatprep.subr.mxu0 0.0
    %1310 = vmatpush2.msra.mxu0 0.0
    %1311 = vmatprep.subr.mxu0 0.0
    %1312 = vmatpush2.msra.mxu0 0.0
    %1313 = vmatprep.mubr.f32.mxu0 0.0
    %1314 = vmatmul.mubr.f32.gmra.mxu0 %v1247
    %v1315 = vpop.f32.mrf.mxu0
    %v1316 = vadd.f32 0.0, %v1315
    %v1317 = vpop.f32.mrf.mxu0
    %1318 = vdwg.mxu0
    %1319 = vmatprep.subr.mxu0 0.0
    %1320 = vmatpush1.msra.mxu0 0.0
    %1321 = vmatprep.subr.mxu0 0.0
    %1322 = vmatpush1.msra.mxu0 0.0
    %1323 = vmatprep.subr.mxu0 0.0
    %1324 = vmatpush1.msra.mxu0 0.0
    %1325 = vmatprep.subr.mxu0 0.0
    %1326 = vmatpush1.msra.mxu0 0.0
    %1327 = vmatprep.subr.mxu0 0.0
    %1328 = vmatpush1.msra.mxu0 0.0
    %1329 = vmatprep.subr.mxu0 0.0
    %1330 = vmatpush1.msra.mxu0 0.0
    %1331 = vmatprep.subr.mxu0 0.0
    %1332 = vmatpush1.msra.mxu0 0.0
    %1333 = vmatprep.subr.mxu0 0.0
    %1334 = vmatpush1.msra.mxu0 0.0
    %1335 = vmatprep.subr.mxu0 0.0
    %1336 = vmatpush1.msra.mxu0 0.0
    %1337 = vmatprep.subr.mxu0 0.0
    %1338 = vmatpush1.msra.mxu0 0.0
    %1339 = vmatprep.subr.mxu0 0.0
    %1340 = vmatpush1.msra.mxu0 0.0
    %1341 = vmatprep.subr.mxu0 0.0
    %1342 = vmatpush1.msra.mxu0 0.0
    %1343 = vmatprep.subr.mxu0 0.0
    %1344 = vmatpush1.msra.mxu0 0.0
    %1345 = vmatprep.subr.mxu0 0.0
    %1346 = vmatpush1.msra.mxu0 0.0
    %1347 = vmatprep.subr.mxu0 0.0
    %1348 = vmatpush1.msra.mxu0 %v236
    %1349 = vmatprep.subr.mxu0 0.0
    %1350 = vmatpush1.msra.mxu0 %v235
    %1351 = vmatprep.subr.mxu0 0.0
    %1352 = vmatpush2.msra.mxu0 0.0
    %1353 = vmatprep.subr.mxu0 0.0
    %1354 = vmatpush2.msra.mxu0 0.0
    %1355 = vmatprep.subr.mxu0 0.0
    %1356 = vmatpush2.msra.mxu0 0.0
    %1357 = vmatprep.subr.mxu0 0.0
    %1358 = vmatpush2.msra.mxu0 0.0
    %1359 = vmatprep.subr.mxu0 0.0
    %1360 = vmatpush2.msra.mxu0 0.0
    %1361 = vmatprep.subr.mxu0 0.0
    %1362 = vmatpush2.msra.mxu0 0.0
    %1363 = vmatprep.subr.mxu0 0.0
    %1364 = vmatpush2.msra.mxu0 0.0
    %1365 = vmatprep.subr.mxu0 0.0
    %1366 = vmatpush2.msra.mxu0 0.0
    %1367 = vmatprep.subr.mxu0 0.0
    %1368 = vmatpush2.msra.mxu0 0.0
    %1369 = vmatprep.subr.mxu0 0.0
    %1370 = vmatpush2.msra.mxu0 0.0
    %1371 = vmatprep.subr.mxu0 0.0
    %1372 = vmatpush2.msra.mxu0 0.0
    %1373 = vmatprep.subr.mxu0 0.0
    %1374 = vmatpush2.msra.mxu0 0.0
    %1375 = vmatprep.subr.mxu0 0.0
    %1376 = vmatpush2.msra.mxu0 0.0
    %1377 = vmatprep.subr.mxu0 0.0
    %1378 = vmatpush2.msra.mxu0 0.0
    %1379 = vmatprep.subr.mxu0 0.0
    %1380 = vmatpush2.msra.mxu0 0.0
    %1381 = vmatprep.subr.mxu0 0.0
    %1382 = vmatpush2.msra.mxu0 0.0
    %1383 = vmatprep.mubr.f32.mxu0 0.0
    %1384 = vmatmul.mubr.f32.gmra.mxu0 %v1247
    %v1385 = vpop.f32.mrf.mxu0
    %v1386 = vadd.f32 0.0, %v1385
    %v1387 = vpop.f32.mrf.mxu0
    %1388 = vdwg.mxu0
    %1389 = vmatprep.subr.mxu0 0.0
    %1390 = vmatpush1.msra.mxu0 0.0
    %1391 = vmatprep.subr.mxu0 0.0
    %1392 = vmatpush1.msra.mxu0 0.0
    %1393 = vmatprep.subr.mxu0 0.0
    %1394 = vmatpush1.msra.mxu0 0.0
    %1395 = vmatprep.subr.mxu0 0.0
    %1396 = vmatpush1.msra.mxu0 0.0
    %1397 = vmatprep.subr.mxu0 0.0
    %1398 = vmatpush1.msra.mxu0 0.0
    %1399 = vmatprep.subr.mxu0 0.0
    %1400 = vmatpush1.msra.mxu0 0.0
    %1401 = vmatprep.subr.mxu0 0.0
    %1402 = vmatpush1.msra.mxu0 0.0
    %1403 = vmatprep.subr.mxu0 0.0
    %1404 = vmatpush1.msra.mxu0 0.0
    %1405 = vmatprep.subr.mxu0 0.0
    %1406 = vmatpush1.msra.mxu0 0.0
    %1407 = vmatprep.subr.mxu0 0.0
    %1408 = vmatpush1.msra.mxu0 0.0
    %1409 = vmatprep.subr.mxu0 0.0
    %1410 = vmatpush1.msra.mxu0 0.0
    %1411 = vmatprep.subr.mxu0 0.0
    %1412 = vmatpush1.msra.mxu0 0.0
    %1413 = vmatprep.subr.mxu0 0.0
    %1414 = vmatpush1.msra.mxu0 0.0
    %1415 = vmatprep.subr.mxu0 0.0
    %1416 = vmatpush1.msra.mxu0 0.0
    %1417 = vmatprep.subr.mxu0 0.0
    %1418 = vmatpush1.msra.mxu0 %v239
    %1419 = vmatprep.subr.mxu0 0.0
    %1420 = vmatpush1.msra.mxu0 %v238
    %1421 = vmatprep.subr.mxu0 0.0
    %1422 = vmatpush2.msra.mxu0 0.0
    %1423 = vmatprep.subr.mxu0 0.0
    %1424 = vmatpush2.msra.mxu0 0.0
    %1425 = vmatprep.subr.mxu0 0.0
    %1426 = vmatpush2.msra.mxu0 0.0
    %1427 = vmatprep.subr.mxu0 0.0
    %1428 = vmatpush2.msra.mxu0 0.0
    %1429 = vmatprep.subr.mxu0 0.0
    %1430 = vmatpush2.msra.mxu0 0.0
    %1431 = vmatprep.subr.mxu0 0.0
    %1432 = vmatpush2.msra.mxu0 0.0
    %1433 = vmatprep.subr.mxu0 0.0
    %1434 = vmatpush2.msra.mxu0 0.0
    %1435 = vmatprep.subr.mxu0 0.0
    %1436 = vmatpush2.msra.mxu0 0.0
    %1437 = vmatprep.subr.mxu0 0.0
    %1438 = vmatpush2.msra.mxu0 0.0
    %1439 = vmatprep.subr.mxu0 0.0
    %1440 = vmatpush2.msra.mxu0 0.0
    %1441 = vmatprep.subr.mxu0 0.0
    %1442 = vmatpush2.msra.mxu0 0.0
    %1443 = vmatprep.subr.mxu0 0.0
    %1444 = vmatpush2.msra.mxu0 0.0
    %1445 = vmatprep.subr.mxu0 0.0
    %1446 = vmatpush2.msra.mxu0 0.0
    %1447 = vmatprep.subr.mxu0 0.0
    %1448 = vmatpush2.msra.mxu0 0.0
    %1449 = vmatprep.subr.mxu0 0.0
    %1450 = vmatpush2.msra.mxu0 0.0
    %1451 = vmatprep.subr.mxu0 0.0
    %1452 = vmatpush2.msra.mxu0 0.0
    %1453 = vmatprep.mubr.f32.mxu0 0.0
    %1454 = vmatmul.mubr.f32.gmra.mxu0 %v1247
    %v1455 = vpop.f32.mrf.mxu0
    %v1456 = vadd.f32 %v651, %v1455
    %v1457 = vpop.f32.mrf.mxu0
    %1458 = vdwg.mxu0
    %v1460 = vrot.slane %v1316, 2
    %v1462 = vadd.f32 %v334, %v1460
    %v1463 = vxor.u32 %v1462, 2147483648
    %v1464 = vmul.f32 %v1463, 1.442695
    %v1465 = vpow.pop %v1464
    %v1466 = vadd.f32 %v1465, 1.0
    %v1467 = vrcp.pop %v1466
    %v1468 = vmul.f32 1.0, %v1467
    %v1470 = vrot.slane %v1386, 2
    %v1472 = vadd.f32 %v415, %v1470
    %v1473 = vxor.u32 %v1472, 2147483648
    %v1474 = vmul.f32 %v1473, 1.442695
    %v1475 = vpow.pop %v1474
    %v1476 = vadd.f32 %v1475, 1.0
    %v1477 = vrcp.pop %v1476
    %v1478 = vmul.f32 1.0, %v1477
    %v1480 = vrot.slane %v1456, 2
    %v1482 = vmul.f32 %v1468, %v1480
    %v1483 = vadd.f32 %v496, %v1482
    %v1484 = vtanh.pop %v1483
    %v1486 = vrot.slane %v1484, 2
    %v1488 = vsub.f32 %v1242, %v1486
    %v1490 = vrot.slane %v1488, 6
    %v1492 = vmul.f32 %v1478, %v1490
    %v1493 = vadd.f32 %v1484, %v1492
    %vm1494 = vcmask 130054
    %1495 = vst.msk [vmem:[#allocation2] sm:$0xc0] %vm1494, %v1493
    %v1497 = vrot.slane %v1493, 6
    %v1498 = vsel %vm260, %v1497, 0
    %1500 = vmatprep.subr.mxu0 0.0
    %1501 = vmatpush1.msra.mxu0 0.0
    %1502 = vmatprep.subr.mxu0 0.0
    %1503 = vmatpush1.msra.mxu0 0.0
    %1504 = vmatprep.subr.mxu0 0.0
    %1505 = vmatpush1.msra.mxu0 0.0
    %1506 = vmatprep.subr.mxu0 0.0
    %1507 = vmatpush1.msra.mxu0 0.0
    %1508 = vmatprep.subr.mxu0 0.0
    %1509 = vmatpush1.msra.mxu0 0.0
    %1510 = vmatprep.subr.mxu0 0.0
    %1511 = vmatpush1.msra.mxu0 0.0
    %1512 = vmatprep.subr.mxu0 0.0
    %1513 = vmatpush1.msra.mxu0 0.0
    %1514 = vmatprep.subr.mxu0 0.0
    %1515 = vmatpush1.msra.mxu0 0.0
    %1516 = vmatprep.subr.mxu0 0.0
    %1517 = vmatpush1.msra.mxu0 0.0
    %1518 = vmatprep.subr.mxu0 0.0
    %1519 = vmatpush1.msra.mxu0 0.0
    %1520 = vmatprep.subr.mxu0 0.0
    %1521 = vmatpush1.msra.mxu0 0.0
    %1522 = vmatprep.subr.mxu0 0.0
    %1523 = vmatpush1.msra.mxu0 0.0
    %1524 = vmatprep.subr.mxu0 0.0
    %1525 = vmatpush1.msra.mxu0 0.0
    %1526 = vmatprep.subr.mxu0 0.0
    %1527 = vmatpush1.msra.mxu0 0.0
    %1528 = vmatprep.subr.mxu0 0.0
    %1529 = vmatpush1.msra.mxu0 %v233
    %1530 = vmatprep.subr.mxu0 0.0
    %1531 = vmatpush1.msra.mxu0 %v232
    %1532 = vmatprep.subr.mxu0 0.0
    %1533 = vmatpush2.msra.mxu0 0.0
    %1534 = vmatprep.subr.mxu0 0.0
    %1535 = vmatpush2.msra.mxu0 0.0
    %1536 = vmatprep.subr.mxu0 0.0
    %1537 = vmatpush2.msra.mxu0 0.0
    %1538 = vmatprep.subr.mxu0 0.0
    %1539 = vmatpush2.msra.mxu0 0.0
    %1540 = vmatprep.subr.mxu0 0.0
    %1541 = vmatpush2.msra.mxu0 0.0
    %1542 = vmatprep.subr.mxu0 0.0
    %1543 = vmatpush2.msra.mxu0 0.0
    %1544 = vmatprep.subr.mxu0 0.0
    %1545 = vmatpush2.msra.mxu0 0.0
    %1546 = vmatprep.subr.mxu0 0.0
    %1547 = vmatpush2.msra.mxu0 0.0
    %1548 = vmatprep.subr.mxu0 0.0
    %1549 = vmatpush2.msra.mxu0 0.0
    %1550 = vmatprep.subr.mxu0 0.0
    %1551 = vmatpush2.msra.mxu0 0.0
    %1552 = vmatprep.subr.mxu0 0.0
    %1553 = vmatpush2.msra.mxu0 0.0
    %1554 = vmatprep.subr.mxu0 0.0
    %1555 = vmatpush2.msra.mxu0 0.0
    %1556 = vmatprep.subr.mxu0 0.0
    %1557 = vmatpush2.msra.mxu0 0.0
    %1558 = vmatprep.subr.mxu0 0.0
    %1559 = vmatpush2.msra.mxu0 0.0
    %1560 = vmatprep.subr.mxu0 0.0
    %1561 = vmatpush2.msra.mxu0 0.0
    %1562 = vmatprep.subr.mxu0 0.0
    %1563 = vmatpush2.msra.mxu0 0.0
    %1564 = vmatprep.mubr.f32.mxu0 0.0
    %1565 = vmatmul.mubr.f32.gmra.mxu0 %v1498
    %v1566 = vpop.f32.mrf.mxu0
    %v1567 = vadd.f32 0.0, %v1566
    %v1568 = vpop.f32.mrf.mxu0
    %1569 = vdwg.mxu0
    %1570 = vmatprep.subr.mxu0 0.0
    %1571 = vmatpush1.msra.mxu0 0.0
    %1572 = vmatprep.subr.mxu0 0.0
    %1573 = vmatpush1.msra.mxu0 0.0
    %1574 = vmatprep.subr.mxu0 0.0
    %1575 = vmatpush1.msra.mxu0 0.0
    %1576 = vmatprep.subr.mxu0 0.0
    %1577 = vmatpush1.msra.mxu0 0.0
    %1578 = vmatprep.subr.mxu0 0.0
    %1579 = vmatpush1.msra.mxu0 0.0
    %1580 = vmatprep.subr.mxu0 0.0
    %1581 = vmatpush1.msra.mxu0 0.0
    %1582 = vmatprep.subr.mxu0 0.0
    %1583 = vmatpush1.msra.mxu0 0.0
    %1584 = vmatprep.subr.mxu0 0.0
    %1585 = vmatpush1.msra.mxu0 0.0
    %1586 = vmatprep.subr.mxu0 0.0
    %1587 = vmatpush1.msra.mxu0 0.0
    %1588 = vmatprep.subr.mxu0 0.0
    %1589 = vmatpush1.msra.mxu0 0.0
    %1590 = vmatprep.subr.mxu0 0.0
    %1591 = vmatpush1.msra.mxu0 0.0
    %1592 = vmatprep.subr.mxu0 0.0
    %1593 = vmatpush1.msra.mxu0 0.0
    %1594 = vmatprep.subr.mxu0 0.0
    %1595 = vmatpush1.msra.mxu0 0.0
    %1596 = vmatprep.subr.mxu0 0.0
    %1597 = vmatpush1.msra.mxu0 0.0
    %1598 = vmatprep.subr.mxu0 0.0
    %1599 = vmatpush1.msra.mxu0 %v236
    %1600 = vmatprep.subr.mxu0 0.0
    %1601 = vmatpush1.msra.mxu0 %v235
    %1602 = vmatprep.subr.mxu0 0.0
    %1603 = vmatpush2.msra.mxu0 0.0
    %1604 = vmatprep.subr.mxu0 0.0
    %1605 = vmatpush2.msra.mxu0 0.0
    %1606 = vmatprep.subr.mxu0 0.0
    %1607 = vmatpush2.msra.mxu0 0.0
    %1608 = vmatprep.subr.mxu0 0.0
    %1609 = vmatpush2.msra.mxu0 0.0
    %1610 = vmatprep.subr.mxu0 0.0
    %1611 = vmatpush2.msra.mxu0 0.0
    %1612 = vmatprep.subr.mxu0 0.0
    %1613 = vmatpush2.msra.mxu0 0.0
    %1614 = vmatprep.subr.mxu0 0.0
    %1615 = vmatpush2.msra.mxu0 0.0
    %1616 = vmatprep.subr.mxu0 0.0
    %1617 = vmatpush2.msra.mxu0 0.0
    %1618 = vmatprep.subr.mxu0 0.0
    %1619 = vmatpush2.msra.mxu0 0.0
    %1620 = vmatprep.subr.mxu0 0.0
    %1621 = vmatpush2.msra.mxu0 0.0
    %1622 = vmatprep.subr.mxu0 0.0
    %1623 = vmatpush2.msra.mxu0 0.0
    %1624 = vmatprep.subr.mxu0 0.0
    %1625 = vmatpush2.msra.mxu0 0.0
    %1626 = vmatprep.subr.mxu0 0.0
    %1627 = vmatpush2.msra.mxu0 0.0
    %1628 = vmatprep.subr.mxu0 0.0
    %1629 = vmatpush2.msra.mxu0 0.0
    %1630 = vmatprep.subr.mxu0 0.0
    %1631 = vmatpush2.msra.mxu0 0.0
    %1632 = vmatprep.subr.mxu0 0.0
    %1633 = vmatpush2.msra.mxu0 0.0
    %1634 = vmatprep.mubr.f32.mxu0 0.0
    %1635 = vmatmul.mubr.f32.gmra.mxu0 %v1498
    %v1636 = vpop.f32.mrf.mxu0
    %v1637 = vadd.f32 0.0, %v1636
    %v1638 = vpop.f32.mrf.mxu0
    %1639 = vdwg.mxu0
    %1640 = vmatprep.subr.mxu0 0.0
    %1641 = vmatpush1.msra.mxu0 0.0
    %1642 = vmatprep.subr.mxu0 0.0
    %1643 = vmatpush1.msra.mxu0 0.0
    %1644 = vmatprep.subr.mxu0 0.0
    %1645 = vmatpush1.msra.mxu0 0.0
    %1646 = vmatprep.subr.mxu0 0.0
    %1647 = vmatpush1.msra.mxu0 0.0
    %1648 = vmatprep.subr.mxu0 0.0
    %1649 = vmatpush1.msra.mxu0 0.0
    %1650 = vmatprep.subr.mxu0 0.0
    %1651 = vmatpush1.msra.mxu0 0.0
    %1652 = vmatprep.subr.mxu0 0.0
    %1653 = vmatpush1.msra.mxu0 0.0
    %1654 = vmatprep.subr.mxu0 0.0
    %1655 = vmatpush1.msra.mxu0 0.0
    %1656 = vmatprep.subr.mxu0 0.0
    %1657 = vmatpush1.msra.mxu0 0.0
    %1658 = vmatprep.subr.mxu0 0.0
    %1659 = vmatpush1.msra.mxu0 0.0
    %1660 = vmatprep.subr.mxu0 0.0
    %1661 = vmatpush1.msra.mxu0 0.0
    %1662 = vmatprep.subr.mxu0 0.0
    %1663 = vmatpush1.msra.mxu0 0.0
    %1664 = vmatprep.subr.mxu0 0.0
    %1665 = vmatpush1.msra.mxu0 0.0
    %1666 = vmatprep.subr.mxu0 0.0
    %1667 = vmatpush1.msra.mxu0 0.0
    %1668 = vmatprep.subr.mxu0 0.0
    %1669 = vmatpush1.msra.mxu0 %v239
    %1670 = vmatprep.subr.mxu0 0.0
    %1671 = vmatpush1.msra.mxu0 %v238
    %1672 = vmatprep.subr.mxu0 0.0
    %1673 = vmatpush2.msra.mxu0 0.0
    %1674 = vmatprep.subr.mxu0 0.0
    %1675 = vmatpush2.msra.mxu0 0.0
    %1676 = vmatprep.subr.mxu0 0.0
    %1677 = vmatpush2.msra.mxu0 0.0
    %1678 = vmatprep.subr.mxu0 0.0
    %1679 = vmatpush2.msra.mxu0 0.0
    %1680 = vmatprep.subr.mxu0 0.0
    %1681 = vmatpush2.msra.mxu0 0.0
    %1682 = vmatprep.subr.mxu0 0.0
    %1683 = vmatpush2.msra.mxu0 0.0
    %1684 = vmatprep.subr.mxu0 0.0
    %1685 = vmatpush2.msra.mxu0 0.0
    %1686 = vmatprep.subr.mxu0 0.0
    %1687 = vmatpush2.msra.mxu0 0.0
    %1688 = vmatprep.subr.mxu0 0.0
    %1689 = vmatpush2.msra.mxu0 0.0
    %1690 = vmatprep.subr.mxu0 0.0
    %1691 = vmatpush2.msra.mxu0 0.0
    %1692 = vmatprep.subr.mxu0 0.0
    %1693 = vmatpush2.msra.mxu0 0.0
    %1694 = vmatprep.subr.mxu0 0.0
    %1695 = vmatpush2.msra.mxu0 0.0
    %1696 = vmatprep.subr.mxu0 0.0
    %1697 = vmatpush2.msra.mxu0 0.0
    %1698 = vmatprep.subr.mxu0 0.0
    %1699 = vmatpush2.msra.mxu0 0.0
    %1700 = vmatprep.subr.mxu0 0.0
    %1701 = vmatpush2.msra.mxu0 0.0
    %1702 = vmatprep.subr.mxu0 0.0
    %1703 = vmatpush2.msra.mxu0 0.0
    %1704 = vmatprep.mubr.f32.mxu0 0.0
    %1705 = vmatmul.mubr.f32.gmra.mxu0 %v1498
    %v1706 = vpop.f32.mrf.mxu0
    %v1707 = vadd.f32 %v651, %v1706
    %v1708 = vpop.f32.mrf.mxu0
    %1709 = vdwg.mxu0
    %v1710 = vadd.f32 %v339, %v1567
    %v1711 = vxor.u32 %v1710, 2147483648
    %v1712 = vmul.f32 %v1711, 1.442695
    %v1713 = vpow.pop %v1712
    %v1714 = vadd.f32 %v1713, 1.0
    %v1715 = vrcp.pop %v1714
    %v1716 = vmul.f32 1.0, %v1715
    %v1717 = vadd.f32 %v420, %v1637
    %v1718 = vxor.u32 %v1717, 2147483648
    %v1719 = vmul.f32 %v1718, 1.442695
    %v1720 = vpow.pop %v1719
    %v1721 = vadd.f32 %v1720, 1.0
    %v1722 = vrcp.pop %v1721
    %v1723 = vmul.f32 1.0, %v1722
    %v1724 = vmul.f32 %v1716, %v1707
    %v1725 = vadd.f32 %v501, %v1724
    %v1726 = vtanh.pop %v1725
    %v1728 = vrot.slane %v1726, 2
    %v1730 = vsub.f32 %v1493, %v1728
    %v1732 = vrot.slane %v1730, 6
    %v1734 = vmul.f32 %v1723, %v1732
    %v1735 = vadd.f32 %v1726, %v1734
    %1736 = vst.msk [vmem:[#allocation2 + $0x8] sm:$0x3] %vm193, %v1735
    %v1738 = vsel %vm260, %v1735, 0
    %1740 = vmatprep.subr.mxu0 0.0
    %1741 = vmatpush1.msra.mxu0 0.0
    %1742 = vmatprep.subr.mxu0 0.0
    %1743 = vmatpush1.msra.mxu0 0.0
    %1744 = vmatprep.subr.mxu0 0.0
    %1745 = vmatpush1.msra.mxu0 0.0
    %1746 = vmatprep.subr.mxu0 0.0
    %1747 = vmatpush1.msra.mxu0 0.0
    %1748 = vmatprep.subr.mxu0 0.0
    %1749 = vmatpush1.msra.mxu0 0.0
    %1750 = vmatprep.subr.mxu0 0.0
    %1751 = vmatpush1.msra.mxu0 0.0
    %1752 = vmatprep.subr.mxu0 0.0
    %1753 = vmatpush1.msra.mxu0 0.0
    %1754 = vmatprep.subr.mxu0 0.0
    %1755 = vmatpush1.msra.mxu0 0.0
    %1756 = vmatprep.subr.mxu0 0.0
    %1757 = vmatpush1.msra.mxu0 0.0
    %1758 = vmatprep.subr.mxu0 0.0
    %1759 = vmatpush1.msra.mxu0 0.0
    %1760 = vmatprep.subr.mxu0 0.0
    %1761 = vmatpush1.msra.mxu0 0.0
    %1762 = vmatprep.subr.mxu0 0.0
    %1763 = vmatpush1.msra.mxu0 0.0
    %1764 = vmatprep.subr.mxu0 0.0
    %1765 = vmatpush1.msra.mxu0 0.0
    %1766 = vmatprep.subr.mxu0 0.0
    %1767 = vmatpush1.msra.mxu0 0.0
    %1768 = vmatprep.subr.mxu0 0.0
    %1769 = vmatpush1.msra.mxu0 %v233
    %1770 = vmatprep.subr.mxu0 0.0
    %1771 = vmatpush1.msra.mxu0 %v232
    %1772 = vmatprep.subr.mxu0 0.0
    %1773 = vmatpush2.msra.mxu0 0.0
    %1774 = vmatprep.subr.mxu0 0.0
    %1775 = vmatpush2.msra.mxu0 0.0
    %1776 = vmatprep.subr.mxu0 0.0
    %1777 = vmatpush2.msra.mxu0 0.0
    %1778 = vmatprep.subr.mxu0 0.0
    %1779 = vmatpush2.msra.mxu0 0.0
    %1780 = vmatprep.subr.mxu0 0.0
    %1781 = vmatpush2.msra.mxu0 0.0
    %1782 = vmatprep.subr.mxu0 0.0
    %1783 = vmatpush2.msra.mxu0 0.0
    %1784 = vmatprep.subr.mxu0 0.0
    %1785 = vmatpush2.msra.mxu0 0.0
    %1786 = vmatprep.subr.mxu0 0.0
    %1787 = vmatpush2.msra.mxu0 0.0
    %1788 = vmatprep.subr.mxu0 0.0
    %1789 = vmatpush2.msra.mxu0 0.0
    %1790 = vmatprep.subr.mxu0 0.0
    %1791 = vmatpush2.msra.mxu0 0.0
    %1792 = vmatprep.subr.mxu0 0.0
    %1793 = vmatpush2.msra.mxu0 0.0
    %1794 = vmatprep.subr.mxu0 0.0
    %1795 = vmatpush2.msra.mxu0 0.0
    %1796 = vmatprep.subr.mxu0 0.0
    %1797 = vmatpush2.msra.mxu0 0.0
    %1798 = vmatprep.subr.mxu0 0.0
    %1799 = vmatpush2.msra.mxu0 0.0
    %1800 = vmatprep.subr.mxu0 0.0
    %1801 = vmatpush2.msra.mxu0 0.0
    %1802 = vmatprep.subr.mxu0 0.0
    %1803 = vmatpush2.msra.mxu0 0.0
    %1804 = vmatprep.mubr.f32.mxu0 0.0
    %1805 = vmatmul.mubr.f32.gmra.mxu0 %v1738
    %v1806 = vpop.f32.mrf.mxu0
    %v1807 = vadd.f32 0.0, %v1806
    %v1808 = vpop.f32.mrf.mxu0
    %1809 = vdwg.mxu0
    %1810 = vmatprep.subr.mxu0 0.0
    %1811 = vmatpush1.msra.mxu0 0.0
    %1812 = vmatprep.subr.mxu0 0.0
    %1813 = vmatpush1.msra.mxu0 0.0
    %1814 = vmatprep.subr.mxu0 0.0
    %1815 = vmatpush1.msra.mxu0 0.0
    %1816 = vmatprep.subr.mxu0 0.0
    %1817 = vmatpush1.msra.mxu0 0.0
    %1818 = vmatprep.subr.mxu0 0.0
    %1819 = vmatpush1.msra.mxu0 0.0
    %1820 = vmatprep.subr.mxu0 0.0
    %1821 = vmatpush1.msra.mxu0 0.0
    %1822 = vmatprep.subr.mxu0 0.0
    %1823 = vmatpush1.msra.mxu0 0.0
    %1824 = vmatprep.subr.mxu0 0.0
    %1825 = vmatpush1.msra.mxu0 0.0
    %1826 = vmatprep.subr.mxu0 0.0
    %1827 = vmatpush1.msra.mxu0 0.0
    %1828 = vmatprep.subr.mxu0 0.0
    %1829 = vmatpush1.msra.mxu0 0.0
    %1830 = vmatprep.subr.mxu0 0.0
    %1831 = vmatpush1.msra.mxu0 0.0
    %1832 = vmatprep.subr.mxu0 0.0
    %1833 = vmatpush1.msra.mxu0 0.0
    %1834 = vmatprep.subr.mxu0 0.0
    %1835 = vmatpush1.msra.mxu0 0.0
    %1836 = vmatprep.subr.mxu0 0.0
    %1837 = vmatpush1.msra.mxu0 0.0
    %1838 = vmatprep.subr.mxu0 0.0
    %1839 = vmatpush1.msra.mxu0 %v236
    %1840 = vmatprep.subr.mxu0 0.0
    %1841 = vmatpush1.msra.mxu0 %v235
    %1842 = vmatprep.subr.mxu0 0.0
    %1843 = vmatpush2.msra.mxu0 0.0
    %1844 = vmatprep.subr.mxu0 0.0
    %1845 = vmatpush2.msra.mxu0 0.0
    %1846 = vmatprep.subr.mxu0 0.0
    %1847 = vmatpush2.msra.mxu0 0.0
    %1848 = vmatprep.subr.mxu0 0.0
    %1849 = vmatpush2.msra.mxu0 0.0
    %1850 = vmatprep.subr.mxu0 0.0
    %1851 = vmatpush2.msra.mxu0 0.0
    %1852 = vmatprep.subr.mxu0 0.0
    %1853 = vmatpush2.msra.mxu0 0.0
    %1854 = vmatprep.subr.mxu0 0.0
    %1855 = vmatpush2.msra.mxu0 0.0
    %1856 = vmatprep.subr.mxu0 0.0
    %1857 = vmatpush2.msra.mxu0 0.0
    %1858 = vmatprep.subr.mxu0 0.0
    %1859 = vmatpush2.msra.mxu0 0.0
    %1860 = vmatprep.subr.mxu0 0.0
    %1861 = vmatpush2.msra.mxu0 0.0
    %1862 = vmatprep.subr.mxu0 0.0
    %1863 = vmatpush2.msra.mxu0 0.0
    %1864 = vmatprep.subr.mxu0 0.0
    %1865 = vmatpush2.msra.mxu0 0.0
    %1866 = vmatprep.subr.mxu0 0.0
    %1867 = vmatpush2.msra.mxu0 0.0
    %1868 = vmatprep.subr.mxu0 0.0
    %1869 = vmatpush2.msra.mxu0 0.0
    %1870 = vmatprep.subr.mxu0 0.0
    %1871 = vmatpush2.msra.mxu0 0.0
    %1872 = vmatprep.subr.mxu0 0.0
    %1873 = vmatpush2.msra.mxu0 0.0
    %1874 = vmatprep.mubr.f32.mxu0 0.0
    %1875 = vmatmul.mubr.f32.gmra.mxu0 %v1738
    %v1876 = vpop.f32.mrf.mxu0
    %v1877 = vadd.f32 0.0, %v1876
    %v1878 = vpop.f32.mrf.mxu0
    %1879 = vdwg.mxu0
    %1880 = vmatprep.subr.mxu0 0.0
    %1881 = vmatpush1.msra.mxu0 0.0
    %1882 = vmatprep.subr.mxu0 0.0
    %1883 = vmatpush1.msra.mxu0 0.0
    %1884 = vmatprep.subr.mxu0 0.0
    %1885 = vmatpush1.msra.mxu0 0.0
    %1886 = vmatprep.subr.mxu0 0.0
    %1887 = vmatpush1.msra.mxu0 0.0
    %1888 = vmatprep.subr.mxu0 0.0
    %1889 = vmatpush1.msra.mxu0 0.0
    %1890 = vmatprep.subr.mxu0 0.0
    %1891 = vmatpush1.msra.mxu0 0.0
    %1892 = vmatprep.subr.mxu0 0.0
    %1893 = vmatpush1.msra.mxu0 0.0
    %1894 = vmatprep.subr.mxu0 0.0
    %1895 = vmatpush1.msra.mxu0 0.0
    %1896 = vmatprep.subr.mxu0 0.0
    %1897 = vmatpush1.msra.mxu0 0.0
    %1898 = vmatprep.subr.mxu0 0.0
    %1899 = vmatpush1.msra.mxu0 0.0
    %1900 = vmatprep.subr.mxu0 0.0
    %1901 = vmatpush1.msra.mxu0 0.0
    %1902 = vmatprep.subr.mxu0 0.0
    %1903 = vmatpush1.msra.mxu0 0.0
    %1904 = vmatprep.subr.mxu0 0.0
    %1905 = vmatpush1.msra.mxu0 0.0
    %1906 = vmatprep.subr.mxu0 0.0
    %1907 = vmatpush1.msra.mxu0 0.0
    %1908 = vmatprep.subr.mxu0 0.0
    %1909 = vmatpush1.msra.mxu0 %v239
    %1910 = vmatprep.subr.mxu0 0.0
    %1911 = vmatpush1.msra.mxu0 %v238
    %1912 = vmatprep.subr.mxu0 0.0
    %1913 = vmatpush2.msra.mxu0 0.0
    %1914 = vmatprep.subr.mxu0 0.0
    %1915 = vmatpush2.msra.mxu0 0.0
    %1916 = vmatprep.subr.mxu0 0.0
    %1917 = vmatpush2.msra.mxu0 0.0
    %1918 = vmatprep.subr.mxu0 0.0
    %1919 = vmatpush2.msra.mxu0 0.0
    %1920 = vmatprep.subr.mxu0 0.0
    %1921 = vmatpush2.msra.mxu0 0.0
    %1922 = vmatprep.subr.mxu0 0.0
    %1923 = vmatpush2.msra.mxu0 0.0
    %1924 = vmatprep.subr.mxu0 0.0
    %1925 = vmatpush2.msra.mxu0 0.0
    %1926 = vmatprep.subr.mxu0 0.0
    %1927 = vmatpush2.msra.mxu0 0.0
    %1928 = vmatprep.subr.mxu0 0.0
    %1929 = vmatpush2.msra.mxu0 0.0
    %1930 = vmatprep.subr.mxu0 0.0
    %1931 = vmatpush2.msra.mxu0 0.0
    %1932 = vmatprep.subr.mxu0 0.0
    %1933 = vmatpush2.msra.mxu0 0.0
    %1934 = vmatprep.subr.mxu0 0.0
    %1935 = vmatpush2.msra.mxu0 0.0
    %1936 = vmatprep.subr.mxu0 0.0
    %1937 = vmatpush2.msra.mxu0 0.0
    %1938 = vmatprep.subr.mxu0 0.0
    %1939 = vmatpush2.msra.mxu0 0.0
    %1940 = vmatprep.subr.mxu0 0.0
    %1941 = vmatpush2.msra.mxu0 0.0
    %1942 = vmatprep.subr.mxu0 0.0
    %1943 = vmatpush2.msra.mxu0 0.0
    %1944 = vmatprep.mubr.f32.mxu0 0.0
    %1945 = vmatmul.mubr.f32.gmra.mxu0 %v1738
    %v1946 = vpop.f32.mrf.mxu0
    %v1947 = vadd.f32 %v651, %v1946
    %v1948 = vpop.f32.mrf.mxu0
    %1949 = vdwg.mxu0
    %v1951 = vrot.slane %v1807, 6
    %v1953 = vadd.f32 %v339, %v1951
    %v1954 = vxor.u32 %v1953, 2147483648
    %v1955 = vmul.f32 %v1954, 1.442695
    %v1956 = vpow.pop %v1955
    %v1957 = vadd.f32 %v1956, 1.0
    %v1958 = vrcp.pop %v1957
    %v1959 = vmul.f32 1.0, %v1958
    %v1961 = vrot.slane %v1877, 6
    %v1963 = vadd.f32 %v420, %v1961
    %v1964 = vxor.u32 %v1963, 2147483648
    %v1965 = vmul.f32 %v1964, 1.442695
    %v1966 = vpow.pop %v1965
    %v1967 = vadd.f32 %v1966, 1.0
    %v1968 = vrcp.pop %v1967
    %v1969 = vmul.f32 1.0, %v1968
    %v1971 = vrot.slane %v1947, 6
    %v1973 = vmul.f32 %v1959, %v1971
    %v1974 = vadd.f32 %v501, %v1973
    %v1975 = vtanh.pop %v1974
    %v1977 = vrot.slane %v1975, 2
    %v1979 = vsub.f32 %v1735, %v1977
    %v1981 = vrot.slane %v1979, 6
    %v1983 = vmul.f32 %v1969, %v1981
    %v1984 = vadd.f32 %v1975, %v1983
    %1985 = vst.msk [vmem:[#allocation2 + $0x8] sm:$0xc] %vm992, %v1984
    %v1987 = vrot.slane %v1984, 2
    %v1988 = vsel %vm260, %v1987, 0
    %1990 = vmatprep.subr.mxu0 0.0
    %1991 = vmatpush1.msra.mxu0 0.0
    %1992 = vmatprep.subr.mxu0 0.0
    %1993 = vmatpush1.msra.mxu0 0.0
    %1994 = vmatprep.subr.mxu0 0.0
    %1995 = vmatpush1.msra.mxu0 0.0
    %1996 = vmatprep.subr.mxu0 0.0
    %1997 = vmatpush1.msra.mxu0 0.0
    %1998 = vmatprep.subr.mxu0 0.0
    %1999 = vmatpush1.msra.mxu0 0.0
    %2000 = vmatprep.subr.mxu0 0.0
    %2001 = vmatpush1.msra.mxu0 0.0
    %2002 = vmatprep.subr.mxu0 0.0
    %2003 = vmatpush1.msra.mxu0 0.0
    %2004 = vmatprep.subr.mxu0 0.0
    %2005 = vmatpush1.msra.mxu0 0.0
    %2006 = vmatprep.subr.mxu0 0.0
    %2007 = vmatpush1.msra.mxu0 0.0
    %2008 = vmatprep.subr.mxu0 0.0
    %2009 = vmatpush1.msra.mxu0 0.0
    %2010 = vmatprep.subr.mxu0 0.0
    %2011 = vmatpush1.msra.mxu0 0.0
    %2012 = vmatprep.subr.mxu0 0.0
    %2013 = vmatpush1.msra.mxu0 0.0
    %2014 = vmatprep.subr.mxu0 0.0
    %2015 = vmatpush1.msra.mxu0 0.0
    %2016 = vmatprep.subr.mxu0 0.0
    %2017 = vmatpush1.msra.mxu0 0.0
    %2018 = vmatprep.subr.mxu0 0.0
    %2019 = vmatpush1.msra.mxu0 %v233
    %2020 = vmatprep.subr.mxu0 0.0
    %2021 = vmatpush1.msra.mxu0 %v232
    %2022 = vmatprep.subr.mxu0 0.0
    %2023 = vmatpush2.msra.mxu0 0.0
    %2024 = vmatprep.subr.mxu0 0.0
    %2025 = vmatpush2.msra.mxu0 0.0
    %2026 = vmatprep.subr.mxu0 0.0
    %2027 = vmatpush2.msra.mxu0 0.0
    %2028 = vmatprep.subr.mxu0 0.0
    %2029 = vmatpush2.msra.mxu0 0.0
    %2030 = vmatprep.subr.mxu0 0.0
    %2031 = vmatpush2.msra.mxu0 0.0
    %2032 = vmatprep.subr.mxu0 0.0
    %2033 = vmatpush2.msra.mxu0 0.0
    %2034 = vmatprep.subr.mxu0 0.0
    %2035 = vmatpush2.msra.mxu0 0.0
    %2036 = vmatprep.subr.mxu0 0.0
    %2037 = vmatpush2.msra.mxu0 0.0
    %2038 = vmatprep.subr.mxu0 0.0
    %2039 = vmatpush2.msra.mxu0 0.0
    %2040 = vmatprep.subr.mxu0 0.0
    %2041 = vmatpush2.msra.mxu0 0.0
    %2042 = vmatprep.subr.mxu0 0.0
    %2043 = vmatpush2.msra.mxu0 0.0
    %2044 = vmatprep.subr.mxu0 0.0
    %2045 = vmatpush2.msra.mxu0 0.0
    %2046 = vmatprep.subr.mxu0 0.0
    %2047 = vmatpush2.msra.mxu0 0.0
    %2048 = vmatprep.subr.mxu0 0.0
    %2049 = vmatpush2.msra.mxu0 0.0
    %2050 = vmatprep.subr.mxu0 0.0
    %2051 = vmatpush2.msra.mxu0 0.0
    %2052 = vmatprep.subr.mxu0 0.0
    %2053 = vmatpush2.msra.mxu0 0.0
    %2054 = vmatprep.mubr.f32.mxu0 0.0
    %2055 = vmatmul.mubr.f32.gmra.mxu0 %v1988
    %v2056 = vpop.f32.mrf.mxu0
    %v2057 = vadd.f32 0.0, %v2056
    %v2058 = vpop.f32.mrf.mxu0
    %2059 = vdwg.mxu0
    %2060 = vmatprep.subr.mxu0 0.0
    %2061 = vmatpush1.msra.mxu0 0.0
    %2062 = vmatprep.subr.mxu0 0.0
    %2063 = vmatpush1.msra.mxu0 0.0
    %2064 = vmatprep.subr.mxu0 0.0
    %2065 = vmatpush1.msra.mxu0 0.0
    %2066 = vmatprep.subr.mxu0 0.0
    %2067 = vmatpush1.msra.mxu0 0.0
    %2068 = vmatprep.subr.mxu0 0.0
    %2069 = vmatpush1.msra.mxu0 0.0
    %2070 = vmatprep.subr.mxu0 0.0
    %2071 = vmatpush1.msra.mxu0 0.0
    %2072 = vmatprep.subr.mxu0 0.0
    %2073 = vmatpush1.msra.mxu0 0.0
    %2074 = vmatprep.subr.mxu0 0.0
    %2075 = vmatpush1.msra.mxu0 0.0
    %2076 = vmatprep.subr.mxu0 0.0
    %2077 = vmatpush1.msra.mxu0 0.0
    %2078 = vmatprep.subr.mxu0 0.0
    %2079 = vmatpush1.msra.mxu0 0.0
    %2080 = vmatprep.subr.mxu0 0.0
    %2081 = vmatpush1.msra.mxu0 0.0
    %2082 = vmatprep.subr.mxu0 0.0
    %2083 = vmatpush1.msra.mxu0 0.0
    %2084 = vmatprep.subr.mxu0 0.0
    %2085 = vmatpush1.msra.mxu0 0.0
    %2086 = vmatprep.subr.mxu0 0.0
    %2087 = vmatpush1.msra.mxu0 0.0
    %2088 = vmatprep.subr.mxu0 0.0
    %2089 = vmatpush1.msra.mxu0 %v236
    %2090 = vmatprep.subr.mxu0 0.0
    %2091 = vmatpush1.msra.mxu0 %v235
    %2092 = vmatprep.subr.mxu0 0.0
    %2093 = vmatpush2.msra.mxu0 0.0
    %2094 = vmatprep.subr.mxu0 0.0
    %2095 = vmatpush2.msra.mxu0 0.0
    %2096 = vmatprep.subr.mxu0 0.0
    %2097 = vmatpush2.msra.mxu0 0.0
    %2098 = vmatprep.subr.mxu0 0.0
    %2099 = vmatpush2.msra.mxu0 0.0
    %2100 = vmatprep.subr.mxu0 0.0
    %2101 = vmatpush2.msra.mxu0 0.0
    %2102 = vmatprep.subr.mxu0 0.0
    %2103 = vmatpush2.msra.mxu0 0.0
    %2104 = vmatprep.subr.mxu0 0.0
    %2105 = vmatpush2.msra.mxu0 0.0
    %2106 = vmatprep.subr.mxu0 0.0
    %2107 = vmatpush2.msra.mxu0 0.0
    %2108 = vmatprep.subr.mxu0 0.0
    %2109 = vmatpush2.msra.mxu0 0.0
    %2110 = vmatprep.subr.mxu0 0.0
    %2111 = vmatpush2.msra.mxu0 0.0
    %2112 = vmatprep.subr.mxu0 0.0
    %2113 = vmatpush2.msra.mxu0 0.0
    %2114 = vmatprep.subr.mxu0 0.0
    %2115 = vmatpush2.msra.mxu0 0.0
    %2116 = vmatprep.subr.mxu0 0.0
    %2117 = vmatpush2.msra.mxu0 0.0
    %2118 = vmatprep.subr.mxu0 0.0
    %2119 = vmatpush2.msra.mxu0 0.0
    %2120 = vmatprep.subr.mxu0 0.0
    %2121 = vmatpush2.msra.mxu0 0.0
    %2122 = vmatprep.subr.mxu0 0.0
    %2123 = vmatpush2.msra.mxu0 0.0
    %2124 = vmatprep.mubr.f32.mxu0 0.0
    %2125 = vmatmul.mubr.f32.gmra.mxu0 %v1988
    %v2126 = vpop.f32.mrf.mxu0
    %v2127 = vadd.f32 0.0, %v2126
    %v2128 = vpop.f32.mrf.mxu0
    %2129 = vdwg.mxu0
    %2130 = vmatprep.subr.mxu0 0.0
    %2131 = vmatpush1.msra.mxu0 0.0
    %2132 = vmatprep.subr.mxu0 0.0
    %2133 = vmatpush1.msra.mxu0 0.0
    %2134 = vmatprep.subr.mxu0 0.0
    %2135 = vmatpush1.msra.mxu0 0.0
    %2136 = vmatprep.subr.mxu0 0.0
    %2137 = vmatpush1.msra.mxu0 0.0
    %2138 = vmatprep.subr.mxu0 0.0
    %2139 = vmatpush1.msra.mxu0 0.0
    %2140 = vmatprep.subr.mxu0 0.0
    %2141 = vmatpush1.msra.mxu0 0.0
    %2142 = vmatprep.subr.mxu0 0.0
    %2143 = vmatpush1.msra.mxu0 0.0
    %2144 = vmatprep.subr.mxu0 0.0
    %2145 = vmatpush1.msra.mxu0 0.0
    %2146 = vmatprep.subr.mxu0 0.0
    %2147 = vmatpush1.msra.mxu0 0.0
    %2148 = vmatprep.subr.mxu0 0.0
    %2149 = vmatpush1.msra.mxu0 0.0
    %2150 = vmatprep.subr.mxu0 0.0
    %2151 = vmatpush1.msra.mxu0 0.0
    %2152 = vmatprep.subr.mxu0 0.0
    %2153 = vmatpush1.msra.mxu0 0.0
    %2154 = vmatprep.subr.mxu0 0.0
    %2155 = vmatpush1.msra.mxu0 0.0
    %2156 = vmatprep.subr.mxu0 0.0
    %2157 = vmatpush1.msra.mxu0 0.0
    %2158 = vmatprep.subr.mxu0 0.0
    %2159 = vmatpush1.msra.mxu0 %v239
    %2160 = vmatprep.subr.mxu0 0.0
    %2161 = vmatpush1.msra.mxu0 %v238
    %2162 = vmatprep.subr.mxu0 0.0
    %2163 = vmatpush2.msra.mxu0 0.0
    %2164 = vmatprep.subr.mxu0 0.0
    %2165 = vmatpush2.msra.mxu0 0.0
    %2166 = vmatprep.subr.mxu0 0.0
    %2167 = vmatpush2.msra.mxu0 0.0
    %2168 = vmatprep.subr.mxu0 0.0
    %2169 = vmatpush2.msra.mxu0 0.0
    %2170 = vmatprep.subr.mxu0 0.0
    %2171 = vmatpush2.msra.mxu0 0.0
    %2172 = vmatprep.subr.mxu0 0.0
    %2173 = vmatpush2.msra.mxu0 0.0
    %2174 = vmatprep.subr.mxu0 0.0
    %2175 = vmatpush2.msra.mxu0 0.0
    %2176 = vmatprep.subr.mxu0 0.0
    %2177 = vmatpush2.msra.mxu0 0.0
    %2178 = vmatprep.subr.mxu0 0.0
    %2179 = vmatpush2.msra.mxu0 0.0
    %2180 = vmatprep.subr.mxu0 0.0
    %2181 = vmatpush2.msra.mxu0 0.0
    %2182 = vmatprep.subr.mxu0 0.0
    %2183 = vmatpush2.msra.mxu0 0.0
    %2184 = vmatprep.subr.mxu0 0.0
    %2185 = vmatpush2.msra.mxu0 0.0
    %2186 = vmatprep.subr.mxu0 0.0
    %2187 = vmatpush2.msra.mxu0 0.0
    %2188 = vmatprep.subr.mxu0 0.0
    %2189 = vmatpush2.msra.mxu0 0.0
    %2190 = vmatprep.subr.mxu0 0.0
    %2191 = vmatpush2.msra.mxu0 0.0
    %2192 = vmatprep.subr.mxu0 0.0
    %2193 = vmatpush2.msra.mxu0 0.0
    %2194 = vmatprep.mubr.f32.mxu0 0.0
    %2195 = vmatmul.mubr.f32.gmra.mxu0 %v1988
    %v2196 = vpop.f32.mrf.mxu0
    %v2197 = vadd.f32 %v651, %v2196
    %v2198 = vpop.f32.mrf.mxu0
    %2199 = vdwg.mxu0
    %v2201 = vrot.slane %v2057, 4
    %v2203 = vadd.f32 %v339, %v2201
    %v2204 = vxor.u32 %v2203, 2147483648
    %v2205 = vmul.f32 %v2204, 1.442695
    %v2206 = vpow.pop %v2205
    %v2207 = vadd.f32 %v2206, 1.0
    %v2208 = vrcp.pop %v2207
    %v2209 = vmul.f32 1.0, %v2208
    %v2211 = vrot.slane %v2127, 4
    %v2213 = vadd.f32 %v420, %v2211
    %v2214 = vxor.u32 %v2213, 2147483648
    %v2215 = vmul.f32 %v2214, 1.442695
    %v2216 = vpow.pop %v2215
    %v2217 = vadd.f32 %v2216, 1.0
    %v2218 = vrcp.pop %v2217
    %v2219 = vmul.f32 1.0, %v2218
    %v2221 = vrot.slane %v2197, 4
    %v2223 = vmul.f32 %v2209, %v2221
    %v2224 = vadd.f32 %v501, %v2223
    %v2225 = vtanh.pop %v2224
    %v2227 = vrot.slane %v2225, 2
    %v2229 = vsub.f32 %v1984, %v2227
    %v2231 = vrot.slane %v2229, 6
    %v2233 = vmul.f32 %v2219, %v2231
    %v2234 = vadd.f32 %v2225, %v2233
    %2235 = vst.msk [vmem:[#allocation2 + $0x8] sm:$0x30] %vm1243, %v2234
    %v2237 = vrot.slane %v2234, 4
    %v2238 = vsel %vm260, %v2237, 0
    %2240 = vmatprep.subr.mxu0 0.0
    %2241 = vmatpush1.msra.mxu0 0.0
    %2242 = vmatprep.subr.mxu0 0.0
    %2243 = vmatpush1.msra.mxu0 0.0
    %2244 = vmatprep.subr.mxu0 0.0
    %2245 = vmatpush1.msra.mxu0 0.0
    %2246 = vmatprep.subr.mxu0 0.0
    %2247 = vmatpush1.msra.mxu0 0.0
    %2248 = vmatprep.subr.mxu0 0.0
    %2249 = vmatpush1.msra.mxu0 0.0
    %2250 = vmatprep.subr.mxu0 0.0
    %2251 = vmatpush1.msra.mxu0 0.0
    %2252 = vmatprep.subr.mxu0 0.0
    %2253 = vmatpush1.msra.mxu0 0.0
    %2254 = vmatprep.subr.mxu0 0.0
    %2255 = vmatpush1.msra.mxu0 0.0
    %2256 = vmatprep.subr.mxu0 0.0
    %2257 = vmatpush1.msra.mxu0 0.0
    %2258 = vmatprep.subr.mxu0 0.0
    %2259 = vmatpush1.msra.mxu0 0.0
    %2260 = vmatprep.subr.mxu0 0.0
    %2261 = vmatpush1.msra.mxu0 0.0
    %2262 = vmatprep.subr.mxu0 0.0
    %2263 = vmatpush1.msra.mxu0 0.0
    %2264 = vmatprep.subr.mxu0 0.0
    %2265 = vmatpush1.msra.mxu0 0.0
    %2266 = vmatprep.subr.mxu0 0.0
    %2267 = vmatpush1.msra.mxu0 0.0
    %2268 = vmatprep.subr.mxu0 0.0
    %2269 = vmatpush1.msra.mxu0 %v233
    %2270 = vmatprep.subr.mxu0 0.0
    %2271 = vmatpush1.msra.mxu0 %v232
    %2272 = vmatprep.subr.mxu0 0.0
    %2273 = vmatpush2.msra.mxu0 0.0
    %2274 = vmatprep.subr.mxu0 0.0
    %2275 = vmatpush2.msra.mxu0 0.0
    %2276 = vmatprep.subr.mxu0 0.0
    %2277 = vmatpush2.msra.mxu0 0.0
    %2278 = vmatprep.subr.mxu0 0.0
    %2279 = vmatpush2.msra.mxu0 0.0
    %2280 = vmatprep.subr.mxu0 0.0
    %2281 = vmatpush2.msra.mxu0 0.0
    %2282 = vmatprep.subr.mxu0 0.0
    %2283 = vmatpush2.msra.mxu0 0.0
    %2284 = vmatprep.subr.mxu0 0.0
    %2285 = vmatpush2.msra.mxu0 0.0
    %2286 = vmatprep.subr.mxu0 0.0
    %2287 = vmatpush2.msra.mxu0 0.0
    %2288 = vmatprep.subr.mxu0 0.0
    %2289 = vmatpush2.msra.mxu0 0.0
    %2290 = vmatprep.subr.mxu0 0.0
    %2291 = vmatpush2.msra.mxu0 0.0
    %2292 = vmatprep.subr.mxu0 0.0
    %2293 = vmatpush2.msra.mxu0 0.0
    %2294 = vmatprep.subr.mxu0 0.0
    %2295 = vmatpush2.msra.mxu0 0.0
    %2296 = vmatprep.subr.mxu0 0.0
    %2297 = vmatpush2.msra.mxu0 0.0
    %2298 = vmatprep.subr.mxu0 0.0
    %2299 = vmatpush2.msra.mxu0 0.0
    %2300 = vmatprep.subr.mxu0 0.0
    %2301 = vmatpush2.msra.mxu0 0.0
    %2302 = vmatprep.subr.mxu0 0.0
    %2303 = vmatpush2.msra.mxu0 0.0
    %2304 = vmatprep.mubr.f32.mxu0 0.0
    %2305 = vmatmul.mubr.f32.gmra.mxu0 %v2238
    %v2306 = vpop.f32.mrf.mxu0
    %v2307 = vadd.f32 0.0, %v2306
    %v2308 = vpop.f32.mrf.mxu0
    %2309 = vdwg.mxu0
    %2310 = vmatprep.subr.mxu0 0.0
    %2311 = vmatpush1.msra.mxu0 0.0
    %2312 = vmatprep.subr.mxu0 0.0
    %2313 = vmatpush1.msra.mxu0 0.0
    %2314 = vmatprep.subr.mxu0 0.0
    %2315 = vmatpush1.msra.mxu0 0.0
    %2316 = vmatprep.subr.mxu0 0.0
    %2317 = vmatpush1.msra.mxu0 0.0
    %2318 = vmatprep.subr.mxu0 0.0
    %2319 = vmatpush1.msra.mxu0 0.0
    %2320 = vmatprep.subr.mxu0 0.0
    %2321 = vmatpush1.msra.mxu0 0.0
    %2322 = vmatprep.subr.mxu0 0.0
    %2323 = vmatpush1.msra.mxu0 0.0
    %2324 = vmatprep.subr.mxu0 0.0
    %2325 = vmatpush1.msra.mxu0 0.0
    %2326 = vmatprep.subr.mxu0 0.0
    %2327 = vmatpush1.msra.mxu0 0.0
    %2328 = vmatprep.subr.mxu0 0.0
    %2329 = vmatpush1.msra.mxu0 0.0
    %2330 = vmatprep.subr.mxu0 0.0
    %2331 = vmatpush1.msra.mxu0 0.0
    %2332 = vmatprep.subr.mxu0 0.0
    %2333 = vmatpush1.msra.mxu0 0.0
    %2334 = vmatprep.subr.mxu0 0.0
    %2335 = vmatpush1.msra.mxu0 0.0
    %2336 = vmatprep.subr.mxu0 0.0
    %2337 = vmatpush1.msra.mxu0 0.0
    %2338 = vmatprep.subr.mxu0 0.0
    %2339 = vmatpush1.msra.mxu0 %v236
    %2340 = vmatprep.subr.mxu0 0.0
    %2341 = vmatpush1.msra.mxu0 %v235
    %2342 = vmatprep.subr.mxu0 0.0
    %2343 = vmatpush2.msra.mxu0 0.0
    %2344 = vmatprep.subr.mxu0 0.0
    %2345 = vmatpush2.msra.mxu0 0.0
    %2346 = vmatprep.subr.mxu0 0.0
    %2347 = vmatpush2.msra.mxu0 0.0
    %2348 = vmatprep.subr.mxu0 0.0
    %2349 = vmatpush2.msra.mxu0 0.0
    %2350 = vmatprep.subr.mxu0 0.0
    %2351 = vmatpush2.msra.mxu0 0.0
    %2352 = vmatprep.subr.mxu0 0.0
    %2353 = vmatpush2.msra.mxu0 0.0
    %2354 = vmatprep.subr.mxu0 0.0
    %2355 = vmatpush2.msra.mxu0 0.0
    %2356 = vmatprep.subr.mxu0 0.0
    %2357 = vmatpush2.msra.mxu0 0.0
    %2358 = vmatprep.subr.mxu0 0.0
    %2359 = vmatpush2.msra.mxu0 0.0
    %2360 = vmatprep.subr.mxu0 0.0
    %2361 = vmatpush2.msra.mxu0 0.0
    %2362 = vmatprep.subr.mxu0 0.0
    %2363 = vmatpush2.msra.mxu0 0.0
    %2364 = vmatprep.subr.mxu0 0.0
    %2365 = vmatpush2.msra.mxu0 0.0
    %2366 = vmatprep.subr.mxu0 0.0
    %2367 = vmatpush2.msra.mxu0 0.0
    %2368 = vmatprep.subr.mxu0 0.0
    %2369 = vmatpush2.msra.mxu0 0.0
    %2370 = vmatprep.subr.mxu0 0.0
    %2371 = vmatpush2.msra.mxu0 0.0
    %2372 = vmatprep.subr.mxu0 0.0
    %2373 = vmatpush2.msra.mxu0 0.0
    %2374 = vmatprep.mubr.f32.mxu0 0.0
    %2375 = vmatmul.mubr.f32.gmra.mxu0 %v2238
    %v2376 = vpop.f32.mrf.mxu0
    %v2377 = vadd.f32 0.0, %v2376
    %v2378 = vpop.f32.mrf.mxu0
    %2379 = vdwg.mxu0
    %2380 = vmatprep.subr.mxu0 0.0
    %2381 = vmatpush1.msra.mxu0 0.0
    %2382 = vmatprep.subr.mxu0 0.0
    %2383 = vmatpush1.msra.mxu0 0.0
    %2384 = vmatprep.subr.mxu0 0.0
    %2385 = vmatpush1.msra.mxu0 0.0
    %2386 = vmatprep.subr.mxu0 0.0
    %2387 = vmatpush1.msra.mxu0 0.0
    %2388 = vmatprep.subr.mxu0 0.0
    %2389 = vmatpush1.msra.mxu0 0.0
    %2390 = vmatprep.subr.mxu0 0.0
    %2391 = vmatpush1.msra.mxu0 0.0
    %2392 = vmatprep.subr.mxu0 0.0
    %2393 = vmatpush1.msra.mxu0 0.0
    %2394 = vmatprep.subr.mxu0 0.0
    %2395 = vmatpush1.msra.mxu0 0.0
    %2396 = vmatprep.subr.mxu0 0.0
    %2397 = vmatpush1.msra.mxu0 0.0
    %2398 = vmatprep.subr.mxu0 0.0
    %2399 = vmatpush1.msra.mxu0 0.0
    %2400 = vmatprep.subr.mxu0 0.0
    %2401 = vmatpush1.msra.mxu0 0.0
    %2402 = vmatprep.subr.mxu0 0.0
    %2403 = vmatpush1.msra.mxu0 0.0
    %2404 = vmatprep.subr.mxu0 0.0
    %2405 = vmatpush1.msra.mxu0 0.0
    %2406 = vmatprep.subr.mxu0 0.0
    %2407 = vmatpush1.msra.mxu0 0.0
    %2408 = vmatprep.subr.mxu0 0.0
    %2409 = vmatpush1.msra.mxu0 %v239
    %2410 = vmatprep.subr.mxu0 0.0
    %2411 = vmatpush1.msra.mxu0 %v238
    %2412 = vmatprep.subr.mxu0 0.0
    %2413 = vmatpush2.msra.mxu0 0.0
    %2414 = vmatprep.subr.mxu0 0.0
    %2415 = vmatpush2.msra.mxu0 0.0
    %2416 = vmatprep.subr.mxu0 0.0
    %2417 = vmatpush2.msra.mxu0 0.0
    %2418 = vmatprep.subr.mxu0 0.0
    %2419 = vmatpush2.msra.mxu0 0.0
    %2420 = vmatprep.subr.mxu0 0.0
    %2421 = vmatpush2.msra.mxu0 0.0
    %2422 = vmatprep.subr.mxu0 0.0
    %2423 = vmatpush2.msra.mxu0 0.0
    %2424 = vmatprep.subr.mxu0 0.0
    %2425 = vmatpush2.msra.mxu0 0.0
    %2426 = vmatprep.subr.mxu0 0.0
    %2427 = vmatpush2.msra.mxu0 0.0
    %2428 = vmatprep.subr.mxu0 0.0
    %2429 = vmatpush2.msra.mxu0 0.0
    %2430 = vmatprep.subr.mxu0 0.0
    %2431 = vmatpush2.msra.mxu0 0.0
    %2432 = vmatprep.subr.mxu0 0.0
    %2433 = vmatpush2.msra.mxu0 0.0
    %2434 = vmatprep.subr.mxu0 0.0
    %2435 = vmatpush2.msra.mxu0 0.0
    %2436 = vmatprep.subr.mxu0 0.0
    %2437 = vmatpush2.msra.mxu0 0.0
    %2438 = vmatprep.subr.mxu0 0.0
    %2439 = vmatpush2.msra.mxu0 0.0
    %2440 = vmatprep.subr.mxu0 0.0
    %2441 = vmatpush2.msra.mxu0 0.0
    %2442 = vmatprep.subr.mxu0 0.0
    %2443 = vmatpush2.msra.mxu0 0.0
    %2444 = vmatprep.mubr.f32.mxu0 0.0
    %2445 = vmatmul.mubr.f32.gmra.mxu0 %v2238
    %v2446 = vpop.f32.mrf.mxu0
    %v2447 = vadd.f32 %v651, %v2446
    %v2448 = vpop.f32.mrf.mxu0
    %2449 = vdwg.mxu0
    %v2451 = vrot.slane %v2307, 2
    %v2453 = vadd.f32 %v339, %v2451
    %v2454 = vxor.u32 %v2453, 2147483648
    %v2455 = vmul.f32 %v2454, 1.442695
    %v2456 = vpow.pop %v2455
    %v2457 = vadd.f32 %v2456, 1.0
    %v2458 = vrcp.pop %v2457
    %v2459 = vmul.f32 1.0, %v2458
    %v2461 = vrot.slane %v2377, 2
    %v2463 = vadd.f32 %v420, %v2461
    %v2464 = vxor.u32 %v2463, 2147483648
    %v2465 = vmul.f32 %v2464, 1.442695
    %v2466 = vpow.pop %v2465
    %v2467 = vadd.f32 %v2466, 1.0
    %v2468 = vrcp.pop %v2467
    %v2469 = vmul.f32 1.0, %v2468
    %v2471 = vrot.slane %v2447, 2
    %v2473 = vmul.f32 %v2459, %v2471
    %v2474 = vadd.f32 %v501, %v2473
    %v2475 = vtanh.pop %v2474
    %v2477 = vrot.slane %v2475, 2
    %v2479 = vsub.f32 %v2234, %v2477
    %v2481 = vrot.slane %v2479, 6
    %v2483 = vmul.f32 %v2469, %v2481
    %v2484 = vadd.f32 %v2475, %v2483
    %2485 = vst.msk [vmem:[#allocation2 + $0x8] sm:$0xc0] %vm1494, %v2484
    %s2486 = scalar_lea.vmem [#allocation8], 48
    %v2487 = vld [vmem:[%s2486] sm:$0xff]
    %v2488 = vld [vmem:[%s2486 + $0x8] sm:$0xff]
    %s2489 = scalar_lea.vmem [#allocation8], 64
    %v2490 = vld [vmem:[%s2489] sm:$0xff]
    %v2491 = vld [vmem:[%s2489 + $0x8] sm:$0xff]
    %s2492 = scalar_lea.vmem [#allocation8], 80
    %v2493 = vld [vmem:[%s2492] sm:$0xff]
    %v2494 = vld [vmem:[%s2492 + $0x8] sm:$0xff]
    %s2495 = scalar_lea.vmem [#allocation9], 48
    %v2496 = vld [vmem:[%s2495] sm:$0xff]
    %v2497 = vld [vmem:[%s2495 + $0x8] sm:$0xff]
    %s2498 = scalar_lea.vmem [#allocation9], 64
    %v2499 = vld [vmem:[%s2498] sm:$0xff]
    %v2500 = vld [vmem:[%s2498 + $0x8] sm:$0xff]
    %s2501 = scalar_lea.vmem [#allocation9], 80
    %v2502 = vld [vmem:[%s2501] sm:$0xff]
    %v2503 = vld [vmem:[%s2501 + $0x8] sm:$0xff]
    %s2504 = scalar_lea.vmem [#allocation11], 3
    %v2505 = vld [vmem:[%s2504] sm:$0x1]
    %s2506 = scalar_lea.vmem [#allocation12], 3
    %v2507 = vld [vmem:[%s2506] sm:$0x1]
    %v2508 = vadd.f32 %v2505, %v2507
    %s2509 = scalar_lea.vmem [#allocation11], 4
    %v2510 = vld [vmem:[%s2509] sm:$0x1]
    %s2511 = scalar_lea.vmem [#allocation12], 4
    %v2512 = vld [vmem:[%s2511] sm:$0x1]
    %v2513 = vadd.f32 %v2510, %v2512
    %s2514 = scalar_lea.vmem [#allocation11], 5
    %v2515 = vld [vmem:[%s2514] sm:$0x1]
    %s2516 = scalar_lea.vmem [#allocation12], 5
    %v2517 = vld [vmem:[%s2516] sm:$0x1]
    %v2518 = vld [vmem:[#allocation2] sm:$0xff]
    %v2519 = vld [vmem:[#allocation2 + $0x8] sm:$0xff]
    %v2521 = vlaneseq
    %v2522 = vshrl.u32 %v2521, 7
    %v2523 = vsub.s32 0, %v2522
    %v2524 = vrot.slane %v2508, %v2523
    %v2527 = vsel %vm260, %v2518, 0
    %v2530 = vsel %vm260, %v2519, 0
    %2532 = vmatprep.subr.mxu0 0.0
    %2533 = vmatpush1.msra.mxu0 0.0
    %2534 = vmatprep.subr.mxu0 0.0
    %2535 = vmatpush1.msra.mxu0 0.0
    %2536 = vmatprep.subr.mxu0 0.0
    %2537 = vmatpush1.msra.mxu0 0.0
    %2538 = vmatprep.subr.mxu0 0.0
    %2539 = vmatpush1.msra.mxu0 0.0
    %2540 = vmatprep.subr.mxu0 0.0
    %2541 = vmatpush1.msra.mxu0 0.0
    %2542 = vmatprep.subr.mxu0 0.0
    %2543 = vmatpush1.msra.mxu0 0.0
    %2544 = vmatprep.subr.mxu0 0.0
    %2545 = vmatpush1.msra.mxu0 0.0
    %2546 = vmatprep.subr.mxu0 0.0
    %2547 = vmatpush1.msra.mxu0 0.0
    %2548 = vmatprep.subr.mxu0 0.0
    %2549 = vmatpush1.msra.mxu0 0.0
    %2550 = vmatprep.subr.mxu0 0.0
    %2551 = vmatpush1.msra.mxu0 0.0
    %2552 = vmatprep.subr.mxu0 0.0
    %2553 = vmatpush1.msra.mxu0 0.0
    %2554 = vmatprep.subr.mxu0 0.0
    %2555 = vmatpush1.msra.mxu0 0.0
    %2556 = vmatprep.subr.mxu0 0.0
    %2557 = vmatpush1.msra.mxu0 0.0
    %2558 = vmatprep.subr.mxu0 0.0
    %2559 = vmatpush1.msra.mxu0 0.0
    %2560 = vmatprep.subr.mxu0 0.0
    %2561 = vmatpush1.msra.mxu0 %v2488
    %2562 = vmatprep.subr.mxu0 0.0
    %2563 = vmatpush1.msra.mxu0 %v2487
    %2564 = vmatprep.subr.mxu0 0.0
    %2565 = vmatpush2.msra.mxu0 0.0
    %2566 = vmatprep.subr.mxu0 0.0
    %2567 = vmatpush2.msra.mxu0 0.0
    %2568 = vmatprep.subr.mxu0 0.0
    %2569 = vmatpush2.msra.mxu0 0.0
    %2570 = vmatprep.subr.mxu0 0.0
    %2571 = vmatpush2.msra.mxu0 0.0
    %2572 = vmatprep.subr.mxu0 0.0
    %2573 = vmatpush2.msra.mxu0 0.0
    %2574 = vmatprep.subr.mxu0 0.0
    %2575 = vmatpush2.msra.mxu0 0.0
    %2576 = vmatprep.subr.mxu0 0.0
    %2577 = vmatpush2.msra.mxu0 0.0
    %2578 = vmatprep.subr.mxu0 0.0
    %2579 = vmatpush2.msra.mxu0 0.0
    %2580 = vmatprep.subr.mxu0 0.0
    %2581 = vmatpush2.msra.mxu0 0.0
    %2582 = vmatprep.subr.mxu0 0.0
    %2583 = vmatpush2.msra.mxu0 0.0
    %2584 = vmatprep.subr.mxu0 0.0
    %2585 = vmatpush2.msra.mxu0 0.0
    %2586 = vmatprep.subr.mxu0 0.0
    %2587 = vmatpush2.msra.mxu0 0.0
    %2588 = vmatprep.subr.mxu0 0.0
    %2589 = vmatpush2.msra.mxu0 0.0
    %2590 = vmatprep.subr.mxu0 0.0
    %2591 = vmatpush2.msra.mxu0 0.0
    %2592 = vmatprep.subr.mxu0 0.0
    %2593 = vmatpush2.msra.mxu0 0.0
    %2594 = vmatprep.subr.mxu0 0.0
    %2595 = vmatpush2.msra.mxu0 0.0
    %2596 = vmatprep.mubr.f32.mxu0 0.0
    %2597 = vmatmul.mubr.f32.gmra.mxu0 %v2527
    %v2598 = vpop.f32.mrf.mxu0
    %v2599 = vadd.f32 %v2524, %v2598
    %v2600 = vpop.f32.mrf.mxu0
    %2601 = vmatprep.mubr.f32.mxu0 0.0
    %2602 = vmatmul.mubr.f32.gmra.mxu0 %v2530
    %v2603 = vpop.f32.mrf.mxu0
    %v2604 = vadd.f32 %v2524, %v2603
    %v2605 = vpop.f32.mrf.mxu0
    %2606 = vdwg.mxu0
    %v2608 = vlaneseq
    %v2609 = vshrl.u32 %v2608, 7
    %v2610 = vsub.s32 0, %v2609
    %v2611 = vrot.slane %v2513, %v2610
    %2613 = vmatprep.subr.mxu0 0.0
    %2614 = vmatpush1.msra.mxu0 0.0
    %2615 = vmatprep.subr.mxu0 0.0
    %2616 = vmatpush1.msra.mxu0 0.0
    %2617 = vmatprep.subr.mxu0 0.0
    %2618 = vmatpush1.msra.mxu0 0.0
    %2619 = vmatprep.subr.mxu0 0.0
    %2620 = vmatpush1.msra.mxu0 0.0
    %2621 = vmatprep.subr.mxu0 0.0
    %2622 = vmatpush1.msra.mxu0 0.0
    %2623 = vmatprep.subr.mxu0 0.0
    %2624 = vmatpush1.msra.mxu0 0.0
    %2625 = vmatprep.subr.mxu0 0.0
    %2626 = vmatpush1.msra.mxu0 0.0
    %2627 = vmatprep.subr.mxu0 0.0
    %2628 = vmatpush1.msra.mxu0 0.0
    %2629 = vmatprep.subr.mxu0 0.0
    %2630 = vmatpush1.msra.mxu0 0.0
    %2631 = vmatprep.subr.mxu0 0.0
    %2632 = vmatpush1.msra.mxu0 0.0
    %2633 = vmatprep.subr.mxu0 0.0
    %2634 = vmatpush1.msra.mxu0 0.0
    %2635 = vmatprep.subr.mxu0 0.0
    %2636 = vmatpush1.msra.mxu0 0.0
    %2637 = vmatprep.subr.mxu0 0.0
    %2638 = vmatpush1.msra.mxu0 0.0
    %2639 = vmatprep.subr.mxu0 0.0
    %2640 = vmatpush1.msra.mxu0 0.0
    %2641 = vmatprep.subr.mxu0 0.0
    %2642 = vmatpush1.msra.mxu0 %v2491
    %2643 = vmatprep.subr.mxu0 0.0
    %2644 = vmatpush1.msra.mxu0 %v2490
    %2645 = vmatprep.subr.mxu0 0.0
    %2646 = vmatpush2.msra.mxu0 0.0
    %2647 = vmatprep.subr.mxu0 0.0
    %2648 = vmatpush2.msra.mxu0 0.0
    %2649 = vmatprep.subr.mxu0 0.0
    %2650 = vmatpush2.msra.mxu0 0.0
    %2651 = vmatprep.subr.mxu0 0.0
    %2652 = vmatpush2.msra.mxu0 0.0
    %2653 = vmatprep.subr.mxu0 0.0
    %2654 = vmatpush2.msra.mxu0 0.0
    %2655 = vmatprep.subr.mxu0 0.0
    %2656 = vmatpush2.msra.mxu0 0.0
    %2657 = vmatprep.subr.mxu0 0.0
    %2658 = vmatpush2.msra.mxu0 0.0
    %2659 = vmatprep.subr.mxu0 0.0
    %2660 = vmatpush2.msra.mxu0 0.0
    %2661 = vmatprep.subr.mxu0 0.0
    %2662 = vmatpush2.msra.mxu0 0.0
    %2663 = vmatprep.subr.mxu0 0.0
    %2664 = vmatpush2.msra.mxu0 0.0
    %2665 = vmatprep.subr.mxu0 0.0
    %2666 = vmatpush2.msra.mxu0 0.0
    %2667 = vmatprep.subr.mxu0 0.0
    %2668 = vmatpush2.msra.mxu0 0.0
    %2669 = vmatprep.subr.mxu0 0.0
    %2670 = vmatpush2.msra.mxu0 0.0
    %2671 = vmatprep.subr.mxu0 0.0
    %2672 = vmatpush2.msra.mxu0 0.0
    %2673 = vmatprep.subr.mxu0 0.0
    %2674 = vmatpush2.msra.mxu0 0.0
    %2675 = vmatprep.subr.mxu0 0.0
    %2676 = vmatpush2.msra.mxu0 0.0
    %2677 = vmatprep.mubr.f32.mxu0 0.0
    %2678 = vmatmul.mubr.f32.gmra.mxu0 %v2527
    %v2679 = vpop.f32.mrf.mxu0
    %v2680 = vadd.f32 %v2611, %v2679
    %v2681 = vpop.f32.mrf.mxu0
    %2682 = vmatprep.mubr.f32.mxu0 0.0
    %2683 = vmatmul.mubr.f32.gmra.mxu0 %v2530
    %v2684 = vpop.f32.mrf.mxu0
    %v2685 = vadd.f32 %v2611, %v2684
    %v2686 = vpop.f32.mrf.mxu0
    %2687 = vdwg.mxu0
    %v2689 = vlaneseq
    %v2690 = vshrl.u32 %v2689, 7
    %v2691 = vsub.s32 0, %v2690
    %v2692 = vrot.slane %v2515, %v2691
    %2694 = vmatprep.subr.mxu0 0.0
    %2695 = vmatpush1.msra.mxu0 0.0
    %2696 = vmatprep.subr.mxu0 0.0
    %2697 = vmatpush1.msra.mxu0 0.0
    %2698 = vmatprep.subr.mxu0 0.0
    %2699 = vmatpush1.msra.mxu0 0.0
    %2700 = vmatprep.subr.mxu0 0.0
    %2701 = vmatpush1.msra.mxu0 0.0
    %2702 = vmatprep.subr.mxu0 0.0
    %2703 = vmatpush1.msra.mxu0 0.0
    %2704 = vmatprep.subr.mxu0 0.0
    %2705 = vmatpush1.msra.mxu0 0.0
    %2706 = vmatprep.subr.mxu0 0.0
    %2707 = vmatpush1.msra.mxu0 0.0
    %2708 = vmatprep.subr.mxu0 0.0
    %2709 = vmatpush1.msra.mxu0 0.0
    %2710 = vmatprep.subr.mxu0 0.0
    %2711 = vmatpush1.msra.mxu0 0.0
    %2712 = vmatprep.subr.mxu0 0.0
    %2713 = vmatpush1.msra.mxu0 0.0
    %2714 = vmatprep.subr.mxu0 0.0
    %2715 = vmatpush1.msra.mxu0 0.0
    %2716 = vmatprep.subr.mxu0 0.0
    %2717 = vmatpush1.msra.mxu0 0.0
    %2718 = vmatprep.subr.mxu0 0.0
    %2719 = vmatpush1.msra.mxu0 0.0
    %2720 = vmatprep.subr.mxu0 0.0
    %2721 = vmatpush1.msra.mxu0 0.0
    %2722 = vmatprep.subr.mxu0 0.0
    %2723 = vmatpush1.msra.mxu0 %v2494
    %2724 = vmatprep.subr.mxu0 0.0
    %2725 = vmatpush1.msra.mxu0 %v2493
    %2726 = vmatprep.subr.mxu0 0.0
    %2727 = vmatpush2.msra.mxu0 0.0
    %2728 = vmatprep.subr.mxu0 0.0
    %2729 = vmatpush2.msra.mxu0 0.0
    %2730 = vmatprep.subr.mxu0 0.0
    %2731 = vmatpush2.msra.mxu0 0.0
    %2732 = vmatprep.subr.mxu0 0.0
    %2733 = vmatpush2.msra.mxu0 0.0
    %2734 = vmatprep.subr.mxu0 0.0
    %2735 = vmatpush2.msra.mxu0 0.0
    %2736 = vmatprep.subr.mxu0 0.0
    %2737 = vmatpush2.msra.mxu0 0.0
    %2738 = vmatprep.subr.mxu0 0.0
    %2739 = vmatpush2.msra.mxu0 0.0
    %2740 = vmatprep.subr.mxu0 0.0
    %2741 = vmatpush2.msra.mxu0 0.0
    %2742 = vmatprep.subr.mxu0 0.0
    %2743 = vmatpush2.msra.mxu0 0.0
    %2744 = vmatprep.subr.mxu0 0.0
    %2745 = vmatpush2.msra.mxu0 0.0
    %2746 = vmatprep.subr.mxu0 0.0
    %2747 = vmatpush2.msra.mxu0 0.0
    %2748 = vmatprep.subr.mxu0 0.0
    %2749 = vmatpush2.msra.mxu0 0.0
    %2750 = vmatprep.subr.mxu0 0.0
    %2751 = vmatpush2.msra.mxu0 0.0
    %2752 = vmatprep.subr.mxu0 0.0
    %2753 = vmatpush2.msra.mxu0 0.0
    %2754 = vmatprep.subr.mxu0 0.0
    %2755 = vmatpush2.msra.mxu0 0.0
    %2756 = vmatprep.subr.mxu0 0.0
    %2757 = vmatpush2.msra.mxu0 0.0
    %2758 = vmatprep.mubr.f32.mxu0 0.0
    %2759 = vmatmul.mubr.f32.gmra.mxu0 %v2527
    %v2760 = vpop.f32.mrf.mxu0
    %v2761 = vadd.f32 %v2692, %v2760
    %v2762 = vpop.f32.mrf.mxu0
    %2763 = vmatprep.mubr.f32.mxu0 0.0
    %2764 = vmatmul.mubr.f32.gmra.mxu0 %v2530
    %v2765 = vpop.f32.mrf.mxu0
    %v2766 = vadd.f32 %v2692, %v2765
    %v2767 = vpop.f32.mrf.mxu0
    %2768 = vdwg.mxu0
    %2769 = vmatprep.subr.mxu0 0.0
    %2770 = vmatpush1.msra.mxu0 0.0
    %2771 = vmatprep.subr.mxu0 0.0
    %2772 = vmatpush1.msra.mxu0 0.0
    %2773 = vmatprep.subr.mxu0 0.0
    %2774 = vmatpush1.msra.mxu0 0.0
    %2775 = vmatprep.subr.mxu0 0.0
    %2776 = vmatpush1.msra.mxu0 0.0
    %2777 = vmatprep.subr.mxu0 0.0
    %2778 = vmatpush1.msra.mxu0 0.0
    %2779 = vmatprep.subr.mxu0 0.0
    %2780 = vmatpush1.msra.mxu0 0.0
    %2781 = vmatprep.subr.mxu0 0.0
    %2782 = vmatpush1.msra.mxu0 0.0
    %2783 = vmatprep.subr.mxu0 0.0
    %2784 = vmatpush1.msra.mxu0 0.0
    %2785 = vmatprep.subr.mxu0 0.0
    %2786 = vmatpush1.msra.mxu0 0.0
    %2787 = vmatprep.subr.mxu0 0.0
    %2788 = vmatpush1.msra.mxu0 0.0
    %2789 = vmatprep.subr.mxu0 0.0
    %2790 = vmatpush1.msra.mxu0 0.0
    %2791 = vmatprep.subr.mxu0 0.0
    %2792 = vmatpush1.msra.mxu0 0.0
    %2793 = vmatprep.subr.mxu0 0.0
    %2794 = vmatpush1.msra.mxu0 0.0
    %2795 = vmatprep.subr.mxu0 0.0
    %2796 = vmatpush1.msra.mxu0 0.0
    %2797 = vmatprep.subr.mxu0 0.0
    %2798 = vmatpush1.msra.mxu0 %v2497
    %2799 = vmatprep.subr.mxu0 0.0
    %2800 = vmatpush1.msra.mxu0 %v2496
    %2801 = vmatprep.subr.mxu0 0.0
    %2802 = vmatpush2.msra.mxu0 0.0
    %2803 = vmatprep.subr.mxu0 0.0
    %2804 = vmatpush2.msra.mxu0 0.0
    %2805 = vmatprep.subr.mxu0 0.0
    %2806 = vmatpush2.msra.mxu0 0.0
    %2807 = vmatprep.subr.mxu0 0.0
    %2808 = vmatpush2.msra.mxu0 0.0
    %2809 = vmatprep.subr.mxu0 0.0
    %2810 = vmatpush2.msra.mxu0 0.0
    %2811 = vmatprep.subr.mxu0 0.0
    %2812 = vmatpush2.msra.mxu0 0.0
    %2813 = vmatprep.subr.mxu0 0.0
    %2814 = vmatpush2.msra.mxu0 0.0
    %2815 = vmatprep.subr.mxu0 0.0
    %2816 = vmatpush2.msra.mxu0 0.0
    %2817 = vmatprep.subr.mxu0 0.0
    %2818 = vmatpush2.msra.mxu0 0.0
    %2819 = vmatprep.subr.mxu0 0.0
    %2820 = vmatpush2.msra.mxu0 0.0
    %2821 = vmatprep.subr.mxu0 0.0
    %2822 = vmatpush2.msra.mxu0 0.0
    %2823 = vmatprep.subr.mxu0 0.0
    %2824 = vmatpush2.msra.mxu0 0.0
    %2825 = vmatprep.subr.mxu0 0.0
    %2826 = vmatpush2.msra.mxu0 0.0
    %2827 = vmatprep.subr.mxu0 0.0
    %2828 = vmatpush2.msra.mxu0 0.0
    %2829 = vmatprep.subr.mxu0 0.0
    %2830 = vmatpush2.msra.mxu0 0.0
    %2831 = vmatprep.subr.mxu0 0.0
    %2832 = vmatpush2.msra.mxu0 0.0
    %2833 = vmatprep.mubr.f32.mxu0 0.0
    %2834 = vmatmul.mubr.f32.gmra.mxu0 %v505
    %v2835 = vpop.f32.mrf.mxu0
    %v2836 = vadd.f32 0.0, %v2835
    %v2837 = vpop.f32.mrf.mxu0
    %2838 = vdwg.mxu0
    %2839 = vmatprep.subr.mxu0 0.0
    %2840 = vmatpush1.msra.mxu0 0.0
    %2841 = vmatprep.subr.mxu0 0.0
    %2842 = vmatpush1.msra.mxu0 0.0
    %2843 = vmatprep.subr.mxu0 0.0
    %2844 = vmatpush1.msra.mxu0 0.0
    %2845 = vmatprep.subr.mxu0 0.0
    %2846 = vmatpush1.msra.mxu0 0.0
    %2847 = vmatprep.subr.mxu0 0.0
    %2848 = vmatpush1.msra.mxu0 0.0
    %2849 = vmatprep.subr.mxu0 0.0
    %2850 = vmatpush1.msra.mxu0 0.0
    %2851 = vmatprep.subr.mxu0 0.0
    %2852 = vmatpush1.msra.mxu0 0.0
    %2853 = vmatprep.subr.mxu0 0.0
    %2854 = vmatpush1.msra.mxu0 0.0
    %2855 = vmatprep.subr.mxu0 0.0
    %2856 = vmatpush1.msra.mxu0 0.0
    %2857 = vmatprep.subr.mxu0 0.0
    %2858 = vmatpush1.msra.mxu0 0.0
    %2859 = vmatprep.subr.mxu0 0.0
    %2860 = vmatpush1.msra.mxu0 0.0
    %2861 = vmatprep.subr.mxu0 0.0
    %2862 = vmatpush1.msra.mxu0 0.0
    %2863 = vmatprep.subr.mxu0 0.0
    %2864 = vmatpush1.msra.mxu0 0.0
    %2865 = vmatprep.subr.mxu0 0.0
    %2866 = vmatpush1.msra.mxu0 0.0
    %2867 = vmatprep.subr.mxu0 0.0
    %2868 = vmatpush1.msra.mxu0 %v2500
    %2869 = vmatprep.subr.mxu0 0.0
    %2870 = vmatpush1.msra.mxu0 %v2499
    %2871 = vmatprep.subr.mxu0 0.0
    %2872 = vmatpush2.msra.mxu0 0.0
    %2873 = vmatprep.subr.mxu0 0.0
    %2874 = vmatpush2.msra.mxu0 0.0
    %2875 = vmatprep.subr.mxu0 0.0
    %2876 = vmatpush2.msra.mxu0 0.0
    %2877 = vmatprep.subr.mxu0 0.0
    %2878 = vmatpush2.msra.mxu0 0.0
    %2879 = vmatprep.subr.mxu0 0.0
    %2880 = vmatpush2.msra.mxu0 0.0
    %2881 = vmatprep.subr.mxu0 0.0
    %2882 = vmatpush2.msra.mxu0 0.0
    %2883 = vmatprep.subr.mxu0 0.0
    %2884 = vmatpush2.msra.mxu0 0.0
    %2885 = vmatprep.subr.mxu0 0.0
    %2886 = vmatpush2.msra.mxu0 0.0
    %2887 = vmatprep.subr.mxu0 0.0
    %2888 = vmatpush2.msra.mxu0 0.0
    %2889 = vmatprep.subr.mxu0 0.0
    %2890 = vmatpush2.msra.mxu0 0.0
    %2891 = vmatprep.subr.mxu0 0.0
    %2892 = vmatpush2.msra.mxu0 0.0
    %2893 = vmatprep.subr.mxu0 0.0
    %2894 = vmatpush2.msra.mxu0 0.0
    %2895 = vmatprep.subr.mxu0 0.0
    %2896 = vmatpush2.msra.mxu0 0.0
    %2897 = vmatprep.subr.mxu0 0.0
    %2898 = vmatpush2.msra.mxu0 0.0
    %2899 = vmatprep.subr.mxu0 0.0
    %2900 = vmatpush2.msra.mxu0 0.0
    %2901 = vmatprep.subr.mxu0 0.0
    %2902 = vmatpush2.msra.mxu0 0.0
    %2903 = vmatprep.mubr.f32.mxu0 0.0
    %2904 = vmatmul.mubr.f32.gmra.mxu0 %v505
    %v2905 = vpop.f32.mrf.mxu0
    %v2906 = vadd.f32 0.0, %v2905
    %v2907 = vpop.f32.mrf.mxu0
    %2908 = vdwg.mxu0
    %v2910 = vlaneseq
    %v2911 = vshrl.u32 %v2910, 7
    %v2912 = vsub.s32 0, %v2911
    %v2913 = vrot.slane %v2517, %v2912
    %2915 = vmatprep.subr.mxu0 0.0
    %2916 = vmatpush1.msra.mxu0 0.0
    %2917 = vmatprep.subr.mxu0 0.0
    %2918 = vmatpush1.msra.mxu0 0.0
    %2919 = vmatprep.subr.mxu0 0.0
    %2920 = vmatpush1.msra.mxu0 0.0
    %2921 = vmatprep.subr.mxu0 0.0
    %2922 = vmatpush1.msra.mxu0 0.0
    %2923 = vmatprep.subr.mxu0 0.0
    %2924 = vmatpush1.msra.mxu0 0.0
    %2925 = vmatprep.subr.mxu0 0.0
    %2926 = vmatpush1.msra.mxu0 0.0
    %2927 = vmatprep.subr.mxu0 0.0
    %2928 = vmatpush1.msra.mxu0 0.0
    %2929 = vmatprep.subr.mxu0 0.0
    %2930 = vmatpush1.msra.mxu0 0.0
    %2931 = vmatprep.subr.mxu0 0.0
    %2932 = vmatpush1.msra.mxu0 0.0
    %2933 = vmatprep.subr.mxu0 0.0
    %2934 = vmatpush1.msra.mxu0 0.0
    %2935 = vmatprep.subr.mxu0 0.0
    %2936 = vmatpush1.msra.mxu0 0.0
    %2937 = vmatprep.subr.mxu0 0.0
    %2938 = vmatpush1.msra.mxu0 0.0
    %2939 = vmatprep.subr.mxu0 0.0
    %2940 = vmatpush1.msra.mxu0 0.0
    %2941 = vmatprep.subr.mxu0 0.0
    %2942 = vmatpush1.msra.mxu0 0.0
    %2943 = vmatprep.subr.mxu0 0.0
    %2944 = vmatpush1.msra.mxu0 %v2503
    %2945 = vmatprep.subr.mxu0 0.0
    %2946 = vmatpush1.msra.mxu0 %v2502
    %2947 = vmatprep.subr.mxu0 0.0
    %2948 = vmatpush2.msra.mxu0 0.0
    %2949 = vmatprep.subr.mxu0 0.0
    %2950 = vmatpush2.msra.mxu0 0.0
    %2951 = vmatprep.subr.mxu0 0.0
    %2952 = vmatpush2.msra.mxu0 0.0
    %2953 = vmatprep.subr.mxu0 0.0
    %2954 = vmatpush2.msra.mxu0 0.0
    %2955 = vmatprep.subr.mxu0 0.0
    %2956 = vmatpush2.msra.mxu0 0.0
    %2957 = vmatprep.subr.mxu0 0.0
    %2958 = vmatpush2.msra.mxu0 0.0
    %2959 = vmatprep.subr.mxu0 0.0
    %2960 = vmatpush2.msra.mxu0 0.0
    %2961 = vmatprep.subr.mxu0 0.0
    %2962 = vmatpush2.msra.mxu0 0.0
    %2963 = vmatprep.subr.mxu0 0.0
    %2964 = vmatpush2.msra.mxu0 0.0
    %2965 = vmatprep.subr.mxu0 0.0
    %2966 = vmatpush2.msra.mxu0 0.0
    %2967 = vmatprep.subr.mxu0 0.0
    %2968 = vmatpush2.msra.mxu0 0.0
    %2969 = vmatprep.subr.mxu0 0.0
    %2970 = vmatpush2.msra.mxu0 0.0
    %2971 = vmatprep.subr.mxu0 0.0
    %2972 = vmatpush2.msra.mxu0 0.0
    %2973 = vmatprep.subr.mxu0 0.0
    %2974 = vmatpush2.msra.mxu0 0.0
    %2975 = vmatprep.subr.mxu0 0.0
    %2976 = vmatpush2.msra.mxu0 0.0
    %2977 = vmatprep.subr.mxu0 0.0
    %2978 = vmatpush2.msra.mxu0 0.0
    %2979 = vmatprep.mubr.f32.mxu0 0.0
    %2980 = vmatmul.mubr.f32.gmra.mxu0 %v505
    %v2981 = vpop.f32.mrf.mxu0
    %v2982 = vadd.f32 %v2913, %v2981
    %v2983 = vpop.f32.mrf.mxu0
    %2984 = vdwg.mxu0
    %v2985 = vadd.f32 %v2599, %v2836
    %v2986 = vxor.u32 %v2985, 2147483648
    %v2987 = vmul.f32 %v2986, 1.442695
    %v2988 = vpow.pop %v2987
    %v2989 = vadd.f32 %v2988, 1.0
    %v2990 = vrcp.pop %v2989
    %v2991 = vmul.f32 1.0, %v2990
    %v2992 = vadd.f32 %v2680, %v2906
    %v2993 = vxor.u32 %v2992, 2147483648
    %v2994 = vmul.f32 %v2993, 1.442695
    %v2995 = vpow.pop %v2994
    %v2996 = vadd.f32 %v2995, 1.0
    %v2997 = vrcp.pop %v2996
    %v2998 = vmul.f32 1.0, %v2997
    %v2999 = vmul.f32 %v2991, %v2982
    %v3000 = vadd.f32 %v2761, %v2999
    %v3001 = vtanh.pop %v3000
    %v3002 = vsub.f32 0.0, %v3001
    %v3003 = vmul.f32 %v2998, %v3002
    %v3004 = vadd.f32 %v3001, %v3003
    %3005 = vst.msk [vmem:[#allocation2] sm:$0x3] %vm193, %v3004
    %v3007 = vsel %vm260, %v3004, 0
    %3009 = vmatprep.subr.mxu0 0.0
    %3010 = vmatpush1.msra.mxu0 0.0
    %3011 = vmatprep.subr.mxu0 0.0
    %3012 = vmatpush1.msra.mxu0 0.0
    %3013 = vmatprep.subr.mxu0 0.0
    %3014 = vmatpush1.msra.mxu0 0.0
    %3015 = vmatprep.subr.mxu0 0.0
    %3016 = vmatpush1.msra.mxu0 0.0
    %3017 = vmatprep.subr.mxu0 0.0
    %3018 = vmatpush1.msra.mxu0 0.0
    %3019 = vmatprep.subr.mxu0 0.0
    %3020 = vmatpush1.msra.mxu0 0.0
    %3021 = vmatprep.subr.mxu0 0.0
    %3022 = vmatpush1.msra.mxu0 0.0
    %3023 = vmatprep.subr.mxu0 0.0
    %3024 = vmatpush1.msra.mxu0 0.0
    %3025 = vmatprep.subr.mxu0 0.0
    %3026 = vmatpush1.msra.mxu0 0.0
    %3027 = vmatprep.subr.mxu0 0.0
    %3028 = vmatpush1.msra.mxu0 0.0
    %3029 = vmatprep.subr.mxu0 0.0
    %3030 = vmatpush1.msra.mxu0 0.0
    %3031 = vmatprep.subr.mxu0 0.0
    %3032 = vmatpush1.msra.mxu0 0.0
    %3033 = vmatprep.subr.mxu0 0.0
    %3034 = vmatpush1.msra.mxu0 0.0
    %3035 = vmatprep.subr.mxu0 0.0
    %3036 = vmatpush1.msra.mxu0 0.0
    %3037 = vmatprep.subr.mxu0 0.0
    %3038 = vmatpush1.msra.mxu0 %v2497
    %3039 = vmatprep.subr.mxu0 0.0
    %3040 = vmatpush1.msra.mxu0 %v2496
    %3041 = vmatprep.subr.mxu0 0.0
    %3042 = vmatpush2.msra.mxu0 0.0
    %3043 = vmatprep.subr.mxu0 0.0
    %3044 = vmatpush2.msra.mxu0 0.0
    %3045 = vmatprep.subr.mxu0 0.0
    %3046 = vmatpush2.msra.mxu0 0.0
    %3047 = vmatprep.subr.mxu0 0.0
    %3048 = vmatpush2.msra.mxu0 0.0
    %3049 = vmatprep.subr.mxu0 0.0
    %3050 = vmatpush2.msra.mxu0 0.0
    %3051 = vmatprep.subr.mxu0 0.0
    %3052 = vmatpush2.msra.mxu0 0.0
    %3053 = vmatprep.subr.mxu0 0.0
    %3054 = vmatpush2.msra.mxu0 0.0
    %3055 = vmatprep.subr.mxu0 0.0
    %3056 = vmatpush2.msra.mxu0 0.0
    %3057 = vmatprep.subr.mxu0 0.0
    %3058 = vmatpush2.msra.mxu0 0.0
    %3059 = vmatprep.subr.mxu0 0.0
    %3060 = vmatpush2.msra.mxu0 0.0
    %3061 = vmatprep.subr.mxu0 0.0
    %3062 = vmatpush2.msra.mxu0 0.0
    %3063 = vmatprep.subr.mxu0 0.0
    %3064 = vmatpush2.msra.mxu0 0.0
    %3065 = vmatprep.subr.mxu0 0.0
    %3066 = vmatpush2.msra.mxu0 0.0
    %3067 = vmatprep.subr.mxu0 0.0
    %3068 = vmatpush2.msra.mxu0 0.0
    %3069 = vmatprep.subr.mxu0 0.0
    %3070 = vmatpush2.msra.mxu0 0.0
    %3071 = vmatprep.subr.mxu0 0.0
    %3072 = vmatpush2.msra.mxu0 0.0
    %3073 = vmatprep.mubr.f32.mxu0 0.0
    %3074 = vmatmul.mubr.f32.gmra.mxu0 %v3007
    %v3075 = vpop.f32.mrf.mxu0
    %v3076 = vadd.f32 0.0, %v3075
    %v3077 = vpop.f32.mrf.mxu0
    %3078 = vdwg.mxu0
    %3079 = vmatprep.subr.mxu0 0.0
    %3080 = vmatpush1.msra.mxu0 0.0
    %3081 = vmatprep.subr.mxu0 0.0
    %3082 = vmatpush1.msra.mxu0 0.0
    %3083 = vmatprep.subr.mxu0 0.0
    %3084 = vmatpush1.msra.mxu0 0.0
    %3085 = vmatprep.subr.mxu0 0.0
    %3086 = vmatpush1.msra.mxu0 0.0
    %3087 = vmatprep.subr.mxu0 0.0
    %3088 = vmatpush1.msra.mxu0 0.0
    %3089 = vmatprep.subr.mxu0 0.0
    %3090 = vmatpush1.msra.mxu0 0.0
    %3091 = vmatprep.subr.mxu0 0.0
    %3092 = vmatpush1.msra.mxu0 0.0
    %3093 = vmatprep.subr.mxu0 0.0
    %3094 = vmatpush1.msra.mxu0 0.0
    %3095 = vmatprep.subr.mxu0 0.0
    %3096 = vmatpush1.msra.mxu0 0.0
    %3097 = vmatprep.subr.mxu0 0.0
    %3098 = vmatpush1.msra.mxu0 0.0
    %3099 = vmatprep.subr.mxu0 0.0
    %3100 = vmatpush1.msra.mxu0 0.0
    %3101 = vmatprep.subr.mxu0 0.0
    %3102 = vmatpush1.msra.mxu0 0.0
    %3103 = vmatprep.subr.mxu0 0.0
    %3104 = vmatpush1.msra.mxu0 0.0
    %3105 = vmatprep.subr.mxu0 0.0
    %3106 = vmatpush1.msra.mxu0 0.0
    %3107 = vmatprep.subr.mxu0 0.0
    %3108 = vmatpush1.msra.mxu0 %v2500
    %3109 = vmatprep.subr.mxu0 0.0
    %3110 = vmatpush1.msra.mxu0 %v2499
    %3111 = vmatprep.subr.mxu0 0.0
    %3112 = vmatpush2.msra.mxu0 0.0
    %3113 = vmatprep.subr.mxu0 0.0
    %3114 = vmatpush2.msra.mxu0 0.0
    %3115 = vmatprep.subr.mxu0 0.0
    %3116 = vmatpush2.msra.mxu0 0.0
    %3117 = vmatprep.subr.mxu0 0.0
    %3118 = vmatpush2.msra.mxu0 0.0
    %3119 = vmatprep.subr.mxu0 0.0
    %3120 = vmatpush2.msra.mxu0 0.0
    %3121 = vmatprep.subr.mxu0 0.0
    %3122 = vmatpush2.msra.mxu0 0.0
    %3123 = vmatprep.subr.mxu0 0.0
    %3124 = vmatpush2.msra.mxu0 0.0
    %3125 = vmatprep.subr.mxu0 0.0
    %3126 = vmatpush2.msra.mxu0 0.0
    %3127 = vmatprep.subr.mxu0 0.0
    %3128 = vmatpush2.msra.mxu0 0.0
    %3129 = vmatprep.subr.mxu0 0.0
    %3130 = vmatpush2.msra.mxu0 0.0
    %3131 = vmatprep.subr.mxu0 0.0
    %3132 = vmatpush2.msra.mxu0 0.0
    %3133 = vmatprep.subr.mxu0 0.0
    %3134 = vmatpush2.msra.mxu0 0.0
    %3135 = vmatprep.subr.mxu0 0.0
    %3136 = vmatpush2.msra.mxu0 0.0
    %3137 = vmatprep.subr.mxu0 0.0
    %3138 = vmatpush2.msra.mxu0 0.0
    %3139 = vmatprep.subr.mxu0 0.0
    %3140 = vmatpush2.msra.mxu0 0.0
    %3141 = vmatprep.subr.mxu0 0.0
    %3142 = vmatpush2.msra.mxu0 0.0
    %3143 = vmatprep.mubr.f32.mxu0 0.0
    %3144 = vmatmul.mubr.f32.gmra.mxu0 %v3007
    %v3145 = vpop.f32.mrf.mxu0
    %v3146 = vadd.f32 0.0, %v3145
    %v3147 = vpop.f32.mrf.mxu0
    %3148 = vdwg.mxu0
    %3149 = vmatprep.subr.mxu0 0.0
    %3150 = vmatpush1.msra.mxu0 0.0
    %3151 = vmatprep.subr.mxu0 0.0
    %3152 = vmatpush1.msra.mxu0 0.0
    %3153 = vmatprep.subr.mxu0 0.0
    %3154 = vmatpush1.msra.mxu0 0.0
    %3155 = vmatprep.subr.mxu0 0.0
    %3156 = vmatpush1.msra.mxu0 0.0
    %3157 = vmatprep.subr.mxu0 0.0
    %3158 = vmatpush1.msra.mxu0 0.0
    %3159 = vmatprep.subr.mxu0 0.0
    %3160 = vmatpush1.msra.mxu0 0.0
    %3161 = vmatprep.subr.mxu0 0.0
    %3162 = vmatpush1.msra.mxu0 0.0
    %3163 = vmatprep.subr.mxu0 0.0
    %3164 = vmatpush1.msra.mxu0 0.0
    %3165 = vmatprep.subr.mxu0 0.0
    %3166 = vmatpush1.msra.mxu0 0.0
    %3167 = vmatprep.subr.mxu0 0.0
    %3168 = vmatpush1.msra.mxu0 0.0
    %3169 = vmatprep.subr.mxu0 0.0
    %3170 = vmatpush1.msra.mxu0 0.0
    %3171 = vmatprep.subr.mxu0 0.0
    %3172 = vmatpush1.msra.mxu0 0.0
    %3173 = vmatprep.subr.mxu0 0.0
    %3174 = vmatpush1.msra.mxu0 0.0
    %3175 = vmatprep.subr.mxu0 0.0
    %3176 = vmatpush1.msra.mxu0 0.0
    %3177 = vmatprep.subr.mxu0 0.0
    %3178 = vmatpush1.msra.mxu0 %v2503
    %3179 = vmatprep.subr.mxu0 0.0
    %3180 = vmatpush1.msra.mxu0 %v2502
    %3181 = vmatprep.subr.mxu0 0.0
    %3182 = vmatpush2.msra.mxu0 0.0
    %3183 = vmatprep.subr.mxu0 0.0
    %3184 = vmatpush2.msra.mxu0 0.0
    %3185 = vmatprep.subr.mxu0 0.0
    %3186 = vmatpush2.msra.mxu0 0.0
    %3187 = vmatprep.subr.mxu0 0.0
    %3188 = vmatpush2.msra.mxu0 0.0
    %3189 = vmatprep.subr.mxu0 0.0
    %3190 = vmatpush2.msra.mxu0 0.0
    %3191 = vmatprep.subr.mxu0 0.0
    %3192 = vmatpush2.msra.mxu0 0.0
    %3193 = vmatprep.subr.mxu0 0.0
    %3194 = vmatpush2.msra.mxu0 0.0
    %3195 = vmatprep.subr.mxu0 0.0
    %3196 = vmatpush2.msra.mxu0 0.0
    %3197 = vmatprep.subr.mxu0 0.0
    %3198 = vmatpush2.msra.mxu0 0.0
    %3199 = vmatprep.subr.mxu0 0.0
    %3200 = vmatpush2.msra.mxu0 0.0
    %3201 = vmatprep.subr.mxu0 0.0
    %3202 = vmatpush2.msra.mxu0 0.0
    %3203 = vmatprep.subr.mxu0 0.0
    %3204 = vmatpush2.msra.mxu0 0.0
    %3205 = vmatprep.subr.mxu0 0.0
    %3206 = vmatpush2.msra.mxu0 0.0
    %3207 = vmatprep.subr.mxu0 0.0
    %3208 = vmatpush2.msra.mxu0 0.0
    %3209 = vmatprep.subr.mxu0 0.0
    %3210 = vmatpush2.msra.mxu0 0.0
    %3211 = vmatprep.subr.mxu0 0.0
    %3212 = vmatpush2.msra.mxu0 0.0
    %3213 = vmatprep.mubr.f32.mxu0 0.0
    %3214 = vmatmul.mubr.f32.gmra.mxu0 %v3007
    %v3215 = vpop.f32.mrf.mxu0
    %v3216 = vadd.f32 %v2913, %v3215
    %v3217 = vpop.f32.mrf.mxu0
    %3218 = vdwg.mxu0
    %v3220 = vrot.slane %v3076, 6
    %v3222 = vadd.f32 %v2599, %v3220
    %v3223 = vxor.u32 %v3222, 2147483648
    %v3224 = vmul.f32 %v3223, 1.442695
    %v3225 = vpow.pop %v3224
    %v3226 = vadd.f32 %v3225, 1.0
    %v3227 = vrcp.pop %v3226
    %v3228 = vmul.f32 1.0, %v3227
    %v3230 = vrot.slane %v3146, 6
    %v3232 = vadd.f32 %v2680, %v3230
    %v3233 = vxor.u32 %v3232, 2147483648
    %v3234 = vmul.f32 %v3233, 1.442695
    %v3235 = vpow.pop %v3234
    %v3236 = vadd.f32 %v3235, 1.0
    %v3237 = vrcp.pop %v3236
    %v3238 = vmul.f32 1.0, %v3237
    %v3240 = vrot.slane %v3216, 6
    %v3242 = vmul.f32 %v3228, %v3240
    %v3243 = vadd.f32 %v2761, %v3242
    %v3244 = vtanh.pop %v3243
    %v3246 = vrot.slane %v3244, 2
    %v3248 = vsub.f32 %v3004, %v3246
    %v3250 = vrot.slane %v3248, 6
    %v3252 = vmul.f32 %v3238, %v3250
    %v3253 = vadd.f32 %v3244, %v3252
    %3254 = vst.msk [vmem:[#allocation2] sm:$0xc] %vm992, %v3253
    %v3256 = vrot.slane %v3253, 2
    %v3257 = vsel %vm260, %v3256, 0
    %3259 = vmatprep.subr.mxu0 0.0
    %3260 = vmatpush1.msra.mxu0 0.0
    %3261 = vmatprep.subr.mxu0 0.0
    %3262 = vmatpush1.msra.mxu0 0.0
    %3263 = vmatprep.subr.mxu0 0.0
    %3264 = vmatpush1.msra.mxu0 0.0
    %3265 = vmatprep.subr.mxu0 0.0
    %3266 = vmatpush1.msra.mxu0 0.0
    %3267 = vmatprep.subr.mxu0 0.0
    %3268 = vmatpush1.msra.mxu0 0.0
    %3269 = vmatprep.subr.mxu0 0.0
    %3270 = vmatpush1.msra.mxu0 0.0
    %3271 = vmatprep.subr.mxu0 0.0
    %3272 = vmatpush1.msra.mxu0 0.0
    %3273 = vmatprep.subr.mxu0 0.0
    %3274 = vmatpush1.msra.mxu0 0.0
    %3275 = vmatprep.subr.mxu0 0.0
    %3276 = vmatpush1.msra.mxu0 0.0
    %3277 = vmatprep.subr.mxu0 0.0
    %3278 = vmatpush1.msra.mxu0 0.0
    %3279 = vmatprep.subr.mxu0 0.0
    %3280 = vmatpush1.msra.mxu0 0.0
    %3281 = vmatprep.subr.mxu0 0.0
    %3282 = vmatpush1.msra.mxu0 0.0
    %3283 = vmatprep.subr.mxu0 0.0
    %3284 = vmatpush1.msra.mxu0 0.0
    %3285 = vmatprep.subr.mxu0 0.0
    %3286 = vmatpush1.msra.mxu0 0.0
    %3287 = vmatprep.subr.mxu0 0.0
    %3288 = vmatpush1.msra.mxu0 %v2497
    %3289 = vmatprep.subr.mxu0 0.0
    %3290 = vmatpush1.msra.mxu0 %v2496
    %3291 = vmatprep.subr.mxu0 0.0
    %3292 = vmatpush2.msra.mxu0 0.0
    %3293 = vmatprep.subr.mxu0 0.0
    %3294 = vmatpush2.msra.mxu0 0.0
    %3295 = vmatprep.subr.mxu0 0.0
    %3296 = vmatpush2.msra.mxu0 0.0
    %3297 = vmatprep.subr.mxu0 0.0
    %3298 = vmatpush2.msra.mxu0 0.0
    %3299 = vmatprep.subr.mxu0 0.0
    %3300 = vmatpush2.msra.mxu0 0.0
    %3301 = vmatprep.subr.mxu0 0.0
    %3302 = vmatpush2.msra.mxu0 0.0
    %3303 = vmatprep.subr.mxu0 0.0
    %3304 = vmatpush2.msra.mxu0 0.0
    %3305 = vmatprep.subr.mxu0 0.0
    %3306 = vmatpush2.msra.mxu0 0.0
    %3307 = vmatprep.subr.mxu0 0.0
    %3308 = vmatpush2.msra.mxu0 0.0
    %3309 = vmatprep.subr.mxu0 0.0
    %3310 = vmatpush2.msra.mxu0 0.0
    %3311 = vmatprep.subr.mxu0 0.0
    %3312 = vmatpush2.msra.mxu0 0.0
    %3313 = vmatprep.subr.mxu0 0.0
    %3314 = vmatpush2.msra.mxu0 0.0
    %3315 = vmatprep.subr.mxu0 0.0
    %3316 = vmatpush2.msra.mxu0 0.0
    %3317 = vmatprep.subr.mxu0 0.0
    %3318 = vmatpush2.msra.mxu0 0.0
    %3319 = vmatprep.subr.mxu0 0.0
    %3320 = vmatpush2.msra.mxu0 0.0
    %3321 = vmatprep.subr.mxu0 0.0
    %3322 = vmatpush2.msra.mxu0 0.0
    %3323 = vmatprep.mubr.f32.mxu0 0.0
    %3324 = vmatmul.mubr.f32.gmra.mxu0 %v3257
    %v3325 = vpop.f32.mrf.mxu0
    %v3326 = vadd.f32 0.0, %v3325
    %v3327 = vpop.f32.mrf.mxu0
    %3328 = vdwg.mxu0
    %3329 = vmatprep.subr.mxu0 0.0
    %3330 = vmatpush1.msra.mxu0 0.0
    %3331 = vmatprep.subr.mxu0 0.0
    %3332 = vmatpush1.msra.mxu0 0.0
    %3333 = vmatprep.subr.mxu0 0.0
    %3334 = vmatpush1.msra.mxu0 0.0
    %3335 = vmatprep.subr.mxu0 0.0
    %3336 = vmatpush1.msra.mxu0 0.0
    %3337 = vmatprep.subr.mxu0 0.0
    %3338 = vmatpush1.msra.mxu0 0.0
    %3339 = vmatprep.subr.mxu0 0.0
    %3340 = vmatpush1.msra.mxu0 0.0
    %3341 = vmatprep.subr.mxu0 0.0
    %3342 = vmatpush1.msra.mxu0 0.0
    %3343 = vmatprep.subr.mxu0 0.0
    %3344 = vmatpush1.msra.mxu0 0.0
    %3345 = vmatprep.subr.mxu0 0.0
    %3346 = vmatpush1.msra.mxu0 0.0
    %3347 = vmatprep.subr.mxu0 0.0
    %3348 = vmatpush1.msra.mxu0 0.0
    %3349 = vmatprep.subr.mxu0 0.0
    %3350 = vmatpush1.msra.mxu0 0.0
    %3351 = vmatprep.subr.mxu0 0.0
    %3352 = vmatpush1.msra.mxu0 0.0
    %3353 = vmatprep.subr.mxu0 0.0
    %3354 = vmatpush1.msra.mxu0 0.0
    %3355 = vmatprep.subr.mxu0 0.0
    %3356 = vmatpush1.msra.mxu0 0.0
    %3357 = vmatprep.subr.mxu0 0.0
    %3358 = vmatpush1.msra.mxu0 %v2500
    %3359 = vmatprep.subr.mxu0 0.0
    %3360 = vmatpush1.msra.mxu0 %v2499
    %3361 = vmatprep.subr.mxu0 0.0
    %3362 = vmatpush2.msra.mxu0 0.0
    %3363 = vmatprep.subr.mxu0 0.0
    %3364 = vmatpush2.msra.mxu0 0.0
    %3365 = vmatprep.subr.mxu0 0.0
    %3366 = vmatpush2.msra.mxu0 0.0
    %3367 = vmatprep.subr.mxu0 0.0
    %3368 = vmatpush2.msra.mxu0 0.0
    %3369 = vmatprep.subr.mxu0 0.0
    %3370 = vmatpush2.msra.mxu0 0.0
    %3371 = vmatprep.subr.mxu0 0.0
    %3372 = vmatpush2.msra.mxu0 0.0
    %3373 = vmatprep.subr.mxu0 0.0
    %3374 = vmatpush2.msra.mxu0 0.0
    %3375 = vmatprep.subr.mxu0 0.0
    %3376 = vmatpush2.msra.mxu0 0.0
    %3377 = vmatprep.subr.mxu0 0.0
    %3378 = vmatpush2.msra.mxu0 0.0
    %3379 = vmatprep.subr.mxu0 0.0
    %3380 = vmatpush2.msra.mxu0 0.0
    %3381 = vmatprep.subr.mxu0 0.0
    %3382 = vmatpush2.msra.mxu0 0.0
    %3383 = vmatprep.subr.mxu0 0.0
    %3384 = vmatpush2.msra.mxu0 0.0
    %3385 = vmatprep.subr.mxu0 0.0
    %3386 = vmatpush2.msra.mxu0 0.0
    %3387 = vmatprep.subr.mxu0 0.0
    %3388 = vmatpush2.msra.mxu0 0.0
    %3389 = vmatprep.subr.mxu0 0.0
    %3390 = vmatpush2.msra.mxu0 0.0
    %3391 = vmatprep.subr.mxu0 0.0
    %3392 = vmatpush2.msra.mxu0 0.0
    %3393 = vmatprep.mubr.f32.mxu0 0.0
    %3394 = vmatmul.mubr.f32.gmra.mxu0 %v3257
    %v3395 = vpop.f32.mrf.mxu0
    %v3396 = vadd.f32 0.0, %v3395
    %v3397 = vpop.f32.mrf.mxu0
    %3398 = vdwg.mxu0
    %3399 = vmatprep.subr.mxu0 0.0
    %3400 = vmatpush1.msra.mxu0 0.0
    %3401 = vmatprep.subr.mxu0 0.0
    %3402 = vmatpush1.msra.mxu0 0.0
    %3403 = vmatprep.subr.mxu0 0.0
    %3404 = vmatpush1.msra.mxu0 0.0
    %3405 = vmatprep.subr.mxu0 0.0
    %3406 = vmatpush1.msra.mxu0 0.0
    %3407 = vmatprep.subr.mxu0 0.0
    %3408 = vmatpush1.msra.mxu0 0.0
    %3409 = vmatprep.subr.mxu0 0.0
    %3410 = vmatpush1.msra.mxu0 0.0
    %3411 = vmatprep.subr.mxu0 0.0
    %3412 = vmatpush1.msra.mxu0 0.0
    %3413 = vmatprep.subr.mxu0 0.0
    %3414 = vmatpush1.msra.mxu0 0.0
    %3415 = vmatprep.subr.mxu0 0.0
    %3416 = vmatpush1.msra.mxu0 0.0
    %3417 = vmatprep.subr.mxu0 0.0
    %3418 = vmatpush1.msra.mxu0 0.0
    %3419 = vmatprep.subr.mxu0 0.0
    %3420 = vmatpush1.msra.mxu0 0.0
    %3421 = vmatprep.subr.mxu0 0.0
    %3422 = vmatpush1.msra.mxu0 0.0
    %3423 = vmatprep.subr.mxu0 0.0
    %3424 = vmatpush1.msra.mxu0 0.0
    %3425 = vmatprep.subr.mxu0 0.0
    %3426 = vmatpush1.msra.mxu0 0.0
    %3427 = vmatprep.subr.mxu0 0.0
    %3428 = vmatpush1.msra.mxu0 %v2503
    %3429 = vmatprep.subr.mxu0 0.0
    %3430 = vmatpush1.msra.mxu0 %v2502
    %3431 = vmatprep.subr.mxu0 0.0
    %3432 = vmatpush2.msra.mxu0 0.0
    %3433 = vmatprep.subr.mxu0 0.0
    %3434 = vmatpush2.msra.mxu0 0.0
    %3435 = vmatprep.subr.mxu0 0.0
    %3436 = vmatpush2.msra.mxu0 0.0
    %3437 = vmatprep.subr.mxu0 0.0
    %3438 = vmatpush2.msra.mxu0 0.0
    %3439 = vmatprep.subr.mxu0 0.0
    %3440 = vmatpush2.msra.mxu0 0.0
    %3441 = vmatprep.subr.mxu0 0.0
    %3442 = vmatpush2.msra.mxu0 0.0
    %3443 = vmatprep.subr.mxu0 0.0
    %3444 = vmatpush2.msra.mxu0 0.0
    %3445 = vmatprep.subr.mxu0 0.0
    %3446 = vmatpush2.msra.mxu0 0.0
    %3447 = vmatprep.subr.mxu0 0.0
    %3448 = vmatpush2.msra.mxu0 0.0
    %3449 = vmatprep.subr.mxu0 0.0
    %3450 = vmatpush2.msra.mxu0 0.0
    %3451 = vmatprep.subr.mxu0 0.0
    %3452 = vmatpush2.msra.mxu0 0.0
    %3453 = vmatprep.subr.mxu0 0.0
    %3454 = vmatpush2.msra.mxu0 0.0
    %3455 = vmatprep.subr.mxu0 0.0
    %3456 = vmatpush2.msra.mxu0 0.0
    %3457 = vmatprep.subr.mxu0 0.0
    %3458 = vmatpush2.msra.mxu0 0.0
    %3459 = vmatprep.subr.mxu0 0.0
    %3460 = vmatpush2.msra.mxu0 0.0
    %3461 = vmatprep.subr.mxu0 0.0
    %3462 = vmatpush2.msra.mxu0 0.0
    %3463 = vmatprep.mubr.f32.mxu0 0.0
    %3464 = vmatmul.mubr.f32.gmra.mxu0 %v3257
    %v3465 = vpop.f32.mrf.mxu0
    %v3466 = vadd.f32 %v2913, %v3465
    %v3467 = vpop.f32.mrf.mxu0
    %3468 = vdwg.mxu0
    %v3470 = vrot.slane %v3326, 4
    %v3472 = vadd.f32 %v2599, %v3470
    %v3473 = vxor.u32 %v3472, 2147483648
    %v3474 = vmul.f32 %v3473, 1.442695
    %v3475 = vpow.pop %v3474
    %v3476 = vadd.f32 %v3475, 1.0
    %v3477 = vrcp.pop %v3476
    %v3478 = vmul.f32 1.0, %v3477
    %v3480 = vrot.slane %v3396, 4
    %v3482 = vadd.f32 %v2680, %v3480
    %v3483 = vxor.u32 %v3482, 2147483648
    %v3484 = vmul.f32 %v3483, 1.442695
    %v3485 = vpow.pop %v3484
    %v3486 = vadd.f32 %v3485, 1.0
    %v3487 = vrcp.pop %v3486
    %v3488 = vmul.f32 1.0, %v3487
    %v3490 = vrot.slane %v3466, 4
    %v3492 = vmul.f32 %v3478, %v3490
    %v3493 = vadd.f32 %v2761, %v3492
    %v3494 = vtanh.pop %v3493
    %v3496 = vrot.slane %v3494, 2
    %v3498 = vsub.f32 %v3253, %v3496
    %v3500 = vrot.slane %v3498, 6
    %v3502 = vmul.f32 %v3488, %v3500
    %v3503 = vadd.f32 %v3494, %v3502
    %3504 = vst.msk [vmem:[#allocation2] sm:$0x30] %vm1243, %v3503
    %v3506 = vrot.slane %v3503, 4
    %v3507 = vsel %vm260, %v3506, 0
    %3509 = vmatprep.subr.mxu0 0.0
    %3510 = vmatpush1.msra.mxu0 0.0
    %3511 = vmatprep.subr.mxu0 0.0
    %3512 = vmatpush1.msra.mxu0 0.0
    %3513 = vmatprep.subr.mxu0 0.0
    %3514 = vmatpush1.msra.mxu0 0.0
    %3515 = vmatprep.subr.mxu0 0.0
    %3516 = vmatpush1.msra.mxu0 0.0
    %3517 = vmatprep.subr.mxu0 0.0
    %3518 = vmatpush1.msra.mxu0 0.0
    %3519 = vmatprep.subr.mxu0 0.0
    %3520 = vmatpush1.msra.mxu0 0.0
    %3521 = vmatprep.subr.mxu0 0.0
    %3522 = vmatpush1.msra.mxu0 0.0
    %3523 = vmatprep.subr.mxu0 0.0
    %3524 = vmatpush1.msra.mxu0 0.0
    %3525 = vmatprep.subr.mxu0 0.0
    %3526 = vmatpush1.msra.mxu0 0.0
    %3527 = vmatprep.subr.mxu0 0.0
    %3528 = vmatpush1.msra.mxu0 0.0
    %3529 = vmatprep.subr.mxu0 0.0
    %3530 = vmatpush1.msra.mxu0 0.0
    %3531 = vmatprep.subr.mxu0 0.0
    %3532 = vmatpush1.msra.mxu0 0.0
    %3533 = vmatprep.subr.mxu0 0.0
    %3534 = vmatpush1.msra.mxu0 0.0
    %3535 = vmatprep.subr.mxu0 0.0
    %3536 = vmatpush1.msra.mxu0 0.0
    %3537 = vmatprep.subr.mxu0 0.0
    %3538 = vmatpush1.msra.mxu0 %v2497
    %3539 = vmatprep.subr.mxu0 0.0
    %3540 = vmatpush1.msra.mxu0 %v2496
    %3541 = vmatprep.subr.mxu0 0.0
    %3542 = vmatpush2.msra.mxu0 0.0
    %3543 = vmatprep.subr.mxu0 0.0
    %3544 = vmatpush2.msra.mxu0 0.0
    %3545 = vmatprep.subr.mxu0 0.0
    %3546 = vmatpush2.msra.mxu0 0.0
    %3547 = vmatprep.subr.mxu0 0.0
    %3548 = vmatpush2.msra.mxu0 0.0
    %3549 = vmatprep.subr.mxu0 0.0
    %3550 = vmatpush2.msra.mxu0 0.0
    %3551 = vmatprep.subr.mxu0 0.0
    %3552 = vmatpush2.msra.mxu0 0.0
    %3553 = vmatprep.subr.mxu0 0.0
    %3554 = vmatpush2.msra.mxu0 0.0
    %3555 = vmatprep.subr.mxu0 0.0
    %3556 = vmatpush2.msra.mxu0 0.0
    %3557 = vmatprep.subr.mxu0 0.0
    %3558 = vmatpush2.msra.mxu0 0.0
    %3559 = vmatprep.subr.mxu0 0.0
    %3560 = vmatpush2.msra.mxu0 0.0
    %3561 = vmatprep.subr.mxu0 0.0
    %3562 = vmatpush2.msra.mxu0 0.0
    %3563 = vmatprep.subr.mxu0 0.0
    %3564 = vmatpush2.msra.mxu0 0.0
    %3565 = vmatprep.subr.mxu0 0.0
    %3566 = vmatpush2.msra.mxu0 0.0
    %3567 = vmatprep.subr.mxu0 0.0
    %3568 = vmatpush2.msra.mxu0 0.0
    %3569 = vmatprep.subr.mxu0 0.0
    %3570 = vmatpush2.msra.mxu0 0.0
    %3571 = vmatprep.subr.mxu0 0.0
    %3572 = vmatpush2.msra.mxu0 0.0
    %3573 = vmatprep.mubr.f32.mxu0 0.0
    %3574 = vmatmul.mubr.f32.gmra.mxu0 %v3507
    %v3575 = vpop.f32.mrf.mxu0
    %v3576 = vadd.f32 0.0, %v3575
    %v3577 = vpop.f32.mrf.mxu0
    %3578 = vdwg.mxu0
    %3579 = vmatprep.subr.mxu0 0.0
    %3580 = vmatpush1.msra.mxu0 0.0
    %3581 = vmatprep.subr.mxu0 0.0
    %3582 = vmatpush1.msra.mxu0 0.0
    %3583 = vmatprep.subr.mxu0 0.0
    %3584 = vmatpush1.msra.mxu0 0.0
    %3585 = vmatprep.subr.mxu0 0.0
    %3586 = vmatpush1.msra.mxu0 0.0
    %3587 = vmatprep.subr.mxu0 0.0
    %3588 = vmatpush1.msra.mxu0 0.0
    %3589 = vmatprep.subr.mxu0 0.0
    %3590 = vmatpush1.msra.mxu0 0.0
    %3591 = vmatprep.subr.mxu0 0.0
    %3592 = vmatpush1.msra.mxu0 0.0
    %3593 = vmatprep.subr.mxu0 0.0
    %3594 = vmatpush1.msra.mxu0 0.0
    %3595 = vmatprep.subr.mxu0 0.0
    %3596 = vmatpush1.msra.mxu0 0.0
    %3597 = vmatprep.subr.mxu0 0.0
    %3598 = vmatpush1.msra.mxu0 0.0
    %3599 = vmatprep.subr.mxu0 0.0
    %3600 = vmatpush1.msra.mxu0 0.0
    %3601 = vmatprep.subr.mxu0 0.0
    %3602 = vmatpush1.msra.mxu0 0.0
    %3603 = vmatprep.subr.mxu0 0.0
    %3604 = vmatpush1.msra.mxu0 0.0
    %3605 = vmatprep.subr.mxu0 0.0
    %3606 = vmatpush1.msra.mxu0 0.0
    %3607 = vmatprep.subr.mxu0 0.0
    %3608 = vmatpush1.msra.mxu0 %v2500
    %3609 = vmatprep.subr.mxu0 0.0
    %3610 = vmatpush1.msra.mxu0 %v2499
    %3611 = vmatprep.subr.mxu0 0.0
    %3612 = vmatpush2.msra.mxu0 0.0
    %3613 = vmatprep.subr.mxu0 0.0
    %3614 = vmatpush2.msra.mxu0 0.0
    %3615 = vmatprep.subr.mxu0 0.0
    %3616 = vmatpush2.msra.mxu0 0.0
    %3617 = vmatprep.subr.mxu0 0.0
    %3618 = vmatpush2.msra.mxu0 0.0
    %3619 = vmatprep.subr.mxu0 0.0
    %3620 = vmatpush2.msra.mxu0 0.0
    %3621 = vmatprep.subr.mxu0 0.0
    %3622 = vmatpush2.msra.mxu0 0.0
    %3623 = vmatprep.subr.mxu0 0.0
    %3624 = vmatpush2.msra.mxu0 0.0
    %3625 = vmatprep.subr.mxu0 0.0
    %3626 = vmatpush2.msra.mxu0 0.0
    %3627 = vmatprep.subr.mxu0 0.0
    %3628 = vmatpush2.msra.mxu0 0.0
    %3629 = vmatprep.subr.mxu0 0.0
    %3630 = vmatpush2.msra.mxu0 0.0
    %3631 = vmatprep.subr.mxu0 0.0
    %3632 = vmatpush2.msra.mxu0 0.0
    %3633 = vmatprep.subr.mxu0 0.0
    %3634 = vmatpush2.msra.mxu0 0.0
    %3635 = vmatprep.subr.mxu0 0.0
    %3636 = vmatpush2.msra.mxu0 0.0
    %3637 = vmatprep.subr.mxu0 0.0
    %3638 = vmatpush2.msra.mxu0 0.0
    %3639 = vmatprep.subr.mxu0 0.0
    %3640 = vmatpush2.msra.mxu0 0.0
    %3641 = vmatprep.subr.mxu0 0.0
    %3642 = vmatpush2.msra.mxu0 0.0
    %3643 = vmatprep.mubr.f32.mxu0 0.0
    %3644 = vmatmul.mubr.f32.gmra.mxu0 %v3507
    %v3645 = vpop.f32.mrf.mxu0
    %v3646 = vadd.f32 0.0, %v3645
    %v3647 = vpop.f32.mrf.mxu0
    %3648 = vdwg.mxu0
    %3649 = vmatprep.subr.mxu0 0.0
    %3650 = vmatpush1.msra.mxu0 0.0
    %3651 = vmatprep.subr.mxu0 0.0
    %3652 = vmatpush1.msra.mxu0 0.0
    %3653 = vmatprep.subr.mxu0 0.0
    %3654 = vmatpush1.msra.mxu0 0.0
    %3655 = vmatprep.subr.mxu0 0.0
    %3656 = vmatpush1.msra.mxu0 0.0
    %3657 = vmatprep.subr.mxu0 0.0
    %3658 = vmatpush1.msra.mxu0 0.0
    %3659 = vmatprep.subr.mxu0 0.0
    %3660 = vmatpush1.msra.mxu0 0.0
    %3661 = vmatprep.subr.mxu0 0.0
    %3662 = vmatpush1.msra.mxu0 0.0
    %3663 = vmatprep.subr.mxu0 0.0
    %3664 = vmatpush1.msra.mxu0 0.0
    %3665 = vmatprep.subr.mxu0 0.0
    %3666 = vmatpush1.msra.mxu0 0.0
    %3667 = vmatprep.subr.mxu0 0.0
    %3668 = vmatpush1.msra.mxu0 0.0
    %3669 = vmatprep.subr.mxu0 0.0
    %3670 = vmatpush1.msra.mxu0 0.0
    %3671 = vmatprep.subr.mxu0 0.0
    %3672 = vmatpush1.msra.mxu0 0.0
    %3673 = vmatprep.subr.mxu0 0.0
    %3674 = vmatpush1.msra.mxu0 0.0
    %3675 = vmatprep.subr.mxu0 0.0
    %3676 = vmatpush1.msra.mxu0 0.0
    %3677 = vmatprep.subr.mxu0 0.0
    %3678 = vmatpush1.msra.mxu0 %v2503
    %3679 = vmatprep.subr.mxu0 0.0
    %3680 = vmatpush1.msra.mxu0 %v2502
    %3681 = vmatprep.subr.mxu0 0.0
    %3682 = vmatpush2.msra.mxu0 0.0
    %3683 = vmatprep.subr.mxu0 0.0
    %3684 = vmatpush2.msra.mxu0 0.0
    %3685 = vmatprep.subr.mxu0 0.0
    %3686 = vmatpush2.msra.mxu0 0.0
    %3687 = vmatprep.subr.mxu0 0.0
    %3688 = vmatpush2.msra.mxu0 0.0
    %3689 = vmatprep.subr.mxu0 0.0
    %3690 = vmatpush2.msra.mxu0 0.0
    %3691 = vmatprep.subr.mxu0 0.0
    %3692 = vmatpush2.msra.mxu0 0.0
    %3693 = vmatprep.subr.mxu0 0.0
    %3694 = vmatpush2.msra.mxu0 0.0
    %3695 = vmatprep.subr.mxu0 0.0
    %3696 = vmatpush2.msra.mxu0 0.0
    %3697 = vmatprep.subr.mxu0 0.0
    %3698 = vmatpush2.msra.mxu0 0.0
    %3699 = vmatprep.subr.mxu0 0.0
    %3700 = vmatpush2.msra.mxu0 0.0
    %3701 = vmatprep.subr.mxu0 0.0
    %3702 = vmatpush2.msra.mxu0 0.0
    %3703 = vmatprep.subr.mxu0 0.0
    %3704 = vmatpush2.msra.mxu0 0.0
    %3705 = vmatprep.subr.mxu0 0.0
    %3706 = vmatpush2.msra.mxu0 0.0
    %3707 = vmatprep.subr.mxu0 0.0
    %3708 = vmatpush2.msra.mxu0 0.0
    %3709 = vmatprep.subr.mxu0 0.0
    %3710 = vmatpush2.msra.mxu0 0.0
    %3711 = vmatprep.subr.mxu0 0.0
    %3712 = vmatpush2.msra.mxu0 0.0
    %3713 = vmatprep.mubr.f32.mxu0 0.0
    %3714 = vmatmul.mubr.f32.gmra.mxu0 %v3507
    %v3715 = vpop.f32.mrf.mxu0
    %v3716 = vadd.f32 %v2913, %v3715
    %v3717 = vpop.f32.mrf.mxu0
    %3718 = vdwg.mxu0
    %v3720 = vrot.slane %v3576, 2
    %v3722 = vadd.f32 %v2599, %v3720
    %v3723 = vxor.u32 %v3722, 2147483648
    %v3724 = vmul.f32 %v3723, 1.442695
    %v3725 = vpow.pop %v3724
    %v3726 = vadd.f32 %v3725, 1.0
    %v3727 = vrcp.pop %v3726
    %v3728 = vmul.f32 1.0, %v3727
    %v3730 = vrot.slane %v3646, 2
    %v3732 = vadd.f32 %v2680, %v3730
    %v3733 = vxor.u32 %v3732, 2147483648
    %v3734 = vmul.f32 %v3733, 1.442695
    %v3735 = vpow.pop %v3734
    %v3736 = vadd.f32 %v3735, 1.0
    %v3737 = vrcp.pop %v3736
    %v3738 = vmul.f32 1.0, %v3737
    %v3740 = vrot.slane %v3716, 2
    %v3742 = vmul.f32 %v3728, %v3740
    %v3743 = vadd.f32 %v2761, %v3742
    %v3744 = vtanh.pop %v3743
    %v3746 = vrot.slane %v3744, 2
    %v3748 = vsub.f32 %v3503, %v3746
    %v3750 = vrot.slane %v3748, 6
    %v3752 = vmul.f32 %v3738, %v3750
    %v3753 = vadd.f32 %v3744, %v3752
    %3754 = vst.msk [vmem:[#allocation2] sm:$0xc0] %vm1494, %v3753
    %v3756 = vrot.slane %v3753, 6
    %v3757 = vsel %vm260, %v3756, 0
    %3759 = vmatprep.subr.mxu0 0.0
    %3760 = vmatpush1.msra.mxu0 0.0
    %3761 = vmatprep.subr.mxu0 0.0
    %3762 = vmatpush1.msra.mxu0 0.0
    %3763 = vmatprep.subr.mxu0 0.0
    %3764 = vmatpush1.msra.mxu0 0.0
    %3765 = vmatprep.subr.mxu0 0.0
    %3766 = vmatpush1.msra.mxu0 0.0
    %3767 = vmatprep.subr.mxu0 0.0
    %3768 = vmatpush1.msra.mxu0 0.0
    %3769 = vmatprep.subr.mxu0 0.0
    %3770 = vmatpush1.msra.mxu0 0.0
    %3771 = vmatprep.subr.mxu0 0.0
    %3772 = vmatpush1.msra.mxu0 0.0
    %3773 = vmatprep.subr.mxu0 0.0
    %3774 = vmatpush1.msra.mxu0 0.0
    %3775 = vmatprep.subr.mxu0 0.0
    %3776 = vmatpush1.msra.mxu0 0.0
    %3777 = vmatprep.subr.mxu0 0.0
    %3778 = vmatpush1.msra.mxu0 0.0
    %3779 = vmatprep.subr.mxu0 0.0
    %3780 = vmatpush1.msra.mxu0 0.0
    %3781 = vmatprep.subr.mxu0 0.0
    %3782 = vmatpush1.msra.mxu0 0.0
    %3783 = vmatprep.subr.mxu0 0.0
    %3784 = vmatpush1.msra.mxu0 0.0
    %3785 = vmatprep.subr.mxu0 0.0
    %3786 = vmatpush1.msra.mxu0 0.0
    %3787 = vmatprep.subr.mxu0 0.0
    %3788 = vmatpush1.msra.mxu0 %v2497
    %3789 = vmatprep.subr.mxu0 0.0
    %3790 = vmatpush1.msra.mxu0 %v2496
    %3791 = vmatprep.subr.mxu0 0.0
    %3792 = vmatpush2.msra.mxu0 0.0
    %3793 = vmatprep.subr.mxu0 0.0
    %3794 = vmatpush2.msra.mxu0 0.0
    %3795 = vmatprep.subr.mxu0 0.0
    %3796 = vmatpush2.msra.mxu0 0.0
    %3797 = vmatprep.subr.mxu0 0.0
    %3798 = vmatpush2.msra.mxu0 0.0
    %3799 = vmatprep.subr.mxu0 0.0
    %3800 = vmatpush2.msra.mxu0 0.0
    %3801 = vmatprep.subr.mxu0 0.0
    %3802 = vmatpush2.msra.mxu0 0.0
    %3803 = vmatprep.subr.mxu0 0.0
    %3804 = vmatpush2.msra.mxu0 0.0
    %3805 = vmatprep.subr.mxu0 0.0
    %3806 = vmatpush2.msra.mxu0 0.0
    %3807 = vmatprep.subr.mxu0 0.0
    %3808 = vmatpush2.msra.mxu0 0.0
    %3809 = vmatprep.subr.mxu0 0.0
    %3810 = vmatpush2.msra.mxu0 0.0
    %3811 = vmatprep.subr.mxu0 0.0
    %3812 = vmatpush2.msra.mxu0 0.0
    %3813 = vmatprep.subr.mxu0 0.0
    %3814 = vmatpush2.msra.mxu0 0.0
    %3815 = vmatprep.subr.mxu0 0.0
    %3816 = vmatpush2.msra.mxu0 0.0
    %3817 = vmatprep.subr.mxu0 0.0
    %3818 = vmatpush2.msra.mxu0 0.0
    %3819 = vmatprep.subr.mxu0 0.0
    %3820 = vmatpush2.msra.mxu0 0.0
    %3821 = vmatprep.subr.mxu0 0.0
    %3822 = vmatpush2.msra.mxu0 0.0
    %3823 = vmatprep.mubr.f32.mxu0 0.0
    %3824 = vmatmul.mubr.f32.gmra.mxu0 %v3757
    %v3825 = vpop.f32.mrf.mxu0
    %v3826 = vadd.f32 0.0, %v3825
    %v3827 = vpop.f32.mrf.mxu0
    %3828 = vdwg.mxu0
    %3829 = vmatprep.subr.mxu0 0.0
    %3830 = vmatpush1.msra.mxu0 0.0
    %3831 = vmatprep.subr.mxu0 0.0
    %3832 = vmatpush1.msra.mxu0 0.0
    %3833 = vmatprep.subr.mxu0 0.0
    %3834 = vmatpush1.msra.mxu0 0.0
    %3835 = vmatprep.subr.mxu0 0.0
    %3836 = vmatpush1.msra.mxu0 0.0
    %3837 = vmatprep.subr.mxu0 0.0
    %3838 = vmatpush1.msra.mxu0 0.0
    %3839 = vmatprep.subr.mxu0 0.0
    %3840 = vmatpush1.msra.mxu0 0.0
    %3841 = vmatprep.subr.mxu0 0.0
    %3842 = vmatpush1.msra.mxu0 0.0
    %3843 = vmatprep.subr.mxu0 0.0
    %3844 = vmatpush1.msra.mxu0 0.0
    %3845 = vmatprep.subr.mxu0 0.0
    %3846 = vmatpush1.msra.mxu0 0.0
    %3847 = vmatprep.subr.mxu0 0.0
    %3848 = vmatpush1.msra.mxu0 0.0
    %3849 = vmatprep.subr.mxu0 0.0
    %3850 = vmatpush1.msra.mxu0 0.0
    %3851 = vmatprep.subr.mxu0 0.0
    %3852 = vmatpush1.msra.mxu0 0.0
    %3853 = vmatprep.subr.mxu0 0.0
    %3854 = vmatpush1.msra.mxu0 0.0
    %3855 = vmatprep.subr.mxu0 0.0
    %3856 = vmatpush1.msra.mxu0 0.0
    %3857 = vmatprep.subr.mxu0 0.0
    %3858 = vmatpush1.msra.mxu0 %v2500
    %3859 = vmatprep.subr.mxu0 0.0
    %3860 = vmatpush1.msra.mxu0 %v2499
    %3861 = vmatprep.subr.mxu0 0.0
    %3862 = vmatpush2.msra.mxu0 0.0
    %3863 = vmatprep.subr.mxu0 0.0
    %3864 = vmatpush2.msra.mxu0 0.0
    %3865 = vmatprep.subr.mxu0 0.0
    %3866 = vmatpush2.msra.mxu0 0.0
    %3867 = vmatprep.subr.mxu0 0.0
    %3868 = vmatpush2.msra.mxu0 0.0
    %3869 = vmatprep.subr.mxu0 0.0
    %3870 = vmatpush2.msra.mxu0 0.0
    %3871 = vmatprep.subr.mxu0 0.0
    %3872 = vmatpush2.msra.mxu0 0.0
    %3873 = vmatprep.subr.mxu0 0.0
    %3874 = vmatpush2.msra.mxu0 0.0
    %3875 = vmatprep.subr.mxu0 0.0
    %3876 = vmatpush2.msra.mxu0 0.0
    %3877 = vmatprep.subr.mxu0 0.0
    %3878 = vmatpush2.msra.mxu0 0.0
    %3879 = vmatprep.subr.mxu0 0.0
    %3880 = vmatpush2.msra.mxu0 0.0
    %3881 = vmatprep.subr.mxu0 0.0
    %3882 = vmatpush2.msra.mxu0 0.0
    %3883 = vmatprep.subr.mxu0 0.0
    %3884 = vmatpush2.msra.mxu0 0.0
    %3885 = vmatprep.subr.mxu0 0.0
    %3886 = vmatpush2.msra.mxu0 0.0
    %3887 = vmatprep.subr.mxu0 0.0
    %3888 = vmatpush2.msra.mxu0 0.0
    %3889 = vmatprep.subr.mxu0 0.0
    %3890 = vmatpush2.msra.mxu0 0.0
    %3891 = vmatprep.subr.mxu0 0.0
    %3892 = vmatpush2.msra.mxu0 0.0
    %3893 = vmatprep.mubr.f32.mxu0 0.0
    %3894 = vmatmul.mubr.f32.gmra.mxu0 %v3757
    %v3895 = vpop.f32.mrf.mxu0
    %v3896 = vadd.f32 0.0, %v3895
    %v3897 = vpop.f32.mrf.mxu0
    %3898 = vdwg.mxu0
    %3899 = vmatprep.subr.mxu0 0.0
    %3900 = vmatpush1.msra.mxu0 0.0
    %3901 = vmatprep.subr.mxu0 0.0
    %3902 = vmatpush1.msra.mxu0 0.0
    %3903 = vmatprep.subr.mxu0 0.0
    %3904 = vmatpush1.msra.mxu0 0.0
    %3905 = vmatprep.subr.mxu0 0.0
    %3906 = vmatpush1.msra.mxu0 0.0
    %3907 = vmatprep.subr.mxu0 0.0
    %3908 = vmatpush1.msra.mxu0 0.0
    %3909 = vmatprep.subr.mxu0 0.0
    %3910 = vmatpush1.msra.mxu0 0.0
    %3911 = vmatprep.subr.mxu0 0.0
    %3912 = vmatpush1.msra.mxu0 0.0
    %3913 = vmatprep.subr.mxu0 0.0
    %3914 = vmatpush1.msra.mxu0 0.0
    %3915 = vmatprep.subr.mxu0 0.0
    %3916 = vmatpush1.msra.mxu0 0.0
    %3917 = vmatprep.subr.mxu0 0.0
    %3918 = vmatpush1.msra.mxu0 0.0
    %3919 = vmatprep.subr.mxu0 0.0
    %3920 = vmatpush1.msra.mxu0 0.0
    %3921 = vmatprep.subr.mxu0 0.0
    %3922 = vmatpush1.msra.mxu0 0.0
    %3923 = vmatprep.subr.mxu0 0.0
    %3924 = vmatpush1.msra.mxu0 0.0
    %3925 = vmatprep.subr.mxu0 0.0
    %3926 = vmatpush1.msra.mxu0 0.0
    %3927 = vmatprep.subr.mxu0 0.0
    %3928 = vmatpush1.msra.mxu0 %v2503
    %3929 = vmatprep.subr.mxu0 0.0
    %3930 = vmatpush1.msra.mxu0 %v2502
    %3931 = vmatprep.subr.mxu0 0.0
    %3932 = vmatpush2.msra.mxu0 0.0
    %3933 = vmatprep.subr.mxu0 0.0
    %3934 = vmatpush2.msra.mxu0 0.0
    %3935 = vmatprep.subr.mxu0 0.0
    %3936 = vmatpush2.msra.mxu0 0.0
    %3937 = vmatprep.subr.mxu0 0.0
    %3938 = vmatpush2.msra.mxu0 0.0
    %3939 = vmatprep.subr.mxu0 0.0
    %3940 = vmatpush2.msra.mxu0 0.0
    %3941 = vmatprep.subr.mxu0 0.0
    %3942 = vmatpush2.msra.mxu0 0.0
    %3943 = vmatprep.subr.mxu0 0.0
    %3944 = vmatpush2.msra.mxu0 0.0
    %3945 = vmatprep.subr.mxu0 0.0
    %3946 = vmatpush2.msra.mxu0 0.0
    %3947 = vmatprep.subr.mxu0 0.0
    %3948 = vmatpush2.msra.mxu0 0.0
    %3949 = vmatprep.subr.mxu0 0.0
    %3950 = vmatpush2.msra.mxu0 0.0
    %3951 = vmatprep.subr.mxu0 0.0
    %3952 = vmatpush2.msra.mxu0 0.0
    %3953 = vmatprep.subr.mxu0 0.0
    %3954 = vmatpush2.msra.mxu0 0.0
    %3955 = vmatprep.subr.mxu0 0.0
    %3956 = vmatpush2.msra.mxu0 0.0
    %3957 = vmatprep.subr.mxu0 0.0
    %3958 = vmatpush2.msra.mxu0 0.0
    %3959 = vmatprep.subr.mxu0 0.0
    %3960 = vmatpush2.msra.mxu0 0.0
    %3961 = vmatprep.subr.mxu0 0.0
    %3962 = vmatpush2.msra.mxu0 0.0
    %3963 = vmatprep.mubr.f32.mxu0 0.0
    %3964 = vmatmul.mubr.f32.gmra.mxu0 %v3757
    %v3965 = vpop.f32.mrf.mxu0
    %v3966 = vadd.f32 %v2913, %v3965
    %v3967 = vpop.f32.mrf.mxu0
    %3968 = vdwg.mxu0
    %v3969 = vadd.f32 %v2604, %v3826
    %v3970 = vxor.u32 %v3969, 2147483648
    %v3971 = vmul.f32 %v3970, 1.442695
    %v3972 = vpow.pop %v3971
    %v3973 = vadd.f32 %v3972, 1.0
    %v3974 = vrcp.pop %v3973
    %v3975 = vmul.f32 1.0, %v3974
    %v3976 = vadd.f32 %v2685, %v3896
    %v3977 = vxor.u32 %v3976, 2147483648
    %v3978 = vmul.f32 %v3977, 1.442695
    %v3979 = vpow.pop %v3978
    %v3980 = vadd.f32 %v3979, 1.0
    %v3981 = vrcp.pop %v3980
    %v3982 = vmul.f32 1.0, %v3981
    %v3983 = vmul.f32 %v3975, %v3966
    %v3984 = vadd.f32 %v2766, %v3983
    %v3985 = vtanh.pop %v3984
    %v3987 = vrot.slane %v3985, 2
    %v3989 = vsub.f32 %v3753, %v3987
    %v3991 = vrot.slane %v3989, 6
    %v3993 = vmul.f32 %v3982, %v3991
    %v3994 = vadd.f32 %v3985, %v3993
    %3995 = vst.msk [vmem:[#allocation2 + $0x8] sm:$0x3] %vm193, %v3994
    %v3997 = vsel %vm260, %v3994, 0
    %3999 = vmatprep.subr.mxu0 0.0
    %4000 = vmatpush1.msra.mxu0 0.0
    %4001 = vmatprep.subr.mxu0 0.0
    %4002 = vmatpush1.msra.mxu0 0.0
    %4003 = vmatprep.subr.mxu0 0.0
    %4004 = vmatpush1.msra.mxu0 0.0
    %4005 = vmatprep.subr.mxu0 0.0
    %4006 = vmatpush1.msra.mxu0 0.0
    %4007 = vmatprep.subr.mxu0 0.0
    %4008 = vmatpush1.msra.mxu0 0.0
    %4009 = vmatprep.subr.mxu0 0.0
    %4010 = vmatpush1.msra.mxu0 0.0
    %4011 = vmatprep.subr.mxu0 0.0
    %4012 = vmatpush1.msra.mxu0 0.0
    %4013 = vmatprep.subr.mxu0 0.0
    %4014 = vmatpush1.msra.mxu0 0.0
    %4015 = vmatprep.subr.mxu0 0.0
    %4016 = vmatpush1.msra.mxu0 0.0
    %4017 = vmatprep.subr.mxu0 0.0
    %4018 = vmatpush1.msra.mxu0 0.0
    %4019 = vmatprep.subr.mxu0 0.0
    %4020 = vmatpush1.msra.mxu0 0.0
    %4021 = vmatprep.subr.mxu0 0.0
    %4022 = vmatpush1.msra.mxu0 0.0
    %4023 = vmatprep.subr.mxu0 0.0
    %4024 = vmatpush1.msra.mxu0 0.0
    %4025 = vmatprep.subr.mxu0 0.0
    %4026 = vmatpush1.msra.mxu0 0.0
    %4027 = vmatprep.subr.mxu0 0.0
    %4028 = vmatpush1.msra.mxu0 %v2497
    %4029 = vmatprep.subr.mxu0 0.0
    %4030 = vmatpush1.msra.mxu0 %v2496
    %4031 = vmatprep.subr.mxu0 0.0
    %4032 = vmatpush2.msra.mxu0 0.0
    %4033 = vmatprep.subr.mxu0 0.0
    %4034 = vmatpush2.msra.mxu0 0.0
    %4035 = vmatprep.subr.mxu0 0.0
    %4036 = vmatpush2.msra.mxu0 0.0
    %4037 = vmatprep.subr.mxu0 0.0
    %4038 = vmatpush2.msra.mxu0 0.0
    %4039 = vmatprep.subr.mxu0 0.0
    %4040 = vmatpush2.msra.mxu0 0.0
    %4041 = vmatprep.subr.mxu0 0.0
    %4042 = vmatpush2.msra.mxu0 0.0
    %4043 = vmatprep.subr.mxu0 0.0
    %4044 = vmatpush2.msra.mxu0 0.0
    %4045 = vmatprep.subr.mxu0 0.0
    %4046 = vmatpush2.msra.mxu0 0.0
    %4047 = vmatprep.subr.mxu0 0.0
    %4048 = vmatpush2.msra.mxu0 0.0
    %4049 = vmatprep.subr.mxu0 0.0
    %4050 = vmatpush2.msra.mxu0 0.0
    %4051 = vmatprep.subr.mxu0 0.0
    %4052 = vmatpush2.msra.mxu0 0.0
    %4053 = vmatprep.subr.mxu0 0.0
    %4054 = vmatpush2.msra.mxu0 0.0
    %4055 = vmatprep.subr.mxu0 0.0
    %4056 = vmatpush2.msra.mxu0 0.0
    %4057 = vmatprep.subr.mxu0 0.0
    %4058 = vmatpush2.msra.mxu0 0.0
    %4059 = vmatprep.subr.mxu0 0.0
    %4060 = vmatpush2.msra.mxu0 0.0
    %4061 = vmatprep.subr.mxu0 0.0
    %4062 = vmatpush2.msra.mxu0 0.0
    %4063 = vmatprep.mubr.f32.mxu0 0.0
    %4064 = vmatmul.mubr.f32.gmra.mxu0 %v3997
    %v4065 = vpop.f32.mrf.mxu0
    %v4066 = vadd.f32 0.0, %v4065
    %v4067 = vpop.f32.mrf.mxu0
    %4068 = vdwg.mxu0
    %4069 = vmatprep.subr.mxu0 0.0
    %4070 = vmatpush1.msra.mxu0 0.0
    %4071 = vmatprep.subr.mxu0 0.0
    %4072 = vmatpush1.msra.mxu0 0.0
    %4073 = vmatprep.subr.mxu0 0.0
    %4074 = vmatpush1.msra.mxu0 0.0
    %4075 = vmatprep.subr.mxu0 0.0
    %4076 = vmatpush1.msra.mxu0 0.0
    %4077 = vmatprep.subr.mxu0 0.0
    %4078 = vmatpush1.msra.mxu0 0.0
    %4079 = vmatprep.subr.mxu0 0.0
    %4080 = vmatpush1.msra.mxu0 0.0
    %4081 = vmatprep.subr.mxu0 0.0
    %4082 = vmatpush1.msra.mxu0 0.0
    %4083 = vmatprep.subr.mxu0 0.0
    %4084 = vmatpush1.msra.mxu0 0.0
    %4085 = vmatprep.subr.mxu0 0.0
    %4086 = vmatpush1.msra.mxu0 0.0
    %4087 = vmatprep.subr.mxu0 0.0
    %4088 = vmatpush1.msra.mxu0 0.0
    %4089 = vmatprep.subr.mxu0 0.0
    %4090 = vmatpush1.msra.mxu0 0.0
    %4091 = vmatprep.subr.mxu0 0.0
    %4092 = vmatpush1.msra.mxu0 0.0
    %4093 = vmatprep.subr.mxu0 0.0
    %4094 = vmatpush1.msra.mxu0 0.0
    %4095 = vmatprep.subr.mxu0 0.0
    %4096 = vmatpush1.msra.mxu0 0.0
    %4097 = vmatprep.subr.mxu0 0.0
    %4098 = vmatpush1.msra.mxu0 %v2500
    %4099 = vmatprep.subr.mxu0 0.0
    %4100 = vmatpush1.msra.mxu0 %v2499
    %4101 = vmatprep.subr.mxu0 0.0
    %4102 = vmatpush2.msra.mxu0 0.0
    %4103 = vmatprep.subr.mxu0 0.0
    %4104 = vmatpush2.msra.mxu0 0.0
    %4105 = vmatprep.subr.mxu0 0.0
    %4106 = vmatpush2.msra.mxu0 0.0
    %4107 = vmatprep.subr.mxu0 0.0
    %4108 = vmatpush2.msra.mxu0 0.0
    %4109 = vmatprep.subr.mxu0 0.0
    %4110 = vmatpush2.msra.mxu0 0.0
    %4111 = vmatprep.subr.mxu0 0.0
    %4112 = vmatpush2.msra.mxu0 0.0
    %4113 = vmatprep.subr.mxu0 0.0
    %4114 = vmatpush2.msra.mxu0 0.0
    %4115 = vmatprep.subr.mxu0 0.0
    %4116 = vmatpush2.msra.mxu0 0.0
    %4117 = vmatprep.subr.mxu0 0.0
    %4118 = vmatpush2.msra.mxu0 0.0
    %4119 = vmatprep.subr.mxu0 0.0
    %4120 = vmatpush2.msra.mxu0 0.0
    %4121 = vmatprep.subr.mxu0 0.0
    %4122 = vmatpush2.msra.mxu0 0.0
    %4123 = vmatprep.subr.mxu0 0.0
    %4124 = vmatpush2.msra.mxu0 0.0
    %4125 = vmatprep.subr.mxu0 0.0
    %4126 = vmatpush2.msra.mxu0 0.0
    %4127 = vmatprep.subr.mxu0 0.0
    %4128 = vmatpush2.msra.mxu0 0.0
    %4129 = vmatprep.subr.mxu0 0.0
    %4130 = vmatpush2.msra.mxu0 0.0
    %4131 = vmatprep.subr.mxu0 0.0
    %4132 = vmatpush2.msra.mxu0 0.0
    %4133 = vmatprep.mubr.f32.mxu0 0.0
    %4134 = vmatmul.mubr.f32.gmra.mxu0 %v3997
    %v4135 = vpop.f32.mrf.mxu0
    %v4136 = vadd.f32 0.0, %v4135
    %v4137 = vpop.f32.mrf.mxu0
    %4138 = vdwg.mxu0
    %4139 = vmatprep.subr.mxu0 0.0
    %4140 = vmatpush1.msra.mxu0 0.0
    %4141 = vmatprep.subr.mxu0 0.0
    %4142 = vmatpush1.msra.mxu0 0.0
    %4143 = vmatprep.subr.mxu0 0.0
    %4144 = vmatpush1.msra.mxu0 0.0
    %4145 = vmatprep.subr.mxu0 0.0
    %4146 = vmatpush1.msra.mxu0 0.0
    %4147 = vmatprep.subr.mxu0 0.0
    %4148 = vmatpush1.msra.mxu0 0.0
    %4149 = vmatprep.subr.mxu0 0.0
    %4150 = vmatpush1.msra.mxu0 0.0
    %4151 = vmatprep.subr.mxu0 0.0
    %4152 = vmatpush1.msra.mxu0 0.0
    %4153 = vmatprep.subr.mxu0 0.0
    %4154 = vmatpush1.msra.mxu0 0.0
    %4155 = vmatprep.subr.mxu0 0.0
    %4156 = vmatpush1.msra.mxu0 0.0
    %4157 = vmatprep.subr.mxu0 0.0
    %4158 = vmatpush1.msra.mxu0 0.0
    %4159 = vmatprep.subr.mxu0 0.0
    %4160 = vmatpush1.msra.mxu0 0.0
    %4161 = vmatprep.subr.mxu0 0.0
    %4162 = vmatpush1.msra.mxu0 0.0
    %4163 = vmatprep.subr.mxu0 0.0
    %4164 = vmatpush1.msra.mxu0 0.0
    %4165 = vmatprep.subr.mxu0 0.0
    %4166 = vmatpush1.msra.mxu0 0.0
    %4167 = vmatprep.subr.mxu0 0.0
    %4168 = vmatpush1.msra.mxu0 %v2503
    %4169 = vmatprep.subr.mxu0 0.0
    %4170 = vmatpush1.msra.mxu0 %v2502
    %4171 = vmatprep.subr.mxu0 0.0
    %4172 = vmatpush2.msra.mxu0 0.0
    %4173 = vmatprep.subr.mxu0 0.0
    %4174 = vmatpush2.msra.mxu0 0.0
    %4175 = vmatprep.subr.mxu0 0.0
    %4176 = vmatpush2.msra.mxu0 0.0
    %4177 = vmatprep.subr.mxu0 0.0
    %4178 = vmatpush2.msra.mxu0 0.0
    %4179 = vmatprep.subr.mxu0 0.0
    %4180 = vmatpush2.msra.mxu0 0.0
    %4181 = vmatprep.subr.mxu0 0.0
    %4182 = vmatpush2.msra.mxu0 0.0
    %4183 = vmatprep.subr.mxu0 0.0
    %4184 = vmatpush2.msra.mxu0 0.0
    %4185 = vmatprep.subr.mxu0 0.0
    %4186 = vmatpush2.msra.mxu0 0.0
    %4187 = vmatprep.subr.mxu0 0.0
    %4188 = vmatpush2.msra.mxu0 0.0
    %4189 = vmatprep.subr.mxu0 0.0
    %4190 = vmatpush2.msra.mxu0 0.0
    %4191 = vmatprep.subr.mxu0 0.0
    %4192 = vmatpush2.msra.mxu0 0.0
    %4193 = vmatprep.subr.mxu0 0.0
    %4194 = vmatpush2.msra.mxu0 0.0
    %4195 = vmatprep.subr.mxu0 0.0
    %4196 = vmatpush2.msra.mxu0 0.0
    %4197 = vmatprep.subr.mxu0 0.0
    %4198 = vmatpush2.msra.mxu0 0.0
    %4199 = vmatprep.subr.mxu0 0.0
    %4200 = vmatpush2.msra.mxu0 0.0
    %4201 = vmatprep.subr.mxu0 0.0
    %4202 = vmatpush2.msra.mxu0 0.0
    %4203 = vmatprep.mubr.f32.mxu0 0.0
    %4204 = vmatmul.mubr.f32.gmra.mxu0 %v3997
    %v4205 = vpop.f32.mrf.mxu0
    %v4206 = vadd.f32 %v2913, %v4205
    %v4207 = vpop.f32.mrf.mxu0
    %4208 = vdwg.mxu0
    %v4210 = vrot.slane %v4066, 6
    %v4212 = vadd.f32 %v2604, %v4210
    %v4213 = vxor.u32 %v4212, 2147483648
    %v4214 = vmul.f32 %v4213, 1.442695
    %v4215 = vpow.pop %v4214
    %v4216 = vadd.f32 %v4215, 1.0
    %v4217 = vrcp.pop %v4216
    %v4218 = vmul.f32 1.0, %v4217
    %v4220 = vrot.slane %v4136, 6
    %v4222 = vadd.f32 %v2685, %v4220
    %v4223 = vxor.u32 %v4222, 2147483648
    %v4224 = vmul.f32 %v4223, 1.442695
    %v4225 = vpow.pop %v4224
    %v4226 = vadd.f32 %v4225, 1.0
    %v4227 = vrcp.pop %v4226
    %v4228 = vmul.f32 1.0, %v4227
    %v4230 = vrot.slane %v4206, 6
    %v4232 = vmul.f32 %v4218, %v4230
    %v4233 = vadd.f32 %v2766, %v4232
    %v4234 = vtanh.pop %v4233
    %v4236 = vrot.slane %v4234, 2
    %v4238 = vsub.f32 %v3994, %v4236
    %v4240 = vrot.slane %v4238, 6
    %v4242 = vmul.f32 %v4228, %v4240
    %v4243 = vadd.f32 %v4234, %v4242
    %4244 = vst.msk [vmem:[#allocation2 + $0x8] sm:$0xc] %vm992, %v4243
    %v4246 = vrot.slane %v4243, 2
    %v4247 = vsel %vm260, %v4246, 0
    %4249 = vmatprep.subr.mxu0 0.0
    %4250 = vmatpush1.msra.mxu0 0.0
    %4251 = vmatprep.subr.mxu0 0.0
    %4252 = vmatpush1.msra.mxu0 0.0
    %4253 = vmatprep.subr.mxu0 0.0
    %4254 = vmatpush1.msra.mxu0 0.0
    %4255 = vmatprep.subr.mxu0 0.0
    %4256 = vmatpush1.msra.mxu0 0.0
    %4257 = vmatprep.subr.mxu0 0.0
    %4258 = vmatpush1.msra.mxu0 0.0
    %4259 = vmatprep.subr.mxu0 0.0
    %4260 = vmatpush1.msra.mxu0 0.0
    %4261 = vmatprep.subr.mxu0 0.0
    %4262 = vmatpush1.msra.mxu0 0.0
    %4263 = vmatprep.subr.mxu0 0.0
    %4264 = vmatpush1.msra.mxu0 0.0
    %4265 = vmatprep.subr.mxu0 0.0
    %4266 = vmatpush1.msra.mxu0 0.0
    %4267 = vmatprep.subr.mxu0 0.0
    %4268 = vmatpush1.msra.mxu0 0.0
    %4269 = vmatprep.subr.mxu0 0.0
    %4270 = vmatpush1.msra.mxu0 0.0
    %4271 = vmatprep.subr.mxu0 0.0
    %4272 = vmatpush1.msra.mxu0 0.0
    %4273 = vmatprep.subr.mxu0 0.0
    %4274 = vmatpush1.msra.mxu0 0.0
    %4275 = vmatprep.subr.mxu0 0.0
    %4276 = vmatpush1.msra.mxu0 0.0
    %4277 = vmatprep.subr.mxu0 0.0
    %4278 = vmatpush1.msra.mxu0 %v2497
    %4279 = vmatprep.subr.mxu0 0.0
    %4280 = vmatpush1.msra.mxu0 %v2496
    %4281 = vmatprep.subr.mxu0 0.0
    %4282 = vmatpush2.msra.mxu0 0.0
    %4283 = vmatprep.subr.mxu0 0.0
    %4284 = vmatpush2.msra.mxu0 0.0
    %4285 = vmatprep.subr.mxu0 0.0
    %4286 = vmatpush2.msra.mxu0 0.0
    %4287 = vmatprep.subr.mxu0 0.0
    %4288 = vmatpush2.msra.mxu0 0.0
    %4289 = vmatprep.subr.mxu0 0.0
    %4290 = vmatpush2.msra.mxu0 0.0
    %4291 = vmatprep.subr.mxu0 0.0
    %4292 = vmatpush2.msra.mxu0 0.0
    %4293 = vmatprep.subr.mxu0 0.0
    %4294 = vmatpush2.msra.mxu0 0.0
    %4295 = vmatprep.subr.mxu0 0.0
    %4296 = vmatpush2.msra.mxu0 0.0
    %4297 = vmatprep.subr.mxu0 0.0
    %4298 = vmatpush2.msra.mxu0 0.0
    %4299 = vmatprep.subr.mxu0 0.0
    %4300 = vmatpush2.msra.mxu0 0.0
    %4301 = vmatprep.subr.mxu0 0.0
    %4302 = vmatpush2.msra.mxu0 0.0
    %4303 = vmatprep.subr.mxu0 0.0
    %4304 = vmatpush2.msra.mxu0 0.0
    %4305 = vmatprep.subr.mxu0 0.0
    %4306 = vmatpush2.msra.mxu0 0.0
    %4307 = vmatprep.subr.mxu0 0.0
    %4308 = vmatpush2.msra.mxu0 0.0
    %4309 = vmatprep.subr.mxu0 0.0
    %4310 = vmatpush2.msra.mxu0 0.0
    %4311 = vmatprep.subr.mxu0 0.0
    %4312 = vmatpush2.msra.mxu0 0.0
    %4313 = vmatprep.mubr.f32.mxu0 0.0
    %4314 = vmatmul.mubr.f32.gmra.mxu0 %v4247
    %v4315 = vpop.f32.mrf.mxu0
    %v4316 = vadd.f32 0.0, %v4315
    %v4317 = vpop.f32.mrf.mxu0
    %4318 = vdwg.mxu0
    %4319 = vmatprep.subr.mxu0 0.0
    %4320 = vmatpush1.msra.mxu0 0.0
    %4321 = vmatprep.subr.mxu0 0.0
    %4322 = vmatpush1.msra.mxu0 0.0
    %4323 = vmatprep.subr.mxu0 0.0
    %4324 = vmatpush1.msra.mxu0 0.0
    %4325 = vmatprep.subr.mxu0 0.0
    %4326 = vmatpush1.msra.mxu0 0.0
    %4327 = vmatprep.subr.mxu0 0.0
    %4328 = vmatpush1.msra.mxu0 0.0
    %4329 = vmatprep.subr.mxu0 0.0
    %4330 = vmatpush1.msra.mxu0 0.0
    %4331 = vmatprep.subr.mxu0 0.0
    %4332 = vmatpush1.msra.mxu0 0.0
    %4333 = vmatprep.subr.mxu0 0.0
    %4334 = vmatpush1.msra.mxu0 0.0
    %4335 = vmatprep.subr.mxu0 0.0
    %4336 = vmatpush1.msra.mxu0 0.0
    %4337 = vmatprep.subr.mxu0 0.0
    %4338 = vmatpush1.msra.mxu0 0.0
    %4339 = vmatprep.subr.mxu0 0.0
    %4340 = vmatpush1.msra.mxu0 0.0
    %4341 = vmatprep.subr.mxu0 0.0
    %4342 = vmatpush1.msra.mxu0 0.0
    %4343 = vmatprep.subr.mxu0 0.0
    %4344 = vmatpush1.msra.mxu0 0.0
    %4345 = vmatprep.subr.mxu0 0.0
    %4346 = vmatpush1.msra.mxu0 0.0
    %4347 = vmatprep.subr.mxu0 0.0
    %4348 = vmatpush1.msra.mxu0 %v2500
    %4349 = vmatprep.subr.mxu0 0.0
    %4350 = vmatpush1.msra.mxu0 %v2499
    %4351 = vmatprep.subr.mxu0 0.0
    %4352 = vmatpush2.msra.mxu0 0.0
    %4353 = vmatprep.subr.mxu0 0.0
    %4354 = vmatpush2.msra.mxu0 0.0
    %4355 = vmatprep.subr.mxu0 0.0
    %4356 = vmatpush2.msra.mxu0 0.0
    %4357 = vmatprep.subr.mxu0 0.0
    %4358 = vmatpush2.msra.mxu0 0.0
    %4359 = vmatprep.subr.mxu0 0.0
    %4360 = vmatpush2.msra.mxu0 0.0
    %4361 = vmatprep.subr.mxu0 0.0
    %4362 = vmatpush2.msra.mxu0 0.0
    %4363 = vmatprep.subr.mxu0 0.0
    %4364 = vmatpush2.msra.mxu0 0.0
    %4365 = vmatprep.subr.mxu0 0.0
    %4366 = vmatpush2.msra.mxu0 0.0
    %4367 = vmatprep.subr.mxu0 0.0
    %4368 = vmatpush2.msra.mxu0 0.0
    %4369 = vmatprep.subr.mxu0 0.0
    %4370 = vmatpush2.msra.mxu0 0.0
    %4371 = vmatprep.subr.mxu0 0.0
    %4372 = vmatpush2.msra.mxu0 0.0
    %4373 = vmatprep.subr.mxu0 0.0
    %4374 = vmatpush2.msra.mxu0 0.0
    %4375 = vmatprep.subr.mxu0 0.0
    %4376 = vmatpush2.msra.mxu0 0.0
    %4377 = vmatprep.subr.mxu0 0.0
    %4378 = vmatpush2.msra.mxu0 0.0
    %4379 = vmatprep.subr.mxu0 0.0
    %4380 = vmatpush2.msra.mxu0 0.0
    %4381 = vmatprep.subr.mxu0 0.0
    %4382 = vmatpush2.msra.mxu0 0.0
    %4383 = vmatprep.mubr.f32.mxu0 0.0
    %4384 = vmatmul.mubr.f32.gmra.mxu0 %v4247
    %v4385 = vpop.f32.mrf.mxu0
    %v4386 = vadd.f32 0.0, %v4385
    %v4387 = vpop.f32.mrf.mxu0
    %4388 = vdwg.mxu0
    %4389 = vmatprep.subr.mxu0 0.0
    %4390 = vmatpush1.msra.mxu0 0.0
    %4391 = vmatprep.subr.mxu0 0.0
    %4392 = vmatpush1.msra.mxu0 0.0
    %4393 = vmatprep.subr.mxu0 0.0
    %4394 = vmatpush1.msra.mxu0 0.0
    %4395 = vmatprep.subr.mxu0 0.0
    %4396 = vmatpush1.msra.mxu0 0.0
    %4397 = vmatprep.subr.mxu0 0.0
    %4398 = vmatpush1.msra.mxu0 0.0
    %4399 = vmatprep.subr.mxu0 0.0
    %4400 = vmatpush1.msra.mxu0 0.0
    %4401 = vmatprep.subr.mxu0 0.0
    %4402 = vmatpush1.msra.mxu0 0.0
    %4403 = vmatprep.subr.mxu0 0.0
    %4404 = vmatpush1.msra.mxu0 0.0
    %4405 = vmatprep.subr.mxu0 0.0
    %4406 = vmatpush1.msra.mxu0 0.0
    %4407 = vmatprep.subr.mxu0 0.0
    %4408 = vmatpush1.msra.mxu0 0.0
    %4409 = vmatprep.subr.mxu0 0.0
    %4410 = vmatpush1.msra.mxu0 0.0
    %4411 = vmatprep.subr.mxu0 0.0
    %4412 = vmatpush1.msra.mxu0 0.0
    %4413 = vmatprep.subr.mxu0 0.0
    %4414 = vmatpush1.msra.mxu0 0.0
    %4415 = vmatprep.subr.mxu0 0.0
    %4416 = vmatpush1.msra.mxu0 0.0
    %4417 = vmatprep.subr.mxu0 0.0
    %4418 = vmatpush1.msra.mxu0 %v2503
    %4419 = vmatprep.subr.mxu0 0.0
    %4420 = vmatpush1.msra.mxu0 %v2502
    %4421 = vmatprep.subr.mxu0 0.0
    %4422 = vmatpush2.msra.mxu0 0.0
    %4423 = vmatprep.subr.mxu0 0.0
    %4424 = vmatpush2.msra.mxu0 0.0
    %4425 = vmatprep.subr.mxu0 0.0
    %4426 = vmatpush2.msra.mxu0 0.0
    %4427 = vmatprep.subr.mxu0 0.0
    %4428 = vmatpush2.msra.mxu0 0.0
    %4429 = vmatprep.subr.mxu0 0.0
    %4430 = vmatpush2.msra.mxu0 0.0
    %4431 = vmatprep.subr.mxu0 0.0
    %4432 = vmatpush2.msra.mxu0 0.0
    %4433 = vmatprep.subr.mxu0 0.0
    %4434 = vmatpush2.msra.mxu0 0.0
    %4435 = vmatprep.subr.mxu0 0.0
    %4436 = vmatpush2.msra.mxu0 0.0
    %4437 = vmatprep.subr.mxu0 0.0
    %4438 = vmatpush2.msra.mxu0 0.0
    %4439 = vmatprep.subr.mxu0 0.0
    %4440 = vmatpush2.msra.mxu0 0.0
    %4441 = vmatprep.subr.mxu0 0.0
    %4442 = vmatpush2.msra.mxu0 0.0
    %4443 = vmatprep.subr.mxu0 0.0
    %4444 = vmatpush2.msra.mxu0 0.0
    %4445 = vmatprep.subr.mxu0 0.0
    %4446 = vmatpush2.msra.mxu0 0.0
    %4447 = vmatprep.subr.mxu0 0.0
    %4448 = vmatpush2.msra.mxu0 0.0
    %4449 = vmatprep.subr.mxu0 0.0
    %4450 = vmatpush2.msra.mxu0 0.0
    %4451 = vmatprep.subr.mxu0 0.0
    %4452 = vmatpush2.msra.mxu0 0.0
    %4453 = vmatprep.mubr.f32.mxu0 0.0
    %4454 = vmatmul.mubr.f32.gmra.mxu0 %v4247
    %v4455 = vpop.f32.mrf.mxu0
    %v4456 = vadd.f32 %v2913, %v4455
    %v4457 = vpop.f32.mrf.mxu0
    %4458 = vdwg.mxu0
    %v4460 = vrot.slane %v4316, 4
    %v4462 = vadd.f32 %v2604, %v4460
    %v4463 = vxor.u32 %v4462, 2147483648
    %v4464 = vmul.f32 %v4463, 1.442695
    %v4465 = vpow.pop %v4464
    %v4466 = vadd.f32 %v4465, 1.0
    %v4467 = vrcp.pop %v4466
    %v4468 = vmul.f32 1.0, %v4467
    %v4470 = vrot.slane %v4386, 4
    %v4472 = vadd.f32 %v2685, %v4470
    %v4473 = vxor.u32 %v4472, 2147483648
    %v4474 = vmul.f32 %v4473, 1.442695
    %v4475 = vpow.pop %v4474
    %v4476 = vadd.f32 %v4475, 1.0
    %v4477 = vrcp.pop %v4476
    %v4478 = vmul.f32 1.0, %v4477
    %v4480 = vrot.slane %v4456, 4
    %v4482 = vmul.f32 %v4468, %v4480
    %v4483 = vadd.f32 %v2766, %v4482
    %v4484 = vtanh.pop %v4483
    %v4486 = vrot.slane %v4484, 2
    %v4488 = vsub.f32 %v4243, %v4486
    %v4490 = vrot.slane %v4488, 6
    %v4492 = vmul.f32 %v4478, %v4490
    %v4493 = vadd.f32 %v4484, %v4492
    %4494 = vst.msk [vmem:[#allocation2 + $0x8] sm:$0x30] %vm1243, %v4493
    %v4496 = vrot.slane %v4493, 4
    %v4497 = vsel %vm260, %v4496, 0
    %4499 = vmatprep.subr.mxu0 0.0
    %4500 = vmatpush1.msra.mxu0 0.0
    %4501 = vmatprep.subr.mxu0 0.0
    %4502 = vmatpush1.msra.mxu0 0.0
    %4503 = vmatprep.subr.mxu0 0.0
    %4504 = vmatpush1.msra.mxu0 0.0
    %4505 = vmatprep.subr.mxu0 0.0
    %4506 = vmatpush1.msra.mxu0 0.0
    %4507 = vmatprep.subr.mxu0 0.0
    %4508 = vmatpush1.msra.mxu0 0.0
    %4509 = vmatprep.subr.mxu0 0.0
    %4510 = vmatpush1.msra.mxu0 0.0
    %4511 = vmatprep.subr.mxu0 0.0
    %4512 = vmatpush1.msra.mxu0 0.0
    %4513 = vmatprep.subr.mxu0 0.0
    %4514 = vmatpush1.msra.mxu0 0.0
    %4515 = vmatprep.subr.mxu0 0.0
    %4516 = vmatpush1.msra.mxu0 0.0
    %4517 = vmatprep.subr.mxu0 0.0
    %4518 = vmatpush1.msra.mxu0 0.0
    %4519 = vmatprep.subr.mxu0 0.0
    %4520 = vmatpush1.msra.mxu0 0.0
    %4521 = vmatprep.subr.mxu0 0.0
    %4522 = vmatpush1.msra.mxu0 0.0
    %4523 = vmatprep.subr.mxu0 0.0
    %4524 = vmatpush1.msra.mxu0 0.0
    %4525 = vmatprep.subr.mxu0 0.0
    %4526 = vmatpush1.msra.mxu0 0.0
    %4527 = vmatprep.subr.mxu0 0.0
    %4528 = vmatpush1.msra.mxu0 %v2497
    %4529 = vmatprep.subr.mxu0 0.0
    %4530 = vmatpush1.msra.mxu0 %v2496
    %4531 = vmatprep.subr.mxu0 0.0
    %4532 = vmatpush2.msra.mxu0 0.0
    %4533 = vmatprep.subr.mxu0 0.0
    %4534 = vmatpush2.msra.mxu0 0.0
    %4535 = vmatprep.subr.mxu0 0.0
    %4536 = vmatpush2.msra.mxu0 0.0
    %4537 = vmatprep.subr.mxu0 0.0
    %4538 = vmatpush2.msra.mxu0 0.0
    %4539 = vmatprep.subr.mxu0 0.0
    %4540 = vmatpush2.msra.mxu0 0.0
    %4541 = vmatprep.subr.mxu0 0.0
    %4542 = vmatpush2.msra.mxu0 0.0
    %4543 = vmatprep.subr.mxu0 0.0
    %4544 = vmatpush2.msra.mxu0 0.0
    %4545 = vmatprep.subr.mxu0 0.0
    %4546 = vmatpush2.msra.mxu0 0.0
    %4547 = vmatprep.subr.mxu0 0.0
    %4548 = vmatpush2.msra.mxu0 0.0
    %4549 = vmatprep.subr.mxu0 0.0
    %4550 = vmatpush2.msra.mxu0 0.0
    %4551 = vmatprep.subr.mxu0 0.0
    %4552 = vmatpush2.msra.mxu0 0.0
    %4553 = vmatprep.subr.mxu0 0.0
    %4554 = vmatpush2.msra.mxu0 0.0
    %4555 = vmatprep.subr.mxu0 0.0
    %4556 = vmatpush2.msra.mxu0 0.0
    %4557 = vmatprep.subr.mxu0 0.0
    %4558 = vmatpush2.msra.mxu0 0.0
    %4559 = vmatprep.subr.mxu0 0.0
    %4560 = vmatpush2.msra.mxu0 0.0
    %4561 = vmatprep.subr.mxu0 0.0
    %4562 = vmatpush2.msra.mxu0 0.0
    %4563 = vmatprep.mubr.f32.mxu0 0.0
    %4564 = vmatmul.mubr.f32.gmra.mxu0 %v4497
    %v4565 = vpop.f32.mrf.mxu0
    %v4566 = vadd.f32 0.0, %v4565
    %v4567 = vpop.f32.mrf.mxu0
    %4568 = vdwg.mxu0
    %4569 = vmatprep.subr.mxu0 0.0
    %4570 = vmatpush1.msra.mxu0 0.0
    %4571 = vmatprep.subr.mxu0 0.0
    %4572 = vmatpush1.msra.mxu0 0.0
    %4573 = vmatprep.subr.mxu0 0.0
    %4574 = vmatpush1.msra.mxu0 0.0
    %4575 = vmatprep.subr.mxu0 0.0
    %4576 = vmatpush1.msra.mxu0 0.0
    %4577 = vmatprep.subr.mxu0 0.0
    %4578 = vmatpush1.msra.mxu0 0.0
    %4579 = vmatprep.subr.mxu0 0.0
    %4580 = vmatpush1.msra.mxu0 0.0
    %4581 = vmatprep.subr.mxu0 0.0
    %4582 = vmatpush1.msra.mxu0 0.0
    %4583 = vmatprep.subr.mxu0 0.0
    %4584 = vmatpush1.msra.mxu0 0.0
    %4585 = vmatprep.subr.mxu0 0.0
    %4586 = vmatpush1.msra.mxu0 0.0
    %4587 = vmatprep.subr.mxu0 0.0
    %4588 = vmatpush1.msra.mxu0 0.0
    %4589 = vmatprep.subr.mxu0 0.0
    %4590 = vmatpush1.msra.mxu0 0.0
    %4591 = vmatprep.subr.mxu0 0.0
    %4592 = vmatpush1.msra.mxu0 0.0
    %4593 = vmatprep.subr.mxu0 0.0
    %4594 = vmatpush1.msra.mxu0 0.0
    %4595 = vmatprep.subr.mxu0 0.0
    %4596 = vmatpush1.msra.mxu0 0.0
    %4597 = vmatprep.subr.mxu0 0.0
    %4598 = vmatpush1.msra.mxu0 %v2500
    %4599 = vmatprep.subr.mxu0 0.0
    %4600 = vmatpush1.msra.mxu0 %v2499
    %4601 = vmatprep.subr.mxu0 0.0
    %4602 = vmatpush2.msra.mxu0 0.0
    %4603 = vmatprep.subr.mxu0 0.0
    %4604 = vmatpush2.msra.mxu0 0.0
    %4605 = vmatprep.subr.mxu0 0.0
    %4606 = vmatpush2.msra.mxu0 0.0
    %4607 = vmatprep.subr.mxu0 0.0
    %4608 = vmatpush2.msra.mxu0 0.0
    %4609 = vmatprep.subr.mxu0 0.0
    %4610 = vmatpush2.msra.mxu0 0.0
    %4611 = vmatprep.subr.mxu0 0.0
    %4612 = vmatpush2.msra.mxu0 0.0
    %4613 = vmatprep.subr.mxu0 0.0
    %4614 = vmatpush2.msra.mxu0 0.0
    %4615 = vmatprep.subr.mxu0 0.0
    %4616 = vmatpush2.msra.mxu0 0.0
    %4617 = vmatprep.subr.mxu0 0.0
    %4618 = vmatpush2.msra.mxu0 0.0
    %4619 = vmatprep.subr.mxu0 0.0
    %4620 = vmatpush2.msra.mxu0 0.0
    %4621 = vmatprep.subr.mxu0 0.0
    %4622 = vmatpush2.msra.mxu0 0.0
    %4623 = vmatprep.subr.mxu0 0.0
    %4624 = vmatpush2.msra.mxu0 0.0
    %4625 = vmatprep.subr.mxu0 0.0
    %4626 = vmatpush2.msra.mxu0 0.0
    %4627 = vmatprep.subr.mxu0 0.0
    %4628 = vmatpush2.msra.mxu0 0.0
    %4629 = vmatprep.subr.mxu0 0.0
    %4630 = vmatpush2.msra.mxu0 0.0
    %4631 = vmatprep.subr.mxu0 0.0
    %4632 = vmatpush2.msra.mxu0 0.0
    %4633 = vmatprep.mubr.f32.mxu0 0.0
    %4634 = vmatmul.mubr.f32.gmra.mxu0 %v4497
    %v4635 = vpop.f32.mrf.mxu0
    %v4636 = vadd.f32 0.0, %v4635
    %v4637 = vpop.f32.mrf.mxu0
    %4638 = vdwg.mxu0
    %4639 = vmatprep.subr.mxu0 0.0
    %4640 = vmatpush1.msra.mxu0 0.0
    %4641 = vmatprep.subr.mxu0 0.0
    %4642 = vmatpush1.msra.mxu0 0.0
    %4643 = vmatprep.subr.mxu0 0.0
    %4644 = vmatpush1.msra.mxu0 0.0
    %4645 = vmatprep.subr.mxu0 0.0
    %4646 = vmatpush1.msra.mxu0 0.0
    %4647 = vmatprep.subr.mxu0 0.0
    %4648 = vmatpush1.msra.mxu0 0.0
    %4649 = vmatprep.subr.mxu0 0.0
    %4650 = vmatpush1.msra.mxu0 0.0
    %4651 = vmatprep.subr.mxu0 0.0
    %4652 = vmatpush1.msra.mxu0 0.0
    %4653 = vmatprep.subr.mxu0 0.0
    %4654 = vmatpush1.msra.mxu0 0.0
    %4655 = vmatprep.subr.mxu0 0.0
    %4656 = vmatpush1.msra.mxu0 0.0
    %4657 = vmatprep.subr.mxu0 0.0
    %4658 = vmatpush1.msra.mxu0 0.0
    %4659 = vmatprep.subr.mxu0 0.0
    %4660 = vmatpush1.msra.mxu0 0.0
    %4661 = vmatprep.subr.mxu0 0.0
    %4662 = vmatpush1.msra.mxu0 0.0
    %4663 = vmatprep.subr.mxu0 0.0
    %4664 = vmatpush1.msra.mxu0 0.0
    %4665 = vmatprep.subr.mxu0 0.0
    %4666 = vmatpush1.msra.mxu0 0.0
    %4667 = vmatprep.subr.mxu0 0.0
    %4668 = vmatpush1.msra.mxu0 %v2503
    %4669 = vmatprep.subr.mxu0 0.0
    %4670 = vmatpush1.msra.mxu0 %v2502
    %4671 = vmatprep.subr.mxu0 0.0
    %4672 = vmatpush2.msra.mxu0 0.0
    %4673 = vmatprep.subr.mxu0 0.0
    %4674 = vmatpush2.msra.mxu0 0.0
    %4675 = vmatprep.subr.mxu0 0.0
    %4676 = vmatpush2.msra.mxu0 0.0
    %4677 = vmatprep.subr.mxu0 0.0
    %4678 = vmatpush2.msra.mxu0 0.0
    %4679 = vmatprep.subr.mxu0 0.0
    %4680 = vmatpush2.msra.mxu0 0.0
    %4681 = vmatprep.subr.mxu0 0.0
    %4682 = vmatpush2.msra.mxu0 0.0
    %4683 = vmatprep.subr.mxu0 0.0
    %4684 = vmatpush2.msra.mxu0 0.0
    %4685 = vmatprep.subr.mxu0 0.0
    %4686 = vmatpush2.msra.mxu0 0.0
    %4687 = vmatprep.subr.mxu0 0.0
    %4688 = vmatpush2.msra.mxu0 0.0
    %4689 = vmatprep.subr.mxu0 0.0
    %4690 = vmatpush2.msra.mxu0 0.0
    %4691 = vmatprep.subr.mxu0 0.0
    %4692 = vmatpush2.msra.mxu0 0.0
    %4693 = vmatprep.subr.mxu0 0.0
    %4694 = vmatpush2.msra.mxu0 0.0
    %4695 = vmatprep.subr.mxu0 0.0
    %4696 = vmatpush2.msra.mxu0 0.0
    %4697 = vmatprep.subr.mxu0 0.0
    %4698 = vmatpush2.msra.mxu0 0.0
    %4699 = vmatprep.subr.mxu0 0.0
    %4700 = vmatpush2.msra.mxu0 0.0
    %4701 = vmatprep.subr.mxu0 0.0
    %4702 = vmatpush2.msra.mxu0 0.0
    %4703 = vmatprep.mubr.f32.mxu0 0.0
    %4704 = vmatmul.mubr.f32.gmra.mxu0 %v4497
    %v4705 = vpop.f32.mrf.mxu0
    %v4706 = vadd.f32 %v2913, %v4705
    %v4707 = vpop.f32.mrf.mxu0
    %4708 = vdwg.mxu0
    %v4710 = vrot.slane %v4566, 2
    %v4712 = vadd.f32 %v2604, %v4710
    %v4713 = vxor.u32 %v4712, 2147483648
    %v4714 = vmul.f32 %v4713, 1.442695
    %v4715 = vpow.pop %v4714
    %v4716 = vadd.f32 %v4715, 1.0
    %v4717 = vrcp.pop %v4716
    %v4718 = vmul.f32 1.0, %v4717
    %v4720 = vrot.slane %v4636, 2
    %v4722 = vadd.f32 %v2685, %v4720
    %v4723 = vxor.u32 %v4722, 2147483648
    %v4724 = vmul.f32 %v4723, 1.442695
    %v4725 = vpow.pop %v4724
    %v4726 = vadd.f32 %v4725, 1.0
    %v4727 = vrcp.pop %v4726
    %v4728 = vmul.f32 1.0, %v4727
    %v4730 = vrot.slane %v4706, 2
    %v4732 = vmul.f32 %v4718, %v4730
    %v4733 = vadd.f32 %v2766, %v4732
    %v4734 = vtanh.pop %v4733
    %v4736 = vrot.slane %v4734, 2
    %v4738 = vsub.f32 %v4493, %v4736
    %v4740 = vrot.slane %v4738, 6
    %v4742 = vmul.f32 %v4728, %v4740
    %v4743 = vadd.f32 %v4734, %v4742
    %4744 = vst.msk [vmem:[#allocation2 + $0x8] sm:$0xc0] %vm1494, %v4743
    %s4745 = scalar_lea.vmem [#allocation8], 96
    %v4746 = vld [vmem:[%s4745] sm:$0xff]
    %v4747 = vld [vmem:[%s4745 + $0x8] sm:$0xff]
    %s4748 = scalar_lea.vmem [#allocation8], 112
    %v4749 = vld [vmem:[%s4748] sm:$0xff]
    %v4750 = vld [vmem:[%s4748 + $0x8] sm:$0xff]
    %s4751 = scalar_lea.vmem [#allocation8], 128
    %v4752 = vld [vmem:[%s4751] sm:$0xff]
    %v4753 = vld [vmem:[%s4751 + $0x8] sm:$0xff]
    %s4754 = scalar_lea.vmem [#allocation9], 96
    %v4755 = vld [vmem:[%s4754] sm:$0xff]
    %v4756 = vld [vmem:[%s4754 + $0x8] sm:$0xff]
    %s4757 = scalar_lea.vmem [#allocation9], 112
    %v4758 = vld [vmem:[%s4757] sm:$0xff]
    %v4759 = vld [vmem:[%s4757 + $0x8] sm:$0xff]
    %s4760 = scalar_lea.vmem [#allocation9], 128
    %v4761 = vld [vmem:[%s4760] sm:$0xff]
    %v4762 = vld [vmem:[%s4760 + $0x8] sm:$0xff]
    %s4763 = scalar_lea.vmem [#allocation11], 6
    %v4764 = vld [vmem:[%s4763] sm:$0x1]
    %s4765 = scalar_lea.vmem [#allocation12], 6
    %v4766 = vld [vmem:[%s4765] sm:$0x1]
    %v4767 = vadd.f32 %v4764, %v4766
    %s4768 = scalar_lea.vmem [#allocation11], 7
    %v4769 = vld [vmem:[%s4768] sm:$0x1]
    %s4770 = scalar_lea.vmem [#allocation12], 7
    %v4771 = vld [vmem:[%s4770] sm:$0x1]
    %v4772 = vadd.f32 %v4769, %v4771
    %s4773 = scalar_lea.vmem [#allocation11], 8
    %v4774 = vld [vmem:[%s4773] sm:$0x1]
    %s4775 = scalar_lea.vmem [#allocation12], 8
    %v4776 = vld [vmem:[%s4775] sm:$0x1]
    %v4777 = vld [vmem:[#allocation2] sm:$0xff]
    %v4778 = vld [vmem:[#allocation2 + $0x8] sm:$0xff]
    %v4780 = vlaneseq
    %v4781 = vshrl.u32 %v4780, 7
    %v4782 = vsub.s32 0, %v4781
    %v4783 = vrot.slane %v4767, %v4782
    %v4786 = vsel %vm260, %v4777, 0
    %v4789 = vsel %vm260, %v4778, 0
    %4791 = vmatprep.subr.mxu0 0.0
    %4792 = vmatpush1.msra.mxu0 0.0
    %4793 = vmatprep.subr.mxu0 0.0
    %4794 = vmatpush1.msra.mxu0 0.0
    %4795 = vmatprep.subr.mxu0 0.0
    %4796 = vmatpush1.msra.mxu0 0.0
    %4797 = vmatprep.subr.mxu0 0.0
    %4798 = vmatpush1.msra.mxu0 0.0
    %4799 = vmatprep.subr.mxu0 0.0
    %4800 = vmatpush1.msra.mxu0 0.0
    %4801 = vmatprep.subr.mxu0 0.0
    %4802 = vmatpush1.msra.mxu0 0.0
    %4803 = vmatprep.subr.mxu0 0.0
    %4804 = vmatpush1.msra.mxu0 0.0
    %4805 = vmatprep.subr.mxu0 0.0
    %4806 = vmatpush1.msra.mxu0 0.0
    %4807 = vmatprep.subr.mxu0 0.0
    %4808 = vmatpush1.msra.mxu0 0.0
    %4809 = vmatprep.subr.mxu0 0.0
    %4810 = vmatpush1.msra.mxu0 0.0
    %4811 = vmatprep.subr.mxu0 0.0
    %4812 = vmatpush1.msra.mxu0 0.0
    %4813 = vmatprep.subr.mxu0 0.0
    %4814 = vmatpush1.msra.mxu0 0.0
    %4815 = vmatprep.subr.mxu0 0.0
    %4816 = vmatpush1.msra.mxu0 0.0
    %4817 = vmatprep.subr.mxu0 0.0
    %4818 = vmatpush1.msra.mxu0 0.0
    %4819 = vmatprep.subr.mxu0 0.0
    %4820 = vmatpush1.msra.mxu0 %v4747
    %4821 = vmatprep.subr.mxu0 0.0
    %4822 = vmatpush1.msra.mxu0 %v4746
    %4823 = vmatprep.subr.mxu0 0.0
    %4824 = vmatpush2.msra.mxu0 0.0
    %4825 = vmatprep.subr.mxu0 0.0
    %4826 = vmatpush2.msra.mxu0 0.0
    %4827 = vmatprep.subr.mxu0 0.0
    %4828 = vmatpush2.msra.mxu0 0.0
    %4829 = vmatprep.subr.mxu0 0.0
    %4830 = vmatpush2.msra.mxu0 0.0
    %4831 = vmatprep.subr.mxu0 0.0
    %4832 = vmatpush2.msra.mxu0 0.0
    %4833 = vmatprep.subr.mxu0 0.0
    %4834 = vmatpush2.msra.mxu0 0.0
    %4835 = vmatprep.subr.mxu0 0.0
    %4836 = vmatpush2.msra.mxu0 0.0
    %4837 = vmatprep.subr.mxu0 0.0
    %4838 = vmatpush2.msra.mxu0 0.0
    %4839 = vmatprep.subr.mxu0 0.0
    %4840 = vmatpush2.msra.mxu0 0.0
    %4841 = vmatprep.subr.mxu0 0.0
    %4842 = vmatpush2.msra.mxu0 0.0
    %4843 = vmatprep.subr.mxu0 0.0
    %4844 = vmatpush2.msra.mxu0 0.0
    %4845 = vmatprep.subr.mxu0 0.0
    %4846 = vmatpush2.msra.mxu0 0.0
    %4847 = vmatprep.subr.mxu0 0.0
    %4848 = vmatpush2.msra.mxu0 0.0
    %4849 = vmatprep.subr.mxu0 0.0
    %4850 = vmatpush2.msra.mxu0 0.0
    %4851 = vmatprep.subr.mxu0 0.0
    %4852 = vmatpush2.msra.mxu0 0.0
    %4853 = vmatprep.subr.mxu0 0.0
    %4854 = vmatpush2.msra.mxu0 0.0
    %4855 = vmatprep.mubr.f32.mxu0 0.0
    %4856 = vmatmul.mubr.f32.gmra.mxu0 %v4786
    %v4857 = vpop.f32.mrf.mxu0
    %v4858 = vadd.f32 %v4783, %v4857
    %v4859 = vpop.f32.mrf.mxu0
    %4860 = vmatprep.mubr.f32.mxu0 0.0
    %4861 = vmatmul.mubr.f32.gmra.mxu0 %v4789
    %v4862 = vpop.f32.mrf.mxu0
    %v4863 = vadd.f32 %v4783, %v4862
    %v4864 = vpop.f32.mrf.mxu0
    %4865 = vdwg.mxu0
    %v4867 = vlaneseq
    %v4868 = vshrl.u32 %v4867, 7
    %v4869 = vsub.s32 0, %v4868
    %v4870 = vrot.slane %v4772, %v4869
    %4872 = vmatprep.subr.mxu0 0.0
    %4873 = vmatpush1.msra.mxu0 0.0
    %4874 = vmatprep.subr.mxu0 0.0
    %4875 = vmatpush1.msra.mxu0 0.0
    %4876 = vmatprep.subr.mxu0 0.0
    %4877 = vmatpush1.msra.mxu0 0.0
    %4878 = vmatprep.subr.mxu0 0.0
    %4879 = vmatpush1.msra.mxu0 0.0
    %4880 = vmatprep.subr.mxu0 0.0
    %4881 = vmatpush1.msra.mxu0 0.0
    %4882 = vmatprep.subr.mxu0 0.0
    %4883 = vmatpush1.msra.mxu0 0.0
    %4884 = vmatprep.subr.mxu0 0.0
    %4885 = vmatpush1.msra.mxu0 0.0
    %4886 = vmatprep.subr.mxu0 0.0
    %4887 = vmatpush1.msra.mxu0 0.0
    %4888 = vmatprep.subr.mxu0 0.0
    %4889 = vmatpush1.msra.mxu0 0.0
    %4890 = vmatprep.subr.mxu0 0.0
    %4891 = vmatpush1.msra.mxu0 0.0
    %4892 = vmatprep.subr.mxu0 0.0
    %4893 = vmatpush1.msra.mxu0 0.0
    %4894 = vmatprep.subr.mxu0 0.0
    %4895 = vmatpush1.msra.mxu0 0.0
    %4896 = vmatprep.subr.mxu0 0.0
    %4897 = vmatpush1.msra.mxu0 0.0
    %4898 = vmatprep.subr.mxu0 0.0
    %4899 = vmatpush1.msra.mxu0 0.0
    %4900 = vmatprep.subr.mxu0 0.0
    %4901 = vmatpush1.msra.mxu0 %v4750
    %4902 = vmatprep.subr.mxu0 0.0
    %4903 = vmatpush1.msra.mxu0 %v4749
    %4904 = vmatprep.subr.mxu0 0.0
    %4905 = vmatpush2.msra.mxu0 0.0
    %4906 = vmatprep.subr.mxu0 0.0
    %4907 = vmatpush2.msra.mxu0 0.0
    %4908 = vmatprep.subr.mxu0 0.0
    %4909 = vmatpush2.msra.mxu0 0.0
    %4910 = vmatprep.subr.mxu0 0.0
    %4911 = vmatpush2.msra.mxu0 0.0
    %4912 = vmatprep.subr.mxu0 0.0
    %4913 = vmatpush2.msra.mxu0 0.0
    %4914 = vmatprep.subr.mxu0 0.0
    %4915 = vmatpush2.msra.mxu0 0.0
    %4916 = vmatprep.subr.mxu0 0.0
    %4917 = vmatpush2.msra.mxu0 0.0
    %4918 = vmatprep.subr.mxu0 0.0
    %4919 = vmatpush2.msra.mxu0 0.0
    %4920 = vmatprep.subr.mxu0 0.0
    %4921 = vmatpush2.msra.mxu0 0.0
    %4922 = vmatprep.subr.mxu0 0.0
    %4923 = vmatpush2.msra.mxu0 0.0
    %4924 = vmatprep.subr.mxu0 0.0
    %4925 = vmatpush2.msra.mxu0 0.0
    %4926 = vmatprep.subr.mxu0 0.0
    %4927 = vmatpush2.msra.mxu0 0.0
    %4928 = vmatprep.subr.mxu0 0.0
    %4929 = vmatpush2.msra.mxu0 0.0
    %4930 = vmatprep.subr.mxu0 0.0
    %4931 = vmatpush2.msra.mxu0 0.0
    %4932 = vmatprep.subr.mxu0 0.0
    %4933 = vmatpush2.msra.mxu0 0.0
    %4934 = vmatprep.subr.mxu0 0.0
    %4935 = vmatpush2.msra.mxu0 0.0
    %4936 = vmatprep.mubr.f32.mxu0 0.0
    %4937 = vmatmul.mubr.f32.gmra.mxu0 %v4786
    %v4938 = vpop.f32.mrf.mxu0
    %v4939 = vadd.f32 %v4870, %v4938
    %v4940 = vpop.f32.mrf.mxu0
    %4941 = vmatprep.mubr.f32.mxu0 0.0
    %4942 = vmatmul.mubr.f32.gmra.mxu0 %v4789
    %v4943 = vpop.f32.mrf.mxu0
    %v4944 = vadd.f32 %v4870, %v4943
    %v4945 = vpop.f32.mrf.mxu0
    %4946 = vdwg.mxu0
    %v4948 = vlaneseq
    %v4949 = vshrl.u32 %v4948, 7
    %v4950 = vsub.s32 0, %v4949
    %v4951 = vrot.slane %v4774, %v4950
    %4953 = vmatprep.subr.mxu0 0.0
    %4954 = vmatpush1.msra.mxu0 0.0
    %4955 = vmatprep.subr.mxu0 0.0
    %4956 = vmatpush1.msra.mxu0 0.0
    %4957 = vmatprep.subr.mxu0 0.0
    %4958 = vmatpush1.msra.mxu0 0.0
    %4959 = vmatprep.subr.mxu0 0.0
    %4960 = vmatpush1.msra.mxu0 0.0
    %4961 = vmatprep.subr.mxu0 0.0
    %4962 = vmatpush1.msra.mxu0 0.0
    %4963 = vmatprep.subr.mxu0 0.0
    %4964 = vmatpush1.msra.mxu0 0.0
    %4965 = vmatprep.subr.mxu0 0.0
    %4966 = vmatpush1.msra.mxu0 0.0
    %4967 = vmatprep.subr.mxu0 0.0
    %4968 = vmatpush1.msra.mxu0 0.0
    %4969 = vmatprep.subr.mxu0 0.0
    %4970 = vmatpush1.msra.mxu0 0.0
    %4971 = vmatprep.subr.mxu0 0.0
    %4972 = vmatpush1.msra.mxu0 0.0
    %4973 = vmatprep.subr.mxu0 0.0
    %4974 = vmatpush1.msra.mxu0 0.0
    %4975 = vmatprep.subr.mxu0 0.0
    %4976 = vmatpush1.msra.mxu0 0.0
    %4977 = vmatprep.subr.mxu0 0.0
    %4978 = vmatpush1.msra.mxu0 0.0
    %4979 = vmatprep.subr.mxu0 0.0
    %4980 = vmatpush1.msra.mxu0 0.0
    %4981 = vmatprep.subr.mxu0 0.0
    %4982 = vmatpush1.msra.mxu0 %v4753
    %4983 = vmatprep.subr.mxu0 0.0
    %4984 = vmatpush1.msra.mxu0 %v4752
    %4985 = vmatprep.subr.mxu0 0.0
    %4986 = vmatpush2.msra.mxu0 0.0
    %4987 = vmatprep.subr.mxu0 0.0
    %4988 = vmatpush2.msra.mxu0 0.0
    %4989 = vmatprep.subr.mxu0 0.0
    %4990 = vmatpush2.msra.mxu0 0.0
    %4991 = vmatprep.subr.mxu0 0.0
    %4992 = vmatpush2.msra.mxu0 0.0
    %4993 = vmatprep.subr.mxu0 0.0
    %4994 = vmatpush2.msra.mxu0 0.0
    %4995 = vmatprep.subr.mxu0 0.0
    %4996 = vmatpush2.msra.mxu0 0.0
    %4997 = vmatprep.subr.mxu0 0.0
    %4998 = vmatpush2.msra.mxu0 0.0
    %4999 = vmatprep.subr.mxu0 0.0
    %5000 = vmatpush2.msra.mxu0 0.0
    %5001 = vmatprep.subr.mxu0 0.0
    %5002 = vmatpush2.msra.mxu0 0.0
    %5003 = vmatprep.subr.mxu0 0.0
    %5004 = vmatpush2.msra.mxu0 0.0
    %5005 = vmatprep.subr.mxu0 0.0
    %5006 = vmatpush2.msra.mxu0 0.0
    %5007 = vmatprep.subr.mxu0 0.0
    %5008 = vmatpush2.msra.mxu0 0.0
    %5009 = vmatprep.subr.mxu0 0.0
    %5010 = vmatpush2.msra.mxu0 0.0
    %5011 = vmatprep.subr.mxu0 0.0
    %5012 = vmatpush2.msra.mxu0 0.0
    %5013 = vmatprep.subr.mxu0 0.0
    %5014 = vmatpush2.msra.mxu0 0.0
    %5015 = vmatprep.subr.mxu0 0.0
    %5016 = vmatpush2.msra.mxu0 0.0
    %5017 = vmatprep.mubr.f32.mxu0 0.0
    %5018 = vmatmul.mubr.f32.gmra.mxu0 %v4786
    %v5019 = vpop.f32.mrf.mxu0
    %v5020 = vadd.f32 %v4951, %v5019
    %v5021 = vpop.f32.mrf.mxu0
    %5022 = vmatprep.mubr.f32.mxu0 0.0
    %5023 = vmatmul.mubr.f32.gmra.mxu0 %v4789
    %v5024 = vpop.f32.mrf.mxu0
    %v5025 = vadd.f32 %v4951, %v5024
    %v5026 = vpop.f32.mrf.mxu0
    %5027 = vdwg.mxu0
    %5028 = vmatprep.subr.mxu0 0.0
    %5029 = vmatpush1.msra.mxu0 0.0
    %5030 = vmatprep.subr.mxu0 0.0
    %5031 = vmatpush1.msra.mxu0 0.0
    %5032 = vmatprep.subr.mxu0 0.0
    %5033 = vmatpush1.msra.mxu0 0.0
    %5034 = vmatprep.subr.mxu0 0.0
    %5035 = vmatpush1.msra.mxu0 0.0
    %5036 = vmatprep.subr.mxu0 0.0
    %5037 = vmatpush1.msra.mxu0 0.0
    %5038 = vmatprep.subr.mxu0 0.0
    %5039 = vmatpush1.msra.mxu0 0.0
    %5040 = vmatprep.subr.mxu0 0.0
    %5041 = vmatpush1.msra.mxu0 0.0
    %5042 = vmatprep.subr.mxu0 0.0
    %5043 = vmatpush1.msra.mxu0 0.0
    %5044 = vmatprep.subr.mxu0 0.0
    %5045 = vmatpush1.msra.mxu0 0.0
    %5046 = vmatprep.subr.mxu0 0.0
    %5047 = vmatpush1.msra.mxu0 0.0
    %5048 = vmatprep.subr.mxu0 0.0
    %5049 = vmatpush1.msra.mxu0 0.0
    %5050 = vmatprep.subr.mxu0 0.0
    %5051 = vmatpush1.msra.mxu0 0.0
    %5052 = vmatprep.subr.mxu0 0.0
    %5053 = vmatpush1.msra.mxu0 0.0
    %5054 = vmatprep.subr.mxu0 0.0
    %5055 = vmatpush1.msra.mxu0 0.0
    %5056 = vmatprep.subr.mxu0 0.0
    %5057 = vmatpush1.msra.mxu0 %v4756
    %5058 = vmatprep.subr.mxu0 0.0
    %5059 = vmatpush1.msra.mxu0 %v4755
    %5060 = vmatprep.subr.mxu0 0.0
    %5061 = vmatpush2.msra.mxu0 0.0
    %5062 = vmatprep.subr.mxu0 0.0
    %5063 = vmatpush2.msra.mxu0 0.0
    %5064 = vmatprep.subr.mxu0 0.0
    %5065 = vmatpush2.msra.mxu0 0.0
    %5066 = vmatprep.subr.mxu0 0.0
    %5067 = vmatpush2.msra.mxu0 0.0
    %5068 = vmatprep.subr.mxu0 0.0
    %5069 = vmatpush2.msra.mxu0 0.0
    %5070 = vmatprep.subr.mxu0 0.0
    %5071 = vmatpush2.msra.mxu0 0.0
    %5072 = vmatprep.subr.mxu0 0.0
    %5073 = vmatpush2.msra.mxu0 0.0
    %5074 = vmatprep.subr.mxu0 0.0
    %5075 = vmatpush2.msra.mxu0 0.0
    %5076 = vmatprep.subr.mxu0 0.0
    %5077 = vmatpush2.msra.mxu0 0.0
    %5078 = vmatprep.subr.mxu0 0.0
    %5079 = vmatpush2.msra.mxu0 0.0
    %5080 = vmatprep.subr.mxu0 0.0
    %5081 = vmatpush2.msra.mxu0 0.0
    %5082 = vmatprep.subr.mxu0 0.0
    %5083 = vmatpush2.msra.mxu0 0.0
    %5084 = vmatprep.subr.mxu0 0.0
    %5085 = vmatpush2.msra.mxu0 0.0
    %5086 = vmatprep.subr.mxu0 0.0
    %5087 = vmatpush2.msra.mxu0 0.0
    %5088 = vmatprep.subr.mxu0 0.0
    %5089 = vmatpush2.msra.mxu0 0.0
    %5090 = vmatprep.subr.mxu0 0.0
    %5091 = vmatpush2.msra.mxu0 0.0
    %5092 = vmatprep.mubr.f32.mxu0 0.0
    %5093 = vmatmul.mubr.f32.gmra.mxu0 %v505
    %v5094 = vpop.f32.mrf.mxu0
    %v5095 = vadd.f32 0.0, %v5094
    %v5096 = vpop.f32.mrf.mxu0
    %5097 = vdwg.mxu0
    %5098 = vmatprep.subr.mxu0 0.0
    %5099 = vmatpush1.msra.mxu0 0.0
    %5100 = vmatprep.subr.mxu0 0.0
    %5101 = vmatpush1.msra.mxu0 0.0
    %5102 = vmatprep.subr.mxu0 0.0
    %5103 = vmatpush1.msra.mxu0 0.0
    %5104 = vmatprep.subr.mxu0 0.0
    %5105 = vmatpush1.msra.mxu0 0.0
    %5106 = vmatprep.subr.mxu0 0.0
    %5107 = vmatpush1.msra.mxu0 0.0
    %5108 = vmatprep.subr.mxu0 0.0
    %5109 = vmatpush1.msra.mxu0 0.0
    %5110 = vmatprep.subr.mxu0 0.0
    %5111 = vmatpush1.msra.mxu0 0.0
    %5112 = vmatprep.subr.mxu0 0.0
    %5113 = vmatpush1.msra.mxu0 0.0
    %5114 = vmatprep.subr.mxu0 0.0
    %5115 = vmatpush1.msra.mxu0 0.0
    %5116 = vmatprep.subr.mxu0 0.0
    %5117 = vmatpush1.msra.mxu0 0.0
    %5118 = vmatprep.subr.mxu0 0.0
    %5119 = vmatpush1.msra.mxu0 0.0
    %5120 = vmatprep.subr.mxu0 0.0
    %5121 = vmatpush1.msra.mxu0 0.0
    %5122 = vmatprep.subr.mxu0 0.0
    %5123 = vmatpush1.msra.mxu0 0.0
    %5124 = vmatprep.subr.mxu0 0.0
    %5125 = vmatpush1.msra.mxu0 0.0
    %5126 = vmatprep.subr.mxu0 0.0
    %5127 = vmatpush1.msra.mxu0 %v4759
    %5128 = vmatprep.subr.mxu0 0.0
    %5129 = vmatpush1.msra.mxu0 %v4758
    %5130 = vmatprep.subr.mxu0 0.0
    %5131 = vmatpush2.msra.mxu0 0.0
    %5132 = vmatprep.subr.mxu0 0.0
    %5133 = vmatpush2.msra.mxu0 0.0
    %5134 = vmatprep.subr.mxu0 0.0
    %5135 = vmatpush2.msra.mxu0 0.0
    %5136 = vmatprep.subr.mxu0 0.0
    %5137 = vmatpush2.msra.mxu0 0.0
    %5138 = vmatprep.subr.mxu0 0.0
    %5139 = vmatpush2.msra.mxu0 0.0
    %5140 = vmatprep.subr.mxu0 0.0
    %5141 = vmatpush2.msra.mxu0 0.0
    %5142 = vmatprep.subr.mxu0 0.0
    %5143 = vmatpush2.msra.mxu0 0.0
    %5144 = vmatprep.subr.mxu0 0.0
    %5145 = vmatpush2.msra.mxu0 0.0
    %5146 = vmatprep.subr.mxu0 0.0
    %5147 = vmatpush2.msra.mxu0 0.0
    %5148 = vmatprep.subr.mxu0 0.0
    %5149 = vmatpush2.msra.mxu0 0.0
    %5150 = vmatprep.subr.mxu0 0.0
    %5151 = vmatpush2.msra.mxu0 0.0
    %5152 = vmatprep.subr.mxu0 0.0
    %5153 = vmatpush2.msra.mxu0 0.0
    %5154 = vmatprep.subr.mxu0 0.0
    %5155 = vmatpush2.msra.mxu0 0.0
    %5156 = vmatprep.subr.mxu0 0.0
    %5157 = vmatpush2.msra.mxu0 0.0
    %5158 = vmatprep.subr.mxu0 0.0
    %5159 = vmatpush2.msra.mxu0 0.0
    %5160 = vmatprep.subr.mxu0 0.0
    %5161 = vmatpush2.msra.mxu0 0.0
    %5162 = vmatprep.mubr.f32.mxu0 0.0
    %5163 = vmatmul.mubr.f32.gmra.mxu0 %v505
    %v5164 = vpop.f32.mrf.mxu0
    %v5165 = vadd.f32 0.0, %v5164
    %v5166 = vpop.f32.mrf.mxu0
    %5167 = vdwg.mxu0
    %v5169 = vlaneseq
    %v5170 = vshrl.u32 %v5169, 7
    %v5171 = vsub.s32 0, %v5170
    %v5172 = vrot.slane %v4776, %v5171
    %5174 = vmatprep.subr.mxu0 0.0
    %5175 = vmatpush1.msra.mxu0 0.0
    %5176 = vmatprep.subr.mxu0 0.0
    %5177 = vmatpush1.msra.mxu0 0.0
    %5178 = vmatprep.subr.mxu0 0.0
    %5179 = vmatpush1.msra.mxu0 0.0
    %5180 = vmatprep.subr.mxu0 0.0
    %5181 = vmatpush1.msra.mxu0 0.0
    %5182 = vmatprep.subr.mxu0 0.0
    %5183 = vmatpush1.msra.mxu0 0.0
    %5184 = vmatprep.subr.mxu0 0.0
    %5185 = vmatpush1.msra.mxu0 0.0
    %5186 = vmatprep.subr.mxu0 0.0
    %5187 = vmatpush1.msra.mxu0 0.0
    %5188 = vmatprep.subr.mxu0 0.0
    %5189 = vmatpush1.msra.mxu0 0.0
    %5190 = vmatprep.subr.mxu0 0.0
    %5191 = vmatpush1.msra.mxu0 0.0
    %5192 = vmatprep.subr.mxu0 0.0
    %5193 = vmatpush1.msra.mxu0 0.0
    %5194 = vmatprep.subr.mxu0 0.0
    %5195 = vmatpush1.msra.mxu0 0.0
    %5196 = vmatprep.subr.mxu0 0.0
    %5197 = vmatpush1.msra.mxu0 0.0
    %5198 = vmatprep.subr.mxu0 0.0
    %5199 = vmatpush1.msra.mxu0 0.0
    %5200 = vmatprep.subr.mxu0 0.0
    %5201 = vmatpush1.msra.mxu0 0.0
    %5202 = vmatprep.subr.mxu0 0.0
    %5203 = vmatpush1.msra.mxu0 %v4762
    %5204 = vmatprep.subr.mxu0 0.0
    %5205 = vmatpush1.msra.mxu0 %v4761
    %5206 = vmatprep.subr.mxu0 0.0
    %5207 = vmatpush2.msra.mxu0 0.0
    %5208 = vmatprep.subr.mxu0 0.0
    %5209 = vmatpush2.msra.mxu0 0.0
    %5210 = vmatprep.subr.mxu0 0.0
    %5211 = vmatpush2.msra.mxu0 0.0
    %5212 = vmatprep.subr.mxu0 0.0
    %5213 = vmatpush2.msra.mxu0 0.0
    %5214 = vmatprep.subr.mxu0 0.0
    %5215 = vmatpush2.msra.mxu0 0.0
    %5216 = vmatprep.subr.mxu0 0.0
    %5217 = vmatpush2.msra.mxu0 0.0
    %5218 = vmatprep.subr.mxu0 0.0
    %5219 = vmatpush2.msra.mxu0 0.0
    %5220 = vmatprep.subr.mxu0 0.0
    %5221 = vmatpush2.msra.mxu0 0.0
    %5222 = vmatprep.subr.mxu0 0.0
    %5223 = vmatpush2.msra.mxu0 0.0
    %5224 = vmatprep.subr.mxu0 0.0
    %5225 = vmatpush2.msra.mxu0 0.0
    %5226 = vmatprep.subr.mxu0 0.0
    %5227 = vmatpush2.msra.mxu0 0.0
    %5228 = vmatprep.subr.mxu0 0.0
    %5229 = vmatpush2.msra.mxu0 0.0
    %5230 = vmatprep.subr.mxu0 0.0
    %5231 = vmatpush2.msra.mxu0 0.0
    %5232 = vmatprep.subr.mxu0 0.0
    %5233 = vmatpush2.msra.mxu0 0.0
    %5234 = vmatprep.subr.mxu0 0.0
    %5235 = vmatpush2.msra.mxu0 0.0
    %5236 = vmatprep.subr.mxu0 0.0
    %5237 = vmatpush2.msra.mxu0 0.0
    %5238 = vmatprep.mubr.f32.mxu0 0.0
    %5239 = vmatmul.mubr.f32.gmra.mxu0 %v505
    %v5240 = vpop.f32.mrf.mxu0
    %v5241 = vadd.f32 %v5172, %v5240
    %v5242 = vpop.f32.mrf.mxu0
    %5243 = vdwg.mxu0
    %v5244 = vadd.f32 %v4858, %v5095
    %v5245 = vxor.u32 %v5244, 2147483648
    %v5246 = vmul.f32 %v5245, 1.442695
    %v5247 = vpow.pop %v5246
    %v5248 = vadd.f32 %v5247, 1.0
    %v5249 = vrcp.pop %v5248
    %v5250 = vmul.f32 1.0, %v5249
    %v5251 = vadd.f32 %v4939, %v5165
    %v5252 = vxor.u32 %v5251, 2147483648
    %v5253 = vmul.f32 %v5252, 1.442695
    %v5254 = vpow.pop %v5253
    %v5255 = vadd.f32 %v5254, 1.0
    %v5256 = vrcp.pop %v5255
    %v5257 = vmul.f32 1.0, %v5256
    %v5258 = vmul.f32 %v5250, %v5241
    %v5259 = vadd.f32 %v5020, %v5258
    %v5260 = vtanh.pop %v5259
    %v5261 = vsub.f32 0.0, %v5260
    %v5262 = vmul.f32 %v5257, %v5261
    %v5263 = vadd.f32 %v5260, %v5262
    %5264 = vst.msk [vmem:[#allocation2] sm:$0x3] %vm193, %v5263
    %v5266 = vsel %vm260, %v5263, 0
    %5268 = vmatprep.subr.mxu0 0.0
    %5269 = vmatpush1.msra.mxu0 0.0
    %5270 = vmatprep.subr.mxu0 0.0
    %5271 = vmatpush1.msra.mxu0 0.0
    %5272 = vmatprep.subr.mxu0 0.0
    %5273 = vmatpush1.msra.mxu0 0.0
    %5274 = vmatprep.subr.mxu0 0.0
    %5275 = vmatpush1.msra.mxu0 0.0
    %5276 = vmatprep.subr.mxu0 0.0
    %5277 = vmatpush1.msra.mxu0 0.0
    %5278 = vmatprep.subr.mxu0 0.0
    %5279 = vmatpush1.msra.mxu0 0.0
    %5280 = vmatprep.subr.mxu0 0.0
    %5281 = vmatpush1.msra.mxu0 0.0
    %5282 = vmatprep.subr.mxu0 0.0
    %5283 = vmatpush1.msra.mxu0 0.0
    %5284 = vmatprep.subr.mxu0 0.0
    %5285 = vmatpush1.msra.mxu0 0.0
    %5286 = vmatprep.subr.mxu0 0.0
    %5287 = vmatpush1.msra.mxu0 0.0
    %5288 = vmatprep.subr.mxu0 0.0
    %5289 = vmatpush1.msra.mxu0 0.0
    %5290 = vmatprep.subr.mxu0 0.0
    %5291 = vmatpush1.msra.mxu0 0.0
    %5292 = vmatprep.subr.mxu0 0.0
    %5293 = vmatpush1.msra.mxu0 0.0
    %5294 = vmatprep.subr.mxu0 0.0
    %5295 = vmatpush1.msra.mxu0 0.0
    %5296 = vmatprep.subr.mxu0 0.0
    %5297 = vmatpush1.msra.mxu0 %v4756
    %5298 = vmatprep.subr.mxu0 0.0
    %5299 = vmatpush1.msra.mxu0 %v4755
    %5300 = vmatprep.subr.mxu0 0.0
    %5301 = vmatpush2.msra.mxu0 0.0
    %5302 = vmatprep.subr.mxu0 0.0
    %5303 = vmatpush2.msra.mxu0 0.0
    %5304 = vmatprep.subr.mxu0 0.0
    %5305 = vmatpush2.msra.mxu0 0.0
    %5306 = vmatprep.subr.mxu0 0.0
    %5307 = vmatpush2.msra.mxu0 0.0
    %5308 = vmatprep.subr.mxu0 0.0
    %5309 = vmatpush2.msra.mxu0 0.0
    %5310 = vmatprep.subr.mxu0 0.0
    %5311 = vmatpush2.msra.mxu0 0.0
    %5312 = vmatprep.subr.mxu0 0.0
    %5313 = vmatpush2.msra.mxu0 0.0
    %5314 = vmatprep.subr.mxu0 0.0
    %5315 = vmatpush2.msra.mxu0 0.0
    %5316 = vmatprep.subr.mxu0 0.0
    %5317 = vmatpush2.msra.mxu0 0.0
    %5318 = vmatprep.subr.mxu0 0.0
    %5319 = vmatpush2.msra.mxu0 0.0
    %5320 = vmatprep.subr.mxu0 0.0
    %5321 = vmatpush2.msra.mxu0 0.0
    %5322 = vmatprep.subr.mxu0 0.0
    %5323 = vmatpush2.msra.mxu0 0.0
    %5324 = vmatprep.subr.mxu0 0.0
    %5325 = vmatpush2.msra.mxu0 0.0
    %5326 = vmatprep.subr.mxu0 0.0
    %5327 = vmatpush2.msra.mxu0 0.0
    %5328 = vmatprep.subr.mxu0 0.0
    %5329 = vmatpush2.msra.mxu0 0.0
    %5330 = vmatprep.subr.mxu0 0.0
    %5331 = vmatpush2.msra.mxu0 0.0
    %5332 = vmatprep.mubr.f32.mxu0 0.0
    %5333 = vmatmul.mubr.f32.gmra.mxu0 %v5266
    %v5334 = vpop.f32.mrf.mxu0
    %v5335 = vadd.f32 0.0, %v5334
    %v5336 = vpop.f32.mrf.mxu0
    %5337 = vdwg.mxu0
    %5338 = vmatprep.subr.mxu0 0.0
    %5339 = vmatpush1.msra.mxu0 0.0
    %5340 = vmatprep.subr.mxu0 0.0
    %5341 = vmatpush1.msra.mxu0 0.0
    %5342 = vmatprep.subr.mxu0 0.0
    %5343 = vmatpush1.msra.mxu0 0.0
    %5344 = vmatprep.subr.mxu0 0.0
    %5345 = vmatpush1.msra.mxu0 0.0
    %5346 = vmatprep.subr.mxu0 0.0
    %5347 = vmatpush1.msra.mxu0 0.0
    %5348 = vmatprep.subr.mxu0 0.0
    %5349 = vmatpush1.msra.mxu0 0.0
    %5350 = vmatprep.subr.mxu0 0.0
    %5351 = vmatpush1.msra.mxu0 0.0
    %5352 = vmatprep.subr.mxu0 0.0
    %5353 = vmatpush1.msra.mxu0 0.0
    %5354 = vmatprep.subr.mxu0 0.0
    %5355 = vmatpush1.msra.mxu0 0.0
    %5356 = vmatprep.subr.mxu0 0.0
    %5357 = vmatpush1.msra.mxu0 0.0
    %5358 = vmatprep.subr.mxu0 0.0
    %5359 = vmatpush1.msra.mxu0 0.0
    %5360 = vmatprep.subr.mxu0 0.0
    %5361 = vmatpush1.msra.mxu0 0.0
    %5362 = vmatprep.subr.mxu0 0.0
    %5363 = vmatpush1.msra.mxu0 0.0
    %5364 = vmatprep.subr.mxu0 0.0
    %5365 = vmatpush1.msra.mxu0 0.0
    %5366 = vmatprep.subr.mxu0 0.0
    %5367 = vmatpush1.msra.mxu0 %v4759
    %5368 = vmatprep.subr.mxu0 0.0
    %5369 = vmatpush1.msra.mxu0 %v4758
    %5370 = vmatprep.subr.mxu0 0.0
    %5371 = vmatpush2.msra.mxu0 0.0
    %5372 = vmatprep.subr.mxu0 0.0
    %5373 = vmatpush2.msra.mxu0 0.0
    %5374 = vmatprep.subr.mxu0 0.0
    %5375 = vmatpush2.msra.mxu0 0.0
    %5376 = vmatprep.subr.mxu0 0.0
    %5377 = vmatpush2.msra.mxu0 0.0
    %5378 = vmatprep.subr.mxu0 0.0
    %5379 = vmatpush2.msra.mxu0 0.0
    %5380 = vmatprep.subr.mxu0 0.0
    %5381 = vmatpush2.msra.mxu0 0.0
    %5382 = vmatprep.subr.mxu0 0.0
    %5383 = vmatpush2.msra.mxu0 0.0
    %5384 = vmatprep.subr.mxu0 0.0
    %5385 = vmatpush2.msra.mxu0 0.0
    %5386 = vmatprep.subr.mxu0 0.0
    %5387 = vmatpush2.msra.mxu0 0.0
    %5388 = vmatprep.subr.mxu0 0.0
    %5389 = vmatpush2.msra.mxu0 0.0
    %5390 = vmatprep.subr.mxu0 0.0
    %5391 = vmatpush2.msra.mxu0 0.0
    %5392 = vmatprep.subr.mxu0 0.0
    %5393 = vmatpush2.msra.mxu0 0.0
    %5394 = vmatprep.subr.mxu0 0.0
    %5395 = vmatpush2.msra.mxu0 0.0
    %5396 = vmatprep.subr.mxu0 0.0
    %5397 = vmatpush2.msra.mxu0 0.0
    %5398 = vmatprep.subr.mxu0 0.0
    %5399 = vmatpush2.msra.mxu0 0.0
    %5400 = vmatprep.subr.mxu0 0.0
    %5401 = vmatpush2.msra.mxu0 0.0
    %5402 = vmatprep.mubr.f32.mxu0 0.0
    %5403 = vmatmul.mubr.f32.gmra.mxu0 %v5266
    %v5404 = vpop.f32.mrf.mxu0
    %v5405 = vadd.f32 0.0, %v5404
    %v5406 = vpop.f32.mrf.mxu0
    %5407 = vdwg.mxu0
    %5408 = vmatprep.subr.mxu0 0.0
    %5409 = vmatpush1.msra.mxu0 0.0
    %5410 = vmatprep.subr.mxu0 0.0
    %5411 = vmatpush1.msra.mxu0 0.0
    %5412 = vmatprep.subr.mxu0 0.0
    %5413 = vmatpush1.msra.mxu0 0.0
    %5414 = vmatprep.subr.mxu0 0.0
    %5415 = vmatpush1.msra.mxu0 0.0
    %5416 = vmatprep.subr.mxu0 0.0
    %5417 = vmatpush1.msra.mxu0 0.0
    %5418 = vmatprep.subr.mxu0 0.0
    %5419 = vmatpush1.msra.mxu0 0.0
    %5420 = vmatprep.subr.mxu0 0.0
    %5421 = vmatpush1.msra.mxu0 0.0
    %5422 = vmatprep.subr.mxu0 0.0
    %5423 = vmatpush1.msra.mxu0 0.0
    %5424 = vmatprep.subr.mxu0 0.0
    %5425 = vmatpush1.msra.mxu0 0.0
    %5426 = vmatprep.subr.mxu0 0.0
    %5427 = vmatpush1.msra.mxu0 0.0
    %5428 = vmatprep.subr.mxu0 0.0
    %5429 = vmatpush1.msra.mxu0 0.0
    %5430 = vmatprep.subr.mxu0 0.0
    %5431 = vmatpush1.msra.mxu0 0.0
    %5432 = vmatprep.subr.mxu0 0.0
    %5433 = vmatpush1.msra.mxu0 0.0
    %5434 = vmatprep.subr.mxu0 0.0
    %5435 = vmatpush1.msra.mxu0 0.0
    %5436 = vmatprep.subr.mxu0 0.0
    %5437 = vmatpush1.msra.mxu0 %v4762
    %5438 = vmatprep.subr.mxu0 0.0
    %5439 = vmatpush1.msra.mxu0 %v4761
    %5440 = vmatprep.subr.mxu0 0.0
    %5441 = vmatpush2.msra.mxu0 0.0
    %5442 = vmatprep.subr.mxu0 0.0
    %5443 = vmatpush2.msra.mxu0 0.0
    %5444 = vmatprep.subr.mxu0 0.0
    %5445 = vmatpush2.msra.mxu0 0.0
    %5446 = vmatprep.subr.mxu0 0.0
    %5447 = vmatpush2.msra.mxu0 0.0
    %5448 = vmatprep.subr.mxu0 0.0
    %5449 = vmatpush2.msra.mxu0 0.0
    %5450 = vmatprep.subr.mxu0 0.0
    %5451 = vmatpush2.msra.mxu0 0.0
    %5452 = vmatprep.subr.mxu0 0.0
    %5453 = vmatpush2.msra.mxu0 0.0
    %5454 = vmatprep.subr.mxu0 0.0
    %5455 = vmatpush2.msra.mxu0 0.0
    %5456 = vmatprep.subr.mxu0 0.0
    %5457 = vmatpush2.msra.mxu0 0.0
    %5458 = vmatprep.subr.mxu0 0.0
    %5459 = vmatpush2.msra.mxu0 0.0
    %5460 = vmatprep.subr.mxu0 0.0
    %5461 = vmatpush2.msra.mxu0 0.0
    %5462 = vmatprep.subr.mxu0 0.0
    %5463 = vmatpush2.msra.mxu0 0.0
    %5464 = vmatprep.subr.mxu0 0.0
    %5465 = vmatpush2.msra.mxu0 0.0
    %5466 = vmatprep.subr.mxu0 0.0
    %5467 = vmatpush2.msra.mxu0 0.0
    %5468 = vmatprep.subr.mxu0 0.0
    %5469 = vmatpush2.msra.mxu0 0.0
    %5470 = vmatprep.subr.mxu0 0.0
    %5471 = vmatpush2.msra.mxu0 0.0
    %5472 = vmatprep.mubr.f32.mxu0 0.0
    %5473 = vmatmul.mubr.f32.gmra.mxu0 %v5266
    %v5474 = vpop.f32.mrf.mxu0
    %v5475 = vadd.f32 %v5172, %v5474
    %v5476 = vpop.f32.mrf.mxu0
    %5477 = vdwg.mxu0
    %v5479 = vrot.slane %v5335, 6
    %v5481 = vadd.f32 %v4858, %v5479
    %v5482 = vxor.u32 %v5481, 2147483648
    %v5483 = vmul.f32 %v5482, 1.442695
    %v5484 = vpow.pop %v5483
    %v5485 = vadd.f32 %v5484, 1.0
    %v5486 = vrcp.pop %v5485
    %v5487 = vmul.f32 1.0, %v5486
    %v5489 = vrot.slane %v5405, 6
    %v5491 = vadd.f32 %v4939, %v5489
    %v5492 = vxor.u32 %v5491, 2147483648
    %v5493 = vmul.f32 %v5492, 1.442695
    %v5494 = vpow.pop %v5493
    %v5495 = vadd.f32 %v5494, 1.0
    %v5496 = vrcp.pop %v5495
    %v5497 = vmul.f32 1.0, %v5496
    %v5499 = vrot.slane %v5475, 6
    %v5501 = vmul.f32 %v5487, %v5499
    %v5502 = vadd.f32 %v5020, %v5501
    %v5503 = vtanh.pop %v5502
    %v5505 = vrot.slane %v5503, 2
    %v5507 = vsub.f32 %v5263, %v5505
    %v5509 = vrot.slane %v5507, 6
    %v5511 = vmul.f32 %v5497, %v5509
    %v5512 = vadd.f32 %v5503, %v5511
    %5513 = vst.msk [vmem:[#allocation2] sm:$0xc] %vm992, %v5512
    %v5515 = vrot.slane %v5512, 2
    %v5516 = vsel %vm260, %v5515, 0
    %5518 = vmatprep.subr.mxu0 0.0
    %5519 = vmatpush1.msra.mxu0 0.0
    %5520 = vmatprep.subr.mxu0 0.0
    %5521 = vmatpush1.msra.mxu0 0.0
    %5522 = vmatprep.subr.mxu0 0.0
    %5523 = vmatpush1.msra.mxu0 0.0
    %5524 = vmatprep.subr.mxu0 0.0
    %5525 = vmatpush1.msra.mxu0 0.0
    %5526 = vmatprep.subr.mxu0 0.0
    %5527 = vmatpush1.msra.mxu0 0.0
    %5528 = vmatprep.subr.mxu0 0.0
    %5529 = vmatpush1.msra.mxu0 0.0
    %5530 = vmatprep.subr.mxu0 0.0
    %5531 = vmatpush1.msra.mxu0 0.0
    %5532 = vmatprep.subr.mxu0 0.0
    %5533 = vmatpush1.msra.mxu0 0.0
    %5534 = vmatprep.subr.mxu0 0.0
    %5535 = vmatpush1.msra.mxu0 0.0
    %5536 = vmatprep.subr.mxu0 0.0
    %5537 = vmatpush1.msra.mxu0 0.0
    %5538 = vmatprep.subr.mxu0 0.0
    %5539 = vmatpush1.msra.mxu0 0.0
    %5540 = vmatprep.subr.mxu0 0.0
    %5541 = vmatpush1.msra.mxu0 0.0
    %5542 = vmatprep.subr.mxu0 0.0
    %5543 = vmatpush1.msra.mxu0 0.0
    %5544 = vmatprep.subr.mxu0 0.0
    %5545 = vmatpush1.msra.mxu0 0.0
    %5546 = vmatprep.subr.mxu0 0.0
    %5547 = vmatpush1.msra.mxu0 %v4756
    %5548 = vmatprep.subr.mxu0 0.0
    %5549 = vmatpush1.msra.mxu0 %v4755
    %5550 = vmatprep.subr.mxu0 0.0
    %5551 = vmatpush2.msra.mxu0 0.0
    %5552 = vmatprep.subr.mxu0 0.0
    %5553 = vmatpush2.msra.mxu0 0.0
    %5554 = vmatprep.subr.mxu0 0.0
    %5555 = vmatpush2.msra.mxu0 0.0
    %5556 = vmatprep.subr.mxu0 0.0
    %5557 = vmatpush2.msra.mxu0 0.0
    %5558 = vmatprep.subr.mxu0 0.0
    %5559 = vmatpush2.msra.mxu0 0.0
    %5560 = vmatprep.subr.mxu0 0.0
    %5561 = vmatpush2.msra.mxu0 0.0
    %5562 = vmatprep.subr.mxu0 0.0
    %5563 = vmatpush2.msra.mxu0 0.0
    %5564 = vmatprep.subr.mxu0 0.0
    %5565 = vmatpush2.msra.mxu0 0.0
    %5566 = vmatprep.subr.mxu0 0.0
    %5567 = vmatpush2.msra.mxu0 0.0
    %5568 = vmatprep.subr.mxu0 0.0
    %5569 = vmatpush2.msra.mxu0 0.0
    %5570 = vmatprep.subr.mxu0 0.0
    %5571 = vmatpush2.msra.mxu0 0.0
    %5572 = vmatprep.subr.mxu0 0.0
    %5573 = vmatpush2.msra.mxu0 0.0
    %5574 = vmatprep.subr.mxu0 0.0
    %5575 = vmatpush2.msra.mxu0 0.0
    %5576 = vmatprep.subr.mxu0 0.0
    %5577 = vmatpush2.msra.mxu0 0.0
    %5578 = vmatprep.subr.mxu0 0.0
    %5579 = vmatpush2.msra.mxu0 0.0
    %5580 = vmatprep.subr.mxu0 0.0
    %5581 = vmatpush2.msra.mxu0 0.0
    %5582 = vmatprep.mubr.f32.mxu0 0.0
    %5583 = vmatmul.mubr.f32.gmra.mxu0 %v5516
    %v5584 = vpop.f32.mrf.mxu0
    %v5585 = vadd.f32 0.0, %v5584
    %v5586 = vpop.f32.mrf.mxu0
    %5587 = vdwg.mxu0
    %5588 = vmatprep.subr.mxu0 0.0
    %5589 = vmatpush1.msra.mxu0 0.0
    %5590 = vmatprep.subr.mxu0 0.0
    %5591 = vmatpush1.msra.mxu0 0.0
    %5592 = vmatprep.subr.mxu0 0.0
    %5593 = vmatpush1.msra.mxu0 0.0
    %5594 = vmatprep.subr.mxu0 0.0
    %5595 = vmatpush1.msra.mxu0 0.0
    %5596 = vmatprep.subr.mxu0 0.0
    %5597 = vmatpush1.msra.mxu0 0.0
    %5598 = vmatprep.subr.mxu0 0.0
    %5599 = vmatpush1.msra.mxu0 0.0
    %5600 = vmatprep.subr.mxu0 0.0
    %5601 = vmatpush1.msra.mxu0 0.0
    %5602 = vmatprep.subr.mxu0 0.0
    %5603 = vmatpush1.msra.mxu0 0.0
    %5604 = vmatprep.subr.mxu0 0.0
    %5605 = vmatpush1.msra.mxu0 0.0
    %5606 = vmatprep.subr.mxu0 0.0
    %5607 = vmatpush1.msra.mxu0 0.0
    %5608 = vmatprep.subr.mxu0 0.0
    %5609 = vmatpush1.msra.mxu0 0.0
    %5610 = vmatprep.subr.mxu0 0.0
    %5611 = vmatpush1.msra.mxu0 0.0
    %5612 = vmatprep.subr.mxu0 0.0
    %5613 = vmatpush1.msra.mxu0 0.0
    %5614 = vmatprep.subr.mxu0 0.0
    %5615 = vmatpush1.msra.mxu0 0.0
    %5616 = vmatprep.subr.mxu0 0.0
    %5617 = vmatpush1.msra.mxu0 %v4759
    %5618 = vmatprep.subr.mxu0 0.0
    %5619 = vmatpush1.msra.mxu0 %v4758
    %5620 = vmatprep.subr.mxu0 0.0
    %5621 = vmatpush2.msra.mxu0 0.0
    %5622 = vmatprep.subr.mxu0 0.0
    %5623 = vmatpush2.msra.mxu0 0.0
    %5624 = vmatprep.subr.mxu0 0.0
    %5625 = vmatpush2.msra.mxu0 0.0
    %5626 = vmatprep.subr.mxu0 0.0
    %5627 = vmatpush2.msra.mxu0 0.0
    %5628 = vmatprep.subr.mxu0 0.0
    %5629 = vmatpush2.msra.mxu0 0.0
    %5630 = vmatprep.subr.mxu0 0.0
    %5631 = vmatpush2.msra.mxu0 0.0
    %5632 = vmatprep.subr.mxu0 0.0
    %5633 = vmatpush2.msra.mxu0 0.0
    %5634 = vmatprep.subr.mxu0 0.0
    %5635 = vmatpush2.msra.mxu0 0.0
    %5636 = vmatprep.subr.mxu0 0.0
    %5637 = vmatpush2.msra.mxu0 0.0
    %5638 = vmatprep.subr.mxu0 0.0
    %5639 = vmatpush2.msra.mxu0 0.0
    %5640 = vmatprep.subr.mxu0 0.0
    %5641 = vmatpush2.msra.mxu0 0.0
    %5642 = vmatprep.subr.mxu0 0.0
    %5643 = vmatpush2.msra.mxu0 0.0
    %5644 = vmatprep.subr.mxu0 0.0
    %5645 = vmatpush2.msra.mxu0 0.0
    %5646 = vmatprep.subr.mxu0 0.0
    %5647 = vmatpush2.msra.mxu0 0.0
    %5648 = vmatprep.subr.mxu0 0.0
    %5649 = vmatpush2.msra.mxu0 0.0
    %5650 = vmatprep.subr.mxu0 0.0
    %5651 = vmatpush2.msra.mxu0 0.0
    %5652 = vmatprep.mubr.f32.mxu0 0.0
    %5653 = vmatmul.mubr.f32.gmra.mxu0 %v5516
    %v5654 = vpop.f32.mrf.mxu0
    %v5655 = vadd.f32 0.0, %v5654
    %v5656 = vpop.f32.mrf.mxu0
    %5657 = vdwg.mxu0
    %5658 = vmatprep.subr.mxu0 0.0
    %5659 = vmatpush1.msra.mxu0 0.0
    %5660 = vmatprep.subr.mxu0 0.0
    %5661 = vmatpush1.msra.mxu0 0.0
    %5662 = vmatprep.subr.mxu0 0.0
    %5663 = vmatpush1.msra.mxu0 0.0
    %5664 = vmatprep.subr.mxu0 0.0
    %5665 = vmatpush1.msra.mxu0 0.0
    %5666 = vmatprep.subr.mxu0 0.0
    %5667 = vmatpush1.msra.mxu0 0.0
    %5668 = vmatprep.subr.mxu0 0.0
    %5669 = vmatpush1.msra.mxu0 0.0
    %5670 = vmatprep.subr.mxu0 0.0
    %5671 = vmatpush1.msra.mxu0 0.0
    %5672 = vmatprep.subr.mxu0 0.0
    %5673 = vmatpush1.msra.mxu0 0.0
    %5674 = vmatprep.subr.mxu0 0.0
    %5675 = vmatpush1.msra.mxu0 0.0
    %5676 = vmatprep.subr.mxu0 0.0
    %5677 = vmatpush1.msra.mxu0 0.0
    %5678 = vmatprep.subr.mxu0 0.0
    %5679 = vmatpush1.msra.mxu0 0.0
    %5680 = vmatprep.subr.mxu0 0.0
    %5681 = vmatpush1.msra.mxu0 0.0
    %5682 = vmatprep.subr.mxu0 0.0
    %5683 = vmatpush1.msra.mxu0 0.0
    %5684 = vmatprep.subr.mxu0 0.0
    %5685 = vmatpush1.msra.mxu0 0.0
    %5686 = vmatprep.subr.mxu0 0.0
    %5687 = vmatpush1.msra.mxu0 %v4762
    %5688 = vmatprep.subr.mxu0 0.0
    %5689 = vmatpush1.msra.mxu0 %v4761
    %5690 = vmatprep.subr.mxu0 0.0
    %5691 = vmatpush2.msra.mxu0 0.0
    %5692 = vmatprep.subr.mxu0 0.0
    %5693 = vmatpush2.msra.mxu0 0.0
    %5694 = vmatprep.subr.mxu0 0.0
    %5695 = vmatpush2.msra.mxu0 0.0
    %5696 = vmatprep.subr.mxu0 0.0
    %5697 = vmatpush2.msra.mxu0 0.0
    %5698 = vmatprep.subr.mxu0 0.0
    %5699 = vmatpush2.msra.mxu0 0.0
    %5700 = vmatprep.subr.mxu0 0.0
    %5701 = vmatpush2.msra.mxu0 0.0
    %5702 = vmatprep.subr.mxu0 0.0
    %5703 = vmatpush2.msra.mxu0 0.0
    %5704 = vmatprep.subr.mxu0 0.0
    %5705 = vmatpush2.msra.mxu0 0.0
    %5706 = vmatprep.subr.mxu0 0.0
    %5707 = vmatpush2.msra.mxu0 0.0
    %5708 = vmatprep.subr.mxu0 0.0
    %5709 = vmatpush2.msra.mxu0 0.0
    %5710 = vmatprep.subr.mxu0 0.0
    %5711 = vmatpush2.msra.mxu0 0.0
    %5712 = vmatprep.subr.mxu0 0.0
    %5713 = vmatpush2.msra.mxu0 0.0
    %5714 = vmatprep.subr.mxu0 0.0
    %5715 = vmatpush2.msra.mxu0 0.0
    %5716 = vmatprep.subr.mxu0 0.0
    %5717 = vmatpush2.msra.mxu0 0.0
    %5718 = vmatprep.subr.mxu0 0.0
    %5719 = vmatpush2.msra.mxu0 0.0
    %5720 = vmatprep.subr.mxu0 0.0
    %5721 = vmatpush2.msra.mxu0 0.0
    %5722 = vmatprep.mubr.f32.mxu0 0.0
    %5723 = vmatmul.mubr.f32.gmra.mxu0 %v5516
    %v5724 = vpop.f32.mrf.mxu0
    %v5725 = vadd.f32 %v5172, %v5724
    %v5726 = vpop.f32.mrf.mxu0
    %5727 = vdwg.mxu0
    %v5729 = vrot.slane %v5585, 4
    %v5731 = vadd.f32 %v4858, %v5729
    %v5732 = vxor.u32 %v5731, 2147483648
    %v5733 = vmul.f32 %v5732, 1.442695
    %v5734 = vpow.pop %v5733
    %v5735 = vadd.f32 %v5734, 1.0
    %v5736 = vrcp.pop %v5735
    %v5737 = vmul.f32 1.0, %v5736
    %v5739 = vrot.slane %v5655, 4
    %v5741 = vadd.f32 %v4939, %v5739
    %v5742 = vxor.u32 %v5741, 2147483648
    %v5743 = vmul.f32 %v5742, 1.442695
    %v5744 = vpow.pop %v5743
    %v5745 = vadd.f32 %v5744, 1.0
    %v5746 = vrcp.pop %v5745
    %v5747 = vmul.f32 1.0, %v5746
    %v5749 = vrot.slane %v5725, 4
    %v5751 = vmul.f32 %v5737, %v5749
    %v5752 = vadd.f32 %v5020, %v5751
    %v5753 = vtanh.pop %v5752
    %v5755 = vrot.slane %v5753, 2
    %v5757 = vsub.f32 %v5512, %v5755
    %v5759 = vrot.slane %v5757, 6
    %v5761 = vmul.f32 %v5747, %v5759
    %v5762 = vadd.f32 %v5753, %v5761
    %5763 = vst.msk [vmem:[#allocation2] sm:$0x30] %vm1243, %v5762
    %v5765 = vrot.slane %v5762, 4
    %v5766 = vsel %vm260, %v5765, 0
    %5768 = vmatprep.subr.mxu0 0.0
    %5769 = vmatpush1.msra.mxu0 0.0
    %5770 = vmatprep.subr.mxu0 0.0
    %5771 = vmatpush1.msra.mxu0 0.0
    %5772 = vmatprep.subr.mxu0 0.0
    %5773 = vmatpush1.msra.mxu0 0.0
    %5774 = vmatprep.subr.mxu0 0.0
    %5775 = vmatpush1.msra.mxu0 0.0
    %5776 = vmatprep.subr.mxu0 0.0
    %5777 = vmatpush1.msra.mxu0 0.0
    %5778 = vmatprep.subr.mxu0 0.0
    %5779 = vmatpush1.msra.mxu0 0.0
    %5780 = vmatprep.subr.mxu0 0.0
    %5781 = vmatpush1.msra.mxu0 0.0
    %5782 = vmatprep.subr.mxu0 0.0
    %5783 = vmatpush1.msra.mxu0 0.0
    %5784 = vmatprep.subr.mxu0 0.0
    %5785 = vmatpush1.msra.mxu0 0.0
    %5786 = vmatprep.subr.mxu0 0.0
    %5787 = vmatpush1.msra.mxu0 0.0
    %5788 = vmatprep.subr.mxu0 0.0
    %5789 = vmatpush1.msra.mxu0 0.0
    %5790 = vmatprep.subr.mxu0 0.0
    %5791 = vmatpush1.msra.mxu0 0.0
    %5792 = vmatprep.subr.mxu0 0.0
    %5793 = vmatpush1.msra.mxu0 0.0
    %5794 = vmatprep.subr.mxu0 0.0
    %5795 = vmatpush1.msra.mxu0 0.0
    %5796 = vmatprep.subr.mxu0 0.0
    %5797 = vmatpush1.msra.mxu0 %v4756
    %5798 = vmatprep.subr.mxu0 0.0
    %5799 = vmatpush1.msra.mxu0 %v4755
    %5800 = vmatprep.subr.mxu0 0.0
    %5801 = vmatpush2.msra.mxu0 0.0
    %5802 = vmatprep.subr.mxu0 0.0
    %5803 = vmatpush2.msra.mxu0 0.0
    %5804 = vmatprep.subr.mxu0 0.0
    %5805 = vmatpush2.msra.mxu0 0.0
    %5806 = vmatprep.subr.mxu0 0.0
    %5807 = vmatpush2.msra.mxu0 0.0
    %5808 = vmatprep.subr.mxu0 0.0
    %5809 = vmatpush2.msra.mxu0 0.0
    %5810 = vmatprep.subr.mxu0 0.0
    %5811 = vmatpush2.msra.mxu0 0.0
    %5812 = vmatprep.subr.mxu0 0.0
    %5813 = vmatpush2.msra.mxu0 0.0
    %5814 = vmatprep.subr.mxu0 0.0
    %5815 = vmatpush2.msra.mxu0 0.0
    %5816 = vmatprep.subr.mxu0 0.0
    %5817 = vmatpush2.msra.mxu0 0.0
    %5818 = vmatprep.subr.mxu0 0.0
    %5819 = vmatpush2.msra.mxu0 0.0
    %5820 = vmatprep.subr.mxu0 0.0
    %5821 = vmatpush2.msra.mxu0 0.0
    %5822 = vmatprep.subr.mxu0 0.0
    %5823 = vmatpush2.msra.mxu0 0.0
    %5824 = vmatprep.subr.mxu0 0.0
    %5825 = vmatpush2.msra.mxu0 0.0
    %5826 = vmatprep.subr.mxu0 0.0
    %5827 = vmatpush2.msra.mxu0 0.0
    %5828 = vmatprep.subr.mxu0 0.0
    %5829 = vmatpush2.msra.mxu0 0.0
    %5830 = vmatprep.subr.mxu0 0.0
    %5831 = vmatpush2.msra.mxu0 0.0
    %5832 = vmatprep.mubr.f32.mxu0 0.0
    %5833 = vmatmul.mubr.f32.gmra.mxu0 %v5766
    %v5834 = vpop.f32.mrf.mxu0
    %v5835 = vadd.f32 0.0, %v5834
    %v5836 = vpop.f32.mrf.mxu0
    %5837 = vdwg.mxu0
    %5838 = vmatprep.subr.mxu0 0.0
    %5839 = vmatpush1.msra.mxu0 0.0
    %5840 = vmatprep.subr.mxu0 0.0
    %5841 = vmatpush1.msra.mxu0 0.0
    %5842 = vmatprep.subr.mxu0 0.0
    %5843 = vmatpush1.msra.mxu0 0.0
    %5844 = vmatprep.subr.mxu0 0.0
    %5845 = vmatpush1.msra.mxu0 0.0
    %5846 = vmatprep.subr.mxu0 0.0
    %5847 = vmatpush1.msra.mxu0 0.0
    %5848 = vmatprep.subr.mxu0 0.0
    %5849 = vmatpush1.msra.mxu0 0.0
    %5850 = vmatprep.subr.mxu0 0.0
    %5851 = vmatpush1.msra.mxu0 0.0
    %5852 = vmatprep.subr.mxu0 0.0
    %5853 = vmatpush1.msra.mxu0 0.0
    %5854 = vmatprep.subr.mxu0 0.0
    %5855 = vmatpush1.msra.mxu0 0.0
    %5856 = vmatprep.subr.mxu0 0.0
    %5857 = vmatpush1.msra.mxu0 0.0
    %5858 = vmatprep.subr.mxu0 0.0
    %5859 = vmatpush1.msra.mxu0 0.0
    %5860 = vmatprep.subr.mxu0 0.0
    %5861 = vmatpush1.msra.mxu0 0.0
    %5862 = vmatprep.subr.mxu0 0.0
    %5863 = vmatpush1.msra.mxu0 0.0
    %5864 = vmatprep.subr.mxu0 0.0
    %5865 = vmatpush1.msra.mxu0 0.0
    %5866 = vmatprep.subr.mxu0 0.0
    %5867 = vmatpush1.msra.mxu0 %v4759
    %5868 = vmatprep.subr.mxu0 0.0
    %5869 = vmatpush1.msra.mxu0 %v4758
    %5870 = vmatprep.subr.mxu0 0.0
    %5871 = vmatpush2.msra.mxu0 0.0
    %5872 = vmatprep.subr.mxu0 0.0
    %5873 = vmatpush2.msra.mxu0 0.0
    %5874 = vmatprep.subr.mxu0 0.0
    %5875 = vmatpush2.msra.mxu0 0.0
    %5876 = vmatprep.subr.mxu0 0.0
    %5877 = vmatpush2.msra.mxu0 0.0
    %5878 = vmatprep.subr.mxu0 0.0
    %5879 = vmatpush2.msra.mxu0 0.0
    %5880 = vmatprep.subr.mxu0 0.0
    %5881 = vmatpush2.msra.mxu0 0.0
    %5882 = vmatprep.subr.mxu0 0.0
    %5883 = vmatpush2.msra.mxu0 0.0
    %5884 = vmatprep.subr.mxu0 0.0
    %5885 = vmatpush2.msra.mxu0 0.0
    %5886 = vmatprep.subr.mxu0 0.0
    %5887 = vmatpush2.msra.mxu0 0.0
    %5888 = vmatprep.subr.mxu0 0.0
    %5889 = vmatpush2.msra.mxu0 0.0
    %5890 = vmatprep.subr.mxu0 0.0
    %5891 = vmatpush2.msra.mxu0 0.0
    %5892 = vmatprep.subr.mxu0 0.0
    %5893 = vmatpush2.msra.mxu0 0.0
    %5894 = vmatprep.subr.mxu0 0.0
    %5895 = vmatpush2.msra.mxu0 0.0
    %5896 = vmatprep.subr.mxu0 0.0
    %5897 = vmatpush2.msra.mxu0 0.0
    %5898 = vmatprep.subr.mxu0 0.0
    %5899 = vmatpush2.msra.mxu0 0.0
    %5900 = vmatprep.subr.mxu0 0.0
    %5901 = vmatpush2.msra.mxu0 0.0
    %5902 = vmatprep.mubr.f32.mxu0 0.0
    %5903 = vmatmul.mubr.f32.gmra.mxu0 %v5766
    %v5904 = vpop.f32.mrf.mxu0
    %v5905 = vadd.f32 0.0, %v5904
    %v5906 = vpop.f32.mrf.mxu0
    %5907 = vdwg.mxu0
    %5908 = vmatprep.subr.mxu0 0.0
    %5909 = vmatpush1.msra.mxu0 0.0
    %5910 = vmatprep.subr.mxu0 0.0
    %5911 = vmatpush1.msra.mxu0 0.0
    %5912 = vmatprep.subr.mxu0 0.0
    %5913 = vmatpush1.msra.mxu0 0.0
    %5914 = vmatprep.subr.mxu0 0.0
    %5915 = vmatpush1.msra.mxu0 0.0
    %5916 = vmatprep.subr.mxu0 0.0
    %5917 = vmatpush1.msra.mxu0 0.0
    %5918 = vmatprep.subr.mxu0 0.0
    %5919 = vmatpush1.msra.mxu0 0.0
    %5920 = vmatprep.subr.mxu0 0.0
    %5921 = vmatpush1.msra.mxu0 0.0
    %5922 = vmatprep.subr.mxu0 0.0
    %5923 = vmatpush1.msra.mxu0 0.0
    %5924 = vmatprep.subr.mxu0 0.0
    %5925 = vmatpush1.msra.mxu0 0.0
    %5926 = vmatprep.subr.mxu0 0.0
    %5927 = vmatpush1.msra.mxu0 0.0
    %5928 = vmatprep.subr.mxu0 0.0
    %5929 = vmatpush1.msra.mxu0 0.0
    %5930 = vmatprep.subr.mxu0 0.0
    %5931 = vmatpush1.msra.mxu0 0.0
    %5932 = vmatprep.subr.mxu0 0.0
    %5933 = vmatpush1.msra.mxu0 0.0
    %5934 = vmatprep.subr.mxu0 0.0
    %5935 = vmatpush1.msra.mxu0 0.0
    %5936 = vmatprep.subr.mxu0 0.0
    %5937 = vmatpush1.msra.mxu0 %v4762
    %5938 = vmatprep.subr.mxu0 0.0
    %5939 = vmatpush1.msra.mxu0 %v4761
    %5940 = vmatprep.subr.mxu0 0.0
    %5941 = vmatpush2.msra.mxu0 0.0
    %5942 = vmatprep.subr.mxu0 0.0
    %5943 = vmatpush2.msra.mxu0 0.0
    %5944 = vmatprep.subr.mxu0 0.0
    %5945 = vmatpush2.msra.mxu0 0.0
    %5946 = vmatprep.subr.mxu0 0.0
    %5947 = vmatpush2.msra.mxu0 0.0
    %5948 = vmatprep.subr.mxu0 0.0
    %5949 = vmatpush2.msra.mxu0 0.0
    %5950 = vmatprep.subr.mxu0 0.0
    %5951 = vmatpush2.msra.mxu0 0.0
    %5952 = vmatprep.subr.mxu0 0.0
    %5953 = vmatpush2.msra.mxu0 0.0
    %5954 = vmatprep.subr.mxu0 0.0
    %5955 = vmatpush2.msra.mxu0 0.0
    %5956 = vmatprep.subr.mxu0 0.0
    %5957 = vmatpush2.msra.mxu0 0.0
    %5958 = vmatprep.subr.mxu0 0.0
    %5959 = vmatpush2.msra.mxu0 0.0
    %5960 = vmatprep.subr.mxu0 0.0
    %5961 = vmatpush2.msra.mxu0 0.0
    %5962 = vmatprep.subr.mxu0 0.0
    %5963 = vmatpush2.msra.mxu0 0.0
    %5964 = vmatprep.subr.mxu0 0.0
    %5965 = vmatpush2.msra.mxu0 0.0
    %5966 = vmatprep.subr.mxu0 0.0
    %5967 = vmatpush2.msra.mxu0 0.0
    %5968 = vmatprep.subr.mxu0 0.0
    %5969 = vmatpush2.msra.mxu0 0.0
    %5970 = vmatprep.subr.mxu0 0.0
    %5971 = vmatpush2.msra.mxu0 0.0
    %5972 = vmatprep.mubr.f32.mxu0 0.0
    %5973 = vmatmul.mubr.f32.gmra.mxu0 %v5766
    %v5974 = vpop.f32.mrf.mxu0
    %v5975 = vadd.f32 %v5172, %v5974
    %v5976 = vpop.f32.mrf.mxu0
    %5977 = vdwg.mxu0
    %v5979 = vrot.slane %v5835, 2
    %v5981 = vadd.f32 %v4858, %v5979
    %v5982 = vxor.u32 %v5981, 2147483648
    %v5983 = vmul.f32 %v5982, 1.442695
    %v5984 = vpow.pop %v5983
    %v5985 = vadd.f32 %v5984, 1.0
    %v5986 = vrcp.pop %v5985
    %v5987 = vmul.f32 1.0, %v5986
    %v5989 = vrot.slane %v5905, 2
    %v5991 = vadd.f32 %v4939, %v5989
    %v5992 = vxor.u32 %v5991, 2147483648
    %v5993 = vmul.f32 %v5992, 1.442695
    %v5994 = vpow.pop %v5993
    %v5995 = vadd.f32 %v5994, 1.0
    %v5996 = vrcp.pop %v5995
    %v5997 = vmul.f32 1.0, %v5996
    %v5999 = vrot.slane %v5975, 2
    %v6001 = vmul.f32 %v5987, %v5999
    %v6002 = vadd.f32 %v5020, %v6001
    %v6003 = vtanh.pop %v6002
    %v6005 = vrot.slane %v6003, 2
    %v6007 = vsub.f32 %v5762, %v6005
    %v6009 = vrot.slane %v6007, 6
    %v6011 = vmul.f32 %v5997, %v6009
    %v6012 = vadd.f32 %v6003, %v6011
    %6013 = vst.msk [vmem:[#allocation2] sm:$0xc0] %vm1494, %v6012
    %v6015 = vrot.slane %v6012, 6
    %v6016 = vsel %vm260, %v6015, 0
    %6018 = vmatprep.subr.mxu0 0.0
    %6019 = vmatpush1.msra.mxu0 0.0
    %6020 = vmatprep.subr.mxu0 0.0
    %6021 = vmatpush1.msra.mxu0 0.0
    %6022 = vmatprep.subr.mxu0 0.0
    %6023 = vmatpush1.msra.mxu0 0.0
    %6024 = vmatprep.subr.mxu0 0.0
    %6025 = vmatpush1.msra.mxu0 0.0
    %6026 = vmatprep.subr.mxu0 0.0
    %6027 = vmatpush1.msra.mxu0 0.0
    %6028 = vmatprep.subr.mxu0 0.0
    %6029 = vmatpush1.msra.mxu0 0.0
    %6030 = vmatprep.subr.mxu0 0.0
    %6031 = vmatpush1.msra.mxu0 0.0
    %6032 = vmatprep.subr.mxu0 0.0
    %6033 = vmatpush1.msra.mxu0 0.0
    %6034 = vmatprep.subr.mxu0 0.0
    %6035 = vmatpush1.msra.mxu0 0.0
    %6036 = vmatprep.subr.mxu0 0.0
    %6037 = vmatpush1.msra.mxu0 0.0
    %6038 = vmatprep.subr.mxu0 0.0
    %6039 = vmatpush1.msra.mxu0 0.0
    %6040 = vmatprep.subr.mxu0 0.0
    %6041 = vmatpush1.msra.mxu0 0.0
    %6042 = vmatprep.subr.mxu0 0.0
    %6043 = vmatpush1.msra.mxu0 0.0
    %6044 = vmatprep.subr.mxu0 0.0
    %6045 = vmatpush1.msra.mxu0 0.0
    %6046 = vmatprep.subr.mxu0 0.0
    %6047 = vmatpush1.msra.mxu0 %v4756
    %6048 = vmatprep.subr.mxu0 0.0
    %6049 = vmatpush1.msra.mxu0 %v4755
    %6050 = vmatprep.subr.mxu0 0.0
    %6051 = vmatpush2.msra.mxu0 0.0
    %6052 = vmatprep.subr.mxu0 0.0
    %6053 = vmatpush2.msra.mxu0 0.0
    %6054 = vmatprep.subr.mxu0 0.0
    %6055 = vmatpush2.msra.mxu0 0.0
    %6056 = vmatprep.subr.mxu0 0.0
    %6057 = vmatpush2.msra.mxu0 0.0
    %6058 = vmatprep.subr.mxu0 0.0
    %6059 = vmatpush2.msra.mxu0 0.0
    %6060 = vmatprep.subr.mxu0 0.0
    %6061 = vmatpush2.msra.mxu0 0.0
    %6062 = vmatprep.subr.mxu0 0.0
    %6063 = vmatpush2.msra.mxu0 0.0
    %6064 = vmatprep.subr.mxu0 0.0
    %6065 = vmatpush2.msra.mxu0 0.0
    %6066 = vmatprep.subr.mxu0 0.0
    %6067 = vmatpush2.msra.mxu0 0.0
    %6068 = vmatprep.subr.mxu0 0.0
    %6069 = vmatpush2.msra.mxu0 0.0
    %6070 = vmatprep.subr.mxu0 0.0
    %6071 = vmatpush2.msra.mxu0 0.0
    %6072 = vmatprep.subr.mxu0 0.0
    %6073 = vmatpush2.msra.mxu0 0.0
    %6074 = vmatprep.subr.mxu0 0.0
    %6075 = vmatpush2.msra.mxu0 0.0
    %6076 = vmatprep.subr.mxu0 0.0
    %6077 = vmatpush2.msra.mxu0 0.0
    %6078 = vmatprep.subr.mxu0 0.0
    %6079 = vmatpush2.msra.mxu0 0.0
    %6080 = vmatprep.subr.mxu0 0.0
    %6081 = vmatpush2.msra.mxu0 0.0
    %6082 = vmatprep.mubr.f32.mxu0 0.0
    %6083 = vmatmul.mubr.f32.gmra.mxu0 %v6016
    %v6084 = vpop.f32.mrf.mxu0
    %v6085 = vadd.f32 0.0, %v6084
    %v6086 = vpop.f32.mrf.mxu0
    %6087 = vdwg.mxu0
    %6088 = vmatprep.subr.mxu0 0.0
    %6089 = vmatpush1.msra.mxu0 0.0
    %6090 = vmatprep.subr.mxu0 0.0
    %6091 = vmatpush1.msra.mxu0 0.0
    %6092 = vmatprep.subr.mxu0 0.0
    %6093 = vmatpush1.msra.mxu0 0.0
    %6094 = vmatprep.subr.mxu0 0.0
    %6095 = vmatpush1.msra.mxu0 0.0
    %6096 = vmatprep.subr.mxu0 0.0
    %6097 = vmatpush1.msra.mxu0 0.0
    %6098 = vmatprep.subr.mxu0 0.0
    %6099 = vmatpush1.msra.mxu0 0.0
    %6100 = vmatprep.subr.mxu0 0.0
    %6101 = vmatpush1.msra.mxu0 0.0
    %6102 = vmatprep.subr.mxu0 0.0
    %6103 = vmatpush1.msra.mxu0 0.0
    %6104 = vmatprep.subr.mxu0 0.0
    %6105 = vmatpush1.msra.mxu0 0.0
    %6106 = vmatprep.subr.mxu0 0.0
    %6107 = vmatpush1.msra.mxu0 0.0
    %6108 = vmatprep.subr.mxu0 0.0
    %6109 = vmatpush1.msra.mxu0 0.0
    %6110 = vmatprep.subr.mxu0 0.0
    %6111 = vmatpush1.msra.mxu0 0.0
    %6112 = vmatprep.subr.mxu0 0.0
    %6113 = vmatpush1.msra.mxu0 0.0
    %6114 = vmatprep.subr.mxu0 0.0
    %6115 = vmatpush1.msra.mxu0 0.0
    %6116 = vmatprep.subr.mxu0 0.0
    %6117 = vmatpush1.msra.mxu0 %v4759
    %6118 = vmatprep.subr.mxu0 0.0
    %6119 = vmatpush1.msra.mxu0 %v4758
    %6120 = vmatprep.subr.mxu0 0.0
    %6121 = vmatpush2.msra.mxu0 0.0
    %6122 = vmatprep.subr.mxu0 0.0
    %6123 = vmatpush2.msra.mxu0 0.0
    %6124 = vmatprep.subr.mxu0 0.0
    %6125 = vmatpush2.msra.mxu0 0.0
    %6126 = vmatprep.subr.mxu0 0.0
    %6127 = vmatpush2.msra.mxu0 0.0
    %6128 = vmatprep.subr.mxu0 0.0
    %6129 = vmatpush2.msra.mxu0 0.0
    %6130 = vmatprep.subr.mxu0 0.0
    %6131 = vmatpush2.msra.mxu0 0.0
    %6132 = vmatprep.subr.mxu0 0.0
    %6133 = vmatpush2.msra.mxu0 0.0
    %6134 = vmatprep.subr.mxu0 0.0
    %6135 = vmatpush2.msra.mxu0 0.0
    %6136 = vmatprep.subr.mxu0 0.0
    %6137 = vmatpush2.msra.mxu0 0.0
    %6138 = vmatprep.subr.mxu0 0.0
    %6139 = vmatpush2.msra.mxu0 0.0
    %6140 = vmatprep.subr.mxu0 0.0
    %6141 = vmatpush2.msra.mxu0 0.0
    %6142 = vmatprep.subr.mxu0 0.0
    %6143 = vmatpush2.msra.mxu0 0.0
    %6144 = vmatprep.subr.mxu0 0.0
    %6145 = vmatpush2.msra.mxu0 0.0
    %6146 = vmatprep.subr.mxu0 0.0
    %6147 = vmatpush2.msra.mxu0 0.0
    %6148 = vmatprep.subr.mxu0 0.0
    %6149 = vmatpush2.msra.mxu0 0.0
    %6150 = vmatprep.subr.mxu0 0.0
    %6151 = vmatpush2.msra.mxu0 0.0
    %6152 = vmatprep.mubr.f32.mxu0 0.0
    %6153 = vmatmul.mubr.f32.gmra.mxu0 %v6016
    %v6154 = vpop.f32.mrf.mxu0
    %v6155 = vadd.f32 0.0, %v6154
    %v6156 = vpop.f32.mrf.mxu0
    %6157 = vdwg.mxu0
    %6158 = vmatprep.subr.mxu0 0.0
    %6159 = vmatpush1.msra.mxu0 0.0
    %6160 = vmatprep.subr.mxu0 0.0
    %6161 = vmatpush1.msra.mxu0 0.0
    %6162 = vmatprep.subr.mxu0 0.0
    %6163 = vmatpush1.msra.mxu0 0.0
    %6164 = vmatprep.subr.mxu0 0.0
    %6165 = vmatpush1.msra.mxu0 0.0
    %6166 = vmatprep.subr.mxu0 0.0
    %6167 = vmatpush1.msra.mxu0 0.0
    %6168 = vmatprep.subr.mxu0 0.0
    %6169 = vmatpush1.msra.mxu0 0.0
    %6170 = vmatprep.subr.mxu0 0.0
    %6171 = vmatpush1.msra.mxu0 0.0
    %6172 = vmatprep.subr.mxu0 0.0
    %6173 = vmatpush1.msra.mxu0 0.0
    %6174 = vmatprep.subr.mxu0 0.0
    %6175 = vmatpush1.msra.mxu0 0.0
    %6176 = vmatprep.subr.mxu0 0.0
    %6177 = vmatpush1.msra.mxu0 0.0
    %6178 = vmatprep.subr.mxu0 0.0
    %6179 = vmatpush1.msra.mxu0 0.0
    %6180 = vmatprep.subr.mxu0 0.0
    %6181 = vmatpush1.msra.mxu0 0.0
    %6182 = vmatprep.subr.mxu0 0.0
    %6183 = vmatpush1.msra.mxu0 0.0
    %6184 = vmatprep.subr.mxu0 0.0
    %6185 = vmatpush1.msra.mxu0 0.0
    %6186 = vmatprep.subr.mxu0 0.0
    %6187 = vmatpush1.msra.mxu0 %v4762
    %6188 = vmatprep.subr.mxu0 0.0
    %6189 = vmatpush1.msra.mxu0 %v4761
    %6190 = vmatprep.subr.mxu0 0.0
    %6191 = vmatpush2.msra.mxu0 0.0
    %6192 = vmatprep.subr.mxu0 0.0
    %6193 = vmatpush2.msra.mxu0 0.0
    %6194 = vmatprep.subr.mxu0 0.0
    %6195 = vmatpush2.msra.mxu0 0.0
    %6196 = vmatprep.subr.mxu0 0.0
    %6197 = vmatpush2.msra.mxu0 0.0
    %6198 = vmatprep.subr.mxu0 0.0
    %6199 = vmatpush2.msra.mxu0 0.0
    %6200 = vmatprep.subr.mxu0 0.0
    %6201 = vmatpush2.msra.mxu0 0.0
    %6202 = vmatprep.subr.mxu0 0.0
    %6203 = vmatpush2.msra.mxu0 0.0
    %6204 = vmatprep.subr.mxu0 0.0
    %6205 = vmatpush2.msra.mxu0 0.0
    %6206 = vmatprep.subr.mxu0 0.0
    %6207 = vmatpush2.msra.mxu0 0.0
    %6208 = vmatprep.subr.mxu0 0.0
    %6209 = vmatpush2.msra.mxu0 0.0
    %6210 = vmatprep.subr.mxu0 0.0
    %6211 = vmatpush2.msra.mxu0 0.0
    %6212 = vmatprep.subr.mxu0 0.0
    %6213 = vmatpush2.msra.mxu0 0.0
    %6214 = vmatprep.subr.mxu0 0.0
    %6215 = vmatpush2.msra.mxu0 0.0
    %6216 = vmatprep.subr.mxu0 0.0
    %6217 = vmatpush2.msra.mxu0 0.0
    %6218 = vmatprep.subr.mxu0 0.0
    %6219 = vmatpush2.msra.mxu0 0.0
    %6220 = vmatprep.subr.mxu0 0.0
    %6221 = vmatpush2.msra.mxu0 0.0
    %6222 = vmatprep.mubr.f32.mxu0 0.0
    %6223 = vmatmul.mubr.f32.gmra.mxu0 %v6016
    %v6224 = vpop.f32.mrf.mxu0
    %v6225 = vadd.f32 %v5172, %v6224
    %v6226 = vpop.f32.mrf.mxu0
    %6227 = vdwg.mxu0
    %v6228 = vadd.f32 %v4863, %v6085
    %v6229 = vxor.u32 %v6228, 2147483648
    %v6230 = vmul.f32 %v6229, 1.442695
    %v6231 = vpow.pop %v6230
    %v6232 = vadd.f32 %v6231, 1.0
    %v6233 = vrcp.pop %v6232
    %v6234 = vmul.f32 1.0, %v6233
    %v6235 = vadd.f32 %v4944, %v6155
    %v6236 = vxor.u32 %v6235, 2147483648
    %v6237 = vmul.f32 %v6236, 1.442695
    %v6238 = vpow.pop %v6237
    %v6239 = vadd.f32 %v6238, 1.0
    %v6240 = vrcp.pop %v6239
    %v6241 = vmul.f32 1.0, %v6240
    %v6242 = vmul.f32 %v6234, %v6225
    %v6243 = vadd.f32 %v5025, %v6242
    %v6244 = vtanh.pop %v6243
    %v6246 = vrot.slane %v6244, 2
    %v6248 = vsub.f32 %v6012, %v6246
    %v6250 = vrot.slane %v6248, 6
    %v6252 = vmul.f32 %v6241, %v6250
    %v6253 = vadd.f32 %v6244, %v6252
    %6254 = vst.msk [vmem:[#allocation2 + $0x8] sm:$0x3] %vm193, %v6253
    %v6256 = vsel %vm260, %v6253, 0
    %6258 = vmatprep.subr.mxu0 0.0
    %6259 = vmatpush1.msra.mxu0 0.0
    %6260 = vmatprep.subr.mxu0 0.0
    %6261 = vmatpush1.msra.mxu0 0.0
    %6262 = vmatprep.subr.mxu0 0.0
    %6263 = vmatpush1.msra.mxu0 0.0
    %6264 = vmatprep.subr.mxu0 0.0
    %6265 = vmatpush1.msra.mxu0 0.0
    %6266 = vmatprep.subr.mxu0 0.0
    %6267 = vmatpush1.msra.mxu0 0.0
    %6268 = vmatprep.subr.mxu0 0.0
    %6269 = vmatpush1.msra.mxu0 0.0
    %6270 = vmatprep.subr.mxu0 0.0
    %6271 = vmatpush1.msra.mxu0 0.0
    %6272 = vmatprep.subr.mxu0 0.0
    %6273 = vmatpush1.msra.mxu0 0.0
    %6274 = vmatprep.subr.mxu0 0.0
    %6275 = vmatpush1.msra.mxu0 0.0
    %6276 = vmatprep.subr.mxu0 0.0
    %6277 = vmatpush1.msra.mxu0 0.0
    %6278 = vmatprep.subr.mxu0 0.0
    %6279 = vmatpush1.msra.mxu0 0.0
    %6280 = vmatprep.subr.mxu0 0.0
    %6281 = vmatpush1.msra.mxu0 0.0
    %6282 = vmatprep.subr.mxu0 0.0
    %6283 = vmatpush1.msra.mxu0 0.0
    %6284 = vmatprep.subr.mxu0 0.0
    %6285 = vmatpush1.msra.mxu0 0.0
    %6286 = vmatprep.subr.mxu0 0.0
    %6287 = vmatpush1.msra.mxu0 %v4756
    %6288 = vmatprep.subr.mxu0 0.0
    %6289 = vmatpush1.msra.mxu0 %v4755
    %6290 = vmatprep.subr.mxu0 0.0
    %6291 = vmatpush2.msra.mxu0 0.0
    %6292 = vmatprep.subr.mxu0 0.0
    %6293 = vmatpush2.msra.mxu0 0.0
    %6294 = vmatprep.subr.mxu0 0.0
    %6295 = vmatpush2.msra.mxu0 0.0
    %6296 = vmatprep.subr.mxu0 0.0
    %6297 = vmatpush2.msra.mxu0 0.0
    %6298 = vmatprep.subr.mxu0 0.0
    %6299 = vmatpush2.msra.mxu0 0.0
    %6300 = vmatprep.subr.mxu0 0.0
    %6301 = vmatpush2.msra.mxu0 0.0
    %6302 = vmatprep.subr.mxu0 0.0
    %6303 = vmatpush2.msra.mxu0 0.0
    %6304 = vmatprep.subr.mxu0 0.0
    %6305 = vmatpush2.msra.mxu0 0.0
    %6306 = vmatprep.subr.mxu0 0.0
    %6307 = vmatpush2.msra.mxu0 0.0
    %6308 = vmatprep.subr.mxu0 0.0
    %6309 = vmatpush2.msra.mxu0 0.0
    %6310 = vmatprep.subr.mxu0 0.0
    %6311 = vmatpush2.msra.mxu0 0.0
    %6312 = vmatprep.subr.mxu0 0.0
    %6313 = vmatpush2.msra.mxu0 0.0
    %6314 = vmatprep.subr.mxu0 0.0
    %6315 = vmatpush2.msra.mxu0 0.0
    %6316 = vmatprep.subr.mxu0 0.0
    %6317 = vmatpush2.msra.mxu0 0.0
    %6318 = vmatprep.subr.mxu0 0.0
    %6319 = vmatpush2.msra.mxu0 0.0
    %6320 = vmatprep.subr.mxu0 0.0
    %6321 = vmatpush2.msra.mxu0 0.0
    %6322 = vmatprep.mubr.f32.mxu0 0.0
    %6323 = vmatmul.mubr.f32.gmra.mxu0 %v6256
    %v6324 = vpop.f32.mrf.mxu0
    %v6325 = vadd.f32 0.0, %v6324
    %v6326 = vpop.f32.mrf.mxu0
    %6327 = vdwg.mxu0
    %6328 = vmatprep.subr.mxu0 0.0
    %6329 = vmatpush1.msra.mxu0 0.0
    %6330 = vmatprep.subr.mxu0 0.0
    %6331 = vmatpush1.msra.mxu0 0.0
    %6332 = vmatprep.subr.mxu0 0.0
    %6333 = vmatpush1.msra.mxu0 0.0
    %6334 = vmatprep.subr.mxu0 0.0
    %6335 = vmatpush1.msra.mxu0 0.0
    %6336 = vmatprep.subr.mxu0 0.0
    %6337 = vmatpush1.msra.mxu0 0.0
    %6338 = vmatprep.subr.mxu0 0.0
    %6339 = vmatpush1.msra.mxu0 0.0
    %6340 = vmatprep.subr.mxu0 0.0
    %6341 = vmatpush1.msra.mxu0 0.0
    %6342 = vmatprep.subr.mxu0 0.0
    %6343 = vmatpush1.msra.mxu0 0.0
    %6344 = vmatprep.subr.mxu0 0.0
    %6345 = vmatpush1.msra.mxu0 0.0
    %6346 = vmatprep.subr.mxu0 0.0
    %6347 = vmatpush1.msra.mxu0 0.0
    %6348 = vmatprep.subr.mxu0 0.0
    %6349 = vmatpush1.msra.mxu0 0.0
    %6350 = vmatprep.subr.mxu0 0.0
    %6351 = vmatpush1.msra.mxu0 0.0
    %6352 = vmatprep.subr.mxu0 0.0
    %6353 = vmatpush1.msra.mxu0 0.0
    %6354 = vmatprep.subr.mxu0 0.0
    %6355 = vmatpush1.msra.mxu0 0.0
    %6356 = vmatprep.subr.mxu0 0.0
    %6357 = vmatpush1.msra.mxu0 %v4759
    %6358 = vmatprep.subr.mxu0 0.0
    %6359 = vmatpush1.msra.mxu0 %v4758
    %6360 = vmatprep.subr.mxu0 0.0
    %6361 = vmatpush2.msra.mxu0 0.0
    %6362 = vmatprep.subr.mxu0 0.0
    %6363 = vmatpush2.msra.mxu0 0.0
    %6364 = vmatprep.subr.mxu0 0.0
    %6365 = vmatpush2.msra.mxu0 0.0
    %6366 = vmatprep.subr.mxu0 0.0
    %6367 = vmatpush2.msra.mxu0 0.0
    %6368 = vmatprep.subr.mxu0 0.0
    %6369 = vmatpush2.msra.mxu0 0.0
    %6370 = vmatprep.subr.mxu0 0.0
    %6371 = vmatpush2.msra.mxu0 0.0
    %6372 = vmatprep.subr.mxu0 0.0
    %6373 = vmatpush2.msra.mxu0 0.0
    %6374 = vmatprep.subr.mxu0 0.0
    %6375 = vmatpush2.msra.mxu0 0.0
    %6376 = vmatprep.subr.mxu0 0.0
    %6377 = vmatpush2.msra.mxu0 0.0
    %6378 = vmatprep.subr.mxu0 0.0
    %6379 = vmatpush2.msra.mxu0 0.0
    %6380 = vmatprep.subr.mxu0 0.0
    %6381 = vmatpush2.msra.mxu0 0.0
    %6382 = vmatprep.subr.mxu0 0.0
    %6383 = vmatpush2.msra.mxu0 0.0
    %6384 = vmatprep.subr.mxu0 0.0
    %6385 = vmatpush2.msra.mxu0 0.0
    %6386 = vmatprep.subr.mxu0 0.0
    %6387 = vmatpush2.msra.mxu0 0.0
    %6388 = vmatprep.subr.mxu0 0.0
    %6389 = vmatpush2.msra.mxu0 0.0
    %6390 = vmatprep.subr.mxu0 0.0
    %6391 = vmatpush2.msra.mxu0 0.0
    %6392 = vmatprep.mubr.f32.mxu0 0.0
    %6393 = vmatmul.mubr.f32.gmra.mxu0 %v6256
    %v6394 = vpop.f32.mrf.mxu0
    %v6395 = vadd.f32 0.0, %v6394
    %v6396 = vpop.f32.mrf.mxu0
    %6397 = vdwg.mxu0
    %6398 = vmatprep.subr.mxu0 0.0
    %6399 = vmatpush1.msra.mxu0 0.0
    %6400 = vmatprep.subr.mxu0 0.0
    %6401 = vmatpush1.msra.mxu0 0.0
    %6402 = vmatprep.subr.mxu0 0.0
    %6403 = vmatpush1.msra.mxu0 0.0
    %6404 = vmatprep.subr.mxu0 0.0
    %6405 = vmatpush1.msra.mxu0 0.0
    %6406 = vmatprep.subr.mxu0 0.0
    %6407 = vmatpush1.msra.mxu0 0.0
    %6408 = vmatprep.subr.mxu0 0.0
    %6409 = vmatpush1.msra.mxu0 0.0
    %6410 = vmatprep.subr.mxu0 0.0
    %6411 = vmatpush1.msra.mxu0 0.0
    %6412 = vmatprep.subr.mxu0 0.0
    %6413 = vmatpush1.msra.mxu0 0.0
    %6414 = vmatprep.subr.mxu0 0.0
    %6415 = vmatpush1.msra.mxu0 0.0
    %6416 = vmatprep.subr.mxu0 0.0
    %6417 = vmatpush1.msra.mxu0 0.0
    %6418 = vmatprep.subr.mxu0 0.0
    %6419 = vmatpush1.msra.mxu0 0.0
    %6420 = vmatprep.subr.mxu0 0.0
    %6421 = vmatpush1.msra.mxu0 0.0
    %6422 = vmatprep.subr.mxu0 0.0
    %6423 = vmatpush1.msra.mxu0 0.0
    %6424 = vmatprep.subr.mxu0 0.0
    %6425 = vmatpush1.msra.mxu0 0.0
    %6426 = vmatprep.subr.mxu0 0.0
    %6427 = vmatpush1.msra.mxu0 %v4762
    %6428 = vmatprep.subr.mxu0 0.0
    %6429 = vmatpush1.msra.mxu0 %v4761
    %6430 = vmatprep.subr.mxu0 0.0
    %6431 = vmatpush2.msra.mxu0 0.0
    %6432 = vmatprep.subr.mxu0 0.0
    %6433 = vmatpush2.msra.mxu0 0.0
    %6434 = vmatprep.subr.mxu0 0.0
    %6435 = vmatpush2.msra.mxu0 0.0
    %6436 = vmatprep.subr.mxu0 0.0
    %6437 = vmatpush2.msra.mxu0 0.0
    %6438 = vmatprep.subr.mxu0 0.0
    %6439 = vmatpush2.msra.mxu0 0.0
    %6440 = vmatprep.subr.mxu0 0.0
    %6441 = vmatpush2.msra.mxu0 0.0
    %6442 = vmatprep.subr.mxu0 0.0
    %6443 = vmatpush2.msra.mxu0 0.0
    %6444 = vmatprep.subr.mxu0 0.0
    %6445 = vmatpush2.msra.mxu0 0.0
    %6446 = vmatprep.subr.mxu0 0.0
    %6447 = vmatpush2.msra.mxu0 0.0
    %6448 = vmatprep.subr.mxu0 0.0
    %6449 = vmatpush2.msra.mxu0 0.0
    %6450 = vmatprep.subr.mxu0 0.0
    %6451 = vmatpush2.msra.mxu0 0.0
    %6452 = vmatprep.subr.mxu0 0.0
    %6453 = vmatpush2.msra.mxu0 0.0
    %6454 = vmatprep.subr.mxu0 0.0
    %6455 = vmatpush2.msra.mxu0 0.0
    %6456 = vmatprep.subr.mxu0 0.0
    %6457 = vmatpush2.msra.mxu0 0.0
    %6458 = vmatprep.subr.mxu0 0.0
    %6459 = vmatpush2.msra.mxu0 0.0
    %6460 = vmatprep.subr.mxu0 0.0
    %6461 = vmatpush2.msra.mxu0 0.0
    %6462 = vmatprep.mubr.f32.mxu0 0.0
    %6463 = vmatmul.mubr.f32.gmra.mxu0 %v6256
    %v6464 = vpop.f32.mrf.mxu0
    %v6465 = vadd.f32 %v5172, %v6464
    %v6466 = vpop.f32.mrf.mxu0
    %6467 = vdwg.mxu0
    %v6469 = vrot.slane %v6325, 6
    %v6471 = vadd.f32 %v4863, %v6469
    %v6472 = vxor.u32 %v6471, 2147483648
    %v6473 = vmul.f32 %v6472, 1.442695
    %v6474 = vpow.pop %v6473
    %v6475 = vadd.f32 %v6474, 1.0
    %v6476 = vrcp.pop %v6475
    %v6477 = vmul.f32 1.0, %v6476
    %v6479 = vrot.slane %v6395, 6
    %v6481 = vadd.f32 %v4944, %v6479
    %v6482 = vxor.u32 %v6481, 2147483648
    %v6483 = vmul.f32 %v6482, 1.442695
    %v6484 = vpow.pop %v6483
    %v6485 = vadd.f32 %v6484, 1.0
    %v6486 = vrcp.pop %v6485
    %v6487 = vmul.f32 1.0, %v6486
    %v6489 = vrot.slane %v6465, 6
    %v6491 = vmul.f32 %v6477, %v6489
    %v6492 = vadd.f32 %v5025, %v6491
    %v6493 = vtanh.pop %v6492
    %v6495 = vrot.slane %v6493, 2
    %v6497 = vsub.f32 %v6253, %v6495
    %v6499 = vrot.slane %v6497, 6
    %v6501 = vmul.f32 %v6487, %v6499
    %v6502 = vadd.f32 %v6493, %v6501
    %6503 = vst.msk [vmem:[#allocation2 + $0x8] sm:$0xc] %vm992, %v6502
    %v6505 = vrot.slane %v6502, 2
    %v6506 = vsel %vm260, %v6505, 0
    %6508 = vmatprep.subr.mxu0 0.0
    %6509 = vmatpush1.msra.mxu0 0.0
    %6510 = vmatprep.subr.mxu0 0.0
    %6511 = vmatpush1.msra.mxu0 0.0
    %6512 = vmatprep.subr.mxu0 0.0
    %6513 = vmatpush1.msra.mxu0 0.0
    %6514 = vmatprep.subr.mxu0 0.0
    %6515 = vmatpush1.msra.mxu0 0.0
    %6516 = vmatprep.subr.mxu0 0.0
    %6517 = vmatpush1.msra.mxu0 0.0
    %6518 = vmatprep.subr.mxu0 0.0
    %6519 = vmatpush1.msra.mxu0 0.0
    %6520 = vmatprep.subr.mxu0 0.0
    %6521 = vmatpush1.msra.mxu0 0.0
    %6522 = vmatprep.subr.mxu0 0.0
    %6523 = vmatpush1.msra.mxu0 0.0
    %6524 = vmatprep.subr.mxu0 0.0
    %6525 = vmatpush1.msra.mxu0 0.0
    %6526 = vmatprep.subr.mxu0 0.0
    %6527 = vmatpush1.msra.mxu0 0.0
    %6528 = vmatprep.subr.mxu0 0.0
    %6529 = vmatpush1.msra.mxu0 0.0
    %6530 = vmatprep.subr.mxu0 0.0
    %6531 = vmatpush1.msra.mxu0 0.0
    %6532 = vmatprep.subr.mxu0 0.0
    %6533 = vmatpush1.msra.mxu0 0.0
    %6534 = vmatprep.subr.mxu0 0.0
    %6535 = vmatpush1.msra.mxu0 0.0
    %6536 = vmatprep.subr.mxu0 0.0
    %6537 = vmatpush1.msra.mxu0 %v4756
    %6538 = vmatprep.subr.mxu0 0.0
    %6539 = vmatpush1.msra.mxu0 %v4755
    %6540 = vmatprep.subr.mxu0 0.0
    %6541 = vmatpush2.msra.mxu0 0.0
    %6542 = vmatprep.subr.mxu0 0.0
    %6543 = vmatpush2.msra.mxu0 0.0
    %6544 = vmatprep.subr.mxu0 0.0
    %6545 = vmatpush2.msra.mxu0 0.0
    %6546 = vmatprep.subr.mxu0 0.0
    %6547 = vmatpush2.msra.mxu0 0.0
    %6548 = vmatprep.subr.mxu0 0.0
    %6549 = vmatpush2.msra.mxu0 0.0
    %6550 = vmatprep.subr.mxu0 0.0
    %6551 = vmatpush2.msra.mxu0 0.0
    %6552 = vmatprep.subr.mxu0 0.0
    %6553 = vmatpush2.msra.mxu0 0.0
    %6554 = vmatprep.subr.mxu0 0.0
    %6555 = vmatpush2.msra.mxu0 0.0
    %6556 = vmatprep.subr.mxu0 0.0
    %6557 = vmatpush2.msra.mxu0 0.0
    %6558 = vmatprep.subr.mxu0 0.0
    %6559 = vmatpush2.msra.mxu0 0.0
    %6560 = vmatprep.subr.mxu0 0.0
    %6561 = vmatpush2.msra.mxu0 0.0
    %6562 = vmatprep.subr.mxu0 0.0
    %6563 = vmatpush2.msra.mxu0 0.0
    %6564 = vmatprep.subr.mxu0 0.0
    %6565 = vmatpush2.msra.mxu0 0.0
    %6566 = vmatprep.subr.mxu0 0.0
    %6567 = vmatpush2.msra.mxu0 0.0
    %6568 = vmatprep.subr.mxu0 0.0
    %6569 = vmatpush2.msra.mxu0 0.0
    %6570 = vmatprep.subr.mxu0 0.0
    %6571 = vmatpush2.msra.mxu0 0.0
    %6572 = vmatprep.mubr.f32.mxu0 0.0
    %6573 = vmatmul.mubr.f32.gmra.mxu0 %v6506
    %v6574 = vpop.f32.mrf.mxu0
    %v6575 = vadd.f32 0.0, %v6574
    %v6576 = vpop.f32.mrf.mxu0
    %6577 = vdwg.mxu0
    %6578 = vmatprep.subr.mxu0 0.0
    %6579 = vmatpush1.msra.mxu0 0.0
    %6580 = vmatprep.subr.mxu0 0.0
    %6581 = vmatpush1.msra.mxu0 0.0
    %6582 = vmatprep.subr.mxu0 0.0
    %6583 = vmatpush1.msra.mxu0 0.0
    %6584 = vmatprep.subr.mxu0 0.0
    %6585 = vmatpush1.msra.mxu0 0.0
    %6586 = vmatprep.subr.mxu0 0.0
    %6587 = vmatpush1.msra.mxu0 0.0
    %6588 = vmatprep.subr.mxu0 0.0
    %6589 = vmatpush1.msra.mxu0 0.0
    %6590 = vmatprep.subr.mxu0 0.0
    %6591 = vmatpush1.msra.mxu0 0.0
    %6592 = vmatprep.subr.mxu0 0.0
    %6593 = vmatpush1.msra.mxu0 0.0
    %6594 = vmatprep.subr.mxu0 0.0
    %6595 = vmatpush1.msra.mxu0 0.0
    %6596 = vmatprep.subr.mxu0 0.0
    %6597 = vmatpush1.msra.mxu0 0.0
    %6598 = vmatprep.subr.mxu0 0.0
    %6599 = vmatpush1.msra.mxu0 0.0
    %6600 = vmatprep.subr.mxu0 0.0
    %6601 = vmatpush1.msra.mxu0 0.0
    %6602 = vmatprep.subr.mxu0 0.0
    %6603 = vmatpush1.msra.mxu0 0.0
    %6604 = vmatprep.subr.mxu0 0.0
    %6605 = vmatpush1.msra.mxu0 0.0
    %6606 = vmatprep.subr.mxu0 0.0
    %6607 = vmatpush1.msra.mxu0 %v4759
    %6608 = vmatprep.subr.mxu0 0.0
    %6609 = vmatpush1.msra.mxu0 %v4758
    %6610 = vmatprep.subr.mxu0 0.0
    %6611 = vmatpush2.msra.mxu0 0.0
    %6612 = vmatprep.subr.mxu0 0.0
    %6613 = vmatpush2.msra.mxu0 0.0
    %6614 = vmatprep.subr.mxu0 0.0
    %6615 = vmatpush2.msra.mxu0 0.0
    %6616 = vmatprep.subr.mxu0 0.0
    %6617 = vmatpush2.msra.mxu0 0.0
    %6618 = vmatprep.subr.mxu0 0.0
    %6619 = vmatpush2.msra.mxu0 0.0
    %6620 = vmatprep.subr.mxu0 0.0
    %6621 = vmatpush2.msra.mxu0 0.0
    %6622 = vmatprep.subr.mxu0 0.0
    %6623 = vmatpush2.msra.mxu0 0.0
    %6624 = vmatprep.subr.mxu0 0.0
    %6625 = vmatpush2.msra.mxu0 0.0
    %6626 = vmatprep.subr.mxu0 0.0
    %6627 = vmatpush2.msra.mxu0 0.0
    %6628 = vmatprep.subr.mxu0 0.0
    %6629 = vmatpush2.msra.mxu0 0.0
    %6630 = vmatprep.subr.mxu0 0.0
    %6631 = vmatpush2.msra.mxu0 0.0
    %6632 = vmatprep.subr.mxu0 0.0
    %6633 = vmatpush2.msra.mxu0 0.0
    %6634 = vmatprep.subr.mxu0 0.0
    %6635 = vmatpush2.msra.mxu0 0.0
    %6636 = vmatprep.subr.mxu0 0.0
    %6637 = vmatpush2.msra.mxu0 0.0
    %6638 = vmatprep.subr.mxu0 0.0
    %6639 = vmatpush2.msra.mxu0 0.0
    %6640 = vmatprep.subr.mxu0 0.0
    %6641 = vmatpush2.msra.mxu0 0.0
    %6642 = vmatprep.mubr.f32.mxu0 0.0
    %6643 = vmatmul.mubr.f32.gmra.mxu0 %v6506
    %v6644 = vpop.f32.mrf.mxu0
    %v6645 = vadd.f32 0.0, %v6644
    %v6646 = vpop.f32.mrf.mxu0
    %6647 = vdwg.mxu0
    %6648 = vmatprep.subr.mxu0 0.0
    %6649 = vmatpush1.msra.mxu0 0.0
    %6650 = vmatprep.subr.mxu0 0.0
    %6651 = vmatpush1.msra.mxu0 0.0
    %6652 = vmatprep.subr.mxu0 0.0
    %6653 = vmatpush1.msra.mxu0 0.0
    %6654 = vmatprep.subr.mxu0 0.0
    %6655 = vmatpush1.msra.mxu0 0.0
    %6656 = vmatprep.subr.mxu0 0.0
    %6657 = vmatpush1.msra.mxu0 0.0
    %6658 = vmatprep.subr.mxu0 0.0
    %6659 = vmatpush1.msra.mxu0 0.0
    %6660 = vmatprep.subr.mxu0 0.0
    %6661 = vmatpush1.msra.mxu0 0.0
    %6662 = vmatprep.subr.mxu0 0.0
    %6663 = vmatpush1.msra.mxu0 0.0
    %6664 = vmatprep.subr.mxu0 0.0
    %6665 = vmatpush1.msra.mxu0 0.0
    %6666 = vmatprep.subr.mxu0 0.0
    %6667 = vmatpush1.msra.mxu0 0.0
    %6668 = vmatprep.subr.mxu0 0.0
    %6669 = vmatpush1.msra.mxu0 0.0
    %6670 = vmatprep.subr.mxu0 0.0
    %6671 = vmatpush1.msra.mxu0 0.0
    %6672 = vmatprep.subr.mxu0 0.0
    %6673 = vmatpush1.msra.mxu0 0.0
    %6674 = vmatprep.subr.mxu0 0.0
    %6675 = vmatpush1.msra.mxu0 0.0
    %6676 = vmatprep.subr.mxu0 0.0
    %6677 = vmatpush1.msra.mxu0 %v4762
    %6678 = vmatprep.subr.mxu0 0.0
    %6679 = vmatpush1.msra.mxu0 %v4761
    %6680 = vmatprep.subr.mxu0 0.0
    %6681 = vmatpush2.msra.mxu0 0.0
    %6682 = vmatprep.subr.mxu0 0.0
    %6683 = vmatpush2.msra.mxu0 0.0
    %6684 = vmatprep.subr.mxu0 0.0
    %6685 = vmatpush2.msra.mxu0 0.0
    %6686 = vmatprep.subr.mxu0 0.0
    %6687 = vmatpush2.msra.mxu0 0.0
    %6688 = vmatprep.subr.mxu0 0.0
    %6689 = vmatpush2.msra.mxu0 0.0
    %6690 = vmatprep.subr.mxu0 0.0
    %6691 = vmatpush2.msra.mxu0 0.0
    %6692 = vmatprep.subr.mxu0 0.0
    %6693 = vmatpush2.msra.mxu0 0.0
    %6694 = vmatprep.subr.mxu0 0.0
    %6695 = vmatpush2.msra.mxu0 0.0
    %6696 = vmatprep.subr.mxu0 0.0
    %6697 = vmatpush2.msra.mxu0 0.0
    %6698 = vmatprep.subr.mxu0 0.0
    %6699 = vmatpush2.msra.mxu0 0.0
    %6700 = vmatprep.subr.mxu0 0.0
    %6701 = vmatpush2.msra.mxu0 0.0
    %6702 = vmatprep.subr.mxu0 0.0
    %6703 = vmatpush2.msra.mxu0 0.0
    %6704 = vmatprep.subr.mxu0 0.0
    %6705 = vmatpush2.msra.mxu0 0.0
    %6706 = vmatprep.subr.mxu0 0.0
    %6707 = vmatpush2.msra.mxu0 0.0
    %6708 = vmatprep.subr.mxu0 0.0
    %6709 = vmatpush2.msra.mxu0 0.0
    %6710 = vmatprep.subr.mxu0 0.0
    %6711 = vmatpush2.msra.mxu0 0.0
    %6712 = vmatprep.mubr.f32.mxu0 0.0
    %6713 = vmatmul.mubr.f32.gmra.mxu0 %v6506
    %v6714 = vpop.f32.mrf.mxu0
    %v6715 = vadd.f32 %v5172, %v6714
    %v6716 = vpop.f32.mrf.mxu0
    %6717 = vdwg.mxu0
    %v6719 = vrot.slane %v6575, 4
    %v6721 = vadd.f32 %v4863, %v6719
    %v6722 = vxor.u32 %v6721, 2147483648
    %v6723 = vmul.f32 %v6722, 1.442695
    %v6724 = vpow.pop %v6723
    %v6725 = vadd.f32 %v6724, 1.0
    %v6726 = vrcp.pop %v6725
    %v6727 = vmul.f32 1.0, %v6726
    %v6729 = vrot.slane %v6645, 4
    %v6731 = vadd.f32 %v4944, %v6729
    %v6732 = vxor.u32 %v6731, 2147483648
    %v6733 = vmul.f32 %v6732, 1.442695
    %v6734 = vpow.pop %v6733
    %v6735 = vadd.f32 %v6734, 1.0
    %v6736 = vrcp.pop %v6735
    %v6737 = vmul.f32 1.0, %v6736
    %v6739 = vrot.slane %v6715, 4
    %v6741 = vmul.f32 %v6727, %v6739
    %v6742 = vadd.f32 %v5025, %v6741
    %v6743 = vtanh.pop %v6742
    %v6745 = vrot.slane %v6743, 2
    %v6747 = vsub.f32 %v6502, %v6745
    %v6749 = vrot.slane %v6747, 6
    %v6751 = vmul.f32 %v6737, %v6749
    %v6752 = vadd.f32 %v6743, %v6751
    %6753 = vst.msk [vmem:[#allocation2 + $0x8] sm:$0x30] %vm1243, %v6752
    %v6755 = vrot.slane %v6752, 4
    %v6756 = vsel %vm260, %v6755, 0
    %6758 = vmatprep.subr.mxu0 0.0
    %6759 = vmatpush1.msra.mxu0 0.0
    %6760 = vmatprep.subr.mxu0 0.0
    %6761 = vmatpush1.msra.mxu0 0.0
    %6762 = vmatprep.subr.mxu0 0.0
    %6763 = vmatpush1.msra.mxu0 0.0
    %6764 = vmatprep.subr.mxu0 0.0
    %6765 = vmatpush1.msra.mxu0 0.0
    %6766 = vmatprep.subr.mxu0 0.0
    %6767 = vmatpush1.msra.mxu0 0.0
    %6768 = vmatprep.subr.mxu0 0.0
    %6769 = vmatpush1.msra.mxu0 0.0
    %6770 = vmatprep.subr.mxu0 0.0
    %6771 = vmatpush1.msra.mxu0 0.0
    %6772 = vmatprep.subr.mxu0 0.0
    %6773 = vmatpush1.msra.mxu0 0.0
    %6774 = vmatprep.subr.mxu0 0.0
    %6775 = vmatpush1.msra.mxu0 0.0
    %6776 = vmatprep.subr.mxu0 0.0
    %6777 = vmatpush1.msra.mxu0 0.0
    %6778 = vmatprep.subr.mxu0 0.0
    %6779 = vmatpush1.msra.mxu0 0.0
    %6780 = vmatprep.subr.mxu0 0.0
    %6781 = vmatpush1.msra.mxu0 0.0
    %6782 = vmatprep.subr.mxu0 0.0
    %6783 = vmatpush1.msra.mxu0 0.0
    %6784 = vmatprep.subr.mxu0 0.0
    %6785 = vmatpush1.msra.mxu0 0.0
    %6786 = vmatprep.subr.mxu0 0.0
    %6787 = vmatpush1.msra.mxu0 %v4756
    %6788 = vmatprep.subr.mxu0 0.0
    %6789 = vmatpush1.msra.mxu0 %v4755
    %6790 = vmatprep.subr.mxu0 0.0
    %6791 = vmatpush2.msra.mxu0 0.0
    %6792 = vmatprep.subr.mxu0 0.0
    %6793 = vmatpush2.msra.mxu0 0.0
    %6794 = vmatprep.subr.mxu0 0.0
    %6795 = vmatpush2.msra.mxu0 0.0
    %6796 = vmatprep.subr.mxu0 0.0
    %6797 = vmatpush2.msra.mxu0 0.0
    %6798 = vmatprep.subr.mxu0 0.0
    %6799 = vmatpush2.msra.mxu0 0.0
    %6800 = vmatprep.subr.mxu0 0.0
    %6801 = vmatpush2.msra.mxu0 0.0
    %6802 = vmatprep.subr.mxu0 0.0
    %6803 = vmatpush2.msra.mxu0 0.0
    %6804 = vmatprep.subr.mxu0 0.0
    %6805 = vmatpush2.msra.mxu0 0.0
    %6806 = vmatprep.subr.mxu0 0.0
    %6807 = vmatpush2.msra.mxu0 0.0
    %6808 = vmatprep.subr.mxu0 0.0
    %6809 = vmatpush2.msra.mxu0 0.0
    %6810 = vmatprep.subr.mxu0 0.0
    %6811 = vmatpush2.msra.mxu0 0.0
    %6812 = vmatprep.subr.mxu0 0.0
    %6813 = vmatpush2.msra.mxu0 0.0
    %6814 = vmatprep.subr.mxu0 0.0
    %6815 = vmatpush2.msra.mxu0 0.0
    %6816 = vmatprep.subr.mxu0 0.0
    %6817 = vmatpush2.msra.mxu0 0.0
    %6818 = vmatprep.subr.mxu0 0.0
    %6819 = vmatpush2.msra.mxu0 0.0
    %6820 = vmatprep.subr.mxu0 0.0
    %6821 = vmatpush2.msra.mxu0 0.0
    %6822 = vmatprep.mubr.f32.mxu0 0.0
    %6823 = vmatmul.mubr.f32.gmra.mxu0 %v6756
    %v6824 = vpop.f32.mrf.mxu0
    %v6825 = vadd.f32 0.0, %v6824
    %v6826 = vpop.f32.mrf.mxu0
    %6827 = vdwg.mxu0
    %6828 = vmatprep.subr.mxu0 0.0
    %6829 = vmatpush1.msra.mxu0 0.0
    %6830 = vmatprep.subr.mxu0 0.0
    %6831 = vmatpush1.msra.mxu0 0.0
    %6832 = vmatprep.subr.mxu0 0.0
    %6833 = vmatpush1.msra.mxu0 0.0
    %6834 = vmatprep.subr.mxu0 0.0
    %6835 = vmatpush1.msra.mxu0 0.0
    %6836 = vmatprep.subr.mxu0 0.0
    %6837 = vmatpush1.msra.mxu0 0.0
    %6838 = vmatprep.subr.mxu0 0.0
    %6839 = vmatpush1.msra.mxu0 0.0
    %6840 = vmatprep.subr.mxu0 0.0
    %6841 = vmatpush1.msra.mxu0 0.0
    %6842 = vmatprep.subr.mxu0 0.0
    %6843 = vmatpush1.msra.mxu0 0.0
    %6844 = vmatprep.subr.mxu0 0.0
    %6845 = vmatpush1.msra.mxu0 0.0
    %6846 = vmatprep.subr.mxu0 0.0
    %6847 = vmatpush1.msra.mxu0 0.0
    %6848 = vmatprep.subr.mxu0 0.0
    %6849 = vmatpush1.msra.mxu0 0.0
    %6850 = vmatprep.subr.mxu0 0.0
    %6851 = vmatpush1.msra.mxu0 0.0
    %6852 = vmatprep.subr.mxu0 0.0
    %6853 = vmatpush1.msra.mxu0 0.0
    %6854 = vmatprep.subr.mxu0 0.0
    %6855 = vmatpush1.msra.mxu0 0.0
    %6856 = vmatprep.subr.mxu0 0.0
    %6857 = vmatpush1.msra.mxu0 %v4759
    %6858 = vmatprep.subr.mxu0 0.0
    %6859 = vmatpush1.msra.mxu0 %v4758
    %6860 = vmatprep.subr.mxu0 0.0
    %6861 = vmatpush2.msra.mxu0 0.0
    %6862 = vmatprep.subr.mxu0 0.0
    %6863 = vmatpush2.msra.mxu0 0.0
    %6864 = vmatprep.subr.mxu0 0.0
    %6865 = vmatpush2.msra.mxu0 0.0
    %6866 = vmatprep.subr.mxu0 0.0
    %6867 = vmatpush2.msra.mxu0 0.0
    %6868 = vmatprep.subr.mxu0 0.0
    %6869 = vmatpush2.msra.mxu0 0.0
    %6870 = vmatprep.subr.mxu0 0.0
    %6871 = vmatpush2.msra.mxu0 0.0
    %6872 = vmatprep.subr.mxu0 0.0
    %6873 = vmatpush2.msra.mxu0 0.0
    %6874 = vmatprep.subr.mxu0 0.0
    %6875 = vmatpush2.msra.mxu0 0.0
    %6876 = vmatprep.subr.mxu0 0.0
    %6877 = vmatpush2.msra.mxu0 0.0
    %6878 = vmatprep.subr.mxu0 0.0
    %6879 = vmatpush2.msra.mxu0 0.0
    %6880 = vmatprep.subr.mxu0 0.0
    %6881 = vmatpush2.msra.mxu0 0.0
    %6882 = vmatprep.subr.mxu0 0.0
    %6883 = vmatpush2.msra.mxu0 0.0
    %6884 = vmatprep.subr.mxu0 0.0
    %6885 = vmatpush2.msra.mxu0 0.0
    %6886 = vmatprep.subr.mxu0 0.0
    %6887 = vmatpush2.msra.mxu0 0.0
    %6888 = vmatprep.subr.mxu0 0.0
    %6889 = vmatpush2.msra.mxu0 0.0
    %6890 = vmatprep.subr.mxu0 0.0
    %6891 = vmatpush2.msra.mxu0 0.0
    %6892 = vmatprep.mubr.f32.mxu0 0.0
    %6893 = vmatmul.mubr.f32.gmra.mxu0 %v6756
    %v6894 = vpop.f32.mrf.mxu0
    %v6895 = vadd.f32 0.0, %v6894
    %v6896 = vpop.f32.mrf.mxu0
    %6897 = vdwg.mxu0
    %6898 = vmatprep.subr.mxu0 0.0
    %6899 = vmatpush1.msra.mxu0 0.0
    %6900 = vmatprep.subr.mxu0 0.0
    %6901 = vmatpush1.msra.mxu0 0.0
    %6902 = vmatprep.subr.mxu0 0.0
    %6903 = vmatpush1.msra.mxu0 0.0
    %6904 = vmatprep.subr.mxu0 0.0
    %6905 = vmatpush1.msra.mxu0 0.0
    %6906 = vmatprep.subr.mxu0 0.0
    %6907 = vmatpush1.msra.mxu0 0.0
    %6908 = vmatprep.subr.mxu0 0.0
    %6909 = vmatpush1.msra.mxu0 0.0
    %6910 = vmatprep.subr.mxu0 0.0
    %6911 = vmatpush1.msra.mxu0 0.0
    %6912 = vmatprep.subr.mxu0 0.0
    %6913 = vmatpush1.msra.mxu0 0.0
    %6914 = vmatprep.subr.mxu0 0.0
    %6915 = vmatpush1.msra.mxu0 0.0
    %6916 = vmatprep.subr.mxu0 0.0
    %6917 = vmatpush1.msra.mxu0 0.0
    %6918 = vmatprep.subr.mxu0 0.0
    %6919 = vmatpush1.msra.mxu0 0.0
    %6920 = vmatprep.subr.mxu0 0.0
    %6921 = vmatpush1.msra.mxu0 0.0
    %6922 = vmatprep.subr.mxu0 0.0
    %6923 = vmatpush1.msra.mxu0 0.0
    %6924 = vmatprep.subr.mxu0 0.0
    %6925 = vmatpush1.msra.mxu0 0.0
    %6926 = vmatprep.subr.mxu0 0.0
    %6927 = vmatpush1.msra.mxu0 %v4762
    %6928 = vmatprep.subr.mxu0 0.0
    %6929 = vmatpush1.msra.mxu0 %v4761
    %6930 = vmatprep.subr.mxu0 0.0
    %6931 = vmatpush2.msra.mxu0 0.0
    %6932 = vmatprep.subr.mxu0 0.0
    %6933 = vmatpush2.msra.mxu0 0.0
    %6934 = vmatprep.subr.mxu0 0.0
    %6935 = vmatpush2.msra.mxu0 0.0
    %6936 = vmatprep.subr.mxu0 0.0
    %6937 = vmatpush2.msra.mxu0 0.0
    %6938 = vmatprep.subr.mxu0 0.0
    %6939 = vmatpush2.msra.mxu0 0.0
    %6940 = vmatprep.subr.mxu0 0.0
    %6941 = vmatpush2.msra.mxu0 0.0
    %6942 = vmatprep.subr.mxu0 0.0
    %6943 = vmatpush2.msra.mxu0 0.0
    %6944 = vmatprep.subr.mxu0 0.0
    %6945 = vmatpush2.msra.mxu0 0.0
    %6946 = vmatprep.subr.mxu0 0.0
    %6947 = vmatpush2.msra.mxu0 0.0
    %6948 = vmatprep.subr.mxu0 0.0
    %6949 = vmatpush2.msra.mxu0 0.0
    %6950 = vmatprep.subr.mxu0 0.0
    %6951 = vmatpush2.msra.mxu0 0.0
    %6952 = vmatprep.subr.mxu0 0.0
    %6953 = vmatpush2.msra.mxu0 0.0
    %6954 = vmatprep.subr.mxu0 0.0
    %6955 = vmatpush2.msra.mxu0 0.0
    %6956 = vmatprep.subr.mxu0 0.0
    %6957 = vmatpush2.msra.mxu0 0.0
    %6958 = vmatprep.subr.mxu0 0.0
    %6959 = vmatpush2.msra.mxu0 0.0
    %6960 = vmatprep.subr.mxu0 0.0
    %6961 = vmatpush2.msra.mxu0 0.0
    %6962 = vmatprep.mubr.f32.mxu0 0.0
    %6963 = vmatmul.mubr.f32.gmra.mxu0 %v6756
    %v6964 = vpop.f32.mrf.mxu0
    %v6965 = vadd.f32 %v5172, %v6964
    %v6966 = vpop.f32.mrf.mxu0
    %6967 = vdwg.mxu0
    %v6969 = vrot.slane %v6825, 2
    %v6971 = vadd.f32 %v4863, %v6969
    %v6972 = vxor.u32 %v6971, 2147483648
    %v6973 = vmul.f32 %v6972, 1.442695
    %v6974 = vpow.pop %v6973
    %v6975 = vadd.f32 %v6974, 1.0
    %v6976 = vrcp.pop %v6975
    %v6977 = vmul.f32 1.0, %v6976
    %v6979 = vrot.slane %v6895, 2
    %v6981 = vadd.f32 %v4944, %v6979
    %v6982 = vxor.u32 %v6981, 2147483648
    %v6983 = vmul.f32 %v6982, 1.442695
    %v6984 = vpow.pop %v6983
    %v6985 = vadd.f32 %v6984, 1.0
    %v6986 = vrcp.pop %v6985
    %v6987 = vmul.f32 1.0, %v6986
    %v6989 = vrot.slane %v6965, 2
    %v6991 = vmul.f32 %v6977, %v6989
    %v6992 = vadd.f32 %v5025, %v6991
    %v6993 = vtanh.pop %v6992
    %v6995 = vrot.slane %v6993, 2
    %v6997 = vsub.f32 %v6752, %v6995
    %v6999 = vrot.slane %v6997, 6
    %v7001 = vmul.f32 %v6987, %v6999
    %v7002 = vadd.f32 %v6993, %v7001
    %7003 = vst.msk [vmem:[#allocation2 + $0x8] sm:$0xc0] %vm1494, %v7002
    %s7004 = scalar_lea.vmem [#allocation8], 144
    %v7005 = vld [vmem:[%s7004] sm:$0xff]
    %v7006 = vld [vmem:[%s7004 + $0x8] sm:$0xff]
    %s7007 = scalar_lea.vmem [#allocation8], 160
    %v7008 = vld [vmem:[%s7007] sm:$0xff]
    %v7009 = vld [vmem:[%s7007 + $0x8] sm:$0xff]
    %s7010 = scalar_lea.vmem [#allocation8], 176
    %v7011 = vld [vmem:[%s7010] sm:$0xff]
    %v7012 = vld [vmem:[%s7010 + $0x8] sm:$0xff]
    %s7013 = scalar_lea.vmem [#allocation9], 144
    %v7014 = vld [vmem:[%s7013] sm:$0xff]
    %v7015 = vld [vmem:[%s7013 + $0x8] sm:$0xff]
    %s7016 = scalar_lea.vmem [#allocation9], 160
    %v7017 = vld [vmem:[%s7016] sm:$0xff]
    %v7018 = vld [vmem:[%s7016 + $0x8] sm:$0xff]
    %s7019 = scalar_lea.vmem [#allocation9], 176
    %v7020 = vld [vmem:[%s7019] sm:$0xff]
    %v7021 = vld [vmem:[%s7019 + $0x8] sm:$0xff]
    %s7022 = scalar_lea.vmem [#allocation11], 9
    %v7023 = vld [vmem:[%s7022] sm:$0x1]
    %s7024 = scalar_lea.vmem [#allocation12], 9
    %v7025 = vld [vmem:[%s7024] sm:$0x1]
    %v7026 = vadd.f32 %v7023, %v7025
    %s7027 = scalar_lea.vmem [#allocation11], 10
    %v7028 = vld [vmem:[%s7027] sm:$0x1]
    %s7029 = scalar_lea.vmem [#allocation12], 10
    %v7030 = vld [vmem:[%s7029] sm:$0x1]
    %v7031 = vadd.f32 %v7028, %v7030
    %s7032 = scalar_lea.vmem [#allocation11], 11
    %v7033 = vld [vmem:[%s7032] sm:$0x1]
    %s7034 = scalar_lea.vmem [#allocation12], 11
    %v7035 = vld [vmem:[%s7034] sm:$0x1]
    %v7036 = vld [vmem:[#allocation2] sm:$0xff]
    %v7037 = vld [vmem:[#allocation2 + $0x8] sm:$0xff]
    %v7039 = vlaneseq
    %v7040 = vshrl.u32 %v7039, 7
    %v7041 = vsub.s32 0, %v7040
    %v7042 = vrot.slane %v7026, %v7041
    %v7045 = vsel %vm260, %v7036, 0
    %v7048 = vsel %vm260, %v7037, 0
    %7050 = vmatprep.subr.mxu0 0.0
    %7051 = vmatpush1.msra.mxu0 0.0
    %7052 = vmatprep.subr.mxu0 0.0
    %7053 = vmatpush1.msra.mxu0 0.0
    %7054 = vmatprep.subr.mxu0 0.0
    %7055 = vmatpush1.msra.mxu0 0.0
    %7056 = vmatprep.subr.mxu0 0.0
    %7057 = vmatpush1.msra.mxu0 0.0
    %7058 = vmatprep.subr.mxu0 0.0
    %7059 = vmatpush1.msra.mxu0 0.0
    %7060 = vmatprep.subr.mxu0 0.0
    %7061 = vmatpush1.msra.mxu0 0.0
    %7062 = vmatprep.subr.mxu0 0.0
    %7063 = vmatpush1.msra.mxu0 0.0
    %7064 = vmatprep.subr.mxu0 0.0
    %7065 = vmatpush1.msra.mxu0 0.0
    %7066 = vmatprep.subr.mxu0 0.0
    %7067 = vmatpush1.msra.mxu0 0.0
    %7068 = vmatprep.subr.mxu0 0.0
    %7069 = vmatpush1.msra.mxu0 0.0
    %7070 = vmatprep.subr.mxu0 0.0
    %7071 = vmatpush1.msra.mxu0 0.0
    %7072 = vmatprep.subr.mxu0 0.0
    %7073 = vmatpush1.msra.mxu0 0.0
    %7074 = vmatprep.subr.mxu0 0.0
    %7075 = vmatpush1.msra.mxu0 0.0
    %7076 = vmatprep.subr.mxu0 0.0
    %7077 = vmatpush1.msra.mxu0 0.0
    %7078 = vmatprep.subr.mxu0 0.0
    %7079 = vmatpush1.msra.mxu0 %v7006
    %7080 = vmatprep.subr.mxu0 0.0
    %7081 = vmatpush1.msra.mxu0 %v7005
    %7082 = vmatprep.subr.mxu0 0.0
    %7083 = vmatpush2.msra.mxu0 0.0
    %7084 = vmatprep.subr.mxu0 0.0
    %7085 = vmatpush2.msra.mxu0 0.0
    %7086 = vmatprep.subr.mxu0 0.0
    %7087 = vmatpush2.msra.mxu0 0.0
    %7088 = vmatprep.subr.mxu0 0.0
    %7089 = vmatpush2.msra.mxu0 0.0
    %7090 = vmatprep.subr.mxu0 0.0
    %7091 = vmatpush2.msra.mxu0 0.0
    %7092 = vmatprep.subr.mxu0 0.0
    %7093 = vmatpush2.msra.mxu0 0.0
    %7094 = vmatprep.subr.mxu0 0.0
    %7095 = vmatpush2.msra.mxu0 0.0
    %7096 = vmatprep.subr.mxu0 0.0
    %7097 = vmatpush2.msra.mxu0 0.0
    %7098 = vmatprep.subr.mxu0 0.0
    %7099 = vmatpush2.msra.mxu0 0.0
    %7100 = vmatprep.subr.mxu0 0.0
    %7101 = vmatpush2.msra.mxu0 0.0
    %7102 = vmatprep.subr.mxu0 0.0
    %7103 = vmatpush2.msra.mxu0 0.0
    %7104 = vmatprep.subr.mxu0 0.0
    %7105 = vmatpush2.msra.mxu0 0.0
    %7106 = vmatprep.subr.mxu0 0.0
    %7107 = vmatpush2.msra.mxu0 0.0
    %7108 = vmatprep.subr.mxu0 0.0
    %7109 = vmatpush2.msra.mxu0 0.0
    %7110 = vmatprep.subr.mxu0 0.0
    %7111 = vmatpush2.msra.mxu0 0.0
    %7112 = vmatprep.subr.mxu0 0.0
    %7113 = vmatpush2.msra.mxu0 0.0
    %7114 = vmatprep.mubr.f32.mxu0 0.0
    %7115 = vmatmul.mubr.f32.gmra.mxu0 %v7045
    %v7116 = vpop.f32.mrf.mxu0
    %v7117 = vadd.f32 %v7042, %v7116
    %v7118 = vpop.f32.mrf.mxu0
    %7119 = vmatprep.mubr.f32.mxu0 0.0
    %7120 = vmatmul.mubr.f32.gmra.mxu0 %v7048
    %v7121 = vpop.f32.mrf.mxu0
    %v7122 = vadd.f32 %v7042, %v7121
    %v7123 = vpop.f32.mrf.mxu0
    %7124 = vdwg.mxu0
    %v7126 = vlaneseq
    %v7127 = vshrl.u32 %v7126, 7
    %v7128 = vsub.s32 0, %v7127
    %v7129 = vrot.slane %v7031, %v7128
    %7131 = vmatprep.subr.mxu0 0.0
    %7132 = vmatpush1.msra.mxu0 0.0
    %7133 = vmatprep.subr.mxu0 0.0
    %7134 = vmatpush1.msra.mxu0 0.0
    %7135 = vmatprep.subr.mxu0 0.0
    %7136 = vmatpush1.msra.mxu0 0.0
    %7137 = vmatprep.subr.mxu0 0.0
    %7138 = vmatpush1.msra.mxu0 0.0
    %7139 = vmatprep.subr.mxu0 0.0
    %7140 = vmatpush1.msra.mxu0 0.0
    %7141 = vmatprep.subr.mxu0 0.0
    %7142 = vmatpush1.msra.mxu0 0.0
    %7143 = vmatprep.subr.mxu0 0.0
    %7144 = vmatpush1.msra.mxu0 0.0
    %7145 = vmatprep.subr.mxu0 0.0
    %7146 = vmatpush1.msra.mxu0 0.0
    %7147 = vmatprep.subr.mxu0 0.0
    %7148 = vmatpush1.msra.mxu0 0.0
    %7149 = vmatprep.subr.mxu0 0.0
    %7150 = vmatpush1.msra.mxu0 0.0
    %7151 = vmatprep.subr.mxu0 0.0
    %7152 = vmatpush1.msra.mxu0 0.0
    %7153 = vmatprep.subr.mxu0 0.0
    %7154 = vmatpush1.msra.mxu0 0.0
    %7155 = vmatprep.subr.mxu0 0.0
    %7156 = vmatpush1.msra.mxu0 0.0
    %7157 = vmatprep.subr.mxu0 0.0
    %7158 = vmatpush1.msra.mxu0 0.0
    %7159 = vmatprep.subr.mxu0 0.0
    %7160 = vmatpush1.msra.mxu0 %v7009
    %7161 = vmatprep.subr.mxu0 0.0
    %7162 = vmatpush1.msra.mxu0 %v7008
    %7163 = vmatprep.subr.mxu0 0.0
    %7164 = vmatpush2.msra.mxu0 0.0
    %7165 = vmatprep.subr.mxu0 0.0
    %7166 = vmatpush2.msra.mxu0 0.0
    %7167 = vmatprep.subr.mxu0 0.0
    %7168 = vmatpush2.msra.mxu0 0.0
    %7169 = vmatprep.subr.mxu0 0.0
    %7170 = vmatpush2.msra.mxu0 0.0
    %7171 = vmatprep.subr.mxu0 0.0
    %7172 = vmatpush2.msra.mxu0 0.0
    %7173 = vmatprep.subr.mxu0 0.0
    %7174 = vmatpush2.msra.mxu0 0.0
    %7175 = vmatprep.subr.mxu0 0.0
    %7176 = vmatpush2.msra.mxu0 0.0
    %7177 = vmatprep.subr.mxu0 0.0
    %7178 = vmatpush2.msra.mxu0 0.0
    %7179 = vmatprep.subr.mxu0 0.0
    %7180 = vmatpush2.msra.mxu0 0.0
    %7181 = vmatprep.subr.mxu0 0.0
    %7182 = vmatpush2.msra.mxu0 0.0
    %7183 = vmatprep.subr.mxu0 0.0
    %7184 = vmatpush2.msra.mxu0 0.0
    %7185 = vmatprep.subr.mxu0 0.0
    %7186 = vmatpush2.msra.mxu0 0.0
    %7187 = vmatprep.subr.mxu0 0.0
    %7188 = vmatpush2.msra.mxu0 0.0
    %7189 = vmatprep.subr.mxu0 0.0
    %7190 = vmatpush2.msra.mxu0 0.0
    %7191 = vmatprep.subr.mxu0 0.0
    %7192 = vmatpush2.msra.mxu0 0.0
    %7193 = vmatprep.subr.mxu0 0.0
    %7194 = vmatpush2.msra.mxu0 0.0
    %7195 = vmatprep.mubr.f32.mxu0 0.0
    %7196 = vmatmul.mubr.f32.gmra.mxu0 %v7045
    %v7197 = vpop.f32.mrf.mxu0
    %v7198 = vadd.f32 %v7129, %v7197
    %v7199 = vpop.f32.mrf.mxu0
    %7200 = vmatprep.mubr.f32.mxu0 0.0
    %7201 = vmatmul.mubr.f32.gmra.mxu0 %v7048
    %v7202 = vpop.f32.mrf.mxu0
    %v7203 = vadd.f32 %v7129, %v7202
    %v7204 = vpop.f32.mrf.mxu0
    %7205 = vdwg.mxu0
    %v7207 = vlaneseq
    %v7208 = vshrl.u32 %v7207, 7
    %v7209 = vsub.s32 0, %v7208
    %v7210 = vrot.slane %v7033, %v7209
    %7212 = vmatprep.subr.mxu0 0.0
    %7213 = vmatpush1.msra.mxu0 0.0
    %7214 = vmatprep.subr.mxu0 0.0
    %7215 = vmatpush1.msra.mxu0 0.0
    %7216 = vmatprep.subr.mxu0 0.0
    %7217 = vmatpush1.msra.mxu0 0.0
    %7218 = vmatprep.subr.mxu0 0.0
    %7219 = vmatpush1.msra.mxu0 0.0
    %7220 = vmatprep.subr.mxu0 0.0
    %7221 = vmatpush1.msra.mxu0 0.0
    %7222 = vmatprep.subr.mxu0 0.0
    %7223 = vmatpush1.msra.mxu0 0.0
    %7224 = vmatprep.subr.mxu0 0.0
    %7225 = vmatpush1.msra.mxu0 0.0
    %7226 = vmatprep.subr.mxu0 0.0
    %7227 = vmatpush1.msra.mxu0 0.0
    %7228 = vmatprep.subr.mxu0 0.0
    %7229 = vmatpush1.msra.mxu0 0.0
    %7230 = vmatprep.subr.mxu0 0.0
    %7231 = vmatpush1.msra.mxu0 0.0
    %7232 = vmatprep.subr.mxu0 0.0
    %7233 = vmatpush1.msra.mxu0 0.0
    %7234 = vmatprep.subr.mxu0 0.0
    %7235 = vmatpush1.msra.mxu0 0.0
    %7236 = vmatprep.subr.mxu0 0.0
    %7237 = vmatpush1.msra.mxu0 0.0
    %7238 = vmatprep.subr.mxu0 0.0
    %7239 = vmatpush1.msra.mxu0 0.0
    %7240 = vmatprep.subr.mxu0 0.0
    %7241 = vmatpush1.msra.mxu0 %v7012
    %7242 = vmatprep.subr.mxu0 0.0
    %7243 = vmatpush1.msra.mxu0 %v7011
    %7244 = vmatprep.subr.mxu0 0.0
    %7245 = vmatpush2.msra.mxu0 0.0
    %7246 = vmatprep.subr.mxu0 0.0
    %7247 = vmatpush2.msra.mxu0 0.0
    %7248 = vmatprep.subr.mxu0 0.0
    %7249 = vmatpush2.msra.mxu0 0.0
    %7250 = vmatprep.subr.mxu0 0.0
    %7251 = vmatpush2.msra.mxu0 0.0
    %7252 = vmatprep.subr.mxu0 0.0
    %7253 = vmatpush2.msra.mxu0 0.0
    %7254 = vmatprep.subr.mxu0 0.0
    %7255 = vmatpush2.msra.mxu0 0.0
    %7256 = vmatprep.subr.mxu0 0.0
    %7257 = vmatpush2.msra.mxu0 0.0
    %7258 = vmatprep.subr.mxu0 0.0
    %7259 = vmatpush2.msra.mxu0 0.0
    %7260 = vmatprep.subr.mxu0 0.0
    %7261 = vmatpush2.msra.mxu0 0.0
    %7262 = vmatprep.subr.mxu0 0.0
    %7263 = vmatpush2.msra.mxu0 0.0
    %7264 = vmatprep.subr.mxu0 0.0
    %7265 = vmatpush2.msra.mxu0 0.0
    %7266 = vmatprep.subr.mxu0 0.0
    %7267 = vmatpush2.msra.mxu0 0.0
    %7268 = vmatprep.subr.mxu0 0.0
    %7269 = vmatpush2.msra.mxu0 0.0
    %7270 = vmatprep.subr.mxu0 0.0
    %7271 = vmatpush2.msra.mxu0 0.0
    %7272 = vmatprep.subr.mxu0 0.0
    %7273 = vmatpush2.msra.mxu0 0.0
    %7274 = vmatprep.subr.mxu0 0.0
    %7275 = vmatpush2.msra.mxu0 0.0
    %7276 = vmatprep.mubr.f32.mxu0 0.0
    %7277 = vmatmul.mubr.f32.gmra.mxu0 %v7045
    %v7278 = vpop.f32.mrf.mxu0
    %v7279 = vadd.f32 %v7210, %v7278
    %v7280 = vpop.f32.mrf.mxu0
    %7281 = vmatprep.mubr.f32.mxu0 0.0
    %7282 = vmatmul.mubr.f32.gmra.mxu0 %v7048
    %v7283 = vpop.f32.mrf.mxu0
    %v7284 = vadd.f32 %v7210, %v7283
    %v7285 = vpop.f32.mrf.mxu0
    %7286 = vdwg.mxu0
    %7287 = vmatprep.subr.mxu0 0.0
    %7288 = vmatpush1.msra.mxu0 0.0
    %7289 = vmatprep.subr.mxu0 0.0
    %7290 = vmatpush1.msra.mxu0 0.0
    %7291 = vmatprep.subr.mxu0 0.0
    %7292 = vmatpush1.msra.mxu0 0.0
    %7293 = vmatprep.subr.mxu0 0.0
    %7294 = vmatpush1.msra.mxu0 0.0
    %7295 = vmatprep.subr.mxu0 0.0
    %7296 = vmatpush1.msra.mxu0 0.0
    %7297 = vmatprep.subr.mxu0 0.0
    %7298 = vmatpush1.msra.mxu0 0.0
    %7299 = vmatprep.subr.mxu0 0.0
    %7300 = vmatpush1.msra.mxu0 0.0
    %7301 = vmatprep.subr.mxu0 0.0
    %7302 = vmatpush1.msra.mxu0 0.0
    %7303 = vmatprep.subr.mxu0 0.0
    %7304 = vmatpush1.msra.mxu0 0.0
    %7305 = vmatprep.subr.mxu0 0.0
    %7306 = vmatpush1.msra.mxu0 0.0
    %7307 = vmatprep.subr.mxu0 0.0
    %7308 = vmatpush1.msra.mxu0 0.0
    %7309 = vmatprep.subr.mxu0 0.0
    %7310 = vmatpush1.msra.mxu0 0.0
    %7311 = vmatprep.subr.mxu0 0.0
    %7312 = vmatpush1.msra.mxu0 0.0
    %7313 = vmatprep.subr.mxu0 0.0
    %7314 = vmatpush1.msra.mxu0 0.0
    %7315 = vmatprep.subr.mxu0 0.0
    %7316 = vmatpush1.msra.mxu0 %v7015
    %7317 = vmatprep.subr.mxu0 0.0
    %7318 = vmatpush1.msra.mxu0 %v7014
    %7319 = vmatprep.subr.mxu0 0.0
    %7320 = vmatpush2.msra.mxu0 0.0
    %7321 = vmatprep.subr.mxu0 0.0
    %7322 = vmatpush2.msra.mxu0 0.0
    %7323 = vmatprep.subr.mxu0 0.0
    %7324 = vmatpush2.msra.mxu0 0.0
    %7325 = vmatprep.subr.mxu0 0.0
    %7326 = vmatpush2.msra.mxu0 0.0
    %7327 = vmatprep.subr.mxu0 0.0
    %7328 = vmatpush2.msra.mxu0 0.0
    %7329 = vmatprep.subr.mxu0 0.0
    %7330 = vmatpush2.msra.mxu0 0.0
    %7331 = vmatprep.subr.mxu0 0.0
    %7332 = vmatpush2.msra.mxu0 0.0
    %7333 = vmatprep.subr.mxu0 0.0
    %7334 = vmatpush2.msra.mxu0 0.0
    %7335 = vmatprep.subr.mxu0 0.0
    %7336 = vmatpush2.msra.mxu0 0.0
    %7337 = vmatprep.subr.mxu0 0.0
    %7338 = vmatpush2.msra.mxu0 0.0
    %7339 = vmatprep.subr.mxu0 0.0
    %7340 = vmatpush2.msra.mxu0 0.0
    %7341 = vmatprep.subr.mxu0 0.0
    %7342 = vmatpush2.msra.mxu0 0.0
    %7343 = vmatprep.subr.mxu0 0.0
    %7344 = vmatpush2.msra.mxu0 0.0
    %7345 = vmatprep.subr.mxu0 0.0
    %7346 = vmatpush2.msra.mxu0 0.0
    %7347 = vmatprep.subr.mxu0 0.0
    %7348 = vmatpush2.msra.mxu0 0.0
    %7349 = vmatprep.subr.mxu0 0.0
    %7350 = vmatpush2.msra.mxu0 0.0
    %7351 = vmatprep.mubr.f32.mxu0 0.0
    %7352 = vmatmul.mubr.f32.gmra.mxu0 %v505
    %v7353 = vpop.f32.mrf.mxu0
    %v7354 = vadd.f32 0.0, %v7353
    %v7355 = vpop.f32.mrf.mxu0
    %7356 = vdwg.mxu0
    %7357 = vmatprep.subr.mxu0 0.0
    %7358 = vmatpush1.msra.mxu0 0.0
    %7359 = vmatprep.subr.mxu0 0.0
    %7360 = vmatpush1.msra.mxu0 0.0
    %7361 = vmatprep.subr.mxu0 0.0
    %7362 = vmatpush1.msra.mxu0 0.0
    %7363 = vmatprep.subr.mxu0 0.0
    %7364 = vmatpush1.msra.mxu0 0.0
    %7365 = vmatprep.subr.mxu0 0.0
    %7366 = vmatpush1.msra.mxu0 0.0
    %7367 = vmatprep.subr.mxu0 0.0
    %7368 = vmatpush1.msra.mxu0 0.0
    %7369 = vmatprep.subr.mxu0 0.0
    %7370 = vmatpush1.msra.mxu0 0.0
    %7371 = vmatprep.subr.mxu0 0.0
    %7372 = vmatpush1.msra.mxu0 0.0
    %7373 = vmatprep.subr.mxu0 0.0
    %7374 = vmatpush1.msra.mxu0 0.0
    %7375 = vmatprep.subr.mxu0 0.0
    %7376 = vmatpush1.msra.mxu0 0.0
    %7377 = vmatprep.subr.mxu0 0.0
    %7378 = vmatpush1.msra.mxu0 0.0
    %7379 = vmatprep.subr.mxu0 0.0
    %7380 = vmatpush1.msra.mxu0 0.0
    %7381 = vmatprep.subr.mxu0 0.0
    %7382 = vmatpush1.msra.mxu0 0.0
    %7383 = vmatprep.subr.mxu0 0.0
    %7384 = vmatpush1.msra.mxu0 0.0
    %7385 = vmatprep.subr.mxu0 0.0
    %7386 = vmatpush1.msra.mxu0 %v7018
    %7387 = vmatprep.subr.mxu0 0.0
    %7388 = vmatpush1.msra.mxu0 %v7017
    %7389 = vmatprep.subr.mxu0 0.0
    %7390 = vmatpush2.msra.mxu0 0.0
    %7391 = vmatprep.subr.mxu0 0.0
    %7392 = vmatpush2.msra.mxu0 0.0
    %7393 = vmatprep.subr.mxu0 0.0
    %7394 = vmatpush2.msra.mxu0 0.0
    %7395 = vmatprep.subr.mxu0 0.0
    %7396 = vmatpush2.msra.mxu0 0.0
    %7397 = vmatprep.subr.mxu0 0.0
    %7398 = vmatpush2.msra.mxu0 0.0
    %7399 = vmatprep.subr.mxu0 0.0
    %7400 = vmatpush2.msra.mxu0 0.0
    %7401 = vmatprep.subr.mxu0 0.0
    %7402 = vmatpush2.msra.mxu0 0.0
    %7403 = vmatprep.subr.mxu0 0.0
    %7404 = vmatpush2.msra.mxu0 0.0
    %7405 = vmatprep.subr.mxu0 0.0
    %7406 = vmatpush2.msra.mxu0 0.0
    %7407 = vmatprep.subr.mxu0 0.0
    %7408 = vmatpush2.msra.mxu0 0.0
    %7409 = vmatprep.subr.mxu0 0.0
    %7410 = vmatpush2.msra.mxu0 0.0
    %7411 = vmatprep.subr.mxu0 0.0
    %7412 = vmatpush2.msra.mxu0 0.0
    %7413 = vmatprep.subr.mxu0 0.0
    %7414 = vmatpush2.msra.mxu0 0.0
    %7415 = vmatprep.subr.mxu0 0.0
    %7416 = vmatpush2.msra.mxu0 0.0
    %7417 = vmatprep.subr.mxu0 0.0
    %7418 = vmatpush2.msra.mxu0 0.0
    %7419 = vmatprep.subr.mxu0 0.0
    %7420 = vmatpush2.msra.mxu0 0.0
    %7421 = vmatprep.mubr.f32.mxu0 0.0
    %7422 = vmatmul.mubr.f32.gmra.mxu0 %v505
    %v7423 = vpop.f32.mrf.mxu0
    %v7424 = vadd.f32 0.0, %v7423
    %v7425 = vpop.f32.mrf.mxu0
    %7426 = vdwg.mxu0
    %v7428 = vlaneseq
    %v7429 = vshrl.u32 %v7428, 7
    %v7430 = vsub.s32 0, %v7429
    %v7431 = vrot.slane %v7035, %v7430
    %7433 = vmatprep.subr.mxu0 0.0
    %7434 = vmatpush1.msra.mxu0 0.0
    %7435 = vmatprep.subr.mxu0 0.0
    %7436 = vmatpush1.msra.mxu0 0.0
    %7437 = vmatprep.subr.mxu0 0.0
    %7438 = vmatpush1.msra.mxu0 0.0
    %7439 = vmatprep.subr.mxu0 0.0
    %7440 = vmatpush1.msra.mxu0 0.0
    %7441 = vmatprep.subr.mxu0 0.0
    %7442 = vmatpush1.msra.mxu0 0.0
    %7443 = vmatprep.subr.mxu0 0.0
    %7444 = vmatpush1.msra.mxu0 0.0
    %7445 = vmatprep.subr.mxu0 0.0
    %7446 = vmatpush1.msra.mxu0 0.0
    %7447 = vmatprep.subr.mxu0 0.0
    %7448 = vmatpush1.msra.mxu0 0.0
    %7449 = vmatprep.subr.mxu0 0.0
    %7450 = vmatpush1.msra.mxu0 0.0
    %7451 = vmatprep.subr.mxu0 0.0
    %7452 = vmatpush1.msra.mxu0 0.0
    %7453 = vmatprep.subr.mxu0 0.0
    %7454 = vmatpush1.msra.mxu0 0.0
    %7455 = vmatprep.subr.mxu0 0.0
    %7456 = vmatpush1.msra.mxu0 0.0
    %7457 = vmatprep.subr.mxu0 0.0
    %7458 = vmatpush1.msra.mxu0 0.0
    %7459 = vmatprep.subr.mxu0 0.0
    %7460 = vmatpush1.msra.mxu0 0.0
    %7461 = vmatprep.subr.mxu0 0.0
    %7462 = vmatpush1.msra.mxu0 %v7021
    %7463 = vmatprep.subr.mxu0 0.0
    %7464 = vmatpush1.msra.mxu0 %v7020
    %7465 = vmatprep.subr.mxu0 0.0
    %7466 = vmatpush2.msra.mxu0 0.0
    %7467 = vmatprep.subr.mxu0 0.0
    %7468 = vmatpush2.msra.mxu0 0.0
    %7469 = vmatprep.subr.mxu0 0.0
    %7470 = vmatpush2.msra.mxu0 0.0
    %7471 = vmatprep.subr.mxu0 0.0
    %7472 = vmatpush2.msra.mxu0 0.0
    %7473 = vmatprep.subr.mxu0 0.0
    %7474 = vmatpush2.msra.mxu0 0.0
    %7475 = vmatprep.subr.mxu0 0.0
    %7476 = vmatpush2.msra.mxu0 0.0
    %7477 = vmatprep.subr.mxu0 0.0
    %7478 = vmatpush2.msra.mxu0 0.0
    %7479 = vmatprep.subr.mxu0 0.0
    %7480 = vmatpush2.msra.mxu0 0.0
    %7481 = vmatprep.subr.mxu0 0.0
    %7482 = vmatpush2.msra.mxu0 0.0
    %7483 = vmatprep.subr.mxu0 0.0
    %7484 = vmatpush2.msra.mxu0 0.0
    %7485 = vmatprep.subr.mxu0 0.0
    %7486 = vmatpush2.msra.mxu0 0.0
    %7487 = vmatprep.subr.mxu0 0.0
    %7488 = vmatpush2.msra.mxu0 0.0
    %7489 = vmatprep.subr.mxu0 0.0
    %7490 = vmatpush2.msra.mxu0 0.0
    %7491 = vmatprep.subr.mxu0 0.0
    %7492 = vmatpush2.msra.mxu0 0.0
    %7493 = vmatprep.subr.mxu0 0.0
    %7494 = vmatpush2.msra.mxu0 0.0
    %7495 = vmatprep.subr.mxu0 0.0
    %7496 = vmatpush2.msra.mxu0 0.0
    %7497 = vmatprep.mubr.f32.mxu0 0.0
    %7498 = vmatmul.mubr.f32.gmra.mxu0 %v505
    %v7499 = vpop.f32.mrf.mxu0
    %v7500 = vadd.f32 %v7431, %v7499
    %v7501 = vpop.f32.mrf.mxu0
    %7502 = vdwg.mxu0
    %v7503 = vadd.f32 %v7117, %v7354
    %v7504 = vxor.u32 %v7503, 2147483648
    %v7505 = vmul.f32 %v7504, 1.442695
    %v7506 = vpow.pop %v7505
    %v7507 = vadd.f32 %v7506, 1.0
    %v7508 = vrcp.pop %v7507
    %v7509 = vmul.f32 1.0, %v7508
    %v7510 = vadd.f32 %v7198, %v7424
    %v7511 = vxor.u32 %v7510, 2147483648
    %v7512 = vmul.f32 %v7511, 1.442695
    %v7513 = vpow.pop %v7512
    %v7514 = vadd.f32 %v7513, 1.0
    %v7515 = vrcp.pop %v7514
    %v7516 = vmul.f32 1.0, %v7515
    %v7517 = vmul.f32 %v7509, %v7500
    %v7518 = vadd.f32 %v7279, %v7517
    %v7519 = vtanh.pop %v7518
    %v7520 = vsub.f32 0.0, %v7519
    %v7521 = vmul.f32 %v7516, %v7520
    %v7522 = vadd.f32 %v7519, %v7521
    %v7523 = vtanh.pop %v7522
    %7524 = vst.msk [vmem:[#allocation14] sm:$0x3] %vm193, %v7523
    %v7526 = vsel %vm260, %v7522, 0
    %7528 = vmatprep.subr.mxu0 0.0
    %7529 = vmatpush1.msra.mxu0 0.0
    %7530 = vmatprep.subr.mxu0 0.0
    %7531 = vmatpush1.msra.mxu0 0.0
    %7532 = vmatprep.subr.mxu0 0.0
    %7533 = vmatpush1.msra.mxu0 0.0
    %7534 = vmatprep.subr.mxu0 0.0
    %7535 = vmatpush1.msra.mxu0 0.0
    %7536 = vmatprep.subr.mxu0 0.0
    %7537 = vmatpush1.msra.mxu0 0.0
    %7538 = vmatprep.subr.mxu0 0.0
    %7539 = vmatpush1.msra.mxu0 0.0
    %7540 = vmatprep.subr.mxu0 0.0
    %7541 = vmatpush1.msra.mxu0 0.0
    %7542 = vmatprep.subr.mxu0 0.0
    %7543 = vmatpush1.msra.mxu0 0.0
    %7544 = vmatprep.subr.mxu0 0.0
    %7545 = vmatpush1.msra.mxu0 0.0
    %7546 = vmatprep.subr.mxu0 0.0
    %7547 = vmatpush1.msra.mxu0 0.0
    %7548 = vmatprep.subr.mxu0 0.0
    %7549 = vmatpush1.msra.mxu0 0.0
    %7550 = vmatprep.subr.mxu0 0.0
    %7551 = vmatpush1.msra.mxu0 0.0
    %7552 = vmatprep.subr.mxu0 0.0
    %7553 = vmatpush1.msra.mxu0 0.0
    %7554 = vmatprep.subr.mxu0 0.0
    %7555 = vmatpush1.msra.mxu0 0.0
    %7556 = vmatprep.subr.mxu0 0.0
    %7557 = vmatpush1.msra.mxu0 %v7015
    %7558 = vmatprep.subr.mxu0 0.0
    %7559 = vmatpush1.msra.mxu0 %v7014
    %7560 = vmatprep.subr.mxu0 0.0
    %7561 = vmatpush2.msra.mxu0 0.0
    %7562 = vmatprep.subr.mxu0 0.0
    %7563 = vmatpush2.msra.mxu0 0.0
    %7564 = vmatprep.subr.mxu0 0.0
    %7565 = vmatpush2.msra.mxu0 0.0
    %7566 = vmatprep.subr.mxu0 0.0
    %7567 = vmatpush2.msra.mxu0 0.0
    %7568 = vmatprep.subr.mxu0 0.0
    %7569 = vmatpush2.msra.mxu0 0.0
    %7570 = vmatprep.subr.mxu0 0.0
    %7571 = vmatpush2.msra.mxu0 0.0
    %7572 = vmatprep.subr.mxu0 0.0
    %7573 = vmatpush2.msra.mxu0 0.0
    %7574 = vmatprep.subr.mxu0 0.0
    %7575 = vmatpush2.msra.mxu0 0.0
    %7576 = vmatprep.subr.mxu0 0.0
    %7577 = vmatpush2.msra.mxu0 0.0
    %7578 = vmatprep.subr.mxu0 0.0
    %7579 = vmatpush2.msra.mxu0 0.0
    %7580 = vmatprep.subr.mxu0 0.0
    %7581 = vmatpush2.msra.mxu0 0.0
    %7582 = vmatprep.subr.mxu0 0.0
    %7583 = vmatpush2.msra.mxu0 0.0
    %7584 = vmatprep.subr.mxu0 0.0
    %7585 = vmatpush2.msra.mxu0 0.0
    %7586 = vmatprep.subr.mxu0 0.0
    %7587 = vmatpush2.msra.mxu0 0.0
    %7588 = vmatprep.subr.mxu0 0.0
    %7589 = vmatpush2.msra.mxu0 0.0
    %7590 = vmatprep.subr.mxu0 0.0
    %7591 = vmatpush2.msra.mxu0 0.0
    %7592 = vmatprep.mubr.f32.mxu0 0.0
    %7593 = vmatmul.mubr.f32.gmra.mxu0 %v7526
    %v7594 = vpop.f32.mrf.mxu0
    %v7595 = vadd.f32 0.0, %v7594
    %v7596 = vpop.f32.mrf.mxu0
    %7597 = vdwg.mxu0
    %7598 = vmatprep.subr.mxu0 0.0
    %7599 = vmatpush1.msra.mxu0 0.0
    %7600 = vmatprep.subr.mxu0 0.0
    %7601 = vmatpush1.msra.mxu0 0.0
    %7602 = vmatprep.subr.mxu0 0.0
    %7603 = vmatpush1.msra.mxu0 0.0
    %7604 = vmatprep.subr.mxu0 0.0
    %7605 = vmatpush1.msra.mxu0 0.0
    %7606 = vmatprep.subr.mxu0 0.0
    %7607 = vmatpush1.msra.mxu0 0.0
    %7608 = vmatprep.subr.mxu0 0.0
    %7609 = vmatpush1.msra.mxu0 0.0
    %7610 = vmatprep.subr.mxu0 0.0
    %7611 = vmatpush1.msra.mxu0 0.0
    %7612 = vmatprep.subr.mxu0 0.0
    %7613 = vmatpush1.msra.mxu0 0.0
    %7614 = vmatprep.subr.mxu0 0.0
    %7615 = vmatpush1.msra.mxu0 0.0
    %7616 = vmatprep.subr.mxu0 0.0
    %7617 = vmatpush1.msra.mxu0 0.0
    %7618 = vmatprep.subr.mxu0 0.0
    %7619 = vmatpush1.msra.mxu0 0.0
    %7620 = vmatprep.subr.mxu0 0.0
    %7621 = vmatpush1.msra.mxu0 0.0
    %7622 = vmatprep.subr.mxu0 0.0
    %7623 = vmatpush1.msra.mxu0 0.0
    %7624 = vmatprep.subr.mxu0 0.0
    %7625 = vmatpush1.msra.mxu0 0.0
    %7626 = vmatprep.subr.mxu0 0.0
    %7627 = vmatpush1.msra.mxu0 %v7018
    %7628 = vmatprep.subr.mxu0 0.0
    %7629 = vmatpush1.msra.mxu0 %v7017
    %7630 = vmatprep.subr.mxu0 0.0
    %7631 = vmatpush2.msra.mxu0 0.0
    %7632 = vmatprep.subr.mxu0 0.0
    %7633 = vmatpush2.msra.mxu0 0.0
    %7634 = vmatprep.subr.mxu0 0.0
    %7635 = vmatpush2.msra.mxu0 0.0
    %7636 = vmatprep.subr.mxu0 0.0
    %7637 = vmatpush2.msra.mxu0 0.0
    %7638 = vmatprep.subr.mxu0 0.0
    %7639 = vmatpush2.msra.mxu0 0.0
    %7640 = vmatprep.subr.mxu0 0.0
    %7641 = vmatpush2.msra.mxu0 0.0
    %7642 = vmatprep.subr.mxu0 0.0
    %7643 = vmatpush2.msra.mxu0 0.0
    %7644 = vmatprep.subr.mxu0 0.0
    %7645 = vmatpush2.msra.mxu0 0.0
    %7646 = vmatprep.subr.mxu0 0.0
    %7647 = vmatpush2.msra.mxu0 0.0
    %7648 = vmatprep.subr.mxu0 0.0
    %7649 = vmatpush2.msra.mxu0 0.0
    %7650 = vmatprep.subr.mxu0 0.0
    %7651 = vmatpush2.msra.mxu0 0.0
    %7652 = vmatprep.subr.mxu0 0.0
    %7653 = vmatpush2.msra.mxu0 0.0
    %7654 = vmatprep.subr.mxu0 0.0
    %7655 = vmatpush2.msra.mxu0 0.0
    %7656 = vmatprep.subr.mxu0 0.0
    %7657 = vmatpush2.msra.mxu0 0.0
    %7658 = vmatprep.subr.mxu0 0.0
    %7659 = vmatpush2.msra.mxu0 0.0
    %7660 = vmatprep.subr.mxu0 0.0
    %7661 = vmatpush2.msra.mxu0 0.0
    %7662 = vmatprep.mubr.f32.mxu0 0.0
    %7663 = vmatmul.mubr.f32.gmra.mxu0 %v7526
    %v7664 = vpop.f32.mrf.mxu0
    %v7665 = vadd.f32 0.0, %v7664
    %v7666 = vpop.f32.mrf.mxu0
    %7667 = vdwg.mxu0
    %7668 = vmatprep.subr.mxu0 0.0
    %7669 = vmatpush1.msra.mxu0 0.0
    %7670 = vmatprep.subr.mxu0 0.0
    %7671 = vmatpush1.msra.mxu0 0.0
    %7672 = vmatprep.subr.mxu0 0.0
    %7673 = vmatpush1.msra.mxu0 0.0
    %7674 = vmatprep.subr.mxu0 0.0
    %7675 = vmatpush1.msra.mxu0 0.0
    %7676 = vmatprep.subr.mxu0 0.0
    %7677 = vmatpush1.msra.mxu0 0.0
    %7678 = vmatprep.subr.mxu0 0.0
    %7679 = vmatpush1.msra.mxu0 0.0
    %7680 = vmatprep.subr.mxu0 0.0
    %7681 = vmatpush1.msra.mxu0 0.0
    %7682 = vmatprep.subr.mxu0 0.0
    %7683 = vmatpush1.msra.mxu0 0.0
    %7684 = vmatprep.subr.mxu0 0.0
    %7685 = vmatpush1.msra.mxu0 0.0
    %7686 = vmatprep.subr.mxu0 0.0
    %7687 = vmatpush1.msra.mxu0 0.0
    %7688 = vmatprep.subr.mxu0 0.0
    %7689 = vmatpush1.msra.mxu0 0.0
    %7690 = vmatprep.subr.mxu0 0.0
    %7691 = vmatpush1.msra.mxu0 0.0
    %7692 = vmatprep.subr.mxu0 0.0
    %7693 = vmatpush1.msra.mxu0 0.0
    %7694 = vmatprep.subr.mxu0 0.0
    %7695 = vmatpush1.msra.mxu0 0.0
    %7696 = vmatprep.subr.mxu0 0.0
    %7697 = vmatpush1.msra.mxu0 %v7021
    %7698 = vmatprep.subr.mxu0 0.0
    %7699 = vmatpush1.msra.mxu0 %v7020
    %7700 = vmatprep.subr.mxu0 0.0
    %7701 = vmatpush2.msra.mxu0 0.0
    %7702 = vmatprep.subr.mxu0 0.0
    %7703 = vmatpush2.msra.mxu0 0.0
    %7704 = vmatprep.subr.mxu0 0.0
    %7705 = vmatpush2.msra.mxu0 0.0
    %7706 = vmatprep.subr.mxu0 0.0
    %7707 = vmatpush2.msra.mxu0 0.0
    %7708 = vmatprep.subr.mxu0 0.0
    %7709 = vmatpush2.msra.mxu0 0.0
    %7710 = vmatprep.subr.mxu0 0.0
    %7711 = vmatpush2.msra.mxu0 0.0
    %7712 = vmatprep.subr.mxu0 0.0
    %7713 = vmatpush2.msra.mxu0 0.0
    %7714 = vmatprep.subr.mxu0 0.0
    %7715 = vmatpush2.msra.mxu0 0.0
    %7716 = vmatprep.subr.mxu0 0.0
    %7717 = vmatpush2.msra.mxu0 0.0
    %7718 = vmatprep.subr.mxu0 0.0
    %7719 = vmatpush2.msra.mxu0 0.0
    %7720 = vmatprep.subr.mxu0 0.0
    %7721 = vmatpush2.msra.mxu0 0.0
    %7722 = vmatprep.subr.mxu0 0.0
    %7723 = vmatpush2.msra.mxu0 0.0
    %7724 = vmatprep.subr.mxu0 0.0
    %7725 = vmatpush2.msra.mxu0 0.0
    %7726 = vmatprep.subr.mxu0 0.0
    %7727 = vmatpush2.msra.mxu0 0.0
    %7728 = vmatprep.subr.mxu0 0.0
    %7729 = vmatpush2.msra.mxu0 0.0
    %7730 = vmatprep.subr.mxu0 0.0
    %7731 = vmatpush2.msra.mxu0 0.0
    %7732 = vmatprep.mubr.f32.mxu0 0.0
    %7733 = vmatmul.mubr.f32.gmra.mxu0 %v7526
    %v7734 = vpop.f32.mrf.mxu0
    %v7735 = vadd.f32 %v7431, %v7734
    %v7736 = vpop.f32.mrf.mxu0
    %7737 = vdwg.mxu0
    %v7739 = vrot.slane %v7595, 6
    %v7741 = vadd.f32 %v7117, %v7739
    %v7742 = vxor.u32 %v7741, 2147483648
    %v7743 = vmul.f32 %v7742, 1.442695
    %v7744 = vpow.pop %v7743
    %v7745 = vadd.f32 %v7744, 1.0
    %v7746 = vrcp.pop %v7745
    %v7747 = vmul.f32 1.0, %v7746
    %v7749 = vrot.slane %v7665, 6
    %v7751 = vadd.f32 %v7198, %v7749
    %v7752 = vxor.u32 %v7751, 2147483648
    %v7753 = vmul.f32 %v7752, 1.442695
    %v7754 = vpow.pop %v7753
    %v7755 = vadd.f32 %v7754, 1.0
    %v7756 = vrcp.pop %v7755
    %v7757 = vmul.f32 1.0, %v7756
    %v7759 = vrot.slane %v7735, 6
    %v7761 = vmul.f32 %v7747, %v7759
    %v7762 = vadd.f32 %v7279, %v7761
    %v7763 = vtanh.pop %v7762
    %v7765 = vrot.slane %v7763, 2
    %v7767 = vsub.f32 %v7522, %v7765
    %v7769 = vrot.slane %v7767, 6
    %v7771 = vmul.f32 %v7757, %v7769
    %v7772 = vadd.f32 %v7763, %v7771
    %v7773 = vtanh.pop %v7772
    %7775 = vrot.lane.b32.xlu0 %v7773, 16
    %v7776 = vpop.permute.xlu0 %7775
    %vm7778 = vcmask 257154
    %7779 = vst.msk [vmem:[#allocation14 - $0x2] sm:$0xc] %vm7778, %v7776
    %v7781 = vrot.slane %v7772, 2
    %v7782 = vsel %vm260, %v7781, 0
    %7784 = vmatprep.subr.mxu0 0.0
    %7785 = vmatpush1.msra.mxu0 0.0
    %7786 = vmatprep.subr.mxu0 0.0
    %7787 = vmatpush1.msra.mxu0 0.0
    %7788 = vmatprep.subr.mxu0 0.0
    %7789 = vmatpush1.msra.mxu0 0.0
    %7790 = vmatprep.subr.mxu0 0.0
    %7791 = vmatpush1.msra.mxu0 0.0
    %7792 = vmatprep.subr.mxu0 0.0
    %7793 = vmatpush1.msra.mxu0 0.0
    %7794 = vmatprep.subr.mxu0 0.0
    %7795 = vmatpush1.msra.mxu0 0.0
    %7796 = vmatprep.subr.mxu0 0.0
    %7797 = vmatpush1.msra.mxu0 0.0
    %7798 = vmatprep.subr.mxu0 0.0
    %7799 = vmatpush1.msra.mxu0 0.0
    %7800 = vmatprep.subr.mxu0 0.0
    %7801 = vmatpush1.msra.mxu0 0.0
    %7802 = vmatprep.subr.mxu0 0.0
    %7803 = vmatpush1.msra.mxu0 0.0
    %7804 = vmatprep.subr.mxu0 0.0
    %7805 = vmatpush1.msra.mxu0 0.0
    %7806 = vmatprep.subr.mxu0 0.0
    %7807 = vmatpush1.msra.mxu0 0.0
    %7808 = vmatprep.subr.mxu0 0.0
    %7809 = vmatpush1.msra.mxu0 0.0
    %7810 = vmatprep.subr.mxu0 0.0
    %7811 = vmatpush1.msra.mxu0 0.0
    %7812 = vmatprep.subr.mxu0 0.0
    %7813 = vmatpush1.msra.mxu0 %v7015
    %7814 = vmatprep.subr.mxu0 0.0
    %7815 = vmatpush1.msra.mxu0 %v7014
    %7816 = vmatprep.subr.mxu0 0.0
    %7817 = vmatpush2.msra.mxu0 0.0
    %7818 = vmatprep.subr.mxu0 0.0
    %7819 = vmatpush2.msra.mxu0 0.0
    %7820 = vmatprep.subr.mxu0 0.0
    %7821 = vmatpush2.msra.mxu0 0.0
    %7822 = vmatprep.subr.mxu0 0.0
    %7823 = vmatpush2.msra.mxu0 0.0
    %7824 = vmatprep.subr.mxu0 0.0
    %7825 = vmatpush2.msra.mxu0 0.0
    %7826 = vmatprep.subr.mxu0 0.0
    %7827 = vmatpush2.msra.mxu0 0.0
    %7828 = vmatprep.subr.mxu0 0.0
    %7829 = vmatpush2.msra.mxu0 0.0
    %7830 = vmatprep.subr.mxu0 0.0
    %7831 = vmatpush2.msra.mxu0 0.0
    %7832 = vmatprep.subr.mxu0 0.0
    %7833 = vmatpush2.msra.mxu0 0.0
    %7834 = vmatprep.subr.mxu0 0.0
    %7835 = vmatpush2.msra.mxu0 0.0
    %7836 = vmatprep.subr.mxu0 0.0
    %7837 = vmatpush2.msra.mxu0 0.0
    %7838 = vmatprep.subr.mxu0 0.0
    %7839 = vmatpush2.msra.mxu0 0.0
    %7840 = vmatprep.subr.mxu0 0.0
    %7841 = vmatpush2.msra.mxu0 0.0
    %7842 = vmatprep.subr.mxu0 0.0
    %7843 = vmatpush2.msra.mxu0 0.0
    %7844 = vmatprep.subr.mxu0 0.0
    %7845 = vmatpush2.msra.mxu0 0.0
    %7846 = vmatprep.subr.mxu0 0.0
    %7847 = vmatpush2.msra.mxu0 0.0
    %7848 = vmatprep.mubr.f32.mxu0 0.0
    %7849 = vmatmul.mubr.f32.gmra.mxu0 %v7782
    %v7850 = vpop.f32.mrf.mxu0
    %v7851 = vadd.f32 0.0, %v7850
    %v7852 = vpop.f32.mrf.mxu0
    %7853 = vdwg.mxu0
    %7854 = vmatprep.subr.mxu0 0.0
    %7855 = vmatpush1.msra.mxu0 0.0
    %7856 = vmatprep.subr.mxu0 0.0
    %7857 = vmatpush1.msra.mxu0 0.0
    %7858 = vmatprep.subr.mxu0 0.0
    %7859 = vmatpush1.msra.mxu0 0.0
    %7860 = vmatprep.subr.mxu0 0.0
    %7861 = vmatpush1.msra.mxu0 0.0
    %7862 = vmatprep.subr.mxu0 0.0
    %7863 = vmatpush1.msra.mxu0 0.0
    %7864 = vmatprep.subr.mxu0 0.0
    %7865 = vmatpush1.msra.mxu0 0.0
    %7866 = vmatprep.subr.mxu0 0.0
    %7867 = vmatpush1.msra.mxu0 0.0
    %7868 = vmatprep.subr.mxu0 0.0
    %7869 = vmatpush1.msra.mxu0 0.0
    %7870 = vmatprep.subr.mxu0 0.0
    %7871 = vmatpush1.msra.mxu0 0.0
    %7872 = vmatprep.subr.mxu0 0.0
    %7873 = vmatpush1.msra.mxu0 0.0
    %7874 = vmatprep.subr.mxu0 0.0
    %7875 = vmatpush1.msra.mxu0 0.0
    %7876 = vmatprep.subr.mxu0 0.0
    %7877 = vmatpush1.msra.mxu0 0.0
    %7878 = vmatprep.subr.mxu0 0.0
    %7879 = vmatpush1.msra.mxu0 0.0
    %7880 = vmatprep.subr.mxu0 0.0
    %7881 = vmatpush1.msra.mxu0 0.0
    %7882 = vmatprep.subr.mxu0 0.0
    %7883 = vmatpush1.msra.mxu0 %v7018
    %7884 = vmatprep.subr.mxu0 0.0
    %7885 = vmatpush1.msra.mxu0 %v7017
    %7886 = vmatprep.subr.mxu0 0.0
    %7887 = vmatpush2.msra.mxu0 0.0
    %7888 = vmatprep.subr.mxu0 0.0
    %7889 = vmatpush2.msra.mxu0 0.0
    %7890 = vmatprep.subr.mxu0 0.0
    %7891 = vmatpush2.msra.mxu0 0.0
    %7892 = vmatprep.subr.mxu0 0.0
    %7893 = vmatpush2.msra.mxu0 0.0
    %7894 = vmatprep.subr.mxu0 0.0
    %7895 = vmatpush2.msra.mxu0 0.0
    %7896 = vmatprep.subr.mxu0 0.0
    %7897 = vmatpush2.msra.mxu0 0.0
    %7898 = vmatprep.subr.mxu0 0.0
    %7899 = vmatpush2.msra.mxu0 0.0
    %7900 = vmatprep.subr.mxu0 0.0
    %7901 = vmatpush2.msra.mxu0 0.0
    %7902 = vmatprep.subr.mxu0 0.0
    %7903 = vmatpush2.msra.mxu0 0.0
    %7904 = vmatprep.subr.mxu0 0.0
    %7905 = vmatpush2.msra.mxu0 0.0
    %7906 = vmatprep.subr.mxu0 0.0
    %7907 = vmatpush2.msra.mxu0 0.0
    %7908 = vmatprep.subr.mxu0 0.0
    %7909 = vmatpush2.msra.mxu0 0.0
    %7910 = vmatprep.subr.mxu0 0.0
    %7911 = vmatpush2.msra.mxu0 0.0
    %7912 = vmatprep.subr.mxu0 0.0
    %7913 = vmatpush2.msra.mxu0 0.0
    %7914 = vmatprep.subr.mxu0 0.0
    %7915 = vmatpush2.msra.mxu0 0.0
    %7916 = vmatprep.subr.mxu0 0.0
    %7917 = vmatpush2.msra.mxu0 0.0
    %7918 = vmatprep.mubr.f32.mxu0 0.0
    %7919 = vmatmul.mubr.f32.gmra.mxu0 %v7782
    %v7920 = vpop.f32.mrf.mxu0
    %v7921 = vadd.f32 0.0, %v7920
    %v7922 = vpop.f32.mrf.mxu0
    %7923 = vdwg.mxu0
    %7924 = vmatprep.subr.mxu0 0.0
    %7925 = vmatpush1.msra.mxu0 0.0
    %7926 = vmatprep.subr.mxu0 0.0
    %7927 = vmatpush1.msra.mxu0 0.0
    %7928 = vmatprep.subr.mxu0 0.0
    %7929 = vmatpush1.msra.mxu0 0.0
    %7930 = vmatprep.subr.mxu0 0.0
    %7931 = vmatpush1.msra.mxu0 0.0
    %7932 = vmatprep.subr.mxu0 0.0
    %7933 = vmatpush1.msra.mxu0 0.0
    %7934 = vmatprep.subr.mxu0 0.0
    %7935 = vmatpush1.msra.mxu0 0.0
    %7936 = vmatprep.subr.mxu0 0.0
    %7937 = vmatpush1.msra.mxu0 0.0
    %7938 = vmatprep.subr.mxu0 0.0
    %7939 = vmatpush1.msra.mxu0 0.0
    %7940 = vmatprep.subr.mxu0 0.0
    %7941 = vmatpush1.msra.mxu0 0.0
    %7942 = vmatprep.subr.mxu0 0.0
    %7943 = vmatpush1.msra.mxu0 0.0
    %7944 = vmatprep.subr.mxu0 0.0
    %7945 = vmatpush1.msra.mxu0 0.0
    %7946 = vmatprep.subr.mxu0 0.0
    %7947 = vmatpush1.msra.mxu0 0.0
    %7948 = vmatprep.subr.mxu0 0.0
    %7949 = vmatpush1.msra.mxu0 0.0
    %7950 = vmatprep.subr.mxu0 0.0
    %7951 = vmatpush1.msra.mxu0 0.0
    %7952 = vmatprep.subr.mxu0 0.0
    %7953 = vmatpush1.msra.mxu0 %v7021
    %7954 = vmatprep.subr.mxu0 0.0
    %7955 = vmatpush1.msra.mxu0 %v7020
    %7956 = vmatprep.subr.mxu0 0.0
    %7957 = vmatpush2.msra.mxu0 0.0
    %7958 = vmatprep.subr.mxu0 0.0
    %7959 = vmatpush2.msra.mxu0 0.0
    %7960 = vmatprep.subr.mxu0 0.0
    %7961 = vmatpush2.msra.mxu0 0.0
    %7962 = vmatprep.subr.mxu0 0.0
    %7963 = vmatpush2.msra.mxu0 0.0
    %7964 = vmatprep.subr.mxu0 0.0
    %7965 = vmatpush2.msra.mxu0 0.0
    %7966 = vmatprep.subr.mxu0 0.0
    %7967 = vmatpush2.msra.mxu0 0.0
    %7968 = vmatprep.subr.mxu0 0.0
    %7969 = vmatpush2.msra.mxu0 0.0
    %7970 = vmatprep.subr.mxu0 0.0
    %7971 = vmatpush2.msra.mxu0 0.0
    %7972 = vmatprep.subr.mxu0 0.0
    %7973 = vmatpush2.msra.mxu0 0.0
    %7974 = vmatprep.subr.mxu0 0.0
    %7975 = vmatpush2.msra.mxu0 0.0
    %7976 = vmatprep.subr.mxu0 0.0
    %7977 = vmatpush2.msra.mxu0 0.0
    %7978 = vmatprep.subr.mxu0 0.0
    %7979 = vmatpush2.msra.mxu0 0.0
    %7980 = vmatprep.subr.mxu0 0.0
    %7981 = vmatpush2.msra.mxu0 0.0
    %7982 = vmatprep.subr.mxu0 0.0
    %7983 = vmatpush2.msra.mxu0 0.0
    %7984 = vmatprep.subr.mxu0 0.0
    %7985 = vmatpush2.msra.mxu0 0.0
    %7986 = vmatprep.subr.mxu0 0.0
    %7987 = vmatpush2.msra.mxu0 0.0
    %7988 = vmatprep.mubr.f32.mxu0 0.0
    %7989 = vmatmul.mubr.f32.gmra.mxu0 %v7782
    %v7990 = vpop.f32.mrf.mxu0
    %v7991 = vadd.f32 %v7431, %v7990
    %v7992 = vpop.f32.mrf.mxu0
    %7993 = vdwg.mxu0
    %v7995 = vrot.slane %v7851, 4
    %v7997 = vadd.f32 %v7117, %v7995
    %v7998 = vxor.u32 %v7997, 2147483648
    %v7999 = vmul.f32 %v7998, 1.442695
    %v8000 = vpow.pop %v7999
    %v8001 = vadd.f32 %v8000, 1.0
    %v8002 = vrcp.pop %v8001
    %v8003 = vmul.f32 1.0, %v8002
    %v8005 = vrot.slane %v7921, 4
    %v8007 = vadd.f32 %v7198, %v8005
    %v8008 = vxor.u32 %v8007, 2147483648
    %v8009 = vmul.f32 %v8008, 1.442695
    %v8010 = vpow.pop %v8009
    %v8011 = vadd.f32 %v8010, 1.0
    %v8012 = vrcp.pop %v8011
    %v8013 = vmul.f32 1.0, %v8012
    %v8015 = vrot.slane %v7991, 4
    %v8017 = vmul.f32 %v8003, %v8015
    %v8018 = vadd.f32 %v7279, %v8017
    %v8019 = vtanh.pop %v8018
    %v8021 = vrot.slane %v8019, 2
    %v8023 = vsub.f32 %v7772, %v8021
    %v8025 = vrot.slane %v8023, 6
    %v8027 = vmul.f32 %v8013, %v8025
    %v8028 = vadd.f32 %v8019, %v8027
    %v8029 = vtanh.pop %v8028
    %8031 = vrot.lane.b32.xlu0 %v8029, 32
    %v8032 = vpop.permute.xlu0 %8031
    %vm8034 = vcmask 390404
    %8035 = vst.msk [vmem:[#allocation14 - $0x4] sm:$0x30] %vm8034, %v8032
    %v8037 = vrot.slane %v8028, 4
    %v8038 = vsel %vm260, %v8037, 0
    %8040 = vmatprep.subr.mxu0 0.0
    %8041 = vmatpush1.msra.mxu0 0.0
    %8042 = vmatprep.subr.mxu0 0.0
    %8043 = vmatpush1.msra.mxu0 0.0
    %8044 = vmatprep.subr.mxu0 0.0
    %8045 = vmatpush1.msra.mxu0 0.0
    %8046 = vmatprep.subr.mxu0 0.0
    %8047 = vmatpush1.msra.mxu0 0.0
    %8048 = vmatprep.subr.mxu0 0.0
    %8049 = vmatpush1.msra.mxu0 0.0
    %8050 = vmatprep.subr.mxu0 0.0
    %8051 = vmatpush1.msra.mxu0 0.0
    %8052 = vmatprep.subr.mxu0 0.0
    %8053 = vmatpush1.msra.mxu0 0.0
    %8054 = vmatprep.subr.mxu0 0.0
    %8055 = vmatpush1.msra.mxu0 0.0
    %8056 = vmatprep.subr.mxu0 0.0
    %8057 = vmatpush1.msra.mxu0 0.0
    %8058 = vmatprep.subr.mxu0 0.0
    %8059 = vmatpush1.msra.mxu0 0.0
    %8060 = vmatprep.subr.mxu0 0.0
    %8061 = vmatpush1.msra.mxu0 0.0
    %8062 = vmatprep.subr.mxu0 0.0
    %8063 = vmatpush1.msra.mxu0 0.0
    %8064 = vmatprep.subr.mxu0 0.0
    %8065 = vmatpush1.msra.mxu0 0.0
    %8066 = vmatprep.subr.mxu0 0.0
    %8067 = vmatpush1.msra.mxu0 0.0
    %8068 = vmatprep.subr.mxu0 0.0
    %8069 = vmatpush1.msra.mxu0 %v7015
    %8070 = vmatprep.subr.mxu0 0.0
    %8071 = vmatpush1.msra.mxu0 %v7014
    %8072 = vmatprep.subr.mxu0 0.0
    %8073 = vmatpush2.msra.mxu0 0.0
    %8074 = vmatprep.subr.mxu0 0.0
    %8075 = vmatpush2.msra.mxu0 0.0
    %8076 = vmatprep.subr.mxu0 0.0
    %8077 = vmatpush2.msra.mxu0 0.0
    %8078 = vmatprep.subr.mxu0 0.0
    %8079 = vmatpush2.msra.mxu0 0.0
    %8080 = vmatprep.subr.mxu0 0.0
    %8081 = vmatpush2.msra.mxu0 0.0
    %8082 = vmatprep.subr.mxu0 0.0
    %8083 = vmatpush2.msra.mxu0 0.0
    %8084 = vmatprep.subr.mxu0 0.0
    %8085 = vmatpush2.msra.mxu0 0.0
    %8086 = vmatprep.subr.mxu0 0.0
    %8087 = vmatpush2.msra.mxu0 0.0
    %8088 = vmatprep.subr.mxu0 0.0
    %8089 = vmatpush2.msra.mxu0 0.0
    %8090 = vmatprep.subr.mxu0 0.0
    %8091 = vmatpush2.msra.mxu0 0.0
    %8092 = vmatprep.subr.mxu0 0.0
    %8093 = vmatpush2.msra.mxu0 0.0
    %8094 = vmatprep.subr.mxu0 0.0
    %8095 = vmatpush2.msra.mxu0 0.0
    %8096 = vmatprep.subr.mxu0 0.0
    %8097 = vmatpush2.msra.mxu0 0.0
    %8098 = vmatprep.subr.mxu0 0.0
    %8099 = vmatpush2.msra.mxu0 0.0
    %8100 = vmatprep.subr.mxu0 0.0
    %8101 = vmatpush2.msra.mxu0 0.0
    %8102 = vmatprep.subr.mxu0 0.0
    %8103 = vmatpush2.msra.mxu0 0.0
    %8104 = vmatprep.mubr.f32.mxu0 0.0
    %8105 = vmatmul.mubr.f32.gmra.mxu0 %v8038
    %v8106 = vpop.f32.mrf.mxu0
    %v8107 = vadd.f32 0.0, %v8106
    %v8108 = vpop.f32.mrf.mxu0
    %8109 = vdwg.mxu0
    %8110 = vmatprep.subr.mxu0 0.0
    %8111 = vmatpush1.msra.mxu0 0.0
    %8112 = vmatprep.subr.mxu0 0.0
    %8113 = vmatpush1.msra.mxu0 0.0
    %8114 = vmatprep.subr.mxu0 0.0
    %8115 = vmatpush1.msra.mxu0 0.0
    %8116 = vmatprep.subr.mxu0 0.0
    %8117 = vmatpush1.msra.mxu0 0.0
    %8118 = vmatprep.subr.mxu0 0.0
    %8119 = vmatpush1.msra.mxu0 0.0
    %8120 = vmatprep.subr.mxu0 0.0
    %8121 = vmatpush1.msra.mxu0 0.0
    %8122 = vmatprep.subr.mxu0 0.0
    %8123 = vmatpush1.msra.mxu0 0.0
    %8124 = vmatprep.subr.mxu0 0.0
    %8125 = vmatpush1.msra.mxu0 0.0
    %8126 = vmatprep.subr.mxu0 0.0
    %8127 = vmatpush1.msra.mxu0 0.0
    %8128 = vmatprep.subr.mxu0 0.0
    %8129 = vmatpush1.msra.mxu0 0.0
    %8130 = vmatprep.subr.mxu0 0.0
    %8131 = vmatpush1.msra.mxu0 0.0
    %8132 = vmatprep.subr.mxu0 0.0
    %8133 = vmatpush1.msra.mxu0 0.0
    %8134 = vmatprep.subr.mxu0 0.0
    %8135 = vmatpush1.msra.mxu0 0.0
    %8136 = vmatprep.subr.mxu0 0.0
    %8137 = vmatpush1.msra.mxu0 0.0
    %8138 = vmatprep.subr.mxu0 0.0
    %8139 = vmatpush1.msra.mxu0 %v7018
    %8140 = vmatprep.subr.mxu0 0.0
    %8141 = vmatpush1.msra.mxu0 %v7017
    %8142 = vmatprep.subr.mxu0 0.0
    %8143 = vmatpush2.msra.mxu0 0.0
    %8144 = vmatprep.subr.mxu0 0.0
    %8145 = vmatpush2.msra.mxu0 0.0
    %8146 = vmatprep.subr.mxu0 0.0
    %8147 = vmatpush2.msra.mxu0 0.0
    %8148 = vmatprep.subr.mxu0 0.0
    %8149 = vmatpush2.msra.mxu0 0.0
    %8150 = vmatprep.subr.mxu0 0.0
    %8151 = vmatpush2.msra.mxu0 0.0
    %8152 = vmatprep.subr.mxu0 0.0
    %8153 = vmatpush2.msra.mxu0 0.0
    %8154 = vmatprep.subr.mxu0 0.0
    %8155 = vmatpush2.msra.mxu0 0.0
    %8156 = vmatprep.subr.mxu0 0.0
    %8157 = vmatpush2.msra.mxu0 0.0
    %8158 = vmatprep.subr.mxu0 0.0
    %8159 = vmatpush2.msra.mxu0 0.0
    %8160 = vmatprep.subr.mxu0 0.0
    %8161 = vmatpush2.msra.mxu0 0.0
    %8162 = vmatprep.subr.mxu0 0.0
    %8163 = vmatpush2.msra.mxu0 0.0
    %8164 = vmatprep.subr.mxu0 0.0
    %8165 = vmatpush2.msra.mxu0 0.0
    %8166 = vmatprep.subr.mxu0 0.0
    %8167 = vmatpush2.msra.mxu0 0.0
    %8168 = vmatprep.subr.mxu0 0.0
    %8169 = vmatpush2.msra.mxu0 0.0
    %8170 = vmatprep.subr.mxu0 0.0
    %8171 = vmatpush2.msra.mxu0 0.0
    %8172 = vmatprep.subr.mxu0 0.0
    %8173 = vmatpush2.msra.mxu0 0.0
    %8174 = vmatprep.mubr.f32.mxu0 0.0
    %8175 = vmatmul.mubr.f32.gmra.mxu0 %v8038
    %v8176 = vpop.f32.mrf.mxu0
    %v8177 = vadd.f32 0.0, %v8176
    %v8178 = vpop.f32.mrf.mxu0
    %8179 = vdwg.mxu0
    %8180 = vmatprep.subr.mxu0 0.0
    %8181 = vmatpush1.msra.mxu0 0.0
    %8182 = vmatprep.subr.mxu0 0.0
    %8183 = vmatpush1.msra.mxu0 0.0
    %8184 = vmatprep.subr.mxu0 0.0
    %8185 = vmatpush1.msra.mxu0 0.0
    %8186 = vmatprep.subr.mxu0 0.0
    %8187 = vmatpush1.msra.mxu0 0.0
    %8188 = vmatprep.subr.mxu0 0.0
    %8189 = vmatpush1.msra.mxu0 0.0
    %8190 = vmatprep.subr.mxu0 0.0
    %8191 = vmatpush1.msra.mxu0 0.0
    %8192 = vmatprep.subr.mxu0 0.0
    %8193 = vmatpush1.msra.mxu0 0.0
    %8194 = vmatprep.subr.mxu0 0.0
    %8195 = vmatpush1.msra.mxu0 0.0
    %8196 = vmatprep.subr.mxu0 0.0
    %8197 = vmatpush1.msra.mxu0 0.0
    %8198 = vmatprep.subr.mxu0 0.0
    %8199 = vmatpush1.msra.mxu0 0.0
    %8200 = vmatprep.subr.mxu0 0.0
    %8201 = vmatpush1.msra.mxu0 0.0
    %8202 = vmatprep.subr.mxu0 0.0
    %8203 = vmatpush1.msra.mxu0 0.0
    %8204 = vmatprep.subr.mxu0 0.0
    %8205 = vmatpush1.msra.mxu0 0.0
    %8206 = vmatprep.subr.mxu0 0.0
    %8207 = vmatpush1.msra.mxu0 0.0
    %8208 = vmatprep.subr.mxu0 0.0
    %8209 = vmatpush1.msra.mxu0 %v7021
    %8210 = vmatprep.subr.mxu0 0.0
    %8211 = vmatpush1.msra.mxu0 %v7020
    %8212 = vmatprep.subr.mxu0 0.0
    %8213 = vmatpush2.msra.mxu0 0.0
    %8214 = vmatprep.subr.mxu0 0.0
    %8215 = vmatpush2.msra.mxu0 0.0
    %8216 = vmatprep.subr.mxu0 0.0
    %8217 = vmatpush2.msra.mxu0 0.0
    %8218 = vmatprep.subr.mxu0 0.0
    %8219 = vmatpush2.msra.mxu0 0.0
    %8220 = vmatprep.subr.mxu0 0.0
    %8221 = vmatpush2.msra.mxu0 0.0
    %8222 = vmatprep.subr.mxu0 0.0
    %8223 = vmatpush2.msra.mxu0 0.0
    %8224 = vmatprep.subr.mxu0 0.0
    %8225 = vmatpush2.msra.mxu0 0.0
    %8226 = vmatprep.subr.mxu0 0.0
    %8227 = vmatpush2.msra.mxu0 0.0
    %8228 = vmatprep.subr.mxu0 0.0
    %8229 = vmatpush2.msra.mxu0 0.0
    %8230 = vmatprep.subr.mxu0 0.0
    %8231 = vmatpush2.msra.mxu0 0.0
    %8232 = vmatprep.subr.mxu0 0.0
    %8233 = vmatpush2.msra.mxu0 0.0
    %8234 = vmatprep.subr.mxu0 0.0
    %8235 = vmatpush2.msra.mxu0 0.0
    %8236 = vmatprep.subr.mxu0 0.0
    %8237 = vmatpush2.msra.mxu0 0.0
    %8238 = vmatprep.subr.mxu0 0.0
    %8239 = vmatpush2.msra.mxu0 0.0
    %8240 = vmatprep.subr.mxu0 0.0
    %8241 = vmatpush2.msra.mxu0 0.0
    %8242 = vmatprep.subr.mxu0 0.0
    %8243 = vmatpush2.msra.mxu0 0.0
    %8244 = vmatprep.mubr.f32.mxu0 0.0
    %8245 = vmatmul.mubr.f32.gmra.mxu0 %v8038
    %v8246 = vpop.f32.mrf.mxu0
    %v8247 = vadd.f32 %v7431, %v8246
    %v8248 = vpop.f32.mrf.mxu0
    %8249 = vdwg.mxu0
    %v8251 = vrot.slane %v8107, 2
    %v8253 = vadd.f32 %v7117, %v8251
    %v8254 = vxor.u32 %v8253, 2147483648
    %v8255 = vmul.f32 %v8254, 1.442695
    %v8256 = vpow.pop %v8255
    %v8257 = vadd.f32 %v8256, 1.0
    %v8258 = vrcp.pop %v8257
    %v8259 = vmul.f32 1.0, %v8258
    %v8261 = vrot.slane %v8177, 2
    %v8263 = vadd.f32 %v7198, %v8261
    %v8264 = vxor.u32 %v8263, 2147483648
    %v8265 = vmul.f32 %v8264, 1.442695
    %v8266 = vpow.pop %v8265
    %v8267 = vadd.f32 %v8266, 1.0
    %v8268 = vrcp.pop %v8267
    %v8269 = vmul.f32 1.0, %v8268
    %v8271 = vrot.slane %v8247, 2
    %v8273 = vmul.f32 %v8259, %v8271
    %v8274 = vadd.f32 %v7279, %v8273
    %v8275 = vtanh.pop %v8274
    %v8277 = vrot.slane %v8275, 2
    %v8279 = vsub.f32 %v8028, %v8277
    %v8281 = vrot.slane %v8279, 6
    %v8283 = vmul.f32 %v8269, %v8281
    %v8284 = vadd.f32 %v8275, %v8283
    %v8285 = vtanh.pop %v8284
    %8287 = vrot.lane.b32.xlu0 %v8285, 48
    %v8288 = vpop.permute.xlu0 %8287
    %vm8290 = vcmask 523654
    %8291 = vst.msk [vmem:[#allocation14 - $0x6] sm:$0xc0] %vm8290, %v8288
    %v8293 = vrot.slane %v8284, 6
    %v8294 = vsel %vm260, %v8293, 0
    %8296 = vmatprep.subr.mxu0 0.0
    %8297 = vmatpush1.msra.mxu0 0.0
    %8298 = vmatprep.subr.mxu0 0.0
    %8299 = vmatpush1.msra.mxu0 0.0
    %8300 = vmatprep.subr.mxu0 0.0
    %8301 = vmatpush1.msra.mxu0 0.0
    %8302 = vmatprep.subr.mxu0 0.0
    %8303 = vmatpush1.msra.mxu0 0.0
    %8304 = vmatprep.subr.mxu0 0.0
    %8305 = vmatpush1.msra.mxu0 0.0
    %8306 = vmatprep.subr.mxu0 0.0
    %8307 = vmatpush1.msra.mxu0 0.0
    %8308 = vmatprep.subr.mxu0 0.0
    %8309 = vmatpush1.msra.mxu0 0.0
    %8310 = vmatprep.subr.mxu0 0.0
    %8311 = vmatpush1.msra.mxu0 0.0
    %8312 = vmatprep.subr.mxu0 0.0
    %8313 = vmatpush1.msra.mxu0 0.0
    %8314 = vmatprep.subr.mxu0 0.0
    %8315 = vmatpush1.msra.mxu0 0.0
    %8316 = vmatprep.subr.mxu0 0.0
    %8317 = vmatpush1.msra.mxu0 0.0
    %8318 = vmatprep.subr.mxu0 0.0
    %8319 = vmatpush1.msra.mxu0 0.0
    %8320 = vmatprep.subr.mxu0 0.0
    %8321 = vmatpush1.msra.mxu0 0.0
    %8322 = vmatprep.subr.mxu0 0.0
    %8323 = vmatpush1.msra.mxu0 0.0
    %8324 = vmatprep.subr.mxu0 0.0
    %8325 = vmatpush1.msra.mxu0 %v7015
    %8326 = vmatprep.subr.mxu0 0.0
    %8327 = vmatpush1.msra.mxu0 %v7014
    %8328 = vmatprep.subr.mxu0 0.0
    %8329 = vmatpush2.msra.mxu0 0.0
    %8330 = vmatprep.subr.mxu0 0.0
    %8331 = vmatpush2.msra.mxu0 0.0
    %8332 = vmatprep.subr.mxu0 0.0
    %8333 = vmatpush2.msra.mxu0 0.0
    %8334 = vmatprep.subr.mxu0 0.0
    %8335 = vmatpush2.msra.mxu0 0.0
    %8336 = vmatprep.subr.mxu0 0.0
    %8337 = vmatpush2.msra.mxu0 0.0
    %8338 = vmatprep.subr.mxu0 0.0
    %8339 = vmatpush2.msra.mxu0 0.0
    %8340 = vmatprep.subr.mxu0 0.0
    %8341 = vmatpush2.msra.mxu0 0.0
    %8342 = vmatprep.subr.mxu0 0.0
    %8343 = vmatpush2.msra.mxu0 0.0
    %8344 = vmatprep.subr.mxu0 0.0
    %8345 = vmatpush2.msra.mxu0 0.0
    %8346 = vmatprep.subr.mxu0 0.0
    %8347 = vmatpush2.msra.mxu0 0.0
    %8348 = vmatprep.subr.mxu0 0.0
    %8349 = vmatpush2.msra.mxu0 0.0
    %8350 = vmatprep.subr.mxu0 0.0
    %8351 = vmatpush2.msra.mxu0 0.0
    %8352 = vmatprep.subr.mxu0 0.0
    %8353 = vmatpush2.msra.mxu0 0.0
    %8354 = vmatprep.subr.mxu0 0.0
    %8355 = vmatpush2.msra.mxu0 0.0
    %8356 = vmatprep.subr.mxu0 0.0
    %8357 = vmatpush2.msra.mxu0 0.0
    %8358 = vmatprep.subr.mxu0 0.0
    %8359 = vmatpush2.msra.mxu0 0.0
    %8360 = vmatprep.mubr.f32.mxu0 0.0
    %8361 = vmatmul.mubr.f32.gmra.mxu0 %v8294
    %v8362 = vpop.f32.mrf.mxu0
    %v8363 = vadd.f32 0.0, %v8362
    %v8364 = vpop.f32.mrf.mxu0
    %8365 = vdwg.mxu0
    %8366 = vmatprep.subr.mxu0 0.0
    %8367 = vmatpush1.msra.mxu0 0.0
    %8368 = vmatprep.subr.mxu0 0.0
    %8369 = vmatpush1.msra.mxu0 0.0
    %8370 = vmatprep.subr.mxu0 0.0
    %8371 = vmatpush1.msra.mxu0 0.0
    %8372 = vmatprep.subr.mxu0 0.0
    %8373 = vmatpush1.msra.mxu0 0.0
    %8374 = vmatprep.subr.mxu0 0.0
    %8375 = vmatpush1.msra.mxu0 0.0
    %8376 = vmatprep.subr.mxu0 0.0
    %8377 = vmatpush1.msra.mxu0 0.0
    %8378 = vmatprep.subr.mxu0 0.0
    %8379 = vmatpush1.msra.mxu0 0.0
    %8380 = vmatprep.subr.mxu0 0.0
    %8381 = vmatpush1.msra.mxu0 0.0
    %8382 = vmatprep.subr.mxu0 0.0
    %8383 = vmatpush1.msra.mxu0 0.0
    %8384 = vmatprep.subr.mxu0 0.0
    %8385 = vmatpush1.msra.mxu0 0.0
    %8386 = vmatprep.subr.mxu0 0.0
    %8387 = vmatpush1.msra.mxu0 0.0
    %8388 = vmatprep.subr.mxu0 0.0
    %8389 = vmatpush1.msra.mxu0 0.0
    %8390 = vmatprep.subr.mxu0 0.0
    %8391 = vmatpush1.msra.mxu0 0.0
    %8392 = vmatprep.subr.mxu0 0.0
    %8393 = vmatpush1.msra.mxu0 0.0
    %8394 = vmatprep.subr.mxu0 0.0
    %8395 = vmatpush1.msra.mxu0 %v7018
    %8396 = vmatprep.subr.mxu0 0.0
    %8397 = vmatpush1.msra.mxu0 %v7017
    %8398 = vmatprep.subr.mxu0 0.0
    %8399 = vmatpush2.msra.mxu0 0.0
    %8400 = vmatprep.subr.mxu0 0.0
    %8401 = vmatpush2.msra.mxu0 0.0
    %8402 = vmatprep.subr.mxu0 0.0
    %8403 = vmatpush2.msra.mxu0 0.0
    %8404 = vmatprep.subr.mxu0 0.0
    %8405 = vmatpush2.msra.mxu0 0.0
    %8406 = vmatprep.subr.mxu0 0.0
    %8407 = vmatpush2.msra.mxu0 0.0
    %8408 = vmatprep.subr.mxu0 0.0
    %8409 = vmatpush2.msra.mxu0 0.0
    %8410 = vmatprep.subr.mxu0 0.0
    %8411 = vmatpush2.msra.mxu0 0.0
    %8412 = vmatprep.subr.mxu0 0.0
    %8413 = vmatpush2.msra.mxu0 0.0
    %8414 = vmatprep.subr.mxu0 0.0
    %8415 = vmatpush2.msra.mxu0 0.0
    %8416 = vmatprep.subr.mxu0 0.0
    %8417 = vmatpush2.msra.mxu0 0.0
    %8418 = vmatprep.subr.mxu0 0.0
    %8419 = vmatpush2.msra.mxu0 0.0
    %8420 = vmatprep.subr.mxu0 0.0
    %8421 = vmatpush2.msra.mxu0 0.0
    %8422 = vmatprep.subr.mxu0 0.0
    %8423 = vmatpush2.msra.mxu0 0.0
    %8424 = vmatprep.subr.mxu0 0.0
    %8425 = vmatpush2.msra.mxu0 0.0
    %8426 = vmatprep.subr.mxu0 0.0
    %8427 = vmatpush2.msra.mxu0 0.0
    %8428 = vmatprep.subr.mxu0 0.0
    %8429 = vmatpush2.msra.mxu0 0.0
    %8430 = vmatprep.mubr.f32.mxu0 0.0
    %8431 = vmatmul.mubr.f32.gmra.mxu0 %v8294
    %v8432 = vpop.f32.mrf.mxu0
    %v8433 = vadd.f32 0.0, %v8432
    %v8434 = vpop.f32.mrf.mxu0
    %8435 = vdwg.mxu0
    %8436 = vmatprep.subr.mxu0 0.0
    %8437 = vmatpush1.msra.mxu0 0.0
    %8438 = vmatprep.subr.mxu0 0.0
    %8439 = vmatpush1.msra.mxu0 0.0
    %8440 = vmatprep.subr.mxu0 0.0
    %8441 = vmatpush1.msra.mxu0 0.0
    %8442 = vmatprep.subr.mxu0 0.0
    %8443 = vmatpush1.msra.mxu0 0.0
    %8444 = vmatprep.subr.mxu0 0.0
    %8445 = vmatpush1.msra.mxu0 0.0
    %8446 = vmatprep.subr.mxu0 0.0
    %8447 = vmatpush1.msra.mxu0 0.0
    %8448 = vmatprep.subr.mxu0 0.0
    %8449 = vmatpush1.msra.mxu0 0.0
    %8450 = vmatprep.subr.mxu0 0.0
    %8451 = vmatpush1.msra.mxu0 0.0
    %8452 = vmatprep.subr.mxu0 0.0
    %8453 = vmatpush1.msra.mxu0 0.0
    %8454 = vmatprep.subr.mxu0 0.0
    %8455 = vmatpush1.msra.mxu0 0.0
    %8456 = vmatprep.subr.mxu0 0.0
    %8457 = vmatpush1.msra.mxu0 0.0
    %8458 = vmatprep.subr.mxu0 0.0
    %8459 = vmatpush1.msra.mxu0 0.0
    %8460 = vmatprep.subr.mxu0 0.0
    %8461 = vmatpush1.msra.mxu0 0.0
    %8462 = vmatprep.subr.mxu0 0.0
    %8463 = vmatpush1.msra.mxu0 0.0
    %8464 = vmatprep.subr.mxu0 0.0
    %8465 = vmatpush1.msra.mxu0 %v7021
    %8466 = vmatprep.subr.mxu0 0.0
    %8467 = vmatpush1.msra.mxu0 %v7020
    %8468 = vmatprep.subr.mxu0 0.0
    %8469 = vmatpush2.msra.mxu0 0.0
    %8470 = vmatprep.subr.mxu0 0.0
    %8471 = vmatpush2.msra.mxu0 0.0
    %8472 = vmatprep.subr.mxu0 0.0
    %8473 = vmatpush2.msra.mxu0 0.0
    %8474 = vmatprep.subr.mxu0 0.0
    %8475 = vmatpush2.msra.mxu0 0.0
    %8476 = vmatprep.subr.mxu0 0.0
    %8477 = vmatpush2.msra.mxu0 0.0
    %8478 = vmatprep.subr.mxu0 0.0
    %8479 = vmatpush2.msra.mxu0 0.0
    %8480 = vmatprep.subr.mxu0 0.0
    %8481 = vmatpush2.msra.mxu0 0.0
    %8482 = vmatprep.subr.mxu0 0.0
    %8483 = vmatpush2.msra.mxu0 0.0
    %8484 = vmatprep.subr.mxu0 0.0
    %8485 = vmatpush2.msra.mxu0 0.0
    %8486 = vmatprep.subr.mxu0 0.0
    %8487 = vmatpush2.msra.mxu0 0.0
    %8488 = vmatprep.subr.mxu0 0.0
    %8489 = vmatpush2.msra.mxu0 0.0
    %8490 = vmatprep.subr.mxu0 0.0
    %8491 = vmatpush2.msra.mxu0 0.0
    %8492 = vmatprep.subr.mxu0 0.0
    %8493 = vmatpush2.msra.mxu0 0.0
    %8494 = vmatprep.subr.mxu0 0.0
    %8495 = vmatpush2.msra.mxu0 0.0
    %8496 = vmatprep.subr.mxu0 0.0
    %8497 = vmatpush2.msra.mxu0 0.0
    %8498 = vmatprep.subr.mxu0 0.0
    %8499 = vmatpush2.msra.mxu0 0.0
    %8500 = vmatprep.mubr.f32.mxu0 0.0
    %8501 = vmatmul.mubr.f32.gmra.mxu0 %v8294
    %v8502 = vpop.f32.mrf.mxu0
    %v8503 = vadd.f32 %v7431, %v8502
    %v8504 = vpop.f32.mrf.mxu0
    %8505 = vdwg.mxu0
    %v8506 = vadd.f32 %v7122, %v8363
    %v8507 = vxor.u32 %v8506, 2147483648
    %v8508 = vmul.f32 %v8507, 1.442695
    %v8509 = vpow.pop %v8508
    %v8510 = vadd.f32 %v8509, 1.0
    %v8511 = vrcp.pop %v8510
    %v8512 = vmul.f32 1.0, %v8511
    %v8513 = vadd.f32 %v7203, %v8433
    %v8514 = vxor.u32 %v8513, 2147483648
    %v8515 = vmul.f32 %v8514, 1.442695
    %v8516 = vpow.pop %v8515
    %v8517 = vadd.f32 %v8516, 1.0
    %v8518 = vrcp.pop %v8517
    %v8519 = vmul.f32 1.0, %v8518
    %v8520 = vmul.f32 %v8512, %v8503
    %v8521 = vadd.f32 %v7284, %v8520
    %v8522 = vtanh.pop %v8521
    %v8524 = vrot.slane %v8522, 2
    %v8526 = vsub.f32 %v8284, %v8524
    %v8528 = vrot.slane %v8526, 6
    %v8530 = vmul.f32 %v8519, %v8528
    %v8531 = vadd.f32 %v8522, %v8530
    %v8532 = vtanh.pop %v8531
    %8534 = vrot.lane.b32.xlu0 %v8532, 64
    %v8535 = vpop.permute.xlu0 %8534
    %vm8537 = vcmask 648704
    %8538 = vst.msk [vmem:[#allocation14] sm:$0x3] %vm8537, %v8535
    %v8540 = vsel %vm260, %v8531, 0
    %8542 = vmatprep.subr.mxu0 0.0
    %8543 = vmatpush1.msra.mxu0 0.0
    %8544 = vmatprep.subr.mxu0 0.0
    %8545 = vmatpush1.msra.mxu0 0.0
    %8546 = vmatprep.subr.mxu0 0.0
    %8547 = vmatpush1.msra.mxu0 0.0
    %8548 = vmatprep.subr.mxu0 0.0
    %8549 = vmatpush1.msra.mxu0 0.0
    %8550 = vmatprep.subr.mxu0 0.0
    %8551 = vmatpush1.msra.mxu0 0.0
    %8552 = vmatprep.subr.mxu0 0.0
    %8553 = vmatpush1.msra.mxu0 0.0
    %8554 = vmatprep.subr.mxu0 0.0
    %8555 = vmatpush1.msra.mxu0 0.0
    %8556 = vmatprep.subr.mxu0 0.0
    %8557 = vmatpush1.msra.mxu0 0.0
    %8558 = vmatprep.subr.mxu0 0.0
    %8559 = vmatpush1.msra.mxu0 0.0
    %8560 = vmatprep.subr.mxu0 0.0
    %8561 = vmatpush1.msra.mxu0 0.0
    %8562 = vmatprep.subr.mxu0 0.0
    %8563 = vmatpush1.msra.mxu0 0.0
    %8564 = vmatprep.subr.mxu0 0.0
    %8565 = vmatpush1.msra.mxu0 0.0
    %8566 = vmatprep.subr.mxu0 0.0
    %8567 = vmatpush1.msra.mxu0 0.0
    %8568 = vmatprep.subr.mxu0 0.0
    %8569 = vmatpush1.msra.mxu0 0.0
    %8570 = vmatprep.subr.mxu0 0.0
    %8571 = vmatpush1.msra.mxu0 %v7015
    %8572 = vmatprep.subr.mxu0 0.0
    %8573 = vmatpush1.msra.mxu0 %v7014
    %8574 = vmatprep.subr.mxu0 0.0
    %8575 = vmatpush2.msra.mxu0 0.0
    %8576 = vmatprep.subr.mxu0 0.0
    %8577 = vmatpush2.msra.mxu0 0.0
    %8578 = vmatprep.subr.mxu0 0.0
    %8579 = vmatpush2.msra.mxu0 0.0
    %8580 = vmatprep.subr.mxu0 0.0
    %8581 = vmatpush2.msra.mxu0 0.0
    %8582 = vmatprep.subr.mxu0 0.0
    %8583 = vmatpush2.msra.mxu0 0.0
    %8584 = vmatprep.subr.mxu0 0.0
    %8585 = vmatpush2.msra.mxu0 0.0
    %8586 = vmatprep.subr.mxu0 0.0
    %8587 = vmatpush2.msra.mxu0 0.0
    %8588 = vmatprep.subr.mxu0 0.0
    %8589 = vmatpush2.msra.mxu0 0.0
    %8590 = vmatprep.subr.mxu0 0.0
    %8591 = vmatpush2.msra.mxu0 0.0
    %8592 = vmatprep.subr.mxu0 0.0
    %8593 = vmatpush2.msra.mxu0 0.0
    %8594 = vmatprep.subr.mxu0 0.0
    %8595 = vmatpush2.msra.mxu0 0.0
    %8596 = vmatprep.subr.mxu0 0.0
    %8597 = vmatpush2.msra.mxu0 0.0
    %8598 = vmatprep.subr.mxu0 0.0
    %8599 = vmatpush2.msra.mxu0 0.0
    %8600 = vmatprep.subr.mxu0 0.0
    %8601 = vmatpush2.msra.mxu0 0.0
    %8602 = vmatprep.subr.mxu0 0.0
    %8603 = vmatpush2.msra.mxu0 0.0
    %8604 = vmatprep.subr.mxu0 0.0
    %8605 = vmatpush2.msra.mxu0 0.0
    %8606 = vmatprep.mubr.f32.mxu0 0.0
    %8607 = vmatmul.mubr.f32.gmra.mxu0 %v8540
    %v8608 = vpop.f32.mrf.mxu0
    %v8609 = vadd.f32 0.0, %v8608
    %v8610 = vpop.f32.mrf.mxu0
    %8611 = vdwg.mxu0
    %8612 = vmatprep.subr.mxu0 0.0
    %8613 = vmatpush1.msra.mxu0 0.0
    %8614 = vmatprep.subr.mxu0 0.0
    %8615 = vmatpush1.msra.mxu0 0.0
    %8616 = vmatprep.subr.mxu0 0.0
    %8617 = vmatpush1.msra.mxu0 0.0
    %8618 = vmatprep.subr.mxu0 0.0
    %8619 = vmatpush1.msra.mxu0 0.0
    %8620 = vmatprep.subr.mxu0 0.0
    %8621 = vmatpush1.msra.mxu0 0.0
    %8622 = vmatprep.subr.mxu0 0.0
    %8623 = vmatpush1.msra.mxu0 0.0
    %8624 = vmatprep.subr.mxu0 0.0
    %8625 = vmatpush1.msra.mxu0 0.0
    %8626 = vmatprep.subr.mxu0 0.0
    %8627 = vmatpush1.msra.mxu0 0.0
    %8628 = vmatprep.subr.mxu0 0.0
    %8629 = vmatpush1.msra.mxu0 0.0
    %8630 = vmatprep.subr.mxu0 0.0
    %8631 = vmatpush1.msra.mxu0 0.0
    %8632 = vmatprep.subr.mxu0 0.0
    %8633 = vmatpush1.msra.mxu0 0.0
    %8634 = vmatprep.subr.mxu0 0.0
    %8635 = vmatpush1.msra.mxu0 0.0
    %8636 = vmatprep.subr.mxu0 0.0
    %8637 = vmatpush1.msra.mxu0 0.0
    %8638 = vmatprep.subr.mxu0 0.0
    %8639 = vmatpush1.msra.mxu0 0.0
    %8640 = vmatprep.subr.mxu0 0.0
    %8641 = vmatpush1.msra.mxu0 %v7018
    %8642 = vmatprep.subr.mxu0 0.0
    %8643 = vmatpush1.msra.mxu0 %v7017
    %8644 = vmatprep.subr.mxu0 0.0
    %8645 = vmatpush2.msra.mxu0 0.0
    %8646 = vmatprep.subr.mxu0 0.0
    %8647 = vmatpush2.msra.mxu0 0.0
    %8648 = vmatprep.subr.mxu0 0.0
    %8649 = vmatpush2.msra.mxu0 0.0
    %8650 = vmatprep.subr.mxu0 0.0
    %8651 = vmatpush2.msra.mxu0 0.0
    %8652 = vmatprep.subr.mxu0 0.0
    %8653 = vmatpush2.msra.mxu0 0.0
    %8654 = vmatprep.subr.mxu0 0.0
    %8655 = vmatpush2.msra.mxu0 0.0
    %8656 = vmatprep.subr.mxu0 0.0
    %8657 = vmatpush2.msra.mxu0 0.0
    %8658 = vmatprep.subr.mxu0 0.0
    %8659 = vmatpush2.msra.mxu0 0.0
    %8660 = vmatprep.subr.mxu0 0.0
    %8661 = vmatpush2.msra.mxu0 0.0
    %8662 = vmatprep.subr.mxu0 0.0
    %8663 = vmatpush2.msra.mxu0 0.0
    %8664 = vmatprep.subr.mxu0 0.0
    %8665 = vmatpush2.msra.mxu0 0.0
    %8666 = vmatprep.subr.mxu0 0.0
    %8667 = vmatpush2.msra.mxu0 0.0
    %8668 = vmatprep.subr.mxu0 0.0
    %8669 = vmatpush2.msra.mxu0 0.0
    %8670 = vmatprep.subr.mxu0 0.0
    %8671 = vmatpush2.msra.mxu0 0.0
    %8672 = vmatprep.subr.mxu0 0.0
    %8673 = vmatpush2.msra.mxu0 0.0
    %8674 = vmatprep.subr.mxu0 0.0
    %8675 = vmatpush2.msra.mxu0 0.0
    %8676 = vmatprep.mubr.f32.mxu0 0.0
    %8677 = vmatmul.mubr.f32.gmra.mxu0 %v8540
    %v8678 = vpop.f32.mrf.mxu0
    %v8679 = vadd.f32 0.0, %v8678
    %v8680 = vpop.f32.mrf.mxu0
    %8681 = vdwg.mxu0
    %8682 = vmatprep.subr.mxu0 0.0
    %8683 = vmatpush1.msra.mxu0 0.0
    %8684 = vmatprep.subr.mxu0 0.0
    %8685 = vmatpush1.msra.mxu0 0.0
    %8686 = vmatprep.subr.mxu0 0.0
    %8687 = vmatpush1.msra.mxu0 0.0
    %8688 = vmatprep.subr.mxu0 0.0
    %8689 = vmatpush1.msra.mxu0 0.0
    %8690 = vmatprep.subr.mxu0 0.0
    %8691 = vmatpush1.msra.mxu0 0.0
    %8692 = vmatprep.subr.mxu0 0.0
    %8693 = vmatpush1.msra.mxu0 0.0
    %8694 = vmatprep.subr.mxu0 0.0
    %8695 = vmatpush1.msra.mxu0 0.0
    %8696 = vmatprep.subr.mxu0 0.0
    %8697 = vmatpush1.msra.mxu0 0.0
    %8698 = vmatprep.subr.mxu0 0.0
    %8699 = vmatpush1.msra.mxu0 0.0
    %8700 = vmatprep.subr.mxu0 0.0
    %8701 = vmatpush1.msra.mxu0 0.0
    %8702 = vmatprep.subr.mxu0 0.0
    %8703 = vmatpush1.msra.mxu0 0.0
    %8704 = vmatprep.subr.mxu0 0.0
    %8705 = vmatpush1.msra.mxu0 0.0
    %8706 = vmatprep.subr.mxu0 0.0
    %8707 = vmatpush1.msra.mxu0 0.0
    %8708 = vmatprep.subr.mxu0 0.0
    %8709 = vmatpush1.msra.mxu0 0.0
    %8710 = vmatprep.subr.mxu0 0.0
    %8711 = vmatpush1.msra.mxu0 %v7021
    %8712 = vmatprep.subr.mxu0 0.0
    %8713 = vmatpush1.msra.mxu0 %v7020
    %8714 = vmatprep.subr.mxu0 0.0
    %8715 = vmatpush2.msra.mxu0 0.0
    %8716 = vmatprep.subr.mxu0 0.0
    %8717 = vmatpush2.msra.mxu0 0.0
    %8718 = vmatprep.subr.mxu0 0.0
    %8719 = vmatpush2.msra.mxu0 0.0
    %8720 = vmatprep.subr.mxu0 0.0
    %8721 = vmatpush2.msra.mxu0 0.0
    %8722 = vmatprep.subr.mxu0 0.0
    %8723 = vmatpush2.msra.mxu0 0.0
    %8724 = vmatprep.subr.mxu0 0.0
    %8725 = vmatpush2.msra.mxu0 0.0
    %8726 = vmatprep.subr.mxu0 0.0
    %8727 = vmatpush2.msra.mxu0 0.0
    %8728 = vmatprep.subr.mxu0 0.0
    %8729 = vmatpush2.msra.mxu0 0.0
    %8730 = vmatprep.subr.mxu0 0.0
    %8731 = vmatpush2.msra.mxu0 0.0
    %8732 = vmatprep.subr.mxu0 0.0
    %8733 = vmatpush2.msra.mxu0 0.0
    %8734 = vmatprep.subr.mxu0 0.0
    %8735 = vmatpush2.msra.mxu0 0.0
    %8736 = vmatprep.subr.mxu0 0.0
    %8737 = vmatpush2.msra.mxu0 0.0
    %8738 = vmatprep.subr.mxu0 0.0
    %8739 = vmatpush2.msra.mxu0 0.0
    %8740 = vmatprep.subr.mxu0 0.0
    %8741 = vmatpush2.msra.mxu0 0.0
    %8742 = vmatprep.subr.mxu0 0.0
    %8743 = vmatpush2.msra.mxu0 0.0
    %8744 = vmatprep.subr.mxu0 0.0
    %8745 = vmatpush2.msra.mxu0 0.0
    %8746 = vmatprep.mubr.f32.mxu0 0.0
    %8747 = vmatmul.mubr.f32.gmra.mxu0 %v8540
    %v8748 = vpop.f32.mrf.mxu0
    %v8749 = vadd.f32 %v7431, %v8748
    %v8750 = vpop.f32.mrf.mxu0
    %8751 = vdwg.mxu0
    %v8753 = vrot.slane %v8609, 6
    %v8755 = vadd.f32 %v7122, %v8753
    %v8756 = vxor.u32 %v8755, 2147483648
    %v8757 = vmul.f32 %v8756, 1.442695
    %v8758 = vpow.pop %v8757
    %v8759 = vadd.f32 %v8758, 1.0
    %v8760 = vrcp.pop %v8759
    %v8761 = vmul.f32 1.0, %v8760
    %v8763 = vrot.slane %v8679, 6
    %v8765 = vadd.f32 %v7203, %v8763
    %v8766 = vxor.u32 %v8765, 2147483648
    %v8767 = vmul.f32 %v8766, 1.442695
    %v8768 = vpow.pop %v8767
    %v8769 = vadd.f32 %v8768, 1.0
    %v8770 = vrcp.pop %v8769
    %v8771 = vmul.f32 1.0, %v8770
    %v8773 = vrot.slane %v8749, 6
    %v8775 = vmul.f32 %v8761, %v8773
    %v8776 = vadd.f32 %v7284, %v8775
    %v8777 = vtanh.pop %v8776
    %v8779 = vrot.slane %v8777, 2
    %v8781 = vsub.f32 %v8531, %v8779
    %v8783 = vrot.slane %v8781, 6
    %v8785 = vmul.f32 %v8771, %v8783
    %v8786 = vadd.f32 %v8777, %v8785
    %v8787 = vtanh.pop %v8786
    %8789 = vrot.lane.b32.xlu0 %v8787, 80
    %v8790 = vpop.permute.xlu0 %8789
    %vm8792 = vcmask 781954
    %8793 = vst.msk [vmem:[#allocation14 - $0x2] sm:$0xc] %vm8792, %v8790
    %v8795 = vrot.slane %v8786, 2
    %v8796 = vsel %vm260, %v8795, 0
    %8798 = vmatprep.subr.mxu0 0.0
    %8799 = vmatpush1.msra.mxu0 0.0
    %8800 = vmatprep.subr.mxu0 0.0
    %8801 = vmatpush1.msra.mxu0 0.0
    %8802 = vmatprep.subr.mxu0 0.0
    %8803 = vmatpush1.msra.mxu0 0.0
    %8804 = vmatprep.subr.mxu0 0.0
    %8805 = vmatpush1.msra.mxu0 0.0
    %8806 = vmatprep.subr.mxu0 0.0
    %8807 = vmatpush1.msra.mxu0 0.0
    %8808 = vmatprep.subr.mxu0 0.0
    %8809 = vmatpush1.msra.mxu0 0.0
    %8810 = vmatprep.subr.mxu0 0.0
    %8811 = vmatpush1.msra.mxu0 0.0
    %8812 = vmatprep.subr.mxu0 0.0
    %8813 = vmatpush1.msra.mxu0 0.0
    %8814 = vmatprep.subr.mxu0 0.0
    %8815 = vmatpush1.msra.mxu0 0.0
    %8816 = vmatprep.subr.mxu0 0.0
    %8817 = vmatpush1.msra.mxu0 0.0
    %8818 = vmatprep.subr.mxu0 0.0
    %8819 = vmatpush1.msra.mxu0 0.0
    %8820 = vmatprep.subr.mxu0 0.0
    %8821 = vmatpush1.msra.mxu0 0.0
    %8822 = vmatprep.subr.mxu0 0.0
    %8823 = vmatpush1.msra.mxu0 0.0
    %8824 = vmatprep.subr.mxu0 0.0
    %8825 = vmatpush1.msra.mxu0 0.0
    %8826 = vmatprep.subr.mxu0 0.0
    %8827 = vmatpush1.msra.mxu0 %v7015
    %8828 = vmatprep.subr.mxu0 0.0
    %8829 = vmatpush1.msra.mxu0 %v7014
    %8830 = vmatprep.subr.mxu0 0.0
    %8831 = vmatpush2.msra.mxu0 0.0
    %8832 = vmatprep.subr.mxu0 0.0
    %8833 = vmatpush2.msra.mxu0 0.0
    %8834 = vmatprep.subr.mxu0 0.0
    %8835 = vmatpush2.msra.mxu0 0.0
    %8836 = vmatprep.subr.mxu0 0.0
    %8837 = vmatpush2.msra.mxu0 0.0
    %8838 = vmatprep.subr.mxu0 0.0
    %8839 = vmatpush2.msra.mxu0 0.0
    %8840 = vmatprep.subr.mxu0 0.0
    %8841 = vmatpush2.msra.mxu0 0.0
    %8842 = vmatprep.subr.mxu0 0.0
    %8843 = vmatpush2.msra.mxu0 0.0
    %8844 = vmatprep.subr.mxu0 0.0
    %8845 = vmatpush2.msra.mxu0 0.0
    %8846 = vmatprep.subr.mxu0 0.0
    %8847 = vmatpush2.msra.mxu0 0.0
    %8848 = vmatprep.subr.mxu0 0.0
    %8849 = vmatpush2.msra.mxu0 0.0
    %8850 = vmatprep.subr.mxu0 0.0
    %8851 = vmatpush2.msra.mxu0 0.0
    %8852 = vmatprep.subr.mxu0 0.0
    %8853 = vmatpush2.msra.mxu0 0.0
    %8854 = vmatprep.subr.mxu0 0.0
    %8855 = vmatpush2.msra.mxu0 0.0
    %8856 = vmatprep.subr.mxu0 0.0
    %8857 = vmatpush2.msra.mxu0 0.0
    %8858 = vmatprep.subr.mxu0 0.0
    %8859 = vmatpush2.msra.mxu0 0.0
    %8860 = vmatprep.subr.mxu0 0.0
    %8861 = vmatpush2.msra.mxu0 0.0
    %8862 = vmatprep.mubr.f32.mxu0 0.0
    %8863 = vmatmul.mubr.f32.gmra.mxu0 %v8796
    %v8864 = vpop.f32.mrf.mxu0
    %v8865 = vadd.f32 0.0, %v8864
    %v8866 = vpop.f32.mrf.mxu0
    %8867 = vdwg.mxu0
    %8868 = vmatprep.subr.mxu0 0.0
    %8869 = vmatpush1.msra.mxu0 0.0
    %8870 = vmatprep.subr.mxu0 0.0
    %8871 = vmatpush1.msra.mxu0 0.0
    %8872 = vmatprep.subr.mxu0 0.0
    %8873 = vmatpush1.msra.mxu0 0.0
    %8874 = vmatprep.subr.mxu0 0.0
    %8875 = vmatpush1.msra.mxu0 0.0
    %8876 = vmatprep.subr.mxu0 0.0
    %8877 = vmatpush1.msra.mxu0 0.0
    %8878 = vmatprep.subr.mxu0 0.0
    %8879 = vmatpush1.msra.mxu0 0.0
    %8880 = vmatprep.subr.mxu0 0.0
    %8881 = vmatpush1.msra.mxu0 0.0
    %8882 = vmatprep.subr.mxu0 0.0
    %8883 = vmatpush1.msra.mxu0 0.0
    %8884 = vmatprep.subr.mxu0 0.0
    %8885 = vmatpush1.msra.mxu0 0.0
    %8886 = vmatprep.subr.mxu0 0.0
    %8887 = vmatpush1.msra.mxu0 0.0
    %8888 = vmatprep.subr.mxu0 0.0
    %8889 = vmatpush1.msra.mxu0 0.0
    %8890 = vmatprep.subr.mxu0 0.0
    %8891 = vmatpush1.msra.mxu0 0.0
    %8892 = vmatprep.subr.mxu0 0.0
    %8893 = vmatpush1.msra.mxu0 0.0
    %8894 = vmatprep.subr.mxu0 0.0
    %8895 = vmatpush1.msra.mxu0 0.0
    %8896 = vmatprep.subr.mxu0 0.0
    %8897 = vmatpush1.msra.mxu0 %v7018
    %8898 = vmatprep.subr.mxu0 0.0
    %8899 = vmatpush1.msra.mxu0 %v7017
    %8900 = vmatprep.subr.mxu0 0.0
    %8901 = vmatpush2.msra.mxu0 0.0
    %8902 = vmatprep.subr.mxu0 0.0
    %8903 = vmatpush2.msra.mxu0 0.0
    %8904 = vmatprep.subr.mxu0 0.0
    %8905 = vmatpush2.msra.mxu0 0.0
    %8906 = vmatprep.subr.mxu0 0.0
    %8907 = vmatpush2.msra.mxu0 0.0
    %8908 = vmatprep.subr.mxu0 0.0
    %8909 = vmatpush2.msra.mxu0 0.0
    %8910 = vmatprep.subr.mxu0 0.0
    %8911 = vmatpush2.msra.mxu0 0.0
    %8912 = vmatprep.subr.mxu0 0.0
    %8913 = vmatpush2.msra.mxu0 0.0
    %8914 = vmatprep.subr.mxu0 0.0
    %8915 = vmatpush2.msra.mxu0 0.0
    %8916 = vmatprep.subr.mxu0 0.0
    %8917 = vmatpush2.msra.mxu0 0.0
    %8918 = vmatprep.subr.mxu0 0.0
    %8919 = vmatpush2.msra.mxu0 0.0
    %8920 = vmatprep.subr.mxu0 0.0
    %8921 = vmatpush2.msra.mxu0 0.0
    %8922 = vmatprep.subr.mxu0 0.0
    %8923 = vmatpush2.msra.mxu0 0.0
    %8924 = vmatprep.subr.mxu0 0.0
    %8925 = vmatpush2.msra.mxu0 0.0
    %8926 = vmatprep.subr.mxu0 0.0
    %8927 = vmatpush2.msra.mxu0 0.0
    %8928 = vmatprep.subr.mxu0 0.0
    %8929 = vmatpush2.msra.mxu0 0.0
    %8930 = vmatprep.subr.mxu0 0.0
    %8931 = vmatpush2.msra.mxu0 0.0
    %8932 = vmatprep.mubr.f32.mxu0 0.0
    %8933 = vmatmul.mubr.f32.gmra.mxu0 %v8796
    %v8934 = vpop.f32.mrf.mxu0
    %v8935 = vadd.f32 0.0, %v8934
    %v8936 = vpop.f32.mrf.mxu0
    %8937 = vdwg.mxu0
    %8938 = vmatprep.subr.mxu0 0.0
    %8939 = vmatpush1.msra.mxu0 0.0
    %8940 = vmatprep.subr.mxu0 0.0
    %8941 = vmatpush1.msra.mxu0 0.0
    %8942 = vmatprep.subr.mxu0 0.0
    %8943 = vmatpush1.msra.mxu0 0.0
    %8944 = vmatprep.subr.mxu0 0.0
    %8945 = vmatpush1.msra.mxu0 0.0
    %8946 = vmatprep.subr.mxu0 0.0
    %8947 = vmatpush1.msra.mxu0 0.0
    %8948 = vmatprep.subr.mxu0 0.0
    %8949 = vmatpush1.msra.mxu0 0.0
    %8950 = vmatprep.subr.mxu0 0.0
    %8951 = vmatpush1.msra.mxu0 0.0
    %8952 = vmatprep.subr.mxu0 0.0
    %8953 = vmatpush1.msra.mxu0 0.0
    %8954 = vmatprep.subr.mxu0 0.0
    %8955 = vmatpush1.msra.mxu0 0.0
    %8956 = vmatprep.subr.mxu0 0.0
    %8957 = vmatpush1.msra.mxu0 0.0
    %8958 = vmatprep.subr.mxu0 0.0
    %8959 = vmatpush1.msra.mxu0 0.0
    %8960 = vmatprep.subr.mxu0 0.0
    %8961 = vmatpush1.msra.mxu0 0.0
    %8962 = vmatprep.subr.mxu0 0.0
    %8963 = vmatpush1.msra.mxu0 0.0
    %8964 = vmatprep.subr.mxu0 0.0
    %8965 = vmatpush1.msra.mxu0 0.0
    %8966 = vmatprep.subr.mxu0 0.0
    %8967 = vmatpush1.msra.mxu0 %v7021
    %8968 = vmatprep.subr.mxu0 0.0
    %8969 = vmatpush1.msra.mxu0 %v7020
    %8970 = vmatprep.subr.mxu0 0.0
    %8971 = vmatpush2.msra.mxu0 0.0
    %8972 = vmatprep.subr.mxu0 0.0
    %8973 = vmatpush2.msra.mxu0 0.0
    %8974 = vmatprep.subr.mxu0 0.0
    %8975 = vmatpush2.msra.mxu0 0.0
    %8976 = vmatprep.subr.mxu0 0.0
    %8977 = vmatpush2.msra.mxu0 0.0
    %8978 = vmatprep.subr.mxu0 0.0
    %8979 = vmatpush2.msra.mxu0 0.0
    %8980 = vmatprep.subr.mxu0 0.0
    %8981 = vmatpush2.msra.mxu0 0.0
    %8982 = vmatprep.subr.mxu0 0.0
    %8983 = vmatpush2.msra.mxu0 0.0
    %8984 = vmatprep.subr.mxu0 0.0
    %8985 = vmatpush2.msra.mxu0 0.0
    %8986 = vmatprep.subr.mxu0 0.0
    %8987 = vmatpush2.msra.mxu0 0.0
    %8988 = vmatprep.subr.mxu0 0.0
    %8989 = vmatpush2.msra.mxu0 0.0
    %8990 = vmatprep.subr.mxu0 0.0
    %8991 = vmatpush2.msra.mxu0 0.0
    %8992 = vmatprep.subr.mxu0 0.0
    %8993 = vmatpush2.msra.mxu0 0.0
    %8994 = vmatprep.subr.mxu0 0.0
    %8995 = vmatpush2.msra.mxu0 0.0
    %8996 = vmatprep.subr.mxu0 0.0
    %8997 = vmatpush2.msra.mxu0 0.0
    %8998 = vmatprep.subr.mxu0 0.0
    %8999 = vmatpush2.msra.mxu0 0.0
    %9000 = vmatprep.subr.mxu0 0.0
    %9001 = vmatpush2.msra.mxu0 0.0
    %9002 = vmatprep.mubr.f32.mxu0 0.0
    %9003 = vmatmul.mubr.f32.gmra.mxu0 %v8796
    %v9004 = vpop.f32.mrf.mxu0
    %v9005 = vadd.f32 %v7431, %v9004
    %v9006 = vpop.f32.mrf.mxu0
    %9007 = vdwg.mxu0
    %v9009 = vrot.slane %v8865, 4
    %v9011 = vadd.f32 %v7122, %v9009
    %v9012 = vxor.u32 %v9011, 2147483648
    %v9013 = vmul.f32 %v9012, 1.442695
    %v9014 = vpow.pop %v9013
    %v9015 = vadd.f32 %v9014, 1.0
    %v9016 = vrcp.pop %v9015
    %v9017 = vmul.f32 1.0, %v9016
    %v9019 = vrot.slane %v8935, 4
    %v9021 = vadd.f32 %v7203, %v9019
    %v9022 = vxor.u32 %v9021, 2147483648
    %v9023 = vmul.f32 %v9022, 1.442695
    %v9024 = vpow.pop %v9023
    %v9025 = vadd.f32 %v9024, 1.0
    %v9026 = vrcp.pop %v9025
    %v9027 = vmul.f32 1.0, %v9026
    %v9029 = vrot.slane %v9005, 4
    %v9031 = vmul.f32 %v9017, %v9029
    %v9032 = vadd.f32 %v7284, %v9031
    %v9033 = vtanh.pop %v9032
    %v9035 = vrot.slane %v9033, 2
    %v9037 = vsub.f32 %v8786, %v9035
    %v9039 = vrot.slane %v9037, 6
    %v9041 = vmul.f32 %v9027, %v9039
    %v9042 = vadd.f32 %v9033, %v9041
    %v9043 = vtanh.pop %v9042
    %9045 = vrot.lane.b32.xlu0 %v9043, 96
    %v9046 = vpop.permute.xlu0 %9045
    %vm9048 = vcmask 915204
    %9049 = vst.msk [vmem:[#allocation14 - $0x4] sm:$0x30] %vm9048, %v9046
    %v9051 = vrot.slane %v9042, 4
    %v9052 = vsel %vm260, %v9051, 0
    %9054 = vmatprep.subr.mxu0 0.0
    %9055 = vmatpush1.msra.mxu0 0.0
    %9056 = vmatprep.subr.mxu0 0.0
    %9057 = vmatpush1.msra.mxu0 0.0
    %9058 = vmatprep.subr.mxu0 0.0
    %9059 = vmatpush1.msra.mxu0 0.0
    %9060 = vmatprep.subr.mxu0 0.0
    %9061 = vmatpush1.msra.mxu0 0.0
    %9062 = vmatprep.subr.mxu0 0.0
    %9063 = vmatpush1.msra.mxu0 0.0
    %9064 = vmatprep.subr.mxu0 0.0
    %9065 = vmatpush1.msra.mxu0 0.0
    %9066 = vmatprep.subr.mxu0 0.0
    %9067 = vmatpush1.msra.mxu0 0.0
    %9068 = vmatprep.subr.mxu0 0.0
    %9069 = vmatpush1.msra.mxu0 0.0
    %9070 = vmatprep.subr.mxu0 0.0
    %9071 = vmatpush1.msra.mxu0 0.0
    %9072 = vmatprep.subr.mxu0 0.0
    %9073 = vmatpush1.msra.mxu0 0.0
    %9074 = vmatprep.subr.mxu0 0.0
    %9075 = vmatpush1.msra.mxu0 0.0
    %9076 = vmatprep.subr.mxu0 0.0
    %9077 = vmatpush1.msra.mxu0 0.0
    %9078 = vmatprep.subr.mxu0 0.0
    %9079 = vmatpush1.msra.mxu0 0.0
    %9080 = vmatprep.subr.mxu0 0.0
    %9081 = vmatpush1.msra.mxu0 0.0
    %9082 = vmatprep.subr.mxu0 0.0
    %9083 = vmatpush1.msra.mxu0 %v7015
    %9084 = vmatprep.subr.mxu0 0.0
    %9085 = vmatpush1.msra.mxu0 %v7014
    %9086 = vmatprep.subr.mxu0 0.0
    %9087 = vmatpush2.msra.mxu0 0.0
    %9088 = vmatprep.subr.mxu0 0.0
    %9089 = vmatpush2.msra.mxu0 0.0
    %9090 = vmatprep.subr.mxu0 0.0
    %9091 = vmatpush2.msra.mxu0 0.0
    %9092 = vmatprep.subr.mxu0 0.0
    %9093 = vmatpush2.msra.mxu0 0.0
    %9094 = vmatprep.subr.mxu0 0.0
    %9095 = vmatpush2.msra.mxu0 0.0
    %9096 = vmatprep.subr.mxu0 0.0
    %9097 = vmatpush2.msra.mxu0 0.0
    %9098 = vmatprep.subr.mxu0 0.0
    %9099 = vmatpush2.msra.mxu0 0.0
    %9100 = vmatprep.subr.mxu0 0.0
    %9101 = vmatpush2.msra.mxu0 0.0
    %9102 = vmatprep.subr.mxu0 0.0
    %9103 = vmatpush2.msra.mxu0 0.0
    %9104 = vmatprep.subr.mxu0 0.0
    %9105 = vmatpush2.msra.mxu0 0.0
    %9106 = vmatprep.subr.mxu0 0.0
    %9107 = vmatpush2.msra.mxu0 0.0
    %9108 = vmatprep.subr.mxu0 0.0
    %9109 = vmatpush2.msra.mxu0 0.0
    %9110 = vmatprep.subr.mxu0 0.0
    %9111 = vmatpush2.msra.mxu0 0.0
    %9112 = vmatprep.subr.mxu0 0.0
    %9113 = vmatpush2.msra.mxu0 0.0
    %9114 = vmatprep.subr.mxu0 0.0
    %9115 = vmatpush2.msra.mxu0 0.0
    %9116 = vmatprep.subr.mxu0 0.0
    %9117 = vmatpush2.msra.mxu0 0.0
    %9118 = vmatprep.mubr.f32.mxu0 0.0
    %9119 = vmatmul.mubr.f32.gmra.mxu0 %v9052
    %v9120 = vpop.f32.mrf.mxu0
    %v9121 = vadd.f32 0.0, %v9120
    %v9122 = vpop.f32.mrf.mxu0
    %9123 = vdwg.mxu0
    %9124 = vmatprep.subr.mxu0 0.0
    %9125 = vmatpush1.msra.mxu0 0.0
    %9126 = vmatprep.subr.mxu0 0.0
    %9127 = vmatpush1.msra.mxu0 0.0
    %9128 = vmatprep.subr.mxu0 0.0
    %9129 = vmatpush1.msra.mxu0 0.0
    %9130 = vmatprep.subr.mxu0 0.0
    %9131 = vmatpush1.msra.mxu0 0.0
    %9132 = vmatprep.subr.mxu0 0.0
    %9133 = vmatpush1.msra.mxu0 0.0
    %9134 = vmatprep.subr.mxu0 0.0
    %9135 = vmatpush1.msra.mxu0 0.0
    %9136 = vmatprep.subr.mxu0 0.0
    %9137 = vmatpush1.msra.mxu0 0.0
    %9138 = vmatprep.subr.mxu0 0.0
    %9139 = vmatpush1.msra.mxu0 0.0
    %9140 = vmatprep.subr.mxu0 0.0
    %9141 = vmatpush1.msra.mxu0 0.0
    %9142 = vmatprep.subr.mxu0 0.0
    %9143 = vmatpush1.msra.mxu0 0.0
    %9144 = vmatprep.subr.mxu0 0.0
    %9145 = vmatpush1.msra.mxu0 0.0
    %9146 = vmatprep.subr.mxu0 0.0
    %9147 = vmatpush1.msra.mxu0 0.0
    %9148 = vmatprep.subr.mxu0 0.0
    %9149 = vmatpush1.msra.mxu0 0.0
    %9150 = vmatprep.subr.mxu0 0.0
    %9151 = vmatpush1.msra.mxu0 0.0
    %9152 = vmatprep.subr.mxu0 0.0
    %9153 = vmatpush1.msra.mxu0 %v7018
    %9154 = vmatprep.subr.mxu0 0.0
    %9155 = vmatpush1.msra.mxu0 %v7017
    %9156 = vmatprep.subr.mxu0 0.0
    %9157 = vmatpush2.msra.mxu0 0.0
    %9158 = vmatprep.subr.mxu0 0.0
    %9159 = vmatpush2.msra.mxu0 0.0
    %9160 = vmatprep.subr.mxu0 0.0
    %9161 = vmatpush2.msra.mxu0 0.0
    %9162 = vmatprep.subr.mxu0 0.0
    %9163 = vmatpush2.msra.mxu0 0.0
    %9164 = vmatprep.subr.mxu0 0.0
    %9165 = vmatpush2.msra.mxu0 0.0
    %9166 = vmatprep.subr.mxu0 0.0
    %9167 = vmatpush2.msra.mxu0 0.0
    %9168 = vmatprep.subr.mxu0 0.0
    %9169 = vmatpush2.msra.mxu0 0.0
    %9170 = vmatprep.subr.mxu0 0.0
    %9171 = vmatpush2.msra.mxu0 0.0
    %9172 = vmatprep.subr.mxu0 0.0
    %9173 = vmatpush2.msra.mxu0 0.0
    %9174 = vmatprep.subr.mxu0 0.0
    %9175 = vmatpush2.msra.mxu0 0.0
    %9176 = vmatprep.subr.mxu0 0.0
    %9177 = vmatpush2.msra.mxu0 0.0
    %9178 = vmatprep.subr.mxu0 0.0
    %9179 = vmatpush2.msra.mxu0 0.0
    %9180 = vmatprep.subr.mxu0 0.0
    %9181 = vmatpush2.msra.mxu0 0.0
    %9182 = vmatprep.subr.mxu0 0.0
    %9183 = vmatpush2.msra.mxu0 0.0
    %9184 = vmatprep.subr.mxu0 0.0
    %9185 = vmatpush2.msra.mxu0 0.0
    %9186 = vmatprep.subr.mxu0 0.0
    %9187 = vmatpush2.msra.mxu0 0.0
    %9188 = vmatprep.mubr.f32.mxu0 0.0
    %9189 = vmatmul.mubr.f32.gmra.mxu0 %v9052
    %v9190 = vpop.f32.mrf.mxu0
    %v9191 = vadd.f32 0.0, %v9190
    %v9192 = vpop.f32.mrf.mxu0
    %9193 = vdwg.mxu0
    %9194 = vmatprep.subr.mxu0 0.0
    %9195 = vmatpush1.msra.mxu0 0.0
    %9196 = vmatprep.subr.mxu0 0.0
    %9197 = vmatpush1.msra.mxu0 0.0
    %9198 = vmatprep.subr.mxu0 0.0
    %9199 = vmatpush1.msra.mxu0 0.0
    %9200 = vmatprep.subr.mxu0 0.0
    %9201 = vmatpush1.msra.mxu0 0.0
    %9202 = vmatprep.subr.mxu0 0.0
    %9203 = vmatpush1.msra.mxu0 0.0
    %9204 = vmatprep.subr.mxu0 0.0
    %9205 = vmatpush1.msra.mxu0 0.0
    %9206 = vmatprep.subr.mxu0 0.0
    %9207 = vmatpush1.msra.mxu0 0.0
    %9208 = vmatprep.subr.mxu0 0.0
    %9209 = vmatpush1.msra.mxu0 0.0
    %9210 = vmatprep.subr.mxu0 0.0
    %9211 = vmatpush1.msra.mxu0 0.0
    %9212 = vmatprep.subr.mxu0 0.0
    %9213 = vmatpush1.msra.mxu0 0.0
    %9214 = vmatprep.subr.mxu0 0.0
    %9215 = vmatpush1.msra.mxu0 0.0
    %9216 = vmatprep.subr.mxu0 0.0
    %9217 = vmatpush1.msra.mxu0 0.0
    %9218 = vmatprep.subr.mxu0 0.0
    %9219 = vmatpush1.msra.mxu0 0.0
    %9220 = vmatprep.subr.mxu0 0.0
    %9221 = vmatpush1.msra.mxu0 0.0
    %9222 = vmatprep.subr.mxu0 0.0
    %9223 = vmatpush1.msra.mxu0 %v7021
    %9224 = vmatprep.subr.mxu0 0.0
    %9225 = vmatpush1.msra.mxu0 %v7020
    %9226 = vmatprep.subr.mxu0 0.0
    %9227 = vmatpush2.msra.mxu0 0.0
    %9228 = vmatprep.subr.mxu0 0.0
    %9229 = vmatpush2.msra.mxu0 0.0
    %9230 = vmatprep.subr.mxu0 0.0
    %9231 = vmatpush2.msra.mxu0 0.0
    %9232 = vmatprep.subr.mxu0 0.0
    %9233 = vmatpush2.msra.mxu0 0.0
    %9234 = vmatprep.subr.mxu0 0.0
    %9235 = vmatpush2.msra.mxu0 0.0
    %9236 = vmatprep.subr.mxu0 0.0
    %9237 = vmatpush2.msra.mxu0 0.0
    %9238 = vmatprep.subr.mxu0 0.0
    %9239 = vmatpush2.msra.mxu0 0.0
    %9240 = vmatprep.subr.mxu0 0.0
    %9241 = vmatpush2.msra.mxu0 0.0
    %9242 = vmatprep.subr.mxu0 0.0
    %9243 = vmatpush2.msra.mxu0 0.0
    %9244 = vmatprep.subr.mxu0 0.0
    %9245 = vmatpush2.msra.mxu0 0.0
    %9246 = vmatprep.subr.mxu0 0.0
    %9247 = vmatpush2.msra.mxu0 0.0
    %9248 = vmatprep.subr.mxu0 0.0
    %9249 = vmatpush2.msra.mxu0 0.0
    %9250 = vmatprep.subr.mxu0 0.0
    %9251 = vmatpush2.msra.mxu0 0.0
    %9252 = vmatprep.subr.mxu0 0.0
    %9253 = vmatpush2.msra.mxu0 0.0
    %9254 = vmatprep.subr.mxu0 0.0
    %9255 = vmatpush2.msra.mxu0 0.0
    %9256 = vmatprep.subr.mxu0 0.0
    %9257 = vmatpush2.msra.mxu0 0.0
    %9258 = vmatprep.mubr.f32.mxu0 0.0
    %9259 = vmatmul.mubr.f32.gmra.mxu0 %v9052
    %v9260 = vpop.f32.mrf.mxu0
    %v9261 = vadd.f32 %v7431, %v9260
    %v9262 = vpop.f32.mrf.mxu0
    %9263 = vdwg.mxu0
    %v9265 = vrot.slane %v9121, 2
    %v9267 = vadd.f32 %v7122, %v9265
    %v9268 = vxor.u32 %v9267, 2147483648
    %v9269 = vmul.f32 %v9268, 1.442695
    %v9270 = vpow.pop %v9269
    %v9271 = vadd.f32 %v9270, 1.0
    %v9272 = vrcp.pop %v9271
    %v9273 = vmul.f32 1.0, %v9272
    %v9275 = vrot.slane %v9191, 2
    %v9277 = vadd.f32 %v7203, %v9275
    %v9278 = vxor.u32 %v9277, 2147483648
    %v9279 = vmul.f32 %v9278, 1.442695
    %v9280 = vpow.pop %v9279
    %v9281 = vadd.f32 %v9280, 1.0
    %v9282 = vrcp.pop %v9281
    %v9283 = vmul.f32 1.0, %v9282
    %v9285 = vrot.slane %v9261, 2
    %v9287 = vmul.f32 %v9273, %v9285
    %v9288 = vadd.f32 %v7284, %v9287
    %v9289 = vtanh.pop %v9288
    %v9291 = vrot.slane %v9289, 2
    %v9293 = vsub.f32 %v9042, %v9291
    %v9295 = vrot.slane %v9293, 6
    %v9297 = vmul.f32 %v9283, %v9295
    %v9298 = vadd.f32 %v9289, %v9297
    %v9299 = vtanh.pop %v9298
    %9301 = vrot.lane.b32.xlu0 %v9299, 112
    %v9302 = vpop.permute.xlu0 %9301
    %vm9304 = vcmask 1048454
    %9305 = vst.msk [vmem:[#allocation14 - $0x6] sm:$0xc0] %vm9304, %v9302
    // Predicated region
    $region54: #{tpu_custom_call.1} parent=1 // pred_check
      _
    $region55: #{tpu_custom_call.1} parent=1 // pred_check_branch
      %9307 = sbr.rel (0) target = $region57
    $region56: #{tpu_custom_call.1} parent=1 // pred_region
      %s9309 = ssub.s32 32, 32
      %9310 = vsyncadd [#allocation5], %s9309
      %s9312 = sshll.u32 [#allocation14], 4
      %s9313 = int_to_ptr.vmem [resolvable:$true] %s9312
      %9315 = dma.vmem_to_hbm [thread:$0]  %s9313, 32, %s7, [#allocation5]
    $region57: #{tpu_custom_call.1} parent=1 // pred_fallthru
      _
    // Predicated region
    $region58: #{tpu_custom_call.1} parent=1 // pred_check
      _
    $region59: #{tpu_custom_call.1} parent=1 // pred_check_branch
      %9317 = sbr.rel (0) target = $region61
    $region60: #{tpu_custom_call.1} parent=1 // pred_region
      %9318 = dma.done [#allocation5], 32
    $region61: #{tpu_custom_call.1} parent=1 // pred_fallthru
      _
    %9319 = vsyncpa [#allocation4], 1
    %9320 = vsyncpa [#allocation7], 1
    %9321 = vsyncpa [#allocation10], 1
    %9322 = vsyncpa [#allocation13], 1
    %9323 = vsyncpa [#allocation5], 1

</llo_original>
